<compile_context>
chip_gen: v6e
topology: v6e:2x2x1
jax: 0.10.0
libtpu: 0.0.40
codegen_flags: <defaults>
</compile_context>

<pallas_src>
import numpy as np
import jax
import jax.numpy as jnp
from jax.experimental import pallas as pl
from jax.experimental.pallas import tpu as pltpu


# ----------------------------------------------------------------------------
# Static layer table: (name, kind, Cin, Cout, stride, padding, out_padding)
# ----------------------------------------------------------------------------
_LAYER_SPECS = (
    ("e1", "conv",    3,  32, 2, 1, 0),
    ("e2", "conv",   32,  64, 2, 1, 0),
    ("e3", "conv",   64, 128, 2, 1, 0),
    ("e4", "conv",  128, 256, 1, 1, 0),
    ("d1", "convT", 256, 128, 1, 1, 0),
    ("d2", "convT", 128,  64, 2, 1, 1),
    ("d3", "convT",  64,  32, 2, 1, 1),
    ("d4", "convT",  32,   3, 2, 1, 1),
)
_K = 3          # all kernels are 3x3
_T = _K * _K    # 9 taps


def _cdiv(a, b):
    return -(-a // b)


def _choose_strategy(hwi, hwo, cin, cout, sub=8, lane=256):
    """Hardware-rounded MXU slab cost of the two 2-matmul formulations of
       sum_t G_t @ X @ W_t  (A = gather-first, B = weights-first)."""
    cost_a = (_cdiv(_T * hwo, sub) * _cdiv(hwi, lane) * _cdiv(cin, lane)
              + _cdiv(hwo, sub) * _cdiv(_T * cin, lane) * _cdiv(cout, lane))
    cost_b = (_cdiv(hwi, sub) * _cdiv(cin, lane) * _cdiv(_T * cout, lane)
              + _cdiv(hwo, sub) * _cdiv(_T * hwi, lane) * _cdiv(cout, lane))
    return "A" if cost_a < cost_b else "B"


def _layer_configs(h_in):
    """Per-layer spatial sizes + contraction strategy for square h_in x h_in input."""
    cfgs, h = [], h_in
    for name, kind, cin, cout, s, p, op in _LAYER_SPECS:
        if kind == "conv":
            ho = (h + 2 * p - _K) // s + 1
        else:
            ho = (h - 1) * s - 2 * p + _K + op
        hwi, hwo = h * h, ho * ho
        cfgs.append(dict(name=name, kind=kind, cin=cin, cout=cout,
                         h_in=h, h_out=ho, hw_in=hwi, hw_out=hwo,
                         stride=s, pad=p,
                         strategy=_choose_strategy(hwi, hwo, cin, cout)))
        h = ho
    return cfgs


# ----------------------------------------------------------------------------
# Constant 0/1 tap-gather matrices: (out position) x (in position), one per tap.
#   conv :  in = out*stride + tap - pad
#   convT:  in = (out + pad - tap) / stride   (only when divisible & in range)
# Rows with no valid source stay all-zero == implicit zero padding / dilation.
# ----------------------------------------------------------------------------
def _gather_matrices(kind, h_in, h_out, stride, pad):
    g = np.zeros((_T, h_out * h_out, h_in * h_in), np.float32)
    for i in range(_K):
        for j in range(_K):
            t = i * _K + j
            for ro in range(h_out):
                for co in range(h_out):
                    if kind == "conv":
                        ri = ro * stride + i - pad
                        ci = co * stride + j - pad
                    else:
                        rn, cn = ro + pad - i, co + pad - j
                        if rn < 0 or cn < 0 or rn % stride or cn % stride:
                            continue
                        ri, ci = rn // stride, cn // stride
                    if 0 <= ri < h_in and 0 <= ci < h_in:
                        g[t, ro * h_out + co, ri * h_in + ci] = 1.0
    return g


# ----------------------------------------------------------------------------
# Fused Pallas kernel: whole autoencoder for one image per grid step.
# ----------------------------------------------------------------------------
def _make_kernel(cfgs):
    n_layers = len(cfgs)

    def kernel(*refs):
        # refs = (x_ref, [op1, op2, b] * n_layers, out_ref, buf_0..buf_{n-1})
        x_ref = refs[0]
        layer_refs = refs[1:1 + 3 * n_layers]
        out_ref = refs[1 + 3 * n_layers]
        bufs = refs[2 + 3 * n_layers:]

        a = x_ref[0]                                     # (HW_in, 3) f32, VMEM resident
        for li, c in enumerate(cfgs):
            op1 = layer_refs[3 * li + 0]
            op2 = layer_refs[3 * li + 1]
            b_ref = layer_refs[3 * li + 2]
            buf = bufs[li]
            hwi, hwo = c["hw_in"], c["hw_out"]
            cin, cout = c["cin"], c["cout"]

            if c["strategy"] == "A":
                # op1 = Gbig (9*HWo, HWi), op2 = W2 (9*Cin, Cout)
                gx = jnp.dot(op1[...], a, preferred_element_type=jnp.float32)
                for t in range(_T):                      # lane-concat the 9 tap blocks
                    buf[:, t * cin:(t + 1) * cin] = gx[t * hwo:(t + 1) * hwo, :]
                acc = jnp.dot(buf[...], op2[...], preferred_element_type=jnp.float32)
            else:
                # op1 = Wcat (Cin, 9*Cout), op2 = Gcat (HWo, 9*HWi)
                xw = jnp.dot(a, op1[...], preferred_element_type=jnp.float32)
                for t in range(_T):                      # row-stack the 9 tap blocks
                    buf[t * hwi:(t + 1) * hwi, :] = xw[:, t * cout:(t + 1) * cout]
                acc = jnp.dot(op2[...], buf[...], preferred_element_type=jnp.float32)

            acc = acc + b_ref[...]                       # (1, Cout) sublane broadcast

            if li + 1 < n_layers:
                a = jnp.maximum(acc, 0.0)                # ReLU on the VPU
            else:
                # Sigmoid via EUP (exp + approx reciprocal), clamped to [0, 1].
                s = pl.reciprocal(1.0 + jnp.exp(-acc), approx=True)
                a = jnp.minimum(jnp.maximum(s, 0.0), 1.0)

        out_ref[0] = a                                   # (HW, 3) store (3 KB / image)

    return kernel


# ----------------------------------------------------------------------------
# Wrapper: one pallas_call for the whole forward.
# ----------------------------------------------------------------------------
@jax.jit
def small_texture_autoencoder_forward(x_nchw, packed):
    """x_nchw: (N, 3, H, W) float32 -> (N, 3, H, W)."""
    n, cin0, h, w = x_nchw.shape
    assert h == w and cin0 == 3, (x_nchw.shape,)
    cfgs = _layer_configs(h)
    assert len(packed) == len(cfgs)

    x_flat = jnp.transpose(x_nchw, (0, 2, 3, 1)).reshape(n, h * w, cin0)
    x_flat = x_flat.astype(jnp.float32)

    flat_inputs = [x_flat]
    in_specs = [pl.BlockSpec((1, h * w, cin0), lambda b: (b, 0, 0))]
    scratch_shapes = []
    for c, (op1, op2, bt) in zip(cfgs, packed):
        if c["strategy"] == "A":
            assert op1.shape == (_T * c["hw_out"], c["hw_in"]), (c["name"], op1.shape)
            assert op2.shape == (_T * c["cin"], c["cout"]), (c["name"], op2.shape)
            scratch_shapes.append(pltpu.VMEM((c["hw_out"], _T * c["cin"]), jnp.float32))
        else:
            assert op1.shape == (c["cin"], _T * c["cout"]), (c["name"], op1.shape)
            assert op2.shape == (c["hw_out"], _T * c["hw_in"]), (c["name"], op2.shape)
            scratch_shapes.append(pltpu.VMEM((_T * c["hw_in"], c["cout"]), jnp.float32))
        assert bt.shape == (1, c["cout"])
        flat_inputs += [op1, op2, bt]
        in_specs += [pl.BlockSpec(op1.shape, lambda b: (0, 0)),
                     pl.BlockSpec(op2.shape, lambda b: (0, 0)),
                     pl.BlockSpec(bt.shape, lambda b: (0, 0))]

    hw_out = cfgs[-1]["hw_out"]
    c_out = cfgs[-1]["cout"]
    assert hw_out == h * w

    out = pl.pallas_call(
        _make_kernel(cfgs),
        out_shape=jax.ShapeDtypeStruct((n, hw_out, c_out), jnp.float32),
        grid=(n,),                                       # one image per grid step
        in_specs=in_specs,
        out_specs=pl.BlockSpec((1, hw_out, c_out), lambda b: (b, 0, 0)),
        scratch_shapes=scratch_shapes,
        compiler_params=pltpu.CompilerParams(
            dimension_semantics=("parallel",),           # megacore sharding on v7x
            vmem_limit_bytes=32 * 1024 * 1024,
        ),
    )(*flat_inputs)

    y = out.reshape(n, h, w, c_out)                      # (N, H, W, 3)
    return jnp.transpose(y, (0, 3, 1, 2))                # back to NCHW


# ----------------------------------------------------------------------------
# One-time prepack of torch-layout params into the kernel's 2-D operands.
# ----------------------------------------------------------------------------
def prepack(params, input_hw=16):
    cfgs = _layer_configs(input_hw)
    packed = []
    for c in cfgs:
        w = jnp.asarray(params[c["name"] + "_w"], jnp.float32)
        b = jnp.asarray(params[c["name"] + "_b"], jnp.float32)
        if c["kind"] == "conv":   # torch (Cout, Cin, kh, kw) -> (9, Cin, Cout)
            wt = jnp.transpose(w, (2, 3, 1, 0)).reshape(_T, c["cin"], c["cout"])
        else:                     # torch (Cin, Cout, kh, kw) -> (9, Cin, Cout)
            wt = jnp.transpose(w, (2, 3, 0, 1)).reshape(_T, c["cin"], c["cout"])
        g = jnp.asarray(_gather_matrices(c["kind"], c["h_in"], c["h_out"],
                                         c["stride"], c["pad"]))
        bt = b.reshape(1, c["cout"])
        if c["strategy"] == "A":
            op1 = g.reshape(_T * c["hw_out"], c["hw_in"])                       # Gbig
            op2 = wt.reshape(_T * c["cin"], c["cout"])                          # W2
        else:
            op1 = jnp.transpose(wt, (1, 0, 2)).reshape(c["cin"], _T * c["cout"])      # Wcat
            op2 = jnp.transpose(g, (1, 0, 2)).reshape(c["hw_out"], _T * c["hw_in"])   # Gcat
        packed.append((op1, op2, bt))
    return packed


# ----------------------------------------------------------------------------
# Parameters (torch layout, PyTorch-default uniform init).
# ----------------------------------------------------------------------------
def init_params(key):
    def conv_w(k, cout, cin):
        bound = 1.0 / np.sqrt(cin * _K * _K)
        return jax.random.uniform(k, (cout, cin, _K, _K), jnp.float32, -bound, bound)

    def convT_w(k, cin, cout):
        bound = 1.0 / np.sqrt(cout * _K * _K)
        return jax.random.uniform(k, (cin, cout, _K, _K), jnp.float32, -bound, bound)

    def bias(k, n, fan_in):
        bound = 1.0 / np.sqrt(fan_in)
        return jax.random.uniform(k, (n,), jnp.float32, -bound, bound)

    ks = jax.random.split(key, 16)
    p = {}
    p["e1_w"] = conv_w(ks[0], 32, 3);      p["e1_b"] = bias(ks[1], 32, 3 * 9)
    p["e2_w"] = conv_w(ks[2], 64, 32);     p["e2_b"] = bias(ks[3], 64, 32 * 9)
    p["e3_w"] = conv_w(ks[4], 128, 64);    p["e3_b"] = bias(ks[5], 128, 64 * 9)
    p["e4_w"] = conv_w(ks[6], 256, 128);   p["e4_b"] = bias(ks[7], 256, 128 * 9)
    p["d1_w"] = convT_w(ks[8], 256, 128);  p["d1_b"] = bias(ks[9], 128, 128 * 9)
    p["d2_w"] = convT_w(ks[10], 128, 64);  p["d2_b"] = bias(ks[11], 64, 64 * 9)
    p["d3_w"] = convT_w(ks[12], 64, 32);   p["d3_b"] = bias(ks[13], 32, 32 * 9)
    p["d4_w"] = convT_w(ks[14], 32, 3);    p["d4_b"] = bias(ks[15], 3, 3 * 9)
    return p


# ----------------------------------------------------------------------------
# Pure-JAX reference (XLA im2col) — used only to validate the Pallas kernel.
# ----------------------------------------------------------------------------
def _reference_forward(x_nchw, params):
    def conv(x, w, b, s, p):
        n_, hh, ww, cin = x.shape
        cout = w.shape[0]
        xp = jnp.pad(x, ((0, 0), (p, p), (p, p), (0, 0)))
        ho = (hh + 2 * p - _K) // s + 1
        wo = (ww + 2 * p - _K) // s + 1
        cols = [xp[:, i:i + s * (ho - 1) + 1:s, j:j + s * (wo - 1) + 1:s, :]
                for i in range(_K) for j in range(_K)]
        pat = jnp.stack(cols, 3).reshape(n_ * ho * wo, _K * _K * cin)
        w2 = jnp.transpose(w, (2, 3, 1, 0)).reshape(_K * _K * cin, cout)
        return (pat @ w2 + b).reshape(n_, ho, wo, cout)

    def convT(x, w, b, s, p, op):
        n_, hh, ww, cin = x.shape
        cout = w.shape[1]
        if s > 1:
            xd = jnp.zeros((n_, (hh - 1) * s + 1, (ww - 1) * s + 1, cin), x.dtype)
            xd = xd.at[:, ::s, ::s, :].set(x)
        else:
            xd = x
        lo, hi = _K - 1 - p, _K - 1 - p + op
        xp = jnp.pad(xd, ((0, 0), (lo, hi), (lo, hi), (0, 0)))
        ho, wo = xp.shape[1] - _K + 1, xp.shape[2] - _K + 1
        cols = [xp[:, i:i + ho, j:j + wo, :] for i in range(_K) for j in range(_K)]
        pat = jnp.stack(cols, 3).reshape(n_ * ho * wo, _K * _K * cin)
        wf = jnp.flip(w, (2, 3))
        w2 = jnp.transpose(wf, (2, 3, 0, 1)).reshape(_K * _K * cin, cout)
        return (pat @ w2 + b).reshape(n_, ho, wo, cout)

    x = jnp.transpose(x_nchw, (0, 2, 3, 1)).astype(jnp.float32)
    x = jax.nn.relu(conv(x, params["e1_w"], params["e1_b"], 2, 1))
    x = jax.nn.relu(conv(x, params["e2_w"], params["e2_b"], 2, 1))
    x = jax.nn.relu(conv(x, params["e3_w"], params["e3_b"], 2, 1))
    x = jax.nn.relu(conv(x, params["e4_w"], params["e4_b"], 1, 1))
    x = jax.nn.relu(convT(x, params["d1_w"], params["d1_b"], 1, 1, 0))
    x = jax.nn.relu(convT(x, params["d2_w"], params["d2_b"], 2, 1, 1))
    x = jax.nn.relu(convT(x, params["d3_w"], params["d3_b"], 2, 1, 1))
    x = jax.nn.sigmoid(convT(x, params["d4_w"], params["d4_b"], 2, 1, 1))
    return jnp.transpose(x, (0, 3, 1, 2))


if __name__ == "__main__":
    key = jax.random.PRNGKey(0)
    k_params, k_x = jax.random.split(key)

    params = init_params(k_params)
    packed = prepack(params, input_hw=16)   # one-time weight / gather prepack
    # Small runway texture patches: batch=2, RGB, 16x16 (NCHW).
    x = jax.random.uniform(k_x, (2, 3, 16, 16), jnp.float32)

    y = small_texture_autoencoder_forward(x, packed)
    y = jax.block_until_ready(y)

    assert y.shape == x.shape, (y.shape, x.shape)
    assert bool(jnp.all(jnp.isfinite(y)))
    assert bool(jnp.all((y >= 0.0) & (y <= 1.0)))   # sigmoid output range

    # Validate against the pure-JAX reference (tolerance covers the EUP
    # approximate reciprocal used inside the in-kernel sigmoid).
    y_ref = _reference_forward(x, params)
    max_err = float(jnp.max(jnp.abs(y - y_ref)))
    assert max_err < 2e-2, max_err

    print("KERNEL_OK")
</pallas_src>

<mosaic_0001>
module attributes {stable_mosaic.version = 11 : i64} {
  func.func @kernel(%arg0: i32, %arg1: memref<1x256x3xf32, #tpu.memory_space<vmem>>, %arg2: memref<576x256xf32, #tpu.memory_space<vmem>>, %arg3: memref<27x32xf32, #tpu.memory_space<vmem>>, %arg4: memref<1x32xf32, #tpu.memory_space<vmem>>, %arg5: memref<144x64xf32, #tpu.memory_space<vmem>>, %arg6: memref<288x64xf32, #tpu.memory_space<vmem>>, %arg7: memref<1x64xf32, #tpu.memory_space<vmem>>, %arg8: memref<36x16xf32, #tpu.memory_space<vmem>>, %arg9: memref<576x128xf32, #tpu.memory_space<vmem>>, %arg10: memref<1x128xf32, #tpu.memory_space<vmem>>, %arg11: memref<128x2304xf32, #tpu.memory_space<vmem>>, %arg12: memref<4x36xf32, #tpu.memory_space<vmem>>, %arg13: memref<1x256xf32, #tpu.memory_space<vmem>>, %arg14: memref<256x1152xf32, #tpu.memory_space<vmem>>, %arg15: memref<4x36xf32, #tpu.memory_space<vmem>>, %arg16: memref<1x128xf32, #tpu.memory_space<vmem>>, %arg17: memref<128x576xf32, #tpu.memory_space<vmem>>, %arg18: memref<16x36xf32, #tpu.memory_space<vmem>>, %arg19: memref<1x64xf32, #tpu.memory_space<vmem>>, %arg20: memref<64x288xf32, #tpu.memory_space<vmem>>, %arg21: memref<64x144xf32, #tpu.memory_space<vmem>>, %arg22: memref<1x32xf32, #tpu.memory_space<vmem>>, %arg23: memref<32x27xf32, #tpu.memory_space<vmem>>, %arg24: memref<256x576xf32, #tpu.memory_space<vmem>>, %arg25: memref<1x3xf32, #tpu.memory_space<vmem>>, %arg26: memref<1x256x3xf32, #tpu.memory_space<vmem>>, %arg27: memref<64x27xf32, #tpu.memory_space<vmem>>, %arg28: memref<16x288xf32, #tpu.memory_space<vmem>>, %arg29: memref<4x576xf32, #tpu.memory_space<vmem>>, %arg30: memref<36x256xf32, #tpu.memory_space<vmem>>, %arg31: memref<36x128xf32, #tpu.memory_space<vmem>>, %arg32: memref<36x64xf32, #tpu.memory_space<vmem>>, %arg33: memref<144x32xf32, #tpu.memory_space<vmem>>, %arg34: memref<576x3xf32, #tpu.memory_space<vmem>>) attributes {dimension_semantics = [#tpu.dimension_semantics<parallel>], iteration_bounds = array<i64: 2>, scalar_prefetch = 0 : i64, scratch_operands = 8 : i64, tpu.core_type = #tpu.core_type<tc>, window_params = [{transform_indices = @transform_0, window_bounds = array<i64: 1, 256, 3>}, {pipeline_mode = #tpu.pipeline_mode<synchronous>, transform_indices = @transform_1, window_bounds = array<i64: 576, 256>}, {pipeline_mode = #tpu.pipeline_mode<synchronous>, transform_indices = @transform_2, window_bounds = array<i64: 27, 32>}, {pipeline_mode = #tpu.pipeline_mode<synchronous>, transform_indices = @transform_3, window_bounds = array<i64: 1, 32>}, {pipeline_mode = #tpu.pipeline_mode<synchronous>, transform_indices = @transform_4, window_bounds = array<i64: 144, 64>}, {pipeline_mode = #tpu.pipeline_mode<synchronous>, transform_indices = @transform_5, window_bounds = array<i64: 288, 64>}, {pipeline_mode = #tpu.pipeline_mode<synchronous>, transform_indices = @transform_6, window_bounds = array<i64: 1, 64>}, {pipeline_mode = #tpu.pipeline_mode<synchronous>, transform_indices = @transform_7, window_bounds = array<i64: 36, 16>}, {pipeline_mode = #tpu.pipeline_mode<synchronous>, transform_indices = @transform_8, window_bounds = array<i64: 576, 128>}, {pipeline_mode = #tpu.pipeline_mode<synchronous>, transform_indices = @transform_9, window_bounds = array<i64: 1, 128>}, {pipeline_mode = #tpu.pipeline_mode<synchronous>, transform_indices = @transform_10, window_bounds = array<i64: 128, 2304>}, {pipeline_mode = #tpu.pipeline_mode<synchronous>, transform_indices = @transform_11, window_bounds = array<i64: 4, 36>}, {pipeline_mode = #tpu.pipeline_mode<synchronous>, transform_indices = @transform_12, window_bounds = array<i64: 1, 256>}, {pipeline_mode = #tpu.pipeline_mode<synchronous>, transform_indices = @transform_13, window_bounds = array<i64: 256, 1152>}, {pipeline_mode = #tpu.pipeline_mode<synchronous>, transform_indices = @transform_14, window_bounds = array<i64: 4, 36>}, {pipeline_mode = #tpu.pipeline_mode<synchronous>, transform_indices = @transform_15, window_bounds = array<i64: 1, 128>}, {pipeline_mode = #tpu.pipeline_mode<synchronous>, transform_indices = @transform_16, window_bounds = array<i64: 128, 576>}, {pipeline_mode = #tpu.pipeline_mode<synchronous>, transform_indices = @transform_17, window_bounds = array<i64: 16, 36>}, {pipeline_mode = #tpu.pipeline_mode<synchronous>, transform_indices = @transform_18, window_bounds = array<i64: 1, 64>}, {pipeline_mode = #tpu.pipeline_mode<synchronous>, transform_indices = @transform_19, window_bounds = array<i64: 64, 288>}, {pipeline_mode = #tpu.pipeline_mode<synchronous>, transform_indices = @transform_20, window_bounds = array<i64: 64, 144>}, {pipeline_mode = #tpu.pipeline_mode<synchronous>, transform_indices = @transform_21, window_bounds = array<i64: 1, 32>}, {pipeline_mode = #tpu.pipeline_mode<synchronous>, transform_indices = @transform_22, window_bounds = array<i64: 32, 27>}, {pipeline_mode = #tpu.pipeline_mode<synchronous>, transform_indices = @transform_23, window_bounds = array<i64: 256, 576>}, {pipeline_mode = #tpu.pipeline_mode<synchronous>, transform_indices = @transform_24, window_bounds = array<i64: 1, 3>}, {transform_indices = @transform_25, window_bounds = array<i64: 1, 256, 3>}]} {
    %c0 = arith.constant 0 : index
    %c0_0 = arith.constant 0 : index
    %c0_1 = arith.constant 0 : index
    %0 = vector.load %arg1[%c0, %c0_0, %c0_1] : memref<1x256x3xf32, #tpu.memory_space<vmem>>, vector<1x256x3xf32>
    %1 = vector.shape_cast %0 : vector<1x256x3xf32> to vector<256x3xf32>
    %c0_2 = arith.constant 0 : index
    %c0_3 = arith.constant 0 : index
    %2 = vector.load %arg2[%c0_2, %c0_3] : memref<576x256xf32, #tpu.memory_space<vmem>>, vector<576x256xf32>
    %cst = arith.constant dense<0.000000e+00> : vector<576x3xf32>
    %3 = tpu.matmul %2, %1, %cst {dimension_numbers = #tpu.dot_dimension_numbers<[1], [0], [0], [1], [0, 0, 1, 1], [], []>} : vector<576x256xf32>, vector<256x3xf32>, vector<576x3xf32> -> vector<576x3xf32>
    %4 = vector.extract_strided_slice %3 {offsets = [0, 0], sizes = [64, 3], strides = [1, 1]} : vector<576x3xf32> to vector<64x3xf32>
    %c0_4 = arith.constant 0 : index
    %c0_5 = arith.constant 0 : index
    %5 = vector.load %arg27[%c0_4, %c0_5] : memref<64x27xf32, #tpu.memory_space<vmem>>, vector<64x3xf32>
    tpu.vector_store %arg27[%c0_4, %c0_5], %4 {strides = array<i32>} : memref<64x27xf32, #tpu.memory_space<vmem>>, vector<64x3xf32>,
    %6 = vector.extract_strided_slice %3 {offsets = [64, 0], sizes = [64, 3], strides = [1, 1]} : vector<576x3xf32> to vector<64x3xf32>
    %c0_6 = arith.constant 0 : index
    %c3 = arith.constant 3 : index
    %7 = vector.load %arg27[%c0_6, %c3] : memref<64x27xf32, #tpu.memory_space<vmem>>, vector<64x3xf32>
    tpu.vector_store %arg27[%c0_6, %c3], %6 {strides = array<i32>} : memref<64x27xf32, #tpu.memory_space<vmem>>, vector<64x3xf32>,
    %8 = vector.extract_strided_slice %3 {offsets = [128, 0], sizes = [64, 3], strides = [1, 1]} : vector<576x3xf32> to vector<64x3xf32>
    %c0_7 = arith.constant 0 : index
    %c6 = arith.constant 6 : index
    %9 = vector.load %arg27[%c0_7, %c6] : memref<64x27xf32, #tpu.memory_space<vmem>>, vector<64x3xf32>
    tpu.vector_store %arg27[%c0_7, %c6], %8 {strides = array<i32>} : memref<64x27xf32, #tpu.memory_space<vmem>>, vector<64x3xf32>,
    %10 = vector.extract_strided_slice %3 {offsets = [192, 0], sizes = [64, 3], strides = [1, 1]} : vector<576x3xf32> to vector<64x3xf32>
    %c0_8 = arith.constant 0 : index
    %c9 = arith.constant 9 : index
    %11 = vector.load %arg27[%c0_8, %c9] : memref<64x27xf32, #tpu.memory_space<vmem>>, vector<64x3xf32>
    tpu.vector_store %arg27[%c0_8, %c9], %10 {strides = array<i32>} : memref<64x27xf32, #tpu.memory_space<vmem>>, vector<64x3xf32>,
    %12 = vector.extract_strided_slice %3 {offsets = [256, 0], sizes = [64, 3], strides = [1, 1]} : vector<576x3xf32> to vector<64x3xf32>
    %c0_9 = arith.constant 0 : index
    %c12 = arith.constant 12 : index
    %13 = vector.load %arg27[%c0_9, %c12] : memref<64x27xf32, #tpu.memory_space<vmem>>, vector<64x3xf32>
    tpu.vector_store %arg27[%c0_9, %c12], %12 {strides = array<i32>} : memref<64x27xf32, #tpu.memory_space<vmem>>, vector<64x3xf32>,
    %14 = vector.extract_strided_slice %3 {offsets = [320, 0], sizes = [64, 3], strides = [1, 1]} : vector<576x3xf32> to vector<64x3xf32>
    %c0_10 = arith.constant 0 : index
    %c15 = arith.constant 15 : index
    %15 = vector.load %arg27[%c0_10, %c15] : memref<64x27xf32, #tpu.memory_space<vmem>>, vector<64x3xf32>
    tpu.vector_store %arg27[%c0_10, %c15], %14 {strides = array<i32>} : memref<64x27xf32, #tpu.memory_space<vmem>>, vector<64x3xf32>,
    %16 = vector.extract_strided_slice %3 {offsets = [384, 0], sizes = [64, 3], strides = [1, 1]} : vector<576x3xf32> to vector<64x3xf32>
    %c0_11 = arith.constant 0 : index
    %c18 = arith.constant 18 : index
    %17 = vector.load %arg27[%c0_11, %c18] : memref<64x27xf32, #tpu.memory_space<vmem>>, vector<64x3xf32>
    tpu.vector_store %arg27[%c0_11, %c18], %16 {strides = array<i32>} : memref<64x27xf32, #tpu.memory_space<vmem>>, vector<64x3xf32>,
    %18 = vector.extract_strided_slice %3 {offsets = [448, 0], sizes = [64, 3], strides = [1, 1]} : vector<576x3xf32> to vector<64x3xf32>
    %c0_12 = arith.constant 0 : index
    %c21 = arith.constant 21 : index
    %19 = vector.load %arg27[%c0_12, %c21] : memref<64x27xf32, #tpu.memory_space<vmem>>, vector<64x3xf32>
    tpu.vector_store %arg27[%c0_12, %c21], %18 {strides = array<i32>} : memref<64x27xf32, #tpu.memory_space<vmem>>, vector<64x3xf32>,
    %20 = vector.extract_strided_slice %3 {offsets = [512, 0], sizes = [64, 3], strides = [1, 1]} : vector<576x3xf32> to vector<64x3xf32>
    %c0_13 = arith.constant 0 : index
    %c24 = arith.constant 24 : index
    %21 = vector.load %arg27[%c0_13, %c24] : memref<64x27xf32, #tpu.memory_space<vmem>>, vector<64x3xf32>
    tpu.vector_store %arg27[%c0_13, %c24], %20 {strides = array<i32>} : memref<64x27xf32, #tpu.memory_space<vmem>>, vector<64x3xf32>,
    %c0_14 = arith.constant 0 : index
    %c0_15 = arith.constant 0 : index
    %22 = vector.load %arg27[%c0_14, %c0_15] : memref<64x27xf32, #tpu.memory_space<vmem>>, vector<64x27xf32>
    %c0_16 = arith.constant 0 : index
    %c0_17 = arith.constant 0 : index
    %23 = vector.load %arg3[%c0_16, %c0_17] : memref<27x32xf32, #tpu.memory_space<vmem>>, vector<27x32xf32>
    %cst_18 = arith.constant dense<0.000000e+00> : vector<64x32xf32>
    %24 = tpu.matmul %22, %23, %cst_18 {dimension_numbers = #tpu.dot_dimension_numbers<[1], [0], [0], [1], [0, 0, 1, 1], [], []>} : vector<64x27xf32>, vector<27x32xf32>, vector<64x32xf32> -> vector<64x32xf32>
    %c0_19 = arith.constant 0 : index
    %c0_20 = arith.constant 0 : index
    %25 = vector.load %arg4[%c0_19, %c0_20] : memref<1x32xf32, #tpu.memory_space<vmem>>, vector<1x32xf32>
    %26 = vector.broadcast %25 : vector<1x32xf32> to vector<64x32xf32>
    %27 = arith.addf %24, %26 : vector<64x32xf32>
    %cst_21 = arith.constant 0.000000e+00 : f32
    %28 = vector.broadcast %cst_21 : f32 to vector<64x32xf32>
    %29 = arith.maximumf %27, %28 : vector<64x32xf32>
    %c0_22 = arith.constant 0 : index
    %c0_23 = arith.constant 0 : index
    %30 = vector.load %arg5[%c0_22, %c0_23] : memref<144x64xf32, #tpu.memory_space<vmem>>, vector<144x64xf32>
    %cst_24 = arith.constant dense<0.000000e+00> : vector<144x32xf32>
    %31 = tpu.matmul %30, %29, %cst_24 {dimension_numbers = #tpu.dot_dimension_numbers<[1], [0], [0], [1], [0, 0, 1, 1], [], []>} : vector<144x64xf32>, vector<64x32xf32>, vector<144x32xf32> -> vector<144x32xf32>
    %32 = vector.extract_strided_slice %31 {offsets = [0, 0], sizes = [16, 32], strides = [1, 1]} : vector<144x32xf32> to vector<16x32xf32>
    %c0_25 = arith.constant 0 : index
    %c0_26 = arith.constant 0 : index
    %33 = vector.load %arg28[%c0_25, %c0_26] : memref<16x288xf32, #tpu.memory_space<vmem>>, vector<16x32xf32>
    tpu.vector_store %arg28[%c0_25, %c0_26], %32 {strides = array<i32>} : memref<16x288xf32, #tpu.memory_space<vmem>>, vector<16x32xf32>,
    %34 = vector.extract_strided_slice %31 {offsets = [16, 0], sizes = [16, 32], strides = [1, 1]} : vector<144x32xf32> to vector<16x32xf32>
    %c0_27 = arith.constant 0 : index
    %c32 = arith.constant 32 : index
    %35 = vector.load %arg28[%c0_27, %c32] : memref<16x288xf32, #tpu.memory_space<vmem>>, vector<16x32xf32>
    tpu.vector_store %arg28[%c0_27, %c32], %34 {strides = array<i32>} : memref<16x288xf32, #tpu.memory_space<vmem>>, vector<16x32xf32>,
    %36 = vector.extract_strided_slice %31 {offsets = [32, 0], sizes = [16, 32], strides = [1, 1]} : vector<144x32xf32> to vector<16x32xf32>
    %c0_28 = arith.constant 0 : index
    %c64 = arith.constant 64 : index
    %37 = vector.load %arg28[%c0_28, %c64] : memref<16x288xf32, #tpu.memory_space<vmem>>, vector<16x32xf32>
    tpu.vector_store %arg28[%c0_28, %c64], %36 {strides = array<i32>} : memref<16x288xf32, #tpu.memory_space<vmem>>, vector<16x32xf32>,
    %38 = vector.extract_strided_slice %31 {offsets = [48, 0], sizes = [16, 32], strides = [1, 1]} : vector<144x32xf32> to vector<16x32xf32>
    %c0_29 = arith.constant 0 : index
    %c96 = arith.constant 96 : index
    %39 = vector.load %arg28[%c0_29, %c96] : memref<16x288xf32, #tpu.memory_space<vmem>>, vector<16x32xf32>
    tpu.vector_store %arg28[%c0_29, %c96], %38 {strides = array<i32>} : memref<16x288xf32, #tpu.memory_space<vmem>>, vector<16x32xf32>,
    %40 = vector.extract_strided_slice %31 {offsets = [64, 0], sizes = [16, 32], strides = [1, 1]} : vector<144x32xf32> to vector<16x32xf32>
    %c0_30 = arith.constant 0 : index
    %c128 = arith.constant 128 : index
    %41 = vector.load %arg28[%c0_30, %c128] : memref<16x288xf32, #tpu.memory_space<vmem>>, vector<16x32xf32>
    tpu.vector_store %arg28[%c0_30, %c128], %40 {strides = array<i32>} : memref<16x288xf32, #tpu.memory_space<vmem>>, vector<16x32xf32>,
    %42 = vector.extract_strided_slice %31 {offsets = [80, 0], sizes = [16, 32], strides = [1, 1]} : vector<144x32xf32> to vector<16x32xf32>
    %c0_31 = arith.constant 0 : index
    %c160 = arith.constant 160 : index
    %43 = vector.load %arg28[%c0_31, %c160] : memref<16x288xf32, #tpu.memory_space<vmem>>, vector<16x32xf32>
    tpu.vector_store %arg28[%c0_31, %c160], %42 {strides = array<i32>} : memref<16x288xf32, #tpu.memory_space<vmem>>, vector<16x32xf32>,
    %44 = vector.extract_strided_slice %31 {offsets = [96, 0], sizes = [16, 32], strides = [1, 1]} : vector<144x32xf32> to vector<16x32xf32>
    %c0_32 = arith.constant 0 : index
    %c192 = arith.constant 192 : index
    %45 = vector.load %arg28[%c0_32, %c192] : memref<16x288xf32, #tpu.memory_space<vmem>>, vector<16x32xf32>
    tpu.vector_store %arg28[%c0_32, %c192], %44 {strides = array<i32>} : memref<16x288xf32, #tpu.memory_space<vmem>>, vector<16x32xf32>,
    %46 = vector.extract_strided_slice %31 {offsets = [112, 0], sizes = [16, 32], strides = [1, 1]} : vector<144x32xf32> to vector<16x32xf32>
    %c0_33 = arith.constant 0 : index
    %c224 = arith.constant 224 : index
    %47 = vector.load %arg28[%c0_33, %c224] : memref<16x288xf32, #tpu.memory_space<vmem>>, vector<16x32xf32>
    tpu.vector_store %arg28[%c0_33, %c224], %46 {strides = array<i32>} : memref<16x288xf32, #tpu.memory_space<vmem>>, vector<16x32xf32>,
    %48 = vector.extract_strided_slice %31 {offsets = [128, 0], sizes = [16, 32], strides = [1, 1]} : vector<144x32xf32> to vector<16x32xf32>
    %c0_34 = arith.constant 0 : index
    %c256 = arith.constant 256 : index
    %49 = vector.load %arg28[%c0_34, %c256] : memref<16x288xf32, #tpu.memory_space<vmem>>, vector<16x32xf32>
    tpu.vector_store %arg28[%c0_34, %c256], %48 {strides = array<i32>} : memref<16x288xf32, #tpu.memory_space<vmem>>, vector<16x32xf32>,
    %c0_35 = arith.constant 0 : index
    %c0_36 = arith.constant 0 : index
    %50 = vector.load %arg28[%c0_35, %c0_36] : memref<16x288xf32, #tpu.memory_space<vmem>>, vector<16x288xf32>
    %c0_37 = arith.constant 0 : index
    %c0_38 = arith.constant 0 : index
    %51 = vector.load %arg6[%c0_37, %c0_38] : memref<288x64xf32, #tpu.memory_space<vmem>>, vector<288x64xf32>
    %cst_39 = arith.constant dense<0.000000e+00> : vector<16x64xf32>
    %52 = tpu.matmul %50, %51, %cst_39 {dimension_numbers = #tpu.dot_dimension_numbers<[1], [0], [0], [1], [0, 0, 1, 1], [], []>} : vector<16x288xf32>, vector<288x64xf32>, vector<16x64xf32> -> vector<16x64xf32>
    %c0_40 = arith.constant 0 : index
    %c0_41 = arith.constant 0 : index
    %53 = vector.load %arg7[%c0_40, %c0_41] : memref<1x64xf32, #tpu.memory_space<vmem>>, vector<1x64xf32>
    %54 = vector.broadcast %53 : vector<1x64xf32> to vector<16x64xf32>
    %55 = arith.addf %52, %54 : vector<16x64xf32>
    %cst_42 = arith.constant 0.000000e+00 : f32
    %56 = vector.broadcast %cst_42 : f32 to vector<16x64xf32>
    %57 = arith.maximumf %55, %56 : vector<16x64xf32>
    %c0_43 = arith.constant 0 : index
    %c0_44 = arith.constant 0 : index
    %58 = vector.load %arg8[%c0_43, %c0_44] : memref<36x16xf32, #tpu.memory_space<vmem>>, vector<36x16xf32>
    %cst_45 = arith.constant dense<0.000000e+00> : vector<36x64xf32>
    %59 = tpu.matmul %58, %57, %cst_45 {dimension_numbers = #tpu.dot_dimension_numbers<[1], [0], [0], [1], [0, 0, 1, 1], [], []>} : vector<36x16xf32>, vector<16x64xf32>, vector<36x64xf32> -> vector<36x64xf32>
    %60 = vector.extract_strided_slice %59 {offsets = [0, 0], sizes = [4, 64], strides = [1, 1]} : vector<36x64xf32> to vector<4x64xf32>
    %c0_46 = arith.constant 0 : index
    %c0_47 = arith.constant 0 : index
    %61 = vector.load %arg29[%c0_46, %c0_47] : memref<4x576xf32, #tpu.memory_space<vmem>>, vector<4x64xf32>
    tpu.vector_store %arg29[%c0_46, %c0_47], %60 {strides = array<i32>} : memref<4x576xf32, #tpu.memory_space<vmem>>, vector<4x64xf32>,
    %62 = vector.extract_strided_slice %59 {offsets = [4, 0], sizes = [4, 64], strides = [1, 1]} : vector<36x64xf32> to vector<4x64xf32>
    %c0_48 = arith.constant 0 : index
    %c64_49 = arith.constant 64 : index
    %63 = vector.load %arg29[%c0_48, %c64_49] : memref<4x576xf32, #tpu.memory_space<vmem>>, vector<4x64xf32>
    tpu.vector_store %arg29[%c0_48, %c64_49], %62 {strides = array<i32>} : memref<4x576xf32, #tpu.memory_space<vmem>>, vector<4x64xf32>,
    %64 = vector.extract_strided_slice %59 {offsets = [8, 0], sizes = [4, 64], strides = [1, 1]} : vector<36x64xf32> to vector<4x64xf32>
    %c0_50 = arith.constant 0 : index
    %c128_51 = arith.constant 128 : index
    %65 = vector.load %arg29[%c0_50, %c128_51] : memref<4x576xf32, #tpu.memory_space<vmem>>, vector<4x64xf32>
    tpu.vector_store %arg29[%c0_50, %c128_51], %64 {strides = array<i32>} : memref<4x576xf32, #tpu.memory_space<vmem>>, vector<4x64xf32>,
    %66 = vector.extract_strided_slice %59 {offsets = [12, 0], sizes = [4, 64], strides = [1, 1]} : vector<36x64xf32> to vector<4x64xf32>
    %c0_52 = arith.constant 0 : index
    %c192_53 = arith.constant 192 : index
    %67 = vector.load %arg29[%c0_52, %c192_53] : memref<4x576xf32, #tpu.memory_space<vmem>>, vector<4x64xf32>
    tpu.vector_store %arg29[%c0_52, %c192_53], %66 {strides = array<i32>} : memref<4x576xf32, #tpu.memory_space<vmem>>, vector<4x64xf32>,
    %68 = vector.extract_strided_slice %59 {offsets = [16, 0], sizes = [4, 64], strides = [1, 1]} : vector<36x64xf32> to vector<4x64xf32>
    %c0_54 = arith.constant 0 : index
    %c256_55 = arith.constant 256 : index
    %69 = vector.load %arg29[%c0_54, %c256_55] : memref<4x576xf32, #tpu.memory_space<vmem>>, vector<4x64xf32>
    tpu.vector_store %arg29[%c0_54, %c256_55], %68 {strides = array<i32>} : memref<4x576xf32, #tpu.memory_space<vmem>>, vector<4x64xf32>,
    %70 = vector.extract_strided_slice %59 {offsets = [20, 0], sizes = [4, 64], strides = [1, 1]} : vector<36x64xf32> to vector<4x64xf32>
    %c0_56 = arith.constant 0 : index
    %c320 = arith.constant 320 : index
    %71 = vector.load %arg29[%c0_56, %c320] : memref<4x576xf32, #tpu.memory_space<vmem>>, vector<4x64xf32>
    tpu.vector_store %arg29[%c0_56, %c320], %70 {strides = array<i32>} : memref<4x576xf32, #tpu.memory_space<vmem>>, vector<4x64xf32>,
    %72 = vector.extract_strided_slice %59 {offsets = [24, 0], sizes = [4, 64], strides = [1, 1]} : vector<36x64xf32> to vector<4x64xf32>
    %c0_57 = arith.constant 0 : index
    %c384 = arith.constant 384 : index
    %73 = vector.load %arg29[%c0_57, %c384] : memref<4x576xf32, #tpu.memory_space<vmem>>, vector<4x64xf32>
    tpu.vector_store %arg29[%c0_57, %c384], %72 {strides = array<i32>} : memref<4x576xf32, #tpu.memory_space<vmem>>, vector<4x64xf32>,
    %74 = vector.extract_strided_slice %59 {offsets = [28, 0], sizes = [4, 64], strides = [1, 1]} : vector<36x64xf32> to vector<4x64xf32>
    %c0_58 = arith.constant 0 : index
    %c448 = arith.constant 448 : index
    %75 = vector.load %arg29[%c0_58, %c448] : memref<4x576xf32, #tpu.memory_space<vmem>>, vector<4x64xf32>
    tpu.vector_store %arg29[%c0_58, %c448], %74 {strides = array<i32>} : memref<4x576xf32, #tpu.memory_space<vmem>>, vector<4x64xf32>,
    %76 = vector.extract_strided_slice %59 {offsets = [32, 0], sizes = [4, 64], strides = [1, 1]} : vector<36x64xf32> to vector<4x64xf32>
    %c0_59 = arith.constant 0 : index
    %c512 = arith.constant 512 : index
    %77 = vector.load %arg29[%c0_59, %c512] : memref<4x576xf32, #tpu.memory_space<vmem>>, vector<4x64xf32>
    tpu.vector_store %arg29[%c0_59, %c512], %76 {strides = array<i32>} : memref<4x576xf32, #tpu.memory_space<vmem>>, vector<4x64xf32>,
    %c0_60 = arith.constant 0 : index
    %c0_61 = arith.constant 0 : index
    %78 = vector.load %arg29[%c0_60, %c0_61] : memref<4x576xf32, #tpu.memory_space<vmem>>, vector<4x576xf32>
    %c0_62 = arith.constant 0 : index
    %c0_63 = arith.constant 0 : index
    %79 = vector.load %arg9[%c0_62, %c0_63] : memref<576x128xf32, #tpu.memory_space<vmem>>, vector<576x128xf32>
    %cst_64 = arith.constant dense<0.000000e+00> : vector<4x128xf32>
    %80 = tpu.matmul %78, %79, %cst_64 {dimension_numbers = #tpu.dot_dimension_numbers<[1], [0], [0], [1], [0, 0, 1, 1], [], []>} : vector<4x576xf32>, vector<576x128xf32>, vector<4x128xf32> -> vector<4x128xf32>
    %c0_65 = arith.constant 0 : index
    %c0_66 = arith.constant 0 : index
    %81 = vector.load %arg10[%c0_65, %c0_66] : memref<1x128xf32, #tpu.memory_space<vmem>>, vector<1x128xf32>
    %82 = vector.broadcast %81 : vector<1x128xf32> to vector<4x128xf32>
    %83 = arith.addf %80, %82 : vector<4x128xf32>
    %cst_67 = arith.constant 0.000000e+00 : f32
    %84 = vector.broadcast %cst_67 : f32 to vector<4x128xf32>
    %85 = arith.maximumf %83, %84 : vector<4x128xf32>
    %c0_68 = arith.constant 0 : index
    %c0_69 = arith.constant 0 : index
    %86 = vector.load %arg11[%c0_68, %c0_69] : memref<128x2304xf32, #tpu.memory_space<vmem>>, vector<128x2304xf32>
    %cst_70 = arith.constant dense<0.000000e+00> : vector<4x2304xf32>
    %87 = tpu.matmul %85, %86, %cst_70 {dimension_numbers = #tpu.dot_dimension_numbers<[1], [0], [0], [1], [0, 0, 1, 1], [], []>} : vector<4x128xf32>, vector<128x2304xf32>, vector<4x2304xf32> -> vector<4x2304xf32>
    %88 = vector.extract_strided_slice %87 {offsets = [0, 0], sizes = [4, 256], strides = [1, 1]} : vector<4x2304xf32> to vector<4x256xf32>
    %c0_71 = arith.constant 0 : index
    %c0_72 = arith.constant 0 : index
    %89 = vector.load %arg30[%c0_71, %c0_72] : memref<36x256xf32, #tpu.memory_space<vmem>>, vector<4x256xf32>
    tpu.vector_store %arg30[%c0_71, %c0_72], %88 {strides = array<i32>} : memref<36x256xf32, #tpu.memory_space<vmem>>, vector<4x256xf32>,
    %90 = vector.extract_strided_slice %87 {offsets = [0, 256], sizes = [4, 256], strides = [1, 1]} : vector<4x2304xf32> to vector<4x256xf32>
    %c4 = arith.constant 4 : index
    %c0_73 = arith.constant 0 : index
    %91 = vector.load %arg30[%c4, %c0_73] : memref<36x256xf32, #tpu.memory_space<vmem>>, vector<4x256xf32>
    tpu.vector_store %arg30[%c4, %c0_73], %90 {strides = array<i32>} : memref<36x256xf32, #tpu.memory_space<vmem>>, vector<4x256xf32>,
    %92 = vector.extract_strided_slice %87 {offsets = [0, 512], sizes = [4, 256], strides = [1, 1]} : vector<4x2304xf32> to vector<4x256xf32>
    %c8 = arith.constant 8 : index
    %c0_74 = arith.constant 0 : index
    %93 = vector.load %arg30[%c8, %c0_74] : memref<36x256xf32, #tpu.memory_space<vmem>>, vector<4x256xf32>
    tpu.vector_store %arg30[%c8, %c0_74], %92 {strides = array<i32>} : memref<36x256xf32, #tpu.memory_space<vmem>>, vector<4x256xf32>,
    %94 = vector.extract_strided_slice %87 {offsets = [0, 768], sizes = [4, 256], strides = [1, 1]} : vector<4x2304xf32> to vector<4x256xf32>
    %c12_75 = arith.constant 12 : index
    %c0_76 = arith.constant 0 : index
    %95 = vector.load %arg30[%c12_75, %c0_76] : memref<36x256xf32, #tpu.memory_space<vmem>>, vector<4x256xf32>
    tpu.vector_store %arg30[%c12_75, %c0_76], %94 {strides = array<i32>} : memref<36x256xf32, #tpu.memory_space<vmem>>, vector<4x256xf32>,
    %96 = vector.extract_strided_slice %87 {offsets = [0, 1024], sizes = [4, 256], strides = [1, 1]} : vector<4x2304xf32> to vector<4x256xf32>
    %c16 = arith.constant 16 : index
    %c0_77 = arith.constant 0 : index
    %97 = vector.load %arg30[%c16, %c0_77] : memref<36x256xf32, #tpu.memory_space<vmem>>, vector<4x256xf32>
    tpu.vector_store %arg30[%c16, %c0_77], %96 {strides = array<i32>} : memref<36x256xf32, #tpu.memory_space<vmem>>, vector<4x256xf32>,
    %98 = vector.extract_strided_slice %87 {offsets = [0, 1280], sizes = [4, 256], strides = [1, 1]} : vector<4x2304xf32> to vector<4x256xf32>
    %c20 = arith.constant 20 : index
    %c0_78 = arith.constant 0 : index
    %99 = vector.load %arg30[%c20, %c0_78] : memref<36x256xf32, #tpu.memory_space<vmem>>, vector<4x256xf32>
    tpu.vector_store %arg30[%c20, %c0_78], %98 {strides = array<i32>} : memref<36x256xf32, #tpu.memory_space<vmem>>, vector<4x256xf32>,
    %100 = vector.extract_strided_slice %87 {offsets = [0, 1536], sizes = [4, 256], strides = [1, 1]} : vector<4x2304xf32> to vector<4x256xf32>
    %c24_79 = arith.constant 24 : index
    %c0_80 = arith.constant 0 : index
    %101 = vector.load %arg30[%c24_79, %c0_80] : memref<36x256xf32, #tpu.memory_space<vmem>>, vector<4x256xf32>
    tpu.vector_store %arg30[%c24_79, %c0_80], %100 {strides = array<i32>} : memref<36x256xf32, #tpu.memory_space<vmem>>, vector<4x256xf32>,
    %102 = vector.extract_strided_slice %87 {offsets = [0, 1792], sizes = [4, 256], strides = [1, 1]} : vector<4x2304xf32> to vector<4x256xf32>
    %c28 = arith.constant 28 : index
    %c0_81 = arith.constant 0 : index
    %103 = vector.load %arg30[%c28, %c0_81] : memref<36x256xf32, #tpu.memory_space<vmem>>, vector<4x256xf32>
    tpu.vector_store %arg30[%c28, %c0_81], %102 {strides = array<i32>} : memref<36x256xf32, #tpu.memory_space<vmem>>, vector<4x256xf32>,
    %104 = vector.extract_strided_slice %87 {offsets = [0, 2048], sizes = [4, 256], strides = [1, 1]} : vector<4x2304xf32> to vector<4x256xf32>
    %c32_82 = arith.constant 32 : index
    %c0_83 = arith.constant 0 : index
    %105 = vector.load %arg30[%c32_82, %c0_83] : memref<36x256xf32, #tpu.memory_space<vmem>>, vector<4x256xf32>
    tpu.vector_store %arg30[%c32_82, %c0_83], %104 {strides = array<i32>} : memref<36x256xf32, #tpu.memory_space<vmem>>, vector<4x256xf32>,
    %c0_84 = arith.constant 0 : index
    %c0_85 = arith.constant 0 : index
    %106 = vector.load %arg12[%c0_84, %c0_85] : memref<4x36xf32, #tpu.memory_space<vmem>>, vector<4x36xf32>
    %c0_86 = arith.constant 0 : index
    %c0_87 = arith.constant 0 : index
    %107 = vector.load %arg30[%c0_86, %c0_87] : memref<36x256xf32, #tpu.memory_space<vmem>>, vector<36x256xf32>
    %cst_88 = arith.constant dense<0.000000e+00> : vector<4x256xf32>
    %108 = tpu.matmul %106, %107, %cst_88 {dimension_numbers = #tpu.dot_dimension_numbers<[1], [0], [0], [1], [0, 0, 1, 1], [], []>} : vector<4x36xf32>, vector<36x256xf32>, vector<4x256xf32> -> vector<4x256xf32>
    %c0_89 = arith.constant 0 : index
    %c0_90 = arith.constant 0 : index
    %109 = vector.load %arg13[%c0_89, %c0_90] : memref<1x256xf32, #tpu.memory_space<vmem>>, vector<1x256xf32>
    %110 = vector.broadcast %109 : vector<1x256xf32> to vector<4x256xf32>
    %111 = arith.addf %108, %110 : vector<4x256xf32>
    %cst_91 = arith.constant 0.000000e+00 : f32
    %112 = vector.broadcast %cst_91 : f32 to vector<4x256xf32>
    %113 = arith.maximumf %111, %112 : vector<4x256xf32>
    %c0_92 = arith.constant 0 : index
    %c0_93 = arith.constant 0 : index
    %114 = vector.load %arg14[%c0_92, %c0_93] : memref<256x1152xf32, #tpu.memory_space<vmem>>, vector<256x1152xf32>
    %cst_94 = arith.constant dense<0.000000e+00> : vector<4x1152xf32>
    %115 = tpu.matmul %113, %114, %cst_94 {dimension_numbers = #tpu.dot_dimension_numbers<[1], [0], [0], [1], [0, 0, 1, 1], [], []>} : vector<4x256xf32>, vector<256x1152xf32>, vector<4x1152xf32> -> vector<4x1152xf32>
    %116 = vector.extract_strided_slice %115 {offsets = [0, 0], sizes = [4, 128], strides = [1, 1]} : vector<4x1152xf32> to vector<4x128xf32>
    %c0_95 = arith.constant 0 : index
    %c0_96 = arith.constant 0 : index
    %117 = vector.load %arg31[%c0_95, %c0_96] : memref<36x128xf32, #tpu.memory_space<vmem>>, vector<4x128xf32>
    tpu.vector_store %arg31[%c0_95, %c0_96], %116 {strides = array<i32>} : memref<36x128xf32, #tpu.memory_space<vmem>>, vector<4x128xf32>,
    %118 = vector.extract_strided_slice %115 {offsets = [0, 128], sizes = [4, 128], strides = [1, 1]} : vector<4x1152xf32> to vector<4x128xf32>
    %c4_97 = arith.constant 4 : index
    %c0_98 = arith.constant 0 : index
    %119 = vector.load %arg31[%c4_97, %c0_98] : memref<36x128xf32, #tpu.memory_space<vmem>>, vector<4x128xf32>
    tpu.vector_store %arg31[%c4_97, %c0_98], %118 {strides = array<i32>} : memref<36x128xf32, #tpu.memory_space<vmem>>, vector<4x128xf32>,
    %120 = vector.extract_strided_slice %115 {offsets = [0, 256], sizes = [4, 128], strides = [1, 1]} : vector<4x1152xf32> to vector<4x128xf32>
    %c8_99 = arith.constant 8 : index
    %c0_100 = arith.constant 0 : index
    %121 = vector.load %arg31[%c8_99, %c0_100] : memref<36x128xf32, #tpu.memory_space<vmem>>, vector<4x128xf32>
    tpu.vector_store %arg31[%c8_99, %c0_100], %120 {strides = array<i32>} : memref<36x128xf32, #tpu.memory_space<vmem>>, vector<4x128xf32>,
    %122 = vector.extract_strided_slice %115 {offsets = [0, 384], sizes = [4, 128], strides = [1, 1]} : vector<4x1152xf32> to vector<4x128xf32>
    %c12_101 = arith.constant 12 : index
    %c0_102 = arith.constant 0 : index
    %123 = vector.load %arg31[%c12_101, %c0_102] : memref<36x128xf32, #tpu.memory_space<vmem>>, vector<4x128xf32>
    tpu.vector_store %arg31[%c12_101, %c0_102], %122 {strides = array<i32>} : memref<36x128xf32, #tpu.memory_space<vmem>>, vector<4x128xf32>,
    %124 = vector.extract_strided_slice %115 {offsets = [0, 512], sizes = [4, 128], strides = [1, 1]} : vector<4x1152xf32> to vector<4x128xf32>
    %c16_103 = arith.constant 16 : index
    %c0_104 = arith.constant 0 : index
    %125 = vector.load %arg31[%c16_103, %c0_104] : memref<36x128xf32, #tpu.memory_space<vmem>>, vector<4x128xf32>
    tpu.vector_store %arg31[%c16_103, %c0_104], %124 {strides = array<i32>} : memref<36x128xf32, #tpu.memory_space<vmem>>, vector<4x128xf32>,
    %126 = vector.extract_strided_slice %115 {offsets = [0, 640], sizes = [4, 128], strides = [1, 1]} : vector<4x1152xf32> to vector<4x128xf32>
    %c20_105 = arith.constant 20 : index
    %c0_106 = arith.constant 0 : index
    %127 = vector.load %arg31[%c20_105, %c0_106] : memref<36x128xf32, #tpu.memory_space<vmem>>, vector<4x128xf32>
    tpu.vector_store %arg31[%c20_105, %c0_106], %126 {strides = array<i32>} : memref<36x128xf32, #tpu.memory_space<vmem>>, vector<4x128xf32>,
    %128 = vector.extract_strided_slice %115 {offsets = [0, 768], sizes = [4, 128], strides = [1, 1]} : vector<4x1152xf32> to vector<4x128xf32>
    %c24_107 = arith.constant 24 : index
    %c0_108 = arith.constant 0 : index
    %129 = vector.load %arg31[%c24_107, %c0_108] : memref<36x128xf32, #tpu.memory_space<vmem>>, vector<4x128xf32>
    tpu.vector_store %arg31[%c24_107, %c0_108], %128 {strides = array<i32>} : memref<36x128xf32, #tpu.memory_space<vmem>>, vector<4x128xf32>,
    %130 = vector.extract_strided_slice %115 {offsets = [0, 896], sizes = [4, 128], strides = [1, 1]} : vector<4x1152xf32> to vector<4x128xf32>
    %c28_109 = arith.constant 28 : index
    %c0_110 = arith.constant 0 : index
    %131 = vector.load %arg31[%c28_109, %c0_110] : memref<36x128xf32, #tpu.memory_space<vmem>>, vector<4x128xf32>
    tpu.vector_store %arg31[%c28_109, %c0_110], %130 {strides = array<i32>} : memref<36x128xf32, #tpu.memory_space<vmem>>, vector<4x128xf32>,
    %132 = vector.extract_strided_slice %115 {offsets = [0, 1024], sizes = [4, 128], strides = [1, 1]} : vector<4x1152xf32> to vector<4x128xf32>
    %c32_111 = arith.constant 32 : index
    %c0_112 = arith.constant 0 : index
    %133 = vector.load %arg31[%c32_111, %c0_112] : memref<36x128xf32, #tpu.memory_space<vmem>>, vector<4x128xf32>
    tpu.vector_store %arg31[%c32_111, %c0_112], %132 {strides = array<i32>} : memref<36x128xf32, #tpu.memory_space<vmem>>, vector<4x128xf32>,
    %c0_113 = arith.constant 0 : index
    %c0_114 = arith.constant 0 : index
    %134 = vector.load %arg15[%c0_113, %c0_114] : memref<4x36xf32, #tpu.memory_space<vmem>>, vector<4x36xf32>
    %c0_115 = arith.constant 0 : index
    %c0_116 = arith.constant 0 : index
    %135 = vector.load %arg31[%c0_115, %c0_116] : memref<36x128xf32, #tpu.memory_space<vmem>>, vector<36x128xf32>
    %cst_117 = arith.constant dense<0.000000e+00> : vector<4x128xf32>
    %136 = tpu.matmul %134, %135, %cst_117 {dimension_numbers = #tpu.dot_dimension_numbers<[1], [0], [0], [1], [0, 0, 1, 1], [], []>} : vector<4x36xf32>, vector<36x128xf32>, vector<4x128xf32> -> vector<4x128xf32>
    %c0_118 = arith.constant 0 : index
    %c0_119 = arith.constant 0 : index
    %137 = vector.load %arg16[%c0_118, %c0_119] : memref<1x128xf32, #tpu.memory_space<vmem>>, vector<1x128xf32>
    %138 = vector.broadcast %137 : vector<1x128xf32> to vector<4x128xf32>
    %139 = arith.addf %136, %138 : vector<4x128xf32>
    %cst_120 = arith.constant 0.000000e+00 : f32
    %140 = vector.broadcast %cst_120 : f32 to vector<4x128xf32>
    %141 = arith.maximumf %139, %140 : vector<4x128xf32>
    %c0_121 = arith.constant 0 : index
    %c0_122 = arith.constant 0 : index
    %142 = vector.load %arg17[%c0_121, %c0_122] : memref<128x576xf32, #tpu.memory_space<vmem>>, vector<128x576xf32>
    %cst_123 = arith.constant dense<0.000000e+00> : vector<4x576xf32>
    %143 = tpu.matmul %141, %142, %cst_123 {dimension_numbers = #tpu.dot_dimension_numbers<[1], [0], [0], [1], [0, 0, 1, 1], [], []>} : vector<4x128xf32>, vector<128x576xf32>, vector<4x576xf32> -> vector<4x576xf32>
    %144 = vector.extract_strided_slice %143 {offsets = [0, 0], sizes = [4, 64], strides = [1, 1]} : vector<4x576xf32> to vector<4x64xf32>
    %c0_124 = arith.constant 0 : index
    %c0_125 = arith.constant 0 : index
    %145 = vector.load %arg32[%c0_124, %c0_125] : memref<36x64xf32, #tpu.memory_space<vmem>>, vector<4x64xf32>
    tpu.vector_store %arg32[%c0_124, %c0_125], %144 {strides = array<i32>} : memref<36x64xf32, #tpu.memory_space<vmem>>, vector<4x64xf32>,
    %146 = vector.extract_strided_slice %143 {offsets = [0, 64], sizes = [4, 64], strides = [1, 1]} : vector<4x576xf32> to vector<4x64xf32>
    %c4_126 = arith.constant 4 : index
    %c0_127 = arith.constant 0 : index
    %147 = vector.load %arg32[%c4_126, %c0_127] : memref<36x64xf32, #tpu.memory_space<vmem>>, vector<4x64xf32>
    tpu.vector_store %arg32[%c4_126, %c0_127], %146 {strides = array<i32>} : memref<36x64xf32, #tpu.memory_space<vmem>>, vector<4x64xf32>,
    %148 = vector.extract_strided_slice %143 {offsets = [0, 128], sizes = [4, 64], strides = [1, 1]} : vector<4x576xf32> to vector<4x64xf32>
    %c8_128 = arith.constant 8 : index
    %c0_129 = arith.constant 0 : index
    %149 = vector.load %arg32[%c8_128, %c0_129] : memref<36x64xf32, #tpu.memory_space<vmem>>, vector<4x64xf32>
    tpu.vector_store %arg32[%c8_128, %c0_129], %148 {strides = array<i32>} : memref<36x64xf32, #tpu.memory_space<vmem>>, vector<4x64xf32>,
    %150 = vector.extract_strided_slice %143 {offsets = [0, 192], sizes = [4, 64], strides = [1, 1]} : vector<4x576xf32> to vector<4x64xf32>
    %c12_130 = arith.constant 12 : index
    %c0_131 = arith.constant 0 : index
    %151 = vector.load %arg32[%c12_130, %c0_131] : memref<36x64xf32, #tpu.memory_space<vmem>>, vector<4x64xf32>
    tpu.vector_store %arg32[%c12_130, %c0_131], %150 {strides = array<i32>} : memref<36x64xf32, #tpu.memory_space<vmem>>, vector<4x64xf32>,
    %152 = vector.extract_strided_slice %143 {offsets = [0, 256], sizes = [4, 64], strides = [1, 1]} : vector<4x576xf32> to vector<4x64xf32>
    %c16_132 = arith.constant 16 : index
    %c0_133 = arith.constant 0 : index
    %153 = vector.load %arg32[%c16_132, %c0_133] : memref<36x64xf32, #tpu.memory_space<vmem>>, vector<4x64xf32>
    tpu.vector_store %arg32[%c16_132, %c0_133], %152 {strides = array<i32>} : memref<36x64xf32, #tpu.memory_space<vmem>>, vector<4x64xf32>,
    %154 = vector.extract_strided_slice %143 {offsets = [0, 320], sizes = [4, 64], strides = [1, 1]} : vector<4x576xf32> to vector<4x64xf32>
    %c20_134 = arith.constant 20 : index
    %c0_135 = arith.constant 0 : index
    %155 = vector.load %arg32[%c20_134, %c0_135] : memref<36x64xf32, #tpu.memory_space<vmem>>, vector<4x64xf32>
    tpu.vector_store %arg32[%c20_134, %c0_135], %154 {strides = array<i32>} : memref<36x64xf32, #tpu.memory_space<vmem>>, vector<4x64xf32>,
    %156 = vector.extract_strided_slice %143 {offsets = [0, 384], sizes = [4, 64], strides = [1, 1]} : vector<4x576xf32> to vector<4x64xf32>
    %c24_136 = arith.constant 24 : index
    %c0_137 = arith.constant 0 : index
    %157 = vector.load %arg32[%c24_136, %c0_137] : memref<36x64xf32, #tpu.memory_space<vmem>>, vector<4x64xf32>
    tpu.vector_store %arg32[%c24_136, %c0_137], %156 {strides = array<i32>} : memref<36x64xf32, #tpu.memory_space<vmem>>, vector<4x64xf32>,
    %158 = vector.extract_strided_slice %143 {offsets = [0, 448], sizes = [4, 64], strides = [1, 1]} : vector<4x576xf32> to vector<4x64xf32>
    %c28_138 = arith.constant 28 : index
    %c0_139 = arith.constant 0 : index
    %159 = vector.load %arg32[%c28_138, %c0_139] : memref<36x64xf32, #tpu.memory_space<vmem>>, vector<4x64xf32>
    tpu.vector_store %arg32[%c28_138, %c0_139], %158 {strides = array<i32>} : memref<36x64xf32, #tpu.memory_space<vmem>>, vector<4x64xf32>,
    %160 = vector.extract_strided_slice %143 {offsets = [0, 512], sizes = [4, 64], strides = [1, 1]} : vector<4x576xf32> to vector<4x64xf32>
    %c32_140 = arith.constant 32 : index
    %c0_141 = arith.constant 0 : index
    %161 = vector.load %arg32[%c32_140, %c0_141] : memref<36x64xf32, #tpu.memory_space<vmem>>, vector<4x64xf32>
    tpu.vector_store %arg32[%c32_140, %c0_141], %160 {strides = array<i32>} : memref<36x64xf32, #tpu.memory_space<vmem>>, vector<4x64xf32>,
    %c0_142 = arith.constant 0 : index
    %c0_143 = arith.constant 0 : index
    %162 = vector.load %arg18[%c0_142, %c0_143] : memref<16x36xf32, #tpu.memory_space<vmem>>, vector<16x36xf32>
    %c0_144 = arith.constant 0 : index
    %c0_145 = arith.constant 0 : index
    %163 = vector.load %arg32[%c0_144, %c0_145] : memref<36x64xf32, #tpu.memory_space<vmem>>, vector<36x64xf32>
    %cst_146 = arith.constant dense<0.000000e+00> : vector<16x64xf32>
    %164 = tpu.matmul %162, %163, %cst_146 {dimension_numbers = #tpu.dot_dimension_numbers<[1], [0], [0], [1], [0, 0, 1, 1], [], []>} : vector<16x36xf32>, vector<36x64xf32>, vector<16x64xf32> -> vector<16x64xf32>
    %c0_147 = arith.constant 0 : index
    %c0_148 = arith.constant 0 : index
    %165 = vector.load %arg19[%c0_147, %c0_148] : memref<1x64xf32, #tpu.memory_space<vmem>>, vector<1x64xf32>
    %166 = vector.broadcast %165 : vector<1x64xf32> to vector<16x64xf32>
    %167 = arith.addf %164, %166 : vector<16x64xf32>
    %cst_149 = arith.constant 0.000000e+00 : f32
    %168 = vector.broadcast %cst_149 : f32 to vector<16x64xf32>
    %169 = arith.maximumf %167, %168 : vector<16x64xf32>
    %c0_150 = arith.constant 0 : index
    %c0_151 = arith.constant 0 : index
    %170 = vector.load %arg20[%c0_150, %c0_151] : memref<64x288xf32, #tpu.memory_space<vmem>>, vector<64x288xf32>
    %cst_152 = arith.constant dense<0.000000e+00> : vector<16x288xf32>
    %171 = tpu.matmul %169, %170, %cst_152 {dimension_numbers = #tpu.dot_dimension_numbers<[1], [0], [0], [1], [0, 0, 1, 1], [], []>} : vector<16x64xf32>, vector<64x288xf32>, vector<16x288xf32> -> vector<16x288xf32>
    %172 = vector.extract_strided_slice %171 {offsets = [0, 0], sizes = [16, 32], strides = [1, 1]} : vector<16x288xf32> to vector<16x32xf32>
    %c0_153 = arith.constant 0 : index
    %c0_154 = arith.constant 0 : index
    %173 = vector.load %arg33[%c0_153, %c0_154] : memref<144x32xf32, #tpu.memory_space<vmem>>, vector<16x32xf32>
    tpu.vector_store %arg33[%c0_153, %c0_154], %172 {strides = array<i32>} : memref<144x32xf32, #tpu.memory_space<vmem>>, vector<16x32xf32>,
    %174 = vector.extract_strided_slice %171 {offsets = [0, 32], sizes = [16, 32], strides = [1, 1]} : vector<16x288xf32> to vector<16x32xf32>
    %c16_155 = arith.constant 16 : index
    %c0_156 = arith.constant 0 : index
    %175 = vector.load %arg33[%c16_155, %c0_156] : memref<144x32xf32, #tpu.memory_space<vmem>>, vector<16x32xf32>
    tpu.vector_store %arg33[%c16_155, %c0_156], %174 {strides = array<i32>} : memref<144x32xf32, #tpu.memory_space<vmem>>, vector<16x32xf32>,
    %176 = vector.extract_strided_slice %171 {offsets = [0, 64], sizes = [16, 32], strides = [1, 1]} : vector<16x288xf32> to vector<16x32xf32>
    %c32_157 = arith.constant 32 : index
    %c0_158 = arith.constant 0 : index
    %177 = vector.load %arg33[%c32_157, %c0_158] : memref<144x32xf32, #tpu.memory_space<vmem>>, vector<16x32xf32>
    tpu.vector_store %arg33[%c32_157, %c0_158], %176 {strides = array<i32>} : memref<144x32xf32, #tpu.memory_space<vmem>>, vector<16x32xf32>,
    %178 = vector.extract_strided_slice %171 {offsets = [0, 96], sizes = [16, 32], strides = [1, 1]} : vector<16x288xf32> to vector<16x32xf32>
    %c48 = arith.constant 48 : index
    %c0_159 = arith.constant 0 : index
    %179 = vector.load %arg33[%c48, %c0_159] : memref<144x32xf32, #tpu.memory_space<vmem>>, vector<16x32xf32>
    tpu.vector_store %arg33[%c48, %c0_159], %178 {strides = array<i32>} : memref<144x32xf32, #tpu.memory_space<vmem>>, vector<16x32xf32>,
    %180 = vector.extract_strided_slice %171 {offsets = [0, 128], sizes = [16, 32], strides = [1, 1]} : vector<16x288xf32> to vector<16x32xf32>
    %c64_160 = arith.constant 64 : index
    %c0_161 = arith.constant 0 : index
    %181 = vector.load %arg33[%c64_160, %c0_161] : memref<144x32xf32, #tpu.memory_space<vmem>>, vector<16x32xf32>
    tpu.vector_store %arg33[%c64_160, %c0_161], %180 {strides = array<i32>} : memref<144x32xf32, #tpu.memory_space<vmem>>, vector<16x32xf32>,
    %182 = vector.extract_strided_slice %171 {offsets = [0, 160], sizes = [16, 32], strides = [1, 1]} : vector<16x288xf32> to vector<16x32xf32>
    %c80 = arith.constant 80 : index
    %c0_162 = arith.constant 0 : index
    %183 = vector.load %arg33[%c80, %c0_162] : memref<144x32xf32, #tpu.memory_space<vmem>>, vector<16x32xf32>
    tpu.vector_store %arg33[%c80, %c0_162], %182 {strides = array<i32>} : memref<144x32xf32, #tpu.memory_space<vmem>>, vector<16x32xf32>,
    %184 = vector.extract_strided_slice %171 {offsets = [0, 192], sizes = [16, 32], strides = [1, 1]} : vector<16x288xf32> to vector<16x32xf32>
    %c96_163 = arith.constant 96 : index
    %c0_164 = arith.constant 0 : index
    %185 = vector.load %arg33[%c96_163, %c0_164] : memref<144x32xf32, #tpu.memory_space<vmem>>, vector<16x32xf32>
    tpu.vector_store %arg33[%c96_163, %c0_164], %184 {strides = array<i32>} : memref<144x32xf32, #tpu.memory_space<vmem>>, vector<16x32xf32>,
    %186 = vector.extract_strided_slice %171 {offsets = [0, 224], sizes = [16, 32], strides = [1, 1]} : vector<16x288xf32> to vector<16x32xf32>
    %c112 = arith.constant 112 : index
    %c0_165 = arith.constant 0 : index
    %187 = vector.load %arg33[%c112, %c0_165] : memref<144x32xf32, #tpu.memory_space<vmem>>, vector<16x32xf32>
    tpu.vector_store %arg33[%c112, %c0_165], %186 {strides = array<i32>} : memref<144x32xf32, #tpu.memory_space<vmem>>, vector<16x32xf32>,
    %188 = vector.extract_strided_slice %171 {offsets = [0, 256], sizes = [16, 32], strides = [1, 1]} : vector<16x288xf32> to vector<16x32xf32>
    %c128_166 = arith.constant 128 : index
    %c0_167 = arith.constant 0 : index
    %189 = vector.load %arg33[%c128_166, %c0_167] : memref<144x32xf32, #tpu.memory_space<vmem>>, vector<16x32xf32>
    tpu.vector_store %arg33[%c128_166, %c0_167], %188 {strides = array<i32>} : memref<144x32xf32, #tpu.memory_space<vmem>>, vector<16x32xf32>,
    %c0_168 = arith.constant 0 : index
    %c0_169 = arith.constant 0 : index
    %190 = vector.load %arg21[%c0_168, %c0_169] : memref<64x144xf32, #tpu.memory_space<vmem>>, vector<64x144xf32>
    %c0_170 = arith.constant 0 : index
    %c0_171 = arith.constant 0 : index
    %191 = vector.load %arg33[%c0_170, %c0_171] : memref<144x32xf32, #tpu.memory_space<vmem>>, vector<144x32xf32>
    %cst_172 = arith.constant dense<0.000000e+00> : vector<64x32xf32>
    %192 = tpu.matmul %190, %191, %cst_172 {dimension_numbers = #tpu.dot_dimension_numbers<[1], [0], [0], [1], [0, 0, 1, 1], [], []>} : vector<64x144xf32>, vector<144x32xf32>, vector<64x32xf32> -> vector<64x32xf32>
    %c0_173 = arith.constant 0 : index
    %c0_174 = arith.constant 0 : index
    %193 = vector.load %arg22[%c0_173, %c0_174] : memref<1x32xf32, #tpu.memory_space<vmem>>, vector<1x32xf32>
    %194 = vector.broadcast %193 : vector<1x32xf32> to vector<64x32xf32>
    %195 = arith.addf %192, %194 : vector<64x32xf32>
    %cst_175 = arith.constant 0.000000e+00 : f32
    %196 = vector.broadcast %cst_175 : f32 to vector<64x32xf32>
    %197 = arith.maximumf %195, %196 : vector<64x32xf32>
    %c0_176 = arith.constant 0 : index
    %c0_177 = arith.constant 0 : index
    %198 = vector.load %arg23[%c0_176, %c0_177] : memref<32x27xf32, #tpu.memory_space<vmem>>, vector<32x27xf32>
    %cst_178 = arith.constant dense<0.000000e+00> : vector<64x27xf32>
    %199 = tpu.matmul %197, %198, %cst_178 {dimension_numbers = #tpu.dot_dimension_numbers<[1], [0], [0], [1], [0, 0, 1, 1], [], []>} : vector<64x32xf32>, vector<32x27xf32>, vector<64x27xf32> -> vector<64x27xf32>
    %200 = vector.extract_strided_slice %199 {offsets = [0, 0], sizes = [64, 3], strides = [1, 1]} : vector<64x27xf32> to vector<64x3xf32>
    %c0_179 = arith.constant 0 : index
    %c0_180 = arith.constant 0 : index
    %201 = vector.load %arg34[%c0_179, %c0_180] : memref<576x3xf32, #tpu.memory_space<vmem>>, vector<64x3xf32>
    tpu.vector_store %arg34[%c0_179, %c0_180], %200 {strides = array<i32>} : memref<576x3xf32, #tpu.memory_space<vmem>>, vector<64x3xf32>,
    %202 = vector.extract_strided_slice %199 {offsets = [0, 3], sizes = [64, 3], strides = [1, 1]} : vector<64x27xf32> to vector<64x3xf32>
    %c64_181 = arith.constant 64 : index
    %c0_182 = arith.constant 0 : index
    %203 = vector.load %arg34[%c64_181, %c0_182] : memref<576x3xf32, #tpu.memory_space<vmem>>, vector<64x3xf32>
    tpu.vector_store %arg34[%c64_181, %c0_182], %202 {strides = array<i32>} : memref<576x3xf32, #tpu.memory_space<vmem>>, vector<64x3xf32>,
    %204 = vector.extract_strided_slice %199 {offsets = [0, 6], sizes = [64, 3], strides = [1, 1]} : vector<64x27xf32> to vector<64x3xf32>
    %c128_183 = arith.constant 128 : index
    %c0_184 = arith.constant 0 : index
    %205 = vector.load %arg34[%c128_183, %c0_184] : memref<576x3xf32, #tpu.memory_space<vmem>>, vector<64x3xf32>
    tpu.vector_store %arg34[%c128_183, %c0_184], %204 {strides = array<i32>} : memref<576x3xf32, #tpu.memory_space<vmem>>, vector<64x3xf32>,
    %206 = vector.extract_strided_slice %199 {offsets = [0, 9], sizes = [64, 3], strides = [1, 1]} : vector<64x27xf32> to vector<64x3xf32>
    %c192_185 = arith.constant 192 : index
    %c0_186 = arith.constant 0 : index
    %207 = vector.load %arg34[%c192_185, %c0_186] : memref<576x3xf32, #tpu.memory_space<vmem>>, vector<64x3xf32>
    tpu.vector_store %arg34[%c192_185, %c0_186], %206 {strides = array<i32>} : memref<576x3xf32, #tpu.memory_space<vmem>>, vector<64x3xf32>,
    %208 = vector.extract_strided_slice %199 {offsets = [0, 12], sizes = [64, 3], strides = [1, 1]} : vector<64x27xf32> to vector<64x3xf32>
    %c256_187 = arith.constant 256 : index
    %c0_188 = arith.constant 0 : index
    %209 = vector.load %arg34[%c256_187, %c0_188] : memref<576x3xf32, #tpu.memory_space<vmem>>, vector<64x3xf32>
    tpu.vector_store %arg34[%c256_187, %c0_188], %208 {strides = array<i32>} : memref<576x3xf32, #tpu.memory_space<vmem>>, vector<64x3xf32>,
    %210 = vector.extract_strided_slice %199 {offsets = [0, 15], sizes = [64, 3], strides = [1, 1]} : vector<64x27xf32> to vector<64x3xf32>
    %c320_189 = arith.constant 320 : index
    %c0_190 = arith.constant 0 : index
    %211 = vector.load %arg34[%c320_189, %c0_190] : memref<576x3xf32, #tpu.memory_space<vmem>>, vector<64x3xf32>
    tpu.vector_store %arg34[%c320_189, %c0_190], %210 {strides = array<i32>} : memref<576x3xf32, #tpu.memory_space<vmem>>, vector<64x3xf32>,
    %212 = vector.extract_strided_slice %199 {offsets = [0, 18], sizes = [64, 3], strides = [1, 1]} : vector<64x27xf32> to vector<64x3xf32>
    %c384_191 = arith.constant 384 : index
    %c0_192 = arith.constant 0 : index
    %213 = vector.load %arg34[%c384_191, %c0_192] : memref<576x3xf32, #tpu.memory_space<vmem>>, vector<64x3xf32>
    tpu.vector_store %arg34[%c384_191, %c0_192], %212 {strides = array<i32>} : memref<576x3xf32, #tpu.memory_space<vmem>>, vector<64x3xf32>,
    %214 = vector.extract_strided_slice %199 {offsets = [0, 21], sizes = [64, 3], strides = [1, 1]} : vector<64x27xf32> to vector<64x3xf32>
    %c448_193 = arith.constant 448 : index
    %c0_194 = arith.constant 0 : index
    %215 = vector.load %arg34[%c448_193, %c0_194] : memref<576x3xf32, #tpu.memory_space<vmem>>, vector<64x3xf32>
    tpu.vector_store %arg34[%c448_193, %c0_194], %214 {strides = array<i32>} : memref<576x3xf32, #tpu.memory_space<vmem>>, vector<64x3xf32>,
    %216 = vector.extract_strided_slice %199 {offsets = [0, 24], sizes = [64, 3], strides = [1, 1]} : vector<64x27xf32> to vector<64x3xf32>
    %c512_195 = arith.constant 512 : index
    %c0_196 = arith.constant 0 : index
    %217 = vector.load %arg34[%c512_195, %c0_196] : memref<576x3xf32, #tpu.memory_space<vmem>>, vector<64x3xf32>
    tpu.vector_store %arg34[%c512_195, %c0_196], %216 {strides = array<i32>} : memref<576x3xf32, #tpu.memory_space<vmem>>, vector<64x3xf32>,
    %c0_197 = arith.constant 0 : index
    %c0_198 = arith.constant 0 : index
    %218 = vector.load %arg24[%c0_197, %c0_198] : memref<256x576xf32, #tpu.memory_space<vmem>>, vector<256x576xf32>
    %c0_199 = arith.constant 0 : index
    %c0_200 = arith.constant 0 : index
    %219 = vector.load %arg34[%c0_199, %c0_200] : memref<576x3xf32, #tpu.memory_space<vmem>>, vector<576x3xf32>
    %cst_201 = arith.constant dense<0.000000e+00> : vector<256x3xf32>
    %220 = tpu.matmul %218, %219, %cst_201 {dimension_numbers = #tpu.dot_dimension_numbers<[1], [0], [0], [1], [0, 0, 1, 1], [], []>} : vector<256x576xf32>, vector<576x3xf32>, vector<256x3xf32> -> vector<256x3xf32>
    %c0_202 = arith.constant 0 : index
    %c0_203 = arith.constant 0 : index
    %221 = vector.load %arg25[%c0_202, %c0_203] : memref<1x3xf32, #tpu.memory_space<vmem>>, vector<1x3xf32>
    %222 = vector.broadcast %221 : vector<1x3xf32> to vector<256x3xf32>
    %223 = arith.addf %220, %222 : vector<256x3xf32>
    %cst_204 = arith.constant 0.000000e+00 : f32
    %224 = vector.broadcast %cst_204 : f32 to vector<256x3xf32>
    %225 = arith.subf %224, %223 : vector<256x3xf32>
    %226 = math.exp %225 : vector<256x3xf32>
    %cst_205 = arith.constant 1.000000e+00 : f32
    %227 = vector.broadcast %cst_205 : f32 to vector<256x3xf32>
    %228 = arith.addf %227, %226 : vector<256x3xf32>
    %229 = tpu.reciprocal %228 {approx = true} : vector<256x3xf32> -> vector<256x3xf32>
    %cst_206 = arith.constant 0.000000e+00 : f32
    %230 = vector.broadcast %cst_206 : f32 to vector<256x3xf32>
    %231 = arith.maximumf %229, %230 : vector<256x3xf32>
    %cst_207 = arith.constant 1.000000e+00 : f32
    %232 = vector.broadcast %cst_207 : f32 to vector<256x3xf32>
    %233 = arith.minimumf %231, %232 : vector<256x3xf32>
    %c0_208 = arith.constant 0 : index
    %c0_209 = arith.constant 0 : index
    %c0_210 = arith.constant 0 : index
    %234 = vector.load %arg26[%c0_208, %c0_209, %c0_210] : memref<1x256x3xf32, #tpu.memory_space<vmem>>, vector<1x256x3xf32>
    %235 = vector.shape_cast %234 : vector<1x256x3xf32> to vector<256x3xf32>
    %236 = vector.shape_cast %233 : vector<256x3xf32> to vector<1x256x3xf32>
    tpu.vector_store %arg26[%c0_208, %c0_209, %c0_210], %236 {strides = array<i32>} : memref<1x256x3xf32, #tpu.memory_space<vmem>>, vector<1x256x3xf32>,
    return
  }
  func.func @transform_0(%arg0: i32) -> (i32, i32, i32) {
    %c0_i32 = arith.constant 0 : i32
    %c0_i32_0 = arith.constant 0 : i32
    %c0_i32_1 = arith.constant 0 : i32
    return %arg0, %c0_i32, %c0_i32_0 : i32, i32, i32
  }
  func.func @transform_1(%arg0: i32) -> (i32, i32) {
    %c0_i32 = arith.constant 0 : i32
    %c0_i32_0 = arith.constant 0 : i32
    %c0_i32_1 = arith.constant 0 : i32
    return %c0_i32, %c0_i32_0 : i32, i32
  }
  func.func @transform_2(%arg0: i32) -> (i32, i32) {
    %c0_i32 = arith.constant 0 : i32
    %c0_i32_0 = arith.constant 0 : i32
    %c0_i32_1 = arith.constant 0 : i32
    return %c0_i32, %c0_i32_0 : i32, i32
  }
  func.func @transform_3(%arg0: i32) -> (i32, i32) {
    %c0_i32 = arith.constant 0 : i32
    %c0_i32_0 = arith.constant 0 : i32
    %c0_i32_1 = arith.constant 0 : i32
    return %c0_i32, %c0_i32_0 : i32, i32
  }
  func.func @transform_4(%arg0: i32) -> (i32, i32) {
    %c0_i32 = arith.constant 0 : i32
    %c0_i32_0 = arith.constant 0 : i32
    %c0_i32_1 = arith.constant 0 : i32
    return %c0_i32, %c0_i32_0 : i32, i32
  }
  func.func @transform_5(%arg0: i32) -> (i32, i32) {
    %c0_i32 = arith.constant 0 : i32
    %c0_i32_0 = arith.constant 0 : i32
    %c0_i32_1 = arith.constant 0 : i32
    return %c0_i32, %c0_i32_0 : i32, i32
  }
  func.func @transform_6(%arg0: i32) -> (i32, i32) {
    %c0_i32 = arith.constant 0 : i32
    %c0_i32_0 = arith.constant 0 : i32
    %c0_i32_1 = arith.constant 0 : i32
    return %c0_i32, %c0_i32_0 : i32, i32
  }
  func.func @transform_7(%arg0: i32) -> (i32, i32) {
    %c0_i32 = arith.constant 0 : i32
    %c0_i32_0 = arith.constant 0 : i32
    %c0_i32_1 = arith.constant 0 : i32
    return %c0_i32, %c0_i32_0 : i32, i32
  }
  func.func @transform_8(%arg0: i32) -> (i32, i32) {
    %c0_i32 = arith.constant 0 : i32
    %c0_i32_0 = arith.constant 0 : i32
    %c0_i32_1 = arith.constant 0 : i32
    return %c0_i32, %c0_i32_0 : i32, i32
  }
  func.func @transform_9(%arg0: i32) -> (i32, i32) {
    %c0_i32 = arith.constant 0 : i32
    %c0_i32_0 = arith.constant 0 : i32
    %c0_i32_1 = arith.constant 0 : i32
    return %c0_i32, %c0_i32_0 : i32, i32
  }
  func.func @transform_10(%arg0: i32) -> (i32, i32) {
    %c0_i32 = arith.constant 0 : i32
    %c0_i32_0 = arith.constant 0 : i32
    %c0_i32_1 = arith.constant 0 : i32
    return %c0_i32, %c0_i32_0 : i32, i32
  }
  func.func @transform_11(%arg0: i32) -> (i32, i32) {
    %c0_i32 = arith.constant 0 : i32
    %c0_i32_0 = arith.constant 0 : i32
    %c0_i32_1 = arith.constant 0 : i32
    return %c0_i32, %c0_i32_0 : i32, i32
  }
  func.func @transform_12(%arg0: i32) -> (i32, i32) {
    %c0_i32 = arith.constant 0 : i32
    %c0_i32_0 = arith.constant 0 : i32
    %c0_i32_1 = arith.constant 0 : i32
    return %c0_i32, %c0_i32_0 : i32, i32
  }
  func.func @transform_13(%arg0: i32) -> (i32, i32) {
    %c0_i32 = arith.constant 0 : i32
    %c0_i32_0 = arith.constant 0 : i32
    %c0_i32_1 = arith.constant 0 : i32
    return %c0_i32, %c0_i32_0 : i32, i32
  }
  func.func @transform_14(%arg0: i32) -> (i32, i32) {
    %c0_i32 = arith.constant 0 : i32
    %c0_i32_0 = arith.constant 0 : i32
    %c0_i32_1 = arith.constant 0 : i32
    return %c0_i32, %c0_i32_0 : i32, i32
  }
  func.func @transform_15(%arg0: i32) -> (i32, i32) {
    %c0_i32 = arith.constant 0 : i32
    %c0_i32_0 = arith.constant 0 : i32
    %c0_i32_1 = arith.constant 0 : i32
    return %c0_i32, %c0_i32_0 : i32, i32
  }
  func.func @transform_16(%arg0: i32) -> (i32, i32) {
    %c0_i32 = arith.constant 0 : i32
    %c0_i32_0 = arith.constant 0 : i32
    %c0_i32_1 = arith.constant 0 : i32
    return %c0_i32, %c0_i32_0 : i32, i32
  }
  func.func @transform_17(%arg0: i32) -> (i32, i32) {
    %c0_i32 = arith.constant 0 : i32
    %c0_i32_0 = arith.constant 0 : i32
    %c0_i32_1 = arith.constant 0 : i32
    return %c0_i32, %c0_i32_0 : i32, i32
  }
  func.func @transform_18(%arg0: i32) -> (i32, i32) {
    %c0_i32 = arith.constant 0 : i32
    %c0_i32_0 = arith.constant 0 : i32
    %c0_i32_1 = arith.constant 0 : i32
    return %c0_i32, %c0_i32_0 : i32, i32
  }
  func.func @transform_19(%arg0: i32) -> (i32, i32) {
    %c0_i32 = arith.constant 0 : i32
    %c0_i32_0 = arith.constant 0 : i32
    %c0_i32_1 = arith.constant 0 : i32
    return %c0_i32, %c0_i32_0 : i32, i32
  }
  func.func @transform_20(%arg0: i32) -> (i32, i32) {
    %c0_i32 = arith.constant 0 : i32
    %c0_i32_0 = arith.constant 0 : i32
    %c0_i32_1 = arith.constant 0 : i32
    return %c0_i32, %c0_i32_0 : i32, i32
  }
  func.func @transform_21(%arg0: i32) -> (i32, i32) {
    %c0_i32 = arith.constant 0 : i32
    %c0_i32_0 = arith.constant 0 : i32
    %c0_i32_1 = arith.constant 0 : i32
    return %c0_i32, %c0_i32_0 : i32, i32
  }
  func.func @transform_22(%arg0: i32) -> (i32, i32) {
    %c0_i32 = arith.constant 0 : i32
    %c0_i32_0 = arith.constant 0 : i32
    %c0_i32_1 = arith.constant 0 : i32
    return %c0_i32, %c0_i32_0 : i32, i32
  }
  func.func @transform_23(%arg0: i32) -> (i32, i32) {
    %c0_i32 = arith.constant 0 : i32
    %c0_i32_0 = arith.constant 0 : i32
    %c0_i32_1 = arith.constant 0 : i32
    return %c0_i32, %c0_i32_0 : i32, i32
  }
  func.func @transform_24(%arg0: i32) -> (i32, i32) {
    %c0_i32 = arith.constant 0 : i32
    %c0_i32_0 = arith.constant 0 : i32
    %c0_i32_1 = arith.constant 0 : i32
    return %c0_i32, %c0_i32_0 : i32, i32
  }
  func.func @transform_25(%arg0: i32) -> (i32, i32, i32) {
    %c0_i32 = arith.constant 0 : i32
    %c0_i32_0 = arith.constant 0 : i32
    %c0_i32_1 = arith.constant 0 : i32
    return %arg0, %c0_i32, %c0_i32_0 : i32, i32, i32
  }
}

</mosaic_0001>

<llo_original>
// kernel: small_texture_autoencoder_forward.1
$region0: #{small_texture_autoencoder_forward.1}
  #allocation0 [shape = 'u32[]', space=smem, size = 0x4, offset = 0x4, fixed_abs, tag = 'smem constant byte address 0x4 - core index']
  #allocation1 [shape = 'u32[144,128]{1,0:T(1,128)}', space=vmem, size = 0x12000, scoped, tag = 'internal scratch']
  #allocation2 [shape = 'f32[64,27]{1,0:T(8,128)}', space=vmem, size = 0x8000, scoped, tag = 'scratch operand']
  #allocation3 [shape = 'f32[16,288]{1,0:T(8,128)}', space=vmem, size = 0x6000, scoped, tag = 'scratch operand']
  #allocation4 [shape = 'f32[4,576]{1,0:T(4,128)}', space=vmem, size = 0x2800, scoped, tag = 'scratch operand']
  #allocation5 [shape = 'f32[36,256]{1,0:T(8,128)}', space=vmem, size = 0xa000, scoped, tag = 'scratch operand']
  #allocation6 [shape = 'f32[36,128]{1,0:T(8,128)}', space=vmem, size = 0x5000, scoped, tag = 'scratch operand']
  #allocation7 [shape = 'f32[36,64]{1,0:T(8,128)}', space=vmem, size = 0x5000, scoped, tag = 'scratch operand']
  #allocation8 [shape = 'f32[144,32]{1,0:T(8,128)}', space=vmem, size = 0x12000, scoped, tag = 'scratch operand']
  #allocation9 [shape = 'f32[576,3]{1,0:T(8,128)}', space=vmem, size = 0x48000, scoped, tag = 'scratch operand']
  %s0 = inlined_call_operand.vmem [shape: f32[2,256,3], index: 0, kind: input, shape index: {}]
  %s1 = inlined_call_operand.hbm [shape: f32[576,256], index: 1, kind: input, shape index: {}]
  %s2 = inlined_call_operand.vmem [shape: f32[27,32], index: 2, kind: input, shape index: {}]
  %s3 = inlined_call_operand.vmem [shape: f32[1,32], index: 3, kind: input, shape index: {}]
  %s4 = inlined_call_operand.vmem [shape: f32[144,64], index: 4, kind: input, shape index: {}]
  %s5 = inlined_call_operand.vmem [shape: f32[288,64], index: 5, kind: input, shape index: {}]
  %s6 = inlined_call_operand.vmem [shape: f32[1,64], index: 6, kind: input, shape index: {}]
  %s7 = inlined_call_operand.vmem [shape: f32[36,16], index: 7, kind: input, shape index: {}]
  %s8 = inlined_call_operand.hbm [shape: f32[576,128], index: 8, kind: input, shape index: {}]
  %s9 = inlined_call_operand.vmem [shape: f32[1,128], index: 9, kind: input, shape index: {}]
  %s10 = inlined_call_operand.vmem [shape: f32[128,2304], index: 10, kind: input, shape index: {}]
  %s11 = inlined_call_operand.vmem [shape: f32[4,36], index: 11, kind: input, shape index: {}]
  %s12 = inlined_call_operand.vmem [shape: f32[1,256], index: 12, kind: input, shape index: {}]
  %s13 = inlined_call_operand.vmem [shape: f32[256,1152], index: 13, kind: input, shape index: {}]
  %s14 = inlined_call_operand.vmem [shape: f32[4,36], index: 14, kind: input, shape index: {}]
  %s15 = inlined_call_operand.vmem [shape: f32[1,128], index: 15, kind: input, shape index: {}]
  %s16 = inlined_call_operand.vmem [shape: f32[128,576], index: 16, kind: input, shape index: {}]
  %s17 = inlined_call_operand.vmem [shape: f32[16,36], index: 17, kind: input, shape index: {}]
  %s18 = inlined_call_operand.vmem [shape: f32[1,64], index: 18, kind: input, shape index: {}]
  %s19 = inlined_call_operand.vmem [shape: f32[64,288], index: 19, kind: input, shape index: {}]
  %s20 = inlined_call_operand.vmem [shape: f32[64,144], index: 20, kind: input, shape index: {}]
  %s21 = inlined_call_operand.vmem [shape: f32[1,32], index: 21, kind: input, shape index: {}]
  %s22 = inlined_call_operand.vmem [shape: f32[32,27], index: 22, kind: input, shape index: {}]
  %s23 = inlined_call_operand.vmem [shape: f32[256,576], index: 23, kind: input, shape index: {}]
  %s24 = inlined_call_operand.vmem [shape: f32[1,3], index: 24, kind: input, shape index: {}]
  %s25 = inlined_call_operand.vmem [shape: f32[2,256,3], index: 25, kind: output, shape index: {}]
  %s26 = sld [smem:[#allocation0]]
  $region141: #{small_texture_autoencoder_forward.1} parent=0
    _
  %s28 = ssub.s32 1, %s26
  %s29 = scalar_select 0, %s28, %s26
  $region1: #{small_texture_autoencoder_forward.1} parent=0
    #allocation10 [shape = 'u8[589824]{0}', space=vmem, size = 0x90000, scoped, tag = 'input window, operand 1, single buffered']
    #allocation11 [shape = 's32[2]{0}', space=sflag, size = 0x8, scoped, tag = 'scoped memory for small_texture_autoencoder_forward.1']
    #allocation12 [shape = 'u8[294912]{0}', space=vmem, size = 0x48000, scoped, tag = 'input window, operand 8, single buffered']
    #allocation13 [shape = 's32[1]{0}', space=sflag, size = 0x4, scoped, tag = 'scoped memory for small_texture_autoencoder_forward.1']
    %30 = vsyncpa [#allocation11], 0
    %31 = vsyncpa [#allocation13], 0
    loop: start=0, step=1, limit=4
    $region2: #{small_texture_autoencoder_forward.1} parent=1 // loop_pre_header
      _
    $region3: #{small_texture_autoencoder_forward.1} parent=1 // loop_header
      %s33 = sphi 0, %s37
      %p34 = scmp.ge.s32.totalorder %s33, 4
      %s43 = sphi 0, %s45
      %s46 = sphi 0, %s43
      %s47 = sphi 0, %s46
      %s63 = sphi 0, %s47
      %s67 = sphi 0, %s67
      %s69 = sphi 0, %s67
      %s70 = sphi 0, %s69
      %s84 = sphi 0, %s70
      %s88 = sphi 0, %s88
      %s90 = sphi 0, %s88
      %s91 = sphi 0, %s90
      %s105 = sphi 0, %s91
      %s109 = sphi 0, %s109
      %s111 = sphi 0, %s109
      %s112 = sphi 0, %s111
      %s126 = sphi 0, %s112
      %s130 = sphi 0, %s130
      %s132 = sphi 0, %s130
      %s133 = sphi 0, %s132
      %s147 = sphi 0, %s133
      %s151 = sphi 0, %s151
      %s153 = sphi 0, %s151
      %s154 = sphi 0, %s153
      %s168 = sphi 0, %s154
      %s172 = sphi 0, %s172
      %s174 = sphi 0, %s172
      %s175 = sphi 0, %s174
      %s189 = sphi 0, %s175
      %s193 = sphi 0, %s193
      %s195 = sphi 0, %s193
      %s196 = sphi 0, %s195
      %s210 = sphi 0, %s196
      %s214 = sphi 0, %s214
      %s216 = sphi 0, %s214
      %s217 = sphi 0, %s216
      %s231 = sphi 0, %s217
      %s235 = sphi 0, %s235
      %s237 = sphi 0, %s235
      %s238 = sphi 0, %s237
      %s252 = sphi 0, %s238
      %s256 = sphi 0, %s256
      %s258 = sphi 0, %s256
      %s259 = sphi 0, %s258
      %s273 = sphi 0, %s259
      %s277 = sphi 0, %s277
      %s279 = sphi 0, %s277
      %s280 = sphi 0, %s279
      %s294 = sphi 0, %s280
      %s298 = sphi 0, %s298
      %s300 = sphi 0, %s298
      %s301 = sphi 0, %s300
      %s315 = sphi 0, %s301
      %s319 = sphi 0, %s319
      %s321 = sphi 0, %s319
      %s322 = sphi 0, %s321
      %s336 = sphi 0, %s322
      %s340 = sphi 0, %s340
      %s342 = sphi 0, %s340
      %s343 = sphi 0, %s342
      %s357 = sphi 0, %s343
      %s361 = sphi 0, %s361
      %s363 = sphi 0, %s361
      %s364 = sphi 0, %s363
      %s378 = sphi 0, %s364
      %s382 = sphi 0, %s382
      %s384 = sphi 0, %s382
      %s385 = sphi 0, %s384
      %s399 = sphi 0, %s385
      %s403 = sphi 0, %s403
      %s405 = sphi 0, %s403
      %s406 = sphi 0, %s405
      %s420 = sphi 0, %s406
      %s424 = sphi 0, %s424
      %s426 = sphi 0, %s424
      %s427 = sphi 0, %s426
      %s441 = sphi 0, %s427
      %s445 = sphi 0, %s445
      %s447 = sphi 0, %s445
      %s448 = sphi 0, %s447
      %s462 = sphi 0, %s448
      %s466 = sphi 0, %s466
      %s468 = sphi 0, %s466
      %s469 = sphi 0, %s468
      %s483 = sphi 0, %s469
      %s487 = sphi 0, %s487
      %s489 = sphi 0, %s487
      %s490 = sphi 0, %s489
      %s504 = sphi 0, %s490
      %s508 = sphi 0, %s508
      %s510 = sphi 0, %s508
      %s511 = sphi 0, %s510
      %s525 = sphi 0, %s511
      %s529 = sphi 0, %s529
      %s531 = sphi 0, %s529
      %s532 = sphi 0, %s531
      %s546 = sphi 0, %s532
      %s550 = sphi 0, %s550
      %s552 = sphi 0, %s550
      %s553 = sphi 0, %s552
      %s567 = sphi 0, %s553
      %s573 = sphi 0, %s575
      %s576 = sphi 0, %s573
      %s577 = sphi 0, %s576
      %s593 = sphi 0, %s577
    $region4: #{small_texture_autoencoder_forward.1} parent=1 // loop_header_branch
      %36 = sbr.rel (%p34) target = $region8
    $region5: #{small_texture_autoencoder_forward.1} parent=1 // loop_body
      %s38 = ssub.s32 %s33, 1
      %s39 = ssub.s32 %s33, 2
      %s40 = sadd.s32 %s33, 1
      %s41 = ssub.s32 %s33, %s40
      %p42 = scmp.eq.s32.totalorder %s41, 0
      %s44 = sadd.s32 %s43, 1
      %s45 = scalar_select %p42, %s43, %s44
      %p48 = pneg %p42
      %p49 = scmp.eq.s32.totalorder %s33, 1
      %p50 = por %p48, %p49
      %p51 = scmp.ne.s32.totalorder %s43, %s46
      %p52 = scmp.eq.s32.totalorder %s33, 0
      %p53 = por %p51, %p52
      %p54 = scmp.ne.s32.totalorder %s43, %s46
      %p55 = scmp.eq.s32.totalorder %s38, 1
      %p56 = por %p54, %p55
      %p57 = scmp.ne.s32.totalorder %s46, %s47
      %p58 = scmp.eq.s32.totalorder %s38, 0
      %p59 = por %p57, %p58
      %p60 = scmp.ne.s32.totalorder %s46, %s47
      %p61 = scmp.eq.s32.totalorder %s39, 1
      %p62 = por %p60, %p61
      %p64 = scmp.ne.s32.totalorder %s47, %s63
      %p65 = scmp.eq.s32.totalorder %s39, 0
      %p66 = por %p64, %p65
      %s68 = sadd.s32 %s67, 1
      %p71 = scmp.eq.s32.totalorder %s33, 1
      %p72 = scmp.ne.s32.totalorder %s67, %s69
      %p73 = scmp.eq.s32.totalorder %s33, 0
      %p74 = por %p72, %p73
      %p75 = scmp.ne.s32.totalorder %s67, %s69
      %p76 = scmp.eq.s32.totalorder %s38, 1
      %p77 = por %p75, %p76
      %p78 = scmp.ne.s32.totalorder %s69, %s70
      %p79 = scmp.eq.s32.totalorder %s38, 0
      %p80 = por %p78, %p79
      %p81 = scmp.ne.s32.totalorder %s69, %s70
      %p82 = scmp.eq.s32.totalorder %s39, 1
      %p83 = por %p81, %p82
      %p85 = scmp.ne.s32.totalorder %s70, %s84
      %p86 = scmp.eq.s32.totalorder %s39, 0
      %p87 = por %p85, %p86
      %s89 = sadd.s32 %s88, 1
      %p92 = scmp.eq.s32.totalorder %s33, 1
      %p93 = scmp.ne.s32.totalorder %s88, %s90
      %p94 = scmp.eq.s32.totalorder %s33, 0
      %p95 = por %p93, %p94
      %p96 = scmp.ne.s32.totalorder %s88, %s90
      %p97 = scmp.eq.s32.totalorder %s38, 1
      %p98 = por %p96, %p97
      %p99 = scmp.ne.s32.totalorder %s90, %s91
      %p100 = scmp.eq.s32.totalorder %s38, 0
      %p101 = por %p99, %p100
      %p102 = scmp.ne.s32.totalorder %s90, %s91
      %p103 = scmp.eq.s32.totalorder %s39, 1
      %p104 = por %p102, %p103
      %p106 = scmp.ne.s32.totalorder %s91, %s105
      %p107 = scmp.eq.s32.totalorder %s39, 0
      %p108 = por %p106, %p107
      %s110 = sadd.s32 %s109, 1
      %p113 = scmp.eq.s32.totalorder %s33, 1
      %p114 = scmp.ne.s32.totalorder %s109, %s111
      %p115 = scmp.eq.s32.totalorder %s33, 0
      %p116 = por %p114, %p115
      %p117 = scmp.ne.s32.totalorder %s109, %s111
      %p118 = scmp.eq.s32.totalorder %s38, 1
      %p119 = por %p117, %p118
      %p120 = scmp.ne.s32.totalorder %s111, %s112
      %p121 = scmp.eq.s32.totalorder %s38, 0
      %p122 = por %p120, %p121
      %p123 = scmp.ne.s32.totalorder %s111, %s112
      %p124 = scmp.eq.s32.totalorder %s39, 1
      %p125 = por %p123, %p124
      %p127 = scmp.ne.s32.totalorder %s112, %s126
      %p128 = scmp.eq.s32.totalorder %s39, 0
      %p129 = por %p127, %p128
      %s131 = sadd.s32 %s130, 1
      %p134 = scmp.eq.s32.totalorder %s33, 1
      %p135 = scmp.ne.s32.totalorder %s130, %s132
      %p136 = scmp.eq.s32.totalorder %s33, 0
      %p137 = por %p135, %p136
      %p138 = scmp.ne.s32.totalorder %s130, %s132
      %p139 = scmp.eq.s32.totalorder %s38, 1
      %p140 = por %p138, %p139
      %p141 = scmp.ne.s32.totalorder %s132, %s133
      %p142 = scmp.eq.s32.totalorder %s38, 0
      %p143 = por %p141, %p142
      %p144 = scmp.ne.s32.totalorder %s132, %s133
      %p145 = scmp.eq.s32.totalorder %s39, 1
      %p146 = por %p144, %p145
      %p148 = scmp.ne.s32.totalorder %s133, %s147
      %p149 = scmp.eq.s32.totalorder %s39, 0
      %p150 = por %p148, %p149
      %s152 = sadd.s32 %s151, 1
      %p155 = scmp.eq.s32.totalorder %s33, 1
      %p156 = scmp.ne.s32.totalorder %s151, %s153
      %p157 = scmp.eq.s32.totalorder %s33, 0
      %p158 = por %p156, %p157
      %p159 = scmp.ne.s32.totalorder %s151, %s153
      %p160 = scmp.eq.s32.totalorder %s38, 1
      %p161 = por %p159, %p160
      %p162 = scmp.ne.s32.totalorder %s153, %s154
      %p163 = scmp.eq.s32.totalorder %s38, 0
      %p164 = por %p162, %p163
      %p165 = scmp.ne.s32.totalorder %s153, %s154
      %p166 = scmp.eq.s32.totalorder %s39, 1
      %p167 = por %p165, %p166
      %p169 = scmp.ne.s32.totalorder %s154, %s168
      %p170 = scmp.eq.s32.totalorder %s39, 0
      %p171 = por %p169, %p170
      %s173 = sadd.s32 %s172, 1
      %p176 = scmp.eq.s32.totalorder %s33, 1
      %p177 = scmp.ne.s32.totalorder %s172, %s174
      %p178 = scmp.eq.s32.totalorder %s33, 0
      %p179 = por %p177, %p178
      %p180 = scmp.ne.s32.totalorder %s172, %s174
      %p181 = scmp.eq.s32.totalorder %s38, 1
      %p182 = por %p180, %p181
      %p183 = scmp.ne.s32.totalorder %s174, %s175
      %p184 = scmp.eq.s32.totalorder %s38, 0
      %p185 = por %p183, %p184
      %p186 = scmp.ne.s32.totalorder %s174, %s175
      %p187 = scmp.eq.s32.totalorder %s39, 1
      %p188 = por %p186, %p187
      %p190 = scmp.ne.s32.totalorder %s175, %s189
      %p191 = scmp.eq.s32.totalorder %s39, 0
      %p192 = por %p190, %p191
      %s194 = sadd.s32 %s193, 1
      %p197 = scmp.eq.s32.totalorder %s33, 1
      %p198 = scmp.ne.s32.totalorder %s193, %s195
      %p199 = scmp.eq.s32.totalorder %s33, 0
      %p200 = por %p198, %p199
      %p201 = scmp.ne.s32.totalorder %s193, %s195
      %p202 = scmp.eq.s32.totalorder %s38, 1
      %p203 = por %p201, %p202
      %p204 = scmp.ne.s32.totalorder %s195, %s196
      %p205 = scmp.eq.s32.totalorder %s38, 0
      %p206 = por %p204, %p205
      %p207 = scmp.ne.s32.totalorder %s195, %s196
      %p208 = scmp.eq.s32.totalorder %s39, 1
      %p209 = por %p207, %p208
      %p211 = scmp.ne.s32.totalorder %s196, %s210
      %p212 = scmp.eq.s32.totalorder %s39, 0
      %p213 = por %p211, %p212
      %s215 = sadd.s32 %s214, 1
      %p218 = scmp.eq.s32.totalorder %s33, 1
      %p219 = scmp.ne.s32.totalorder %s214, %s216
      %p220 = scmp.eq.s32.totalorder %s33, 0
      %p221 = por %p219, %p220
      %p222 = scmp.ne.s32.totalorder %s214, %s216
      %p223 = scmp.eq.s32.totalorder %s38, 1
      %p224 = por %p222, %p223
      %p225 = scmp.ne.s32.totalorder %s216, %s217
      %p226 = scmp.eq.s32.totalorder %s38, 0
      %p227 = por %p225, %p226
      %p228 = scmp.ne.s32.totalorder %s216, %s217
      %p229 = scmp.eq.s32.totalorder %s39, 1
      %p230 = por %p228, %p229
      %p232 = scmp.ne.s32.totalorder %s217, %s231
      %p233 = scmp.eq.s32.totalorder %s39, 0
      %p234 = por %p232, %p233
      %s236 = sadd.s32 %s235, 1
      %p239 = scmp.eq.s32.totalorder %s33, 1
      %p240 = scmp.ne.s32.totalorder %s235, %s237
      %p241 = scmp.eq.s32.totalorder %s33, 0
      %p242 = por %p240, %p241
      %p243 = scmp.ne.s32.totalorder %s235, %s237
      %p244 = scmp.eq.s32.totalorder %s38, 1
      %p245 = por %p243, %p244
      %p246 = scmp.ne.s32.totalorder %s237, %s238
      %p247 = scmp.eq.s32.totalorder %s38, 0
      %p248 = por %p246, %p247
      %p249 = scmp.ne.s32.totalorder %s237, %s238
      %p250 = scmp.eq.s32.totalorder %s39, 1
      %p251 = por %p249, %p250
      %p253 = scmp.ne.s32.totalorder %s238, %s252
      %p254 = scmp.eq.s32.totalorder %s39, 0
      %p255 = por %p253, %p254
      %s257 = sadd.s32 %s256, 1
      %p260 = scmp.eq.s32.totalorder %s33, 1
      %p261 = scmp.ne.s32.totalorder %s256, %s258
      %p262 = scmp.eq.s32.totalorder %s33, 0
      %p263 = por %p261, %p262
      %p264 = scmp.ne.s32.totalorder %s256, %s258
      %p265 = scmp.eq.s32.totalorder %s38, 1
      %p266 = por %p264, %p265
      %p267 = scmp.ne.s32.totalorder %s258, %s259
      %p268 = scmp.eq.s32.totalorder %s38, 0
      %p269 = por %p267, %p268
      %p270 = scmp.ne.s32.totalorder %s258, %s259
      %p271 = scmp.eq.s32.totalorder %s39, 1
      %p272 = por %p270, %p271
      %p274 = scmp.ne.s32.totalorder %s259, %s273
      %p275 = scmp.eq.s32.totalorder %s39, 0
      %p276 = por %p274, %p275
      %s278 = sadd.s32 %s277, 1
      %p281 = scmp.eq.s32.totalorder %s33, 1
      %p282 = scmp.ne.s32.totalorder %s277, %s279
      %p283 = scmp.eq.s32.totalorder %s33, 0
      %p284 = por %p282, %p283
      %p285 = scmp.ne.s32.totalorder %s277, %s279
      %p286 = scmp.eq.s32.totalorder %s38, 1
      %p287 = por %p285, %p286
      %p288 = scmp.ne.s32.totalorder %s279, %s280
      %p289 = scmp.eq.s32.totalorder %s38, 0
      %p290 = por %p288, %p289
      %p291 = scmp.ne.s32.totalorder %s279, %s280
      %p292 = scmp.eq.s32.totalorder %s39, 1
      %p293 = por %p291, %p292
      %p295 = scmp.ne.s32.totalorder %s280, %s294
      %p296 = scmp.eq.s32.totalorder %s39, 0
      %p297 = por %p295, %p296
      %s299 = sadd.s32 %s298, 1
      %p302 = scmp.eq.s32.totalorder %s33, 1
      %p303 = scmp.ne.s32.totalorder %s298, %s300
      %p304 = scmp.eq.s32.totalorder %s33, 0
      %p305 = por %p303, %p304
      %p306 = scmp.ne.s32.totalorder %s298, %s300
      %p307 = scmp.eq.s32.totalorder %s38, 1
      %p308 = por %p306, %p307
      %p309 = scmp.ne.s32.totalorder %s300, %s301
      %p310 = scmp.eq.s32.totalorder %s38, 0
      %p311 = por %p309, %p310
      %p312 = scmp.ne.s32.totalorder %s300, %s301
      %p313 = scmp.eq.s32.totalorder %s39, 1
      %p314 = por %p312, %p313
      %p316 = scmp.ne.s32.totalorder %s301, %s315
      %p317 = scmp.eq.s32.totalorder %s39, 0
      %p318 = por %p316, %p317
      %s320 = sadd.s32 %s319, 1
      %p323 = scmp.eq.s32.totalorder %s33, 1
      %p324 = scmp.ne.s32.totalorder %s319, %s321
      %p325 = scmp.eq.s32.totalorder %s33, 0
      %p326 = por %p324, %p325
      %p327 = scmp.ne.s32.totalorder %s319, %s321
      %p328 = scmp.eq.s32.totalorder %s38, 1
      %p329 = por %p327, %p328
      %p330 = scmp.ne.s32.totalorder %s321, %s322
      %p331 = scmp.eq.s32.totalorder %s38, 0
      %p332 = por %p330, %p331
      %p333 = scmp.ne.s32.totalorder %s321, %s322
      %p334 = scmp.eq.s32.totalorder %s39, 1
      %p335 = por %p333, %p334
      %p337 = scmp.ne.s32.totalorder %s322, %s336
      %p338 = scmp.eq.s32.totalorder %s39, 0
      %p339 = por %p337, %p338
      %s341 = sadd.s32 %s340, 1
      %p344 = scmp.eq.s32.totalorder %s33, 1
      %p345 = scmp.ne.s32.totalorder %s340, %s342
      %p346 = scmp.eq.s32.totalorder %s33, 0
      %p347 = por %p345, %p346
      %p348 = scmp.ne.s32.totalorder %s340, %s342
      %p349 = scmp.eq.s32.totalorder %s38, 1
      %p350 = por %p348, %p349
      %p351 = scmp.ne.s32.totalorder %s342, %s343
      %p352 = scmp.eq.s32.totalorder %s38, 0
      %p353 = por %p351, %p352
      %p354 = scmp.ne.s32.totalorder %s342, %s343
      %p355 = scmp.eq.s32.totalorder %s39, 1
      %p356 = por %p354, %p355
      %p358 = scmp.ne.s32.totalorder %s343, %s357
      %p359 = scmp.eq.s32.totalorder %s39, 0
      %p360 = por %p358, %p359
      %s362 = sadd.s32 %s361, 1
      %p365 = scmp.eq.s32.totalorder %s33, 1
      %p366 = scmp.ne.s32.totalorder %s361, %s363
      %p367 = scmp.eq.s32.totalorder %s33, 0
      %p368 = por %p366, %p367
      %p369 = scmp.ne.s32.totalorder %s361, %s363
      %p370 = scmp.eq.s32.totalorder %s38, 1
      %p371 = por %p369, %p370
      %p372 = scmp.ne.s32.totalorder %s363, %s364
      %p373 = scmp.eq.s32.totalorder %s38, 0
      %p374 = por %p372, %p373
      %p375 = scmp.ne.s32.totalorder %s363, %s364
      %p376 = scmp.eq.s32.totalorder %s39, 1
      %p377 = por %p375, %p376
      %p379 = scmp.ne.s32.totalorder %s364, %s378
      %p380 = scmp.eq.s32.totalorder %s39, 0
      %p381 = por %p379, %p380
      %s383 = sadd.s32 %s382, 1
      %p386 = scmp.eq.s32.totalorder %s33, 1
      %p387 = scmp.ne.s32.totalorder %s382, %s384
      %p388 = scmp.eq.s32.totalorder %s33, 0
      %p389 = por %p387, %p388
      %p390 = scmp.ne.s32.totalorder %s382, %s384
      %p391 = scmp.eq.s32.totalorder %s38, 1
      %p392 = por %p390, %p391
      %p393 = scmp.ne.s32.totalorder %s384, %s385
      %p394 = scmp.eq.s32.totalorder %s38, 0
      %p395 = por %p393, %p394
      %p396 = scmp.ne.s32.totalorder %s384, %s385
      %p397 = scmp.eq.s32.totalorder %s39, 1
      %p398 = por %p396, %p397
      %p400 = scmp.ne.s32.totalorder %s385, %s399
      %p401 = scmp.eq.s32.totalorder %s39, 0
      %p402 = por %p400, %p401
      %s404 = sadd.s32 %s403, 1
      %p407 = scmp.eq.s32.totalorder %s33, 1
      %p408 = scmp.ne.s32.totalorder %s403, %s405
      %p409 = scmp.eq.s32.totalorder %s33, 0
      %p410 = por %p408, %p409
      %p411 = scmp.ne.s32.totalorder %s403, %s405
      %p412 = scmp.eq.s32.totalorder %s38, 1
      %p413 = por %p411, %p412
      %p414 = scmp.ne.s32.totalorder %s405, %s406
      %p415 = scmp.eq.s32.totalorder %s38, 0
      %p416 = por %p414, %p415
      %p417 = scmp.ne.s32.totalorder %s405, %s406
      %p418 = scmp.eq.s32.totalorder %s39, 1
      %p419 = por %p417, %p418
      %p421 = scmp.ne.s32.totalorder %s406, %s420
      %p422 = scmp.eq.s32.totalorder %s39, 0
      %p423 = por %p421, %p422
      %s425 = sadd.s32 %s424, 1
      %p428 = scmp.eq.s32.totalorder %s33, 1
      %p429 = scmp.ne.s32.totalorder %s424, %s426
      %p430 = scmp.eq.s32.totalorder %s33, 0
      %p431 = por %p429, %p430
      %p432 = scmp.ne.s32.totalorder %s424, %s426
      %p433 = scmp.eq.s32.totalorder %s38, 1
      %p434 = por %p432, %p433
      %p435 = scmp.ne.s32.totalorder %s426, %s427
      %p436 = scmp.eq.s32.totalorder %s38, 0
      %p437 = por %p435, %p436
      %p438 = scmp.ne.s32.totalorder %s426, %s427
      %p439 = scmp.eq.s32.totalorder %s39, 1
      %p440 = por %p438, %p439
      %p442 = scmp.ne.s32.totalorder %s427, %s441
      %p443 = scmp.eq.s32.totalorder %s39, 0
      %p444 = por %p442, %p443
      %s446 = sadd.s32 %s445, 1
      %p449 = scmp.eq.s32.totalorder %s33, 1
      %p450 = scmp.ne.s32.totalorder %s445, %s447
      %p451 = scmp.eq.s32.totalorder %s33, 0
      %p452 = por %p450, %p451
      %p453 = scmp.ne.s32.totalorder %s445, %s447
      %p454 = scmp.eq.s32.totalorder %s38, 1
      %p455 = por %p453, %p454
      %p456 = scmp.ne.s32.totalorder %s447, %s448
      %p457 = scmp.eq.s32.totalorder %s38, 0
      %p458 = por %p456, %p457
      %p459 = scmp.ne.s32.totalorder %s447, %s448
      %p460 = scmp.eq.s32.totalorder %s39, 1
      %p461 = por %p459, %p460
      %p463 = scmp.ne.s32.totalorder %s448, %s462
      %p464 = scmp.eq.s32.totalorder %s39, 0
      %p465 = por %p463, %p464
      %s467 = sadd.s32 %s466, 1
      %p470 = scmp.eq.s32.totalorder %s33, 1
      %p471 = scmp.ne.s32.totalorder %s466, %s468
      %p472 = scmp.eq.s32.totalorder %s33, 0
      %p473 = por %p471, %p472
      %p474 = scmp.ne.s32.totalorder %s466, %s468
      %p475 = scmp.eq.s32.totalorder %s38, 1
      %p476 = por %p474, %p475
      %p477 = scmp.ne.s32.totalorder %s468, %s469
      %p478 = scmp.eq.s32.totalorder %s38, 0
      %p479 = por %p477, %p478
      %p480 = scmp.ne.s32.totalorder %s468, %s469
      %p481 = scmp.eq.s32.totalorder %s39, 1
      %p482 = por %p480, %p481
      %p484 = scmp.ne.s32.totalorder %s469, %s483
      %p485 = scmp.eq.s32.totalorder %s39, 0
      %p486 = por %p484, %p485
      %s488 = sadd.s32 %s487, 1
      %p491 = scmp.eq.s32.totalorder %s33, 1
      %p492 = scmp.ne.s32.totalorder %s487, %s489
      %p493 = scmp.eq.s32.totalorder %s33, 0
      %p494 = por %p492, %p493
      %p495 = scmp.ne.s32.totalorder %s487, %s489
      %p496 = scmp.eq.s32.totalorder %s38, 1
      %p497 = por %p495, %p496
      %p498 = scmp.ne.s32.totalorder %s489, %s490
      %p499 = scmp.eq.s32.totalorder %s38, 0
      %p500 = por %p498, %p499
      %p501 = scmp.ne.s32.totalorder %s489, %s490
      %p502 = scmp.eq.s32.totalorder %s39, 1
      %p503 = por %p501, %p502
      %p505 = scmp.ne.s32.totalorder %s490, %s504
      %p506 = scmp.eq.s32.totalorder %s39, 0
      %p507 = por %p505, %p506
      %s509 = sadd.s32 %s508, 1
      %p512 = scmp.eq.s32.totalorder %s33, 1
      %p513 = scmp.ne.s32.totalorder %s508, %s510
      %p514 = scmp.eq.s32.totalorder %s33, 0
      %p515 = por %p513, %p514
      %p516 = scmp.ne.s32.totalorder %s508, %s510
      %p517 = scmp.eq.s32.totalorder %s38, 1
      %p518 = por %p516, %p517
      %p519 = scmp.ne.s32.totalorder %s510, %s511
      %p520 = scmp.eq.s32.totalorder %s38, 0
      %p521 = por %p519, %p520
      %p522 = scmp.ne.s32.totalorder %s510, %s511
      %p523 = scmp.eq.s32.totalorder %s39, 1
      %p524 = por %p522, %p523
      %p526 = scmp.ne.s32.totalorder %s511, %s525
      %p527 = scmp.eq.s32.totalorder %s39, 0
      %p528 = por %p526, %p527
      %s530 = sadd.s32 %s529, 1
      %p533 = scmp.eq.s32.totalorder %s33, 1
      %p534 = scmp.ne.s32.totalorder %s529, %s531
      %p535 = scmp.eq.s32.totalorder %s33, 0
      %p536 = por %p534, %p535
      %p537 = scmp.ne.s32.totalorder %s529, %s531
      %p538 = scmp.eq.s32.totalorder %s38, 1
      %p539 = por %p537, %p538
      %p540 = scmp.ne.s32.totalorder %s531, %s532
      %p541 = scmp.eq.s32.totalorder %s38, 0
      %p542 = por %p540, %p541
      %p543 = scmp.ne.s32.totalorder %s531, %s532
      %p544 = scmp.eq.s32.totalorder %s39, 1
      %p545 = por %p543, %p544
      %p547 = scmp.ne.s32.totalorder %s532, %s546
      %p548 = scmp.eq.s32.totalorder %s39, 0
      %p549 = por %p547, %p548
      %s551 = sadd.s32 %s550, 1
      %p554 = scmp.eq.s32.totalorder %s33, 1
      %p555 = scmp.ne.s32.totalorder %s550, %s552
      %p556 = scmp.eq.s32.totalorder %s33, 0
      %p557 = por %p555, %p556
      %p558 = scmp.ne.s32.totalorder %s550, %s552
      %p559 = scmp.eq.s32.totalorder %s38, 1
      %p560 = por %p558, %p559
      %p561 = scmp.ne.s32.totalorder %s552, %s553
      %p562 = scmp.eq.s32.totalorder %s38, 0
      %p563 = por %p561, %p562
      %p564 = scmp.ne.s32.totalorder %s552, %s553
      %p565 = scmp.eq.s32.totalorder %s39, 1
      %p566 = por %p564, %p565
      %p568 = scmp.ne.s32.totalorder %s553, %s567
      %p569 = scmp.eq.s32.totalorder %s39, 0
      %p570 = por %p568, %p569
      %s571 = ssub.s32 %s33, %s40
      %p572 = scmp.eq.s32.totalorder %s571, 0
      %s574 = sadd.s32 %s573, 1
      %s575 = scalar_select %p572, %s573, %s574
      %p578 = pneg %p572
      %p579 = scmp.eq.s32.totalorder %s33, 1
      %p580 = por %p578, %p579
      %p581 = scmp.ne.s32.totalorder %s573, %s576
      %p582 = scmp.eq.s32.totalorder %s33, 0
      %p583 = por %p581, %p582
      %p584 = scmp.ne.s32.totalorder %s573, %s576
      %p585 = scmp.eq.s32.totalorder %s38, 1
      %p586 = por %p584, %p585
      %p587 = scmp.ne.s32.totalorder %s576, %s577
      %p588 = scmp.eq.s32.totalorder %s38, 0
      %p589 = por %p587, %p588
      %p590 = scmp.ne.s32.totalorder %s576, %s577
      %p591 = scmp.eq.s32.totalorder %s39, 1
      %p592 = por %p590, %p591
      %p594 = scmp.ne.s32.totalorder %s577, %s593
      %p595 = scmp.eq.s32.totalorder %s39, 0
      %p596 = por %p594, %p595
      %p597 = scmp.le.s32.totalorder 1, %s33
      %p598 = scmp.lt.s32.totalorder %s33, 3
      %p599 = pnand %p597, %p598
      %p600 = pneg %p599
      // Predicated region
      $region9: #{small_texture_autoencoder_forward.1} parent=5 // pred_check
        _
      $region10: #{small_texture_autoencoder_forward.1} parent=5 // pred_check_branch
        %602 = sbr.rel (%p599) target = $region12
      $region11: #{small_texture_autoencoder_forward.1} parent=5 // pred_region
        %s603 = ssub.s32 %s33, 1
        // Predicated region
        $region13: #{small_texture_autoencoder_forward.1} parent=11 // pred_check
          %p604 = pneg %p80
        $region14: #{small_texture_autoencoder_forward.1} parent=11 // pred_check_branch
          %606 = sbr.rel (%p604) target = $region16
        $region15: #{small_texture_autoencoder_forward.1} parent=11 // pred_region
          %s608 = ssub.s32 18432, 18432
          %609 = vsyncadd [#allocation11], %s608
          %s610 = sshll.u32 [#allocation10], 4
          %s611 = int_to_ptr.vmem [resolvable:$true] %s610
          %616 = dma.hbm_to_vmem [thread:$0]  %s1, 18432, %s611, [#allocation11], 256, 256, 16
        $region16: #{small_texture_autoencoder_forward.1} parent=11 // pred_fallthru
          _
        // Predicated region
        $region17: #{small_texture_autoencoder_forward.1} parent=11 // pred_check
          %p617 = pneg %p101
        $region18: #{small_texture_autoencoder_forward.1} parent=11 // pred_check_branch
          %619 = sbr.rel (%p617) target = $region20
        $region19: #{small_texture_autoencoder_forward.1} parent=11 // pred_region
          _
        $region20: #{small_texture_autoencoder_forward.1} parent=11 // pred_fallthru
          _
        // Predicated region
        $region21: #{small_texture_autoencoder_forward.1} parent=11 // pred_check
          %p620 = pneg %p122
        $region22: #{small_texture_autoencoder_forward.1} parent=11 // pred_check_branch
          %622 = sbr.rel (%p620) target = $region24
        $region23: #{small_texture_autoencoder_forward.1} parent=11 // pred_region
          _
        $region24: #{small_texture_autoencoder_forward.1} parent=11 // pred_fallthru
          _
        // Predicated region
        $region25: #{small_texture_autoencoder_forward.1} parent=11 // pred_check
          %p623 = pneg %p143
        $region26: #{small_texture_autoencoder_forward.1} parent=11 // pred_check_branch
          %625 = sbr.rel (%p623) target = $region28
        $region27: #{small_texture_autoencoder_forward.1} parent=11 // pred_region
          _
        $region28: #{small_texture_autoencoder_forward.1} parent=11 // pred_fallthru
          _
        // Predicated region
        $region29: #{small_texture_autoencoder_forward.1} parent=11 // pred_check
          %p626 = pneg %p164
        $region30: #{small_texture_autoencoder_forward.1} parent=11 // pred_check_branch
          %628 = sbr.rel (%p626) target = $region32
        $region31: #{small_texture_autoencoder_forward.1} parent=11 // pred_region
          _
        $region32: #{small_texture_autoencoder_forward.1} parent=11 // pred_fallthru
          _
        // Predicated region
        $region33: #{small_texture_autoencoder_forward.1} parent=11 // pred_check
          %p629 = pneg %p185
        $region34: #{small_texture_autoencoder_forward.1} parent=11 // pred_check_branch
          %631 = sbr.rel (%p629) target = $region36
        $region35: #{small_texture_autoencoder_forward.1} parent=11 // pred_region
          _
        $region36: #{small_texture_autoencoder_forward.1} parent=11 // pred_fallthru
          _
        // Predicated region
        $region37: #{small_texture_autoencoder_forward.1} parent=11 // pred_check
          %p632 = pneg %p206
        $region38: #{small_texture_autoencoder_forward.1} parent=11 // pred_check_branch
          %634 = sbr.rel (%p632) target = $region40
        $region39: #{small_texture_autoencoder_forward.1} parent=11 // pred_region
          _
        $region40: #{small_texture_autoencoder_forward.1} parent=11 // pred_fallthru
          _
        // Predicated region
        $region41: #{small_texture_autoencoder_forward.1} parent=11 // pred_check
          %p635 = pneg %p227
        $region42: #{small_texture_autoencoder_forward.1} parent=11 // pred_check_branch
          %637 = sbr.rel (%p635) target = $region44
        $region43: #{small_texture_autoencoder_forward.1} parent=11 // pred_region
          %s639 = ssub.s32 9216, 9216
          %640 = vsyncadd [#allocation13], %s639
          %s641 = sshll.u32 [#allocation12], 4
          %s642 = int_to_ptr.vmem [resolvable:$true] %s641
          %647 = dma.hbm_to_vmem [thread:$0]  %s8, 9216, %s642, [#allocation13], 128, 128, 8
        $region44: #{small_texture_autoencoder_forward.1} parent=11 // pred_fallthru
          _
        // Predicated region
        $region45: #{small_texture_autoencoder_forward.1} parent=11 // pred_check
          %p648 = pneg %p248
        $region46: #{small_texture_autoencoder_forward.1} parent=11 // pred_check_branch
          %650 = sbr.rel (%p648) target = $region48
        $region47: #{small_texture_autoencoder_forward.1} parent=11 // pred_region
          _
        $region48: #{small_texture_autoencoder_forward.1} parent=11 // pred_fallthru
          _
        // Predicated region
        $region49: #{small_texture_autoencoder_forward.1} parent=11 // pred_check
          %p651 = pneg %p269
        $region50: #{small_texture_autoencoder_forward.1} parent=11 // pred_check_branch
          %653 = sbr.rel (%p651) target = $region52
        $region51: #{small_texture_autoencoder_forward.1} parent=11 // pred_region
          _
        $region52: #{small_texture_autoencoder_forward.1} parent=11 // pred_fallthru
          _
        // Predicated region
        $region53: #{small_texture_autoencoder_forward.1} parent=11 // pred_check
          %p654 = pneg %p290
        $region54: #{small_texture_autoencoder_forward.1} parent=11 // pred_check_branch
          %656 = sbr.rel (%p654) target = $region56
        $region55: #{small_texture_autoencoder_forward.1} parent=11 // pred_region
          _
        $region56: #{small_texture_autoencoder_forward.1} parent=11 // pred_fallthru
          _
        // Predicated region
        $region57: #{small_texture_autoencoder_forward.1} parent=11 // pred_check
          %p657 = pneg %p311
        $region58: #{small_texture_autoencoder_forward.1} parent=11 // pred_check_branch
          %659 = sbr.rel (%p657) target = $region60
        $region59: #{small_texture_autoencoder_forward.1} parent=11 // pred_region
          _
        $region60: #{small_texture_autoencoder_forward.1} parent=11 // pred_fallthru
          _
        // Predicated region
        $region61: #{small_texture_autoencoder_forward.1} parent=11 // pred_check
          %p660 = pneg %p332
        $region62: #{small_texture_autoencoder_forward.1} parent=11 // pred_check_branch
          %662 = sbr.rel (%p660) target = $region64
        $region63: #{small_texture_autoencoder_forward.1} parent=11 // pred_region
          _
        $region64: #{small_texture_autoencoder_forward.1} parent=11 // pred_fallthru
          _
        // Predicated region
        $region65: #{small_texture_autoencoder_forward.1} parent=11 // pred_check
          %p663 = pneg %p353
        $region66: #{small_texture_autoencoder_forward.1} parent=11 // pred_check_branch
          %665 = sbr.rel (%p663) target = $region68
        $region67: #{small_texture_autoencoder_forward.1} parent=11 // pred_region
          _
        $region68: #{small_texture_autoencoder_forward.1} parent=11 // pred_fallthru
          _
        // Predicated region
        $region69: #{small_texture_autoencoder_forward.1} parent=11 // pred_check
          %p666 = pneg %p374
        $region70: #{small_texture_autoencoder_forward.1} parent=11 // pred_check_branch
          %668 = sbr.rel (%p666) target = $region72
        $region71: #{small_texture_autoencoder_forward.1} parent=11 // pred_region
          _
        $region72: #{small_texture_autoencoder_forward.1} parent=11 // pred_fallthru
          _
        // Predicated region
        $region73: #{small_texture_autoencoder_forward.1} parent=11 // pred_check
          %p669 = pneg %p395
        $region74: #{small_texture_autoencoder_forward.1} parent=11 // pred_check_branch
          %671 = sbr.rel (%p669) target = $region76
        $region75: #{small_texture_autoencoder_forward.1} parent=11 // pred_region
          _
        $region76: #{small_texture_autoencoder_forward.1} parent=11 // pred_fallthru
          _
        // Predicated region
        $region77: #{small_texture_autoencoder_forward.1} parent=11 // pred_check
          %p672 = pneg %p416
        $region78: #{small_texture_autoencoder_forward.1} parent=11 // pred_check_branch
          %674 = sbr.rel (%p672) target = $region80
        $region79: #{small_texture_autoencoder_forward.1} parent=11 // pred_region
          _
        $region80: #{small_texture_autoencoder_forward.1} parent=11 // pred_fallthru
          _
        // Predicated region
        $region81: #{small_texture_autoencoder_forward.1} parent=11 // pred_check
          %p675 = pneg %p437
        $region82: #{small_texture_autoencoder_forward.1} parent=11 // pred_check_branch
          %677 = sbr.rel (%p675) target = $region84
        $region83: #{small_texture_autoencoder_forward.1} parent=11 // pred_region
          _
        $region84: #{small_texture_autoencoder_forward.1} parent=11 // pred_fallthru
          _
        // Predicated region
        $region85: #{small_texture_autoencoder_forward.1} parent=11 // pred_check
          %p678 = pneg %p458
        $region86: #{small_texture_autoencoder_forward.1} parent=11 // pred_check_branch
          %680 = sbr.rel (%p678) target = $region88
        $region87: #{small_texture_autoencoder_forward.1} parent=11 // pred_region
          _
        $region88: #{small_texture_autoencoder_forward.1} parent=11 // pred_fallthru
          _
        // Predicated region
        $region89: #{small_texture_autoencoder_forward.1} parent=11 // pred_check
          %p681 = pneg %p479
        $region90: #{small_texture_autoencoder_forward.1} parent=11 // pred_check_branch
          %683 = sbr.rel (%p681) target = $region92
        $region91: #{small_texture_autoencoder_forward.1} parent=11 // pred_region
          _
        $region92: #{small_texture_autoencoder_forward.1} parent=11 // pred_fallthru
          _
        // Predicated region
        $region93: #{small_texture_autoencoder_forward.1} parent=11 // pred_check
          %p684 = pneg %p500
        $region94: #{small_texture_autoencoder_forward.1} parent=11 // pred_check_branch
          %686 = sbr.rel (%p684) target = $region96
        $region95: #{small_texture_autoencoder_forward.1} parent=11 // pred_region
          _
        $region96: #{small_texture_autoencoder_forward.1} parent=11 // pred_fallthru
          _
        // Predicated region
        $region97: #{small_texture_autoencoder_forward.1} parent=11 // pred_check
          %p687 = pneg %p521
        $region98: #{small_texture_autoencoder_forward.1} parent=11 // pred_check_branch
          %689 = sbr.rel (%p687) target = $region100
        $region99: #{small_texture_autoencoder_forward.1} parent=11 // pred_region
          _
        $region100: #{small_texture_autoencoder_forward.1} parent=11 // pred_fallthru
          _
        // Predicated region
        $region101: #{small_texture_autoencoder_forward.1} parent=11 // pred_check
          %p690 = pneg %p542
        $region102: #{small_texture_autoencoder_forward.1} parent=11 // pred_check_branch
          %692 = sbr.rel (%p690) target = $region104
        $region103: #{small_texture_autoencoder_forward.1} parent=11 // pred_region
          _
        $region104: #{small_texture_autoencoder_forward.1} parent=11 // pred_fallthru
          _
        // Predicated region
        $region105: #{small_texture_autoencoder_forward.1} parent=11 // pred_check
          %p693 = pneg %p563
        $region106: #{small_texture_autoencoder_forward.1} parent=11 // pred_check_branch
          %695 = sbr.rel (%p693) target = $region108
        $region107: #{small_texture_autoencoder_forward.1} parent=11 // pred_region
          _
        $region108: #{small_texture_autoencoder_forward.1} parent=11 // pred_fallthru
          _
      $region12: #{small_texture_autoencoder_forward.1} parent=5 // pred_fallthru
        _
      %p696 = scmp.lt.s32.totalorder %s33, 2
      // Predicated region
      $region109: #{small_texture_autoencoder_forward.1} parent=5 // pred_check
        %p697 = pneg %p696
      $region110: #{small_texture_autoencoder_forward.1} parent=5 // pred_check_branch
        %699 = sbr.rel (%p697) target = $region112
      $region111: #{small_texture_autoencoder_forward.1} parent=5 // pred_region
        // Predicated region
        $region113: #{small_texture_autoencoder_forward.1} parent=111 // pred_check
          %p700 = pneg %p53
        $region114: #{small_texture_autoencoder_forward.1} parent=111 // pred_check_branch
          %702 = sbr.rel (%p700) target = $region116
        $region115: #{small_texture_autoencoder_forward.1} parent=111 // pred_region
          %p703 = scmp.lt.s32.totalorder %s33, 1
          %s704 = scalar_select %p703, %s33, 1
          %s705 = smul.addr %s704, 32
          %s706 = smul.addr %s705, 8
          %s707 = scalar_lea.vmem %s0, %s706
        $region116: #{small_texture_autoencoder_forward.1} parent=111 // pred_fallthru
          _
      $region112: #{small_texture_autoencoder_forward.1} parent=5 // pred_fallthru
        _
      %p708 = scmp.le.s32.totalorder 1, %s33
      %p709 = scmp.lt.s32.totalorder %s33, 3
      %p710 = pnand %p708, %p709
      %p711 = pneg %p710
      // Predicated region
      $region117: #{small_texture_autoencoder_forward.1} parent=5 // pred_check
        _
      $region118: #{small_texture_autoencoder_forward.1} parent=5 // pred_check_branch
        %713 = sbr.rel (%p710) target = $region120
      $region119: #{small_texture_autoencoder_forward.1} parent=5 // pred_region
        %s714 = ssub.s32 %s33, 1
        // Predicated region
        $region121: #{small_texture_autoencoder_forward.1} parent=119 // pred_check
          %p715 = pneg %p80
        $region122: #{small_texture_autoencoder_forward.1} parent=119 // pred_check_branch
          %717 = sbr.rel (%p715) target = $region124
        $region123: #{small_texture_autoencoder_forward.1} parent=119 // pred_region
          %718 = dma.done [#allocation11], 18432
        $region124: #{small_texture_autoencoder_forward.1} parent=119 // pred_fallthru
          _
        // Predicated region
        $region125: #{small_texture_autoencoder_forward.1} parent=119 // pred_check
          %p719 = pneg %p227
        $region126: #{small_texture_autoencoder_forward.1} parent=119 // pred_check_branch
          %721 = sbr.rel (%p719) target = $region128
        $region127: #{small_texture_autoencoder_forward.1} parent=119 // pred_region
          %722 = dma.done [#allocation13], 9216
        $region128: #{small_texture_autoencoder_forward.1} parent=119 // pred_fallthru
          _
        %p723 = scmp.lt.s32.totalorder %s38, 1
        %s724 = scalar_select %p723, %s38, 1
        %s725 = smul.addr %s724, 32
        %s726 = smul.addr %s725, 8
        %s727 = scalar_lea.vmem %s0, %s726
        %p728 = pneg %p59
        %p729 = pneg %p56
        %p730 = pneg %p80
        %p731 = pneg %p77
        %p732 = pneg %p101
        %p733 = pneg %p98
        %p734 = pneg %p122
        %p735 = pneg %p119
        %p736 = pneg %p143
        %p737 = pneg %p140
        %p738 = pneg %p164
        %p739 = pneg %p161
        %p740 = pneg %p185
        %p741 = pneg %p182
        %p742 = pneg %p206
        %p743 = pneg %p203
        %p744 = pneg %p227
        %p745 = pneg %p224
        %p746 = pneg %p248
        %p747 = pneg %p245
        %p748 = pneg %p269
        %p749 = pneg %p266
        %p750 = pneg %p290
        %p751 = pneg %p287
        %p752 = pneg %p311
        %p753 = pneg %p308
        %p754 = pneg %p332
        %p755 = pneg %p329
        %p756 = pneg %p353
        %p757 = pneg %p350
        %p758 = pneg %p374
        %p759 = pneg %p371
        %p760 = pneg %p395
        %p761 = pneg %p392
        %p762 = pneg %p416
        %p763 = pneg %p413
        %p764 = pneg %p437
        %p765 = pneg %p434
        %p766 = pneg %p458
        %p767 = pneg %p455
        %p768 = pneg %p479
        %p769 = pneg %p476
        %p770 = pneg %p500
        %p771 = pneg %p497
        %p772 = pneg %p521
        %p773 = pneg %p518
        %p774 = pneg %p542
        %p775 = pneg %p539
        %p776 = pneg %p563
        %p777 = pneg %p560
        %p778 = pneg %p589
        %p779 = pneg %p586
        %p780 = scmp.lt.s32.totalorder %s38, 1
        %s781 = scalar_select %p780, %s38, 1
        %s782 = smul.addr %s781, 32
        %s783 = smul.addr %s782, 8
        %s784 = scalar_lea.vmem %s25, %s783
        %p785 = scmp.lt.s32.totalorder %s38, 1
        %s786 = scalar_select %p785, %s38, 1
        %s787 = smul.addr %s786, 32
        %s788 = smul.addr %s787, 8
        %s789 = scalar_lea.vmem %s0, %s788
        %p790 = scmp.lt.s32.totalorder %s38, 1
        %s791 = scalar_select %p790, %s38, 1
        %s792 = smul.addr %s791, 32
        %s793 = smul.addr %s792, 8
        %s794 = scalar_lea.vmem %s25, %s793
        %v795 = vld [vmem:[%s789] sm:$0xff]
        %v796 = vld [vmem:[%s789 + $0x8] sm:$0xff]
        %v797 = vld [vmem:[%s789 + $0x10] sm:$0xff]
        %v798 = vld [vmem:[%s789 + $0x18] sm:$0xff]
        %v799 = vld [vmem:[%s789 + $0x20] sm:$0xff]
        %v800 = vld [vmem:[%s789 + $0x28] sm:$0xff]
        %v801 = vld [vmem:[%s789 + $0x30] sm:$0xff]
        %v802 = vld [vmem:[%s789 + $0x38] sm:$0xff]
        %v803 = vld [vmem:[%s789 + $0x40] sm:$0xff]
        %v804 = vld [vmem:[%s789 + $0x48] sm:$0xff]
        %v805 = vld [vmem:[%s789 + $0x50] sm:$0xff]
        %v806 = vld [vmem:[%s789 + $0x58] sm:$0xff]
        %v807 = vld [vmem:[%s789 + $0x60] sm:$0xff]
        %v808 = vld [vmem:[%s789 + $0x68] sm:$0xff]
        %v809 = vld [vmem:[%s789 + $0x70] sm:$0xff]
        %v810 = vld [vmem:[%s789 + $0x78] sm:$0xff]
        %v811 = vld [vmem:[%s789 + $0x80] sm:$0xff]
        %v812 = vld [vmem:[%s789 + $0x88] sm:$0xff]
        %v813 = vld [vmem:[%s789 + $0x90] sm:$0xff]
        %v814 = vld [vmem:[%s789 + $0x98] sm:$0xff]
        %v815 = vld [vmem:[%s789 + $0xa0] sm:$0xff]
        %v816 = vld [vmem:[%s789 + $0xa8] sm:$0xff]
        %v817 = vld [vmem:[%s789 + $0xb0] sm:$0xff]
        %v818 = vld [vmem:[%s789 + $0xb8] sm:$0xff]
        %v819 = vld [vmem:[%s789 + $0xc0] sm:$0xff]
        %v820 = vld [vmem:[%s789 + $0xc8] sm:$0xff]
        %v821 = vld [vmem:[%s789 + $0xd0] sm:$0xff]
        %v822 = vld [vmem:[%s789 + $0xd8] sm:$0xff]
        %v823 = vld [vmem:[%s789 + $0xe0] sm:$0xff]
        %v824 = vld [vmem:[%s789 + $0xe8] sm:$0xff]
        %v825 = vld [vmem:[%s789 + $0xf0] sm:$0xff]
        %v826 = vld [vmem:[%s789 + $0xf8] sm:$0xff]
        %v827 = vld [vmem:[#allocation10] sm:$0xff]
        %v828 = vld [vmem:[#allocation10 + $0x8] sm:$0xff]
        %v829 = vld [vmem:[#allocation10 + $0x10] sm:$0xff]
        %v830 = vld [vmem:[#allocation10 + $0x18] sm:$0xff]
        %v831 = vld [vmem:[#allocation10 + $0x20] sm:$0xff]
        %v832 = vld [vmem:[#allocation10 + $0x28] sm:$0xff]
        %v833 = vld [vmem:[#allocation10 + $0x30] sm:$0xff]
        %v834 = vld [vmem:[#allocation10 + $0x38] sm:$0xff]
        %v835 = vld [vmem:[#allocation10 + $0x40] sm:$0xff]
        %v836 = vld [vmem:[#allocation10 + $0x48] sm:$0xff]
        %v837 = vld [vmem:[#allocation10 + $0x50] sm:$0xff]
        %v838 = vld [vmem:[#allocation10 + $0x58] sm:$0xff]
        %v839 = vld [vmem:[#allocation10 + $0x60] sm:$0xff]
        %v840 = vld [vmem:[#allocation10 + $0x68] sm:$0xff]
        %v841 = vld [vmem:[#allocation10 + $0x70] sm:$0xff]
        %v842 = vld [vmem:[#allocation10 + $0x78] sm:$0xff]
        %v843 = vld [vmem:[#allocation10 + $0x80] sm:$0xff]
        %v844 = vld [vmem:[#allocation10 + $0x88] sm:$0xff]
        %v845 = vld [vmem:[#allocation10 + $0x90] sm:$0xff]
        %v846 = vld [vmem:[#allocation10 + $0x98] sm:$0xff]
        %v847 = vld [vmem:[#allocation10 + $0xa0] sm:$0xff]
        %v848 = vld [vmem:[#allocation10 + $0xa8] sm:$0xff]
        %v849 = vld [vmem:[#allocation10 + $0xb0] sm:$0xff]
        %v850 = vld [vmem:[#allocation10 + $0xb8] sm:$0xff]
        %v851 = vld [vmem:[#allocation10 + $0xc0] sm:$0xff]
        %v852 = vld [vmem:[#allocation10 + $0xc8] sm:$0xff]
        %v853 = vld [vmem:[#allocation10 + $0xd0] sm:$0xff]
        %v854 = vld [vmem:[#allocation10 + $0xd8] sm:$0xff]
        %v855 = vld [vmem:[#allocation10 + $0xe0] sm:$0xff]
        %v856 = vld [vmem:[#allocation10 + $0xe8] sm:$0xff]
        %v857 = vld [vmem:[#allocation10 + $0xf0] sm:$0xff]
        %v858 = vld [vmem:[#allocation10 + $0xf8] sm:$0xff]
        %v859 = vld [vmem:[#allocation10 + $0x100] sm:$0xff]
        %v860 = vld [vmem:[#allocation10 + $0x108] sm:$0xff]
        %v861 = vld [vmem:[#allocation10 + $0x110] sm:$0xff]
        %v862 = vld [vmem:[#allocation10 + $0x118] sm:$0xff]
        %v863 = vld [vmem:[#allocation10 + $0x120] sm:$0xff]
        %v864 = vld [vmem:[#allocation10 + $0x128] sm:$0xff]
        %v865 = vld [vmem:[#allocation10 + $0x130] sm:$0xff]
        %v866 = vld [vmem:[#allocation10 + $0x138] sm:$0xff]
        %v867 = vld [vmem:[#allocation10 + $0x140] sm:$0xff]
        %v868 = vld [vmem:[#allocation10 + $0x148] sm:$0xff]
        %v869 = vld [vmem:[#allocation10 + $0x150] sm:$0xff]
        %v870 = vld [vmem:[#allocation10 + $0x158] sm:$0xff]
        %v871 = vld [vmem:[#allocation10 + $0x160] sm:$0xff]
        %v872 = vld [vmem:[#allocation10 + $0x168] sm:$0xff]
        %v873 = vld [vmem:[#allocation10 + $0x170] sm:$0xff]
        %v874 = vld [vmem:[#allocation10 + $0x178] sm:$0xff]
        %v875 = vld [vmem:[#allocation10 + $0x180] sm:$0xff]
        %v876 = vld [vmem:[#allocation10 + $0x188] sm:$0xff]
        %v877 = vld [vmem:[#allocation10 + $0x190] sm:$0xff]
        %v878 = vld [vmem:[#allocation10 + $0x198] sm:$0xff]
        %v879 = vld [vmem:[#allocation10 + $0x1a0] sm:$0xff]
        %v880 = vld [vmem:[#allocation10 + $0x1a8] sm:$0xff]
        %v881 = vld [vmem:[#allocation10 + $0x1b0] sm:$0xff]
        %v882 = vld [vmem:[#allocation10 + $0x1b8] sm:$0xff]
        %v883 = vld [vmem:[#allocation10 + $0x1c0] sm:$0xff]
        %v884 = vld [vmem:[#allocation10 + $0x1c8] sm:$0xff]
        %v885 = vld [vmem:[#allocation10 + $0x1d0] sm:$0xff]
        %v886 = vld [vmem:[#allocation10 + $0x1d8] sm:$0xff]
        %v887 = vld [vmem:[#allocation10 + $0x1e0] sm:$0xff]
        %v888 = vld [vmem:[#allocation10 + $0x1e8] sm:$0xff]
        %v889 = vld [vmem:[#allocation10 + $0x1f0] sm:$0xff]
        %v890 = vld [vmem:[#allocation10 + $0x1f8] sm:$0xff]
        %v891 = vld [vmem:[#allocation10 + $0x200] sm:$0xff]
        %v892 = vld [vmem:[#allocation10 + $0x208] sm:$0xff]
        %v893 = vld [vmem:[#allocation10 + $0x210] sm:$0xff]
        %v894 = vld [vmem:[#allocation10 + $0x218] sm:$0xff]
        %v895 = vld [vmem:[#allocation10 + $0x220] sm:$0xff]
        %v896 = vld [vmem:[#allocation10 + $0x228] sm:$0xff]
        %v897 = vld [vmem:[#allocation10 + $0x230] sm:$0xff]
        %v898 = vld [vmem:[#allocation10 + $0x238] sm:$0xff]
        %v899 = vld [vmem:[#allocation10 + $0x240] sm:$0xff]
        %v900 = vld [vmem:[#allocation10 + $0x248] sm:$0xff]
        %v901 = vld [vmem:[#allocation10 + $0x250] sm:$0xff]
        %v902 = vld [vmem:[#allocation10 + $0x258] sm:$0xff]
        %v903 = vld [vmem:[#allocation10 + $0x260] sm:$0xff]
        %v904 = vld [vmem:[#allocation10 + $0x268] sm:$0xff]
        %v905 = vld [vmem:[#allocation10 + $0x270] sm:$0xff]
        %v906 = vld [vmem:[#allocation10 + $0x278] sm:$0xff]
        %v907 = vld [vmem:[#allocation10 + $0x280] sm:$0xff]
        %v908 = vld [vmem:[#allocation10 + $0x288] sm:$0xff]
        %v909 = vld [vmem:[#allocation10 + $0x290] sm:$0xff]
        %v910 = vld [vmem:[#allocation10 + $0x298] sm:$0xff]
        %v911 = vld [vmem:[#allocation10 + $0x2a0] sm:$0xff]
        %v912 = vld [vmem:[#allocation10 + $0x2a8] sm:$0xff]
        %v913 = vld [vmem:[#allocation10 + $0x2b0] sm:$0xff]
        %v914 = vld [vmem:[#allocation10 + $0x2b8] sm:$0xff]
        %v915 = vld [vmem:[#allocation10 + $0x2c0] sm:$0xff]
        %v916 = vld [vmem:[#allocation10 + $0x2c8] sm:$0xff]
        %v917 = vld [vmem:[#allocation10 + $0x2d0] sm:$0xff]
        %v918 = vld [vmem:[#allocation10 + $0x2d8] sm:$0xff]
        %v919 = vld [vmem:[#allocation10 + $0x2e0] sm:$0xff]
        %v920 = vld [vmem:[#allocation10 + $0x2e8] sm:$0xff]
        %v921 = vld [vmem:[#allocation10 + $0x2f0] sm:$0xff]
        %v922 = vld [vmem:[#allocation10 + $0x2f8] sm:$0xff]
        %v923 = vld [vmem:[#allocation10 + $0x300] sm:$0xff]
        %v924 = vld [vmem:[#allocation10 + $0x308] sm:$0xff]
        %v925 = vld [vmem:[#allocation10 + $0x310] sm:$0xff]
        %v926 = vld [vmem:[#allocation10 + $0x318] sm:$0xff]
        %v927 = vld [vmem:[#allocation10 + $0x320] sm:$0xff]
        %v928 = vld [vmem:[#allocation10 + $0x328] sm:$0xff]
        %v929 = vld [vmem:[#allocation10 + $0x330] sm:$0xff]
        %v930 = vld [vmem:[#allocation10 + $0x338] sm:$0xff]
        %v931 = vld [vmem:[#allocation10 + $0x340] sm:$0xff]
        %v932 = vld [vmem:[#allocation10 + $0x348] sm:$0xff]
        %v933 = vld [vmem:[#allocation10 + $0x350] sm:$0xff]
        %v934 = vld [vmem:[#allocation10 + $0x358] sm:$0xff]
        %v935 = vld [vmem:[#allocation10 + $0x360] sm:$0xff]
        %v936 = vld [vmem:[#allocation10 + $0x368] sm:$0xff]
        %v937 = vld [vmem:[#allocation10 + $0x370] sm:$0xff]
        %v938 = vld [vmem:[#allocation10 + $0x378] sm:$0xff]
        %v939 = vld [vmem:[#allocation10 + $0x380] sm:$0xff]
        %v940 = vld [vmem:[#allocation10 + $0x388] sm:$0xff]
        %v941 = vld [vmem:[#allocation10 + $0x390] sm:$0xff]
        %v942 = vld [vmem:[#allocation10 + $0x398] sm:$0xff]
        %v943 = vld [vmem:[#allocation10 + $0x3a0] sm:$0xff]
        %v944 = vld [vmem:[#allocation10 + $0x3a8] sm:$0xff]
        %v945 = vld [vmem:[#allocation10 + $0x3b0] sm:$0xff]
        %v946 = vld [vmem:[#allocation10 + $0x3b8] sm:$0xff]
        %v947 = vld [vmem:[#allocation10 + $0x3c0] sm:$0xff]
        %v948 = vld [vmem:[#allocation10 + $0x3c8] sm:$0xff]
        %v949 = vld [vmem:[#allocation10 + $0x3d0] sm:$0xff]
        %v950 = vld [vmem:[#allocation10 + $0x3d8] sm:$0xff]
        %v951 = vld [vmem:[#allocation10 + $0x3e0] sm:$0xff]
        %v952 = vld [vmem:[#allocation10 + $0x3e8] sm:$0xff]
        %v953 = vld [vmem:[#allocation10 + $0x3f0] sm:$0xff]
        %v954 = vld [vmem:[#allocation10 + $0x3f8] sm:$0xff]
        %v955 = vld [vmem:[#allocation10 + $0x400] sm:$0xff]
        %v956 = vld [vmem:[#allocation10 + $0x408] sm:$0xff]
        %v957 = vld [vmem:[#allocation10 + $0x410] sm:$0xff]
        %v958 = vld [vmem:[#allocation10 + $0x418] sm:$0xff]
        %v959 = vld [vmem:[#allocation10 + $0x420] sm:$0xff]
        %v960 = vld [vmem:[#allocation10 + $0x428] sm:$0xff]
        %v961 = vld [vmem:[#allocation10 + $0x430] sm:$0xff]
        %v962 = vld [vmem:[#allocation10 + $0x438] sm:$0xff]
        %v963 = vld [vmem:[#allocation10 + $0x440] sm:$0xff]
        %v964 = vld [vmem:[#allocation10 + $0x448] sm:$0xff]
        %v965 = vld [vmem:[#allocation10 + $0x450] sm:$0xff]
        %v966 = vld [vmem:[#allocation10 + $0x458] sm:$0xff]
        %v967 = vld [vmem:[#allocation10 + $0x460] sm:$0xff]
        %v968 = vld [vmem:[#allocation10 + $0x468] sm:$0xff]
        %v969 = vld [vmem:[#allocation10 + $0x470] sm:$0xff]
        %v970 = vld [vmem:[#allocation10 + $0x478] sm:$0xff]
        %971 = vmatprep.subr.mxu0 0.0
        %972 = vmatpush1.msra.mxu0 %v810
        %973 = vmatprep.subr.mxu0 0.0
        %974 = vmatpush1.msra.mxu0 %v809
        %975 = vmatprep.subr.mxu0 0.0
        %976 = vmatpush1.msra.mxu0 %v808
        %977 = vmatprep.subr.mxu0 0.0
        %978 = vmatpush1.msra.mxu0 %v807
        %979 = vmatprep.subr.mxu0 0.0
        %980 = vmatpush1.msra.mxu0 %v806
        %981 = vmatprep.subr.mxu0 0.0
        %982 = vmatpush1.msra.mxu0 %v805
        %983 = vmatprep.subr.mxu0 0.0
        %984 = vmatpush1.msra.mxu0 %v804
        %985 = vmatprep.subr.mxu0 0.0
        %986 = vmatpush1.msra.mxu0 %v803
        %987 = vmatprep.subr.mxu0 0.0
        %988 = vmatpush1.msra.mxu0 %v802
        %989 = vmatprep.subr.mxu0 0.0
        %990 = vmatpush1.msra.mxu0 %v801
        %991 = vmatprep.subr.mxu0 0.0
        %992 = vmatpush1.msra.mxu0 %v800
        %993 = vmatprep.subr.mxu0 0.0
        %994 = vmatpush1.msra.mxu0 %v799
        %995 = vmatprep.subr.mxu0 0.0
        %996 = vmatpush1.msra.mxu0 %v798
        %997 = vmatprep.subr.mxu0 0.0
        %998 = vmatpush1.msra.mxu0 %v797
        %999 = vmatprep.subr.mxu0 0.0
        %1000 = vmatpush1.msra.mxu0 %v796
        %1001 = vmatprep.subr.mxu0 0.0
        %1002 = vmatpush1.msra.mxu0 %v795
        %1003 = vmatprep.subr.mxu0 0.0
        %1004 = vmatpush2.msra.mxu0 %v826
        %1005 = vmatprep.subr.mxu0 0.0
        %1006 = vmatpush2.msra.mxu0 %v825
        %1007 = vmatprep.subr.mxu0 0.0
        %1008 = vmatpush2.msra.mxu0 %v824
        %1009 = vmatprep.subr.mxu0 0.0
        %1010 = vmatpush2.msra.mxu0 %v823
        %1011 = vmatprep.subr.mxu0 0.0
        %1012 = vmatpush2.msra.mxu0 %v822
        %1013 = vmatprep.subr.mxu0 0.0
        %1014 = vmatpush2.msra.mxu0 %v821
        %1015 = vmatprep.subr.mxu0 0.0
        %1016 = vmatpush2.msra.mxu0 %v820
        %1017 = vmatprep.subr.mxu0 0.0
        %1018 = vmatpush2.msra.mxu0 %v819
        %1019 = vmatprep.subr.mxu0 0.0
        %1020 = vmatpush2.msra.mxu0 %v818
        %1021 = vmatprep.subr.mxu0 0.0
        %1022 = vmatpush2.msra.mxu0 %v817
        %1023 = vmatprep.subr.mxu0 0.0
        %1024 = vmatpush2.msra.mxu0 %v816
        %1025 = vmatprep.subr.mxu0 0.0
        %1026 = vmatpush2.msra.mxu0 %v815
        %1027 = vmatprep.subr.mxu0 0.0
        %1028 = vmatpush2.msra.mxu0 %v814
        %1029 = vmatprep.subr.mxu0 0.0
        %1030 = vmatpush2.msra.mxu0 %v813
        %1031 = vmatprep.subr.mxu0 0.0
        %1032 = vmatpush2.msra.mxu0 %v812
        %1033 = vmatprep.subr.mxu0 0.0
        %1034 = vmatpush2.msra.mxu0 %v811
        %1035 = vmatprep.mubr.f32.mxu0 %v828
        %1036 = vmatmul.mubr.f32.gmra.mxu0 %v827
        %v1037 = vpop.f32.mrf.mxu0
        %v1038 = vadd.f32 0.0, %v1037
        %v1039 = vpop.f32.mrf.mxu0
        %1040 = vmatprep.mubr.f32.mxu0 %v830
        %1041 = vmatmul.mubr.f32.gmra.mxu0 %v829
        %v1042 = vpop.f32.mrf.mxu0
        %v1043 = vadd.f32 0.0, %v1042
        %v1044 = vpop.f32.mrf.mxu0
        %1045 = vmatprep.mubr.f32.mxu0 %v832
        %1046 = vmatmul.mubr.f32.gmra.mxu0 %v831
        %v1047 = vpop.f32.mrf.mxu0
        %v1048 = vadd.f32 0.0, %v1047
        %v1049 = vpop.f32.mrf.mxu0
        %1050 = vmatprep.mubr.f32.mxu0 %v834
        %1051 = vmatmul.mubr.f32.gmra.mxu0 %v833
        %v1052 = vpop.f32.mrf.mxu0
        %v1053 = vadd.f32 0.0, %v1052
        %v1054 = vpop.f32.mrf.mxu0
        %1055 = vmatprep.mubr.f32.mxu0 %v836
        %1056 = vmatmul.mubr.f32.gmra.mxu0 %v835
        %v1057 = vpop.f32.mrf.mxu0
        %v1058 = vadd.f32 0.0, %v1057
        %v1059 = vpop.f32.mrf.mxu0
        %1060 = vmatprep.mubr.f32.mxu0 %v838
        %1061 = vmatmul.mubr.f32.gmra.mxu0 %v837
        %v1062 = vpop.f32.mrf.mxu0
        %v1063 = vadd.f32 0.0, %v1062
        %v1064 = vpop.f32.mrf.mxu0
        %1065 = vmatprep.mubr.f32.mxu0 %v840
        %1066 = vmatmul.mubr.f32.gmra.mxu0 %v839
        %v1067 = vpop.f32.mrf.mxu0
        %v1068 = vadd.f32 0.0, %v1067
        %v1069 = vpop.f32.mrf.mxu0
        %1070 = vmatprep.mubr.f32.mxu0 %v842
        %1071 = vmatmul.mubr.f32.gmra.mxu0 %v841
        %v1072 = vpop.f32.mrf.mxu0
        %v1073 = vadd.f32 0.0, %v1072
        %v1074 = vpop.f32.mrf.mxu0
        %1075 = vmatprep.mubr.f32.mxu0 %v844
        %1076 = vmatmul.mubr.f32.gmra.mxu0 %v843
        %v1077 = vpop.f32.mrf.mxu0
        %v1078 = vadd.f32 0.0, %v1077
        %v1079 = vpop.f32.mrf.mxu0
        %1080 = vmatprep.mubr.f32.mxu0 %v846
        %1081 = vmatmul.mubr.f32.gmra.mxu0 %v845
        %v1082 = vpop.f32.mrf.mxu0
        %v1083 = vadd.f32 0.0, %v1082
        %v1084 = vpop.f32.mrf.mxu0
        %1085 = vmatprep.mubr.f32.mxu0 %v848
        %1086 = vmatmul.mubr.f32.gmra.mxu0 %v847
        %v1087 = vpop.f32.mrf.mxu0
        %v1088 = vadd.f32 0.0, %v1087
        %v1089 = vpop.f32.mrf.mxu0
        %1090 = vmatprep.mubr.f32.mxu0 %v850
        %1091 = vmatmul.mubr.f32.gmra.mxu0 %v849
        %v1092 = vpop.f32.mrf.mxu0
        %v1093 = vadd.f32 0.0, %v1092
        %v1094 = vpop.f32.mrf.mxu0
        %1095 = vmatprep.mubr.f32.mxu0 %v852
        %1096 = vmatmul.mubr.f32.gmra.mxu0 %v851
        %v1097 = vpop.f32.mrf.mxu0
        %v1098 = vadd.f32 0.0, %v1097
        %v1099 = vpop.f32.mrf.mxu0
        %1100 = vmatprep.mubr.f32.mxu0 %v854
        %1101 = vmatmul.mubr.f32.gmra.mxu0 %v853
        %v1102 = vpop.f32.mrf.mxu0
        %v1103 = vadd.f32 0.0, %v1102
        %v1104 = vpop.f32.mrf.mxu0
        %1105 = vmatprep.mubr.f32.mxu0 %v856
        %1106 = vmatmul.mubr.f32.gmra.mxu0 %v855
        %v1107 = vpop.f32.mrf.mxu0
        %v1108 = vadd.f32 0.0, %v1107
        %v1109 = vpop.f32.mrf.mxu0
        %1110 = vmatprep.mubr.f32.mxu0 %v858
        %1111 = vmatmul.mubr.f32.gmra.mxu0 %v857
        %v1112 = vpop.f32.mrf.mxu0
        %v1113 = vadd.f32 0.0, %v1112
        %v1114 = vpop.f32.mrf.mxu0
        %1115 = vmatprep.mubr.f32.mxu0 %v860
        %1116 = vmatmul.mubr.f32.gmra.mxu0 %v859
        %v1117 = vpop.f32.mrf.mxu0
        %v1118 = vadd.f32 0.0, %v1117
        %v1119 = vpop.f32.mrf.mxu0
        %1120 = vmatprep.mubr.f32.mxu0 %v862
        %1121 = vmatmul.mubr.f32.gmra.mxu0 %v861
        %v1122 = vpop.f32.mrf.mxu0
        %v1123 = vadd.f32 0.0, %v1122
        %v1124 = vpop.f32.mrf.mxu0
        %1125 = vmatprep.mubr.f32.mxu0 %v864
        %1126 = vmatmul.mubr.f32.gmra.mxu0 %v863
        %v1127 = vpop.f32.mrf.mxu0
        %v1128 = vadd.f32 0.0, %v1127
        %v1129 = vpop.f32.mrf.mxu0
        %1130 = vmatprep.mubr.f32.mxu0 %v866
        %1131 = vmatmul.mubr.f32.gmra.mxu0 %v865
        %v1132 = vpop.f32.mrf.mxu0
        %v1133 = vadd.f32 0.0, %v1132
        %v1134 = vpop.f32.mrf.mxu0
        %1135 = vmatprep.mubr.f32.mxu0 %v868
        %1136 = vmatmul.mubr.f32.gmra.mxu0 %v867
        %v1137 = vpop.f32.mrf.mxu0
        %v1138 = vadd.f32 0.0, %v1137
        %v1139 = vpop.f32.mrf.mxu0
        %1140 = vmatprep.mubr.f32.mxu0 %v870
        %1141 = vmatmul.mubr.f32.gmra.mxu0 %v869
        %v1142 = vpop.f32.mrf.mxu0
        %v1143 = vadd.f32 0.0, %v1142
        %v1144 = vpop.f32.mrf.mxu0
        %1145 = vmatprep.mubr.f32.mxu0 %v872
        %1146 = vmatmul.mubr.f32.gmra.mxu0 %v871
        %v1147 = vpop.f32.mrf.mxu0
        %v1148 = vadd.f32 0.0, %v1147
        %v1149 = vpop.f32.mrf.mxu0
        %1150 = vmatprep.mubr.f32.mxu0 %v874
        %1151 = vmatmul.mubr.f32.gmra.mxu0 %v873
        %v1152 = vpop.f32.mrf.mxu0
        %v1153 = vadd.f32 0.0, %v1152
        %v1154 = vpop.f32.mrf.mxu0
        %1155 = vmatprep.mubr.f32.mxu0 %v876
        %1156 = vmatmul.mubr.f32.gmra.mxu0 %v875
        %v1157 = vpop.f32.mrf.mxu0
        %v1158 = vadd.f32 0.0, %v1157
        %v1159 = vpop.f32.mrf.mxu0
        %1160 = vmatprep.mubr.f32.mxu0 %v878
        %1161 = vmatmul.mubr.f32.gmra.mxu0 %v877
        %v1162 = vpop.f32.mrf.mxu0
        %v1163 = vadd.f32 0.0, %v1162
        %v1164 = vpop.f32.mrf.mxu0
        %1165 = vmatprep.mubr.f32.mxu0 %v880
        %1166 = vmatmul.mubr.f32.gmra.mxu0 %v879
        %v1167 = vpop.f32.mrf.mxu0
        %v1168 = vadd.f32 0.0, %v1167
        %v1169 = vpop.f32.mrf.mxu0
        %1170 = vmatprep.mubr.f32.mxu0 %v882
        %1171 = vmatmul.mubr.f32.gmra.mxu0 %v881
        %v1172 = vpop.f32.mrf.mxu0
        %v1173 = vadd.f32 0.0, %v1172
        %v1174 = vpop.f32.mrf.mxu0
        %1175 = vmatprep.mubr.f32.mxu0 %v884
        %1176 = vmatmul.mubr.f32.gmra.mxu0 %v883
        %v1177 = vpop.f32.mrf.mxu0
        %v1178 = vadd.f32 0.0, %v1177
        %v1179 = vpop.f32.mrf.mxu0
        %1180 = vmatprep.mubr.f32.mxu0 %v886
        %1181 = vmatmul.mubr.f32.gmra.mxu0 %v885
        %v1182 = vpop.f32.mrf.mxu0
        %v1183 = vadd.f32 0.0, %v1182
        %v1184 = vpop.f32.mrf.mxu0
        %1185 = vmatprep.mubr.f32.mxu0 %v888
        %1186 = vmatmul.mubr.f32.gmra.mxu0 %v887
        %v1187 = vpop.f32.mrf.mxu0
        %v1188 = vadd.f32 0.0, %v1187
        %v1189 = vpop.f32.mrf.mxu0
        %1190 = vmatprep.mubr.f32.mxu0 %v890
        %1191 = vmatmul.mubr.f32.gmra.mxu0 %v889
        %v1192 = vpop.f32.mrf.mxu0
        %v1193 = vadd.f32 0.0, %v1192
        %v1194 = vpop.f32.mrf.mxu0
        %1195 = vmatprep.mubr.f32.mxu0 %v892
        %1196 = vmatmul.mubr.f32.gmra.mxu0 %v891
        %v1197 = vpop.f32.mrf.mxu0
        %v1198 = vadd.f32 0.0, %v1197
        %v1199 = vpop.f32.mrf.mxu0
        %1200 = vmatprep.mubr.f32.mxu0 %v894
        %1201 = vmatmul.mubr.f32.gmra.mxu0 %v893
        %v1202 = vpop.f32.mrf.mxu0
        %v1203 = vadd.f32 0.0, %v1202
        %v1204 = vpop.f32.mrf.mxu0
        %1205 = vmatprep.mubr.f32.mxu0 %v896
        %1206 = vmatmul.mubr.f32.gmra.mxu0 %v895
        %v1207 = vpop.f32.mrf.mxu0
        %v1208 = vadd.f32 0.0, %v1207
        %v1209 = vpop.f32.mrf.mxu0
        %1210 = vmatprep.mubr.f32.mxu0 %v898
        %1211 = vmatmul.mubr.f32.gmra.mxu0 %v897
        %v1212 = vpop.f32.mrf.mxu0
        %v1213 = vadd.f32 0.0, %v1212
        %v1214 = vpop.f32.mrf.mxu0
        %1215 = vmatprep.mubr.f32.mxu0 %v900
        %1216 = vmatmul.mubr.f32.gmra.mxu0 %v899
        %v1217 = vpop.f32.mrf.mxu0
        %v1218 = vadd.f32 0.0, %v1217
        %v1219 = vpop.f32.mrf.mxu0
        %1220 = vmatprep.mubr.f32.mxu0 %v902
        %1221 = vmatmul.mubr.f32.gmra.mxu0 %v901
        %v1222 = vpop.f32.mrf.mxu0
        %v1223 = vadd.f32 0.0, %v1222
        %v1224 = vpop.f32.mrf.mxu0
        %1225 = vmatprep.mubr.f32.mxu0 %v904
        %1226 = vmatmul.mubr.f32.gmra.mxu0 %v903
        %v1227 = vpop.f32.mrf.mxu0
        %v1228 = vadd.f32 0.0, %v1227
        %v1229 = vpop.f32.mrf.mxu0
        %1230 = vmatprep.mubr.f32.mxu0 %v906
        %1231 = vmatmul.mubr.f32.gmra.mxu0 %v905
        %v1232 = vpop.f32.mrf.mxu0
        %v1233 = vadd.f32 0.0, %v1232
        %v1234 = vpop.f32.mrf.mxu0
        %1235 = vmatprep.mubr.f32.mxu0 %v908
        %1236 = vmatmul.mubr.f32.gmra.mxu0 %v907
        %v1237 = vpop.f32.mrf.mxu0
        %v1238 = vadd.f32 0.0, %v1237
        %v1239 = vpop.f32.mrf.mxu0
        %1240 = vmatprep.mubr.f32.mxu0 %v910
        %1241 = vmatmul.mubr.f32.gmra.mxu0 %v909
        %v1242 = vpop.f32.mrf.mxu0
        %v1243 = vadd.f32 0.0, %v1242
        %v1244 = vpop.f32.mrf.mxu0
        %1245 = vmatprep.mubr.f32.mxu0 %v912
        %1246 = vmatmul.mubr.f32.gmra.mxu0 %v911
        %v1247 = vpop.f32.mrf.mxu0
        %v1248 = vadd.f32 0.0, %v1247
        %v1249 = vpop.f32.mrf.mxu0
        %1250 = vmatprep.mubr.f32.mxu0 %v914
        %1251 = vmatmul.mubr.f32.gmra.mxu0 %v913
        %v1252 = vpop.f32.mrf.mxu0
        %v1253 = vadd.f32 0.0, %v1252
        %v1254 = vpop.f32.mrf.mxu0
        %1255 = vmatprep.mubr.f32.mxu0 %v916
        %1256 = vmatmul.mubr.f32.gmra.mxu0 %v915
        %v1257 = vpop.f32.mrf.mxu0
        %v1258 = vadd.f32 0.0, %v1257
        %v1259 = vpop.f32.mrf.mxu0
        %1260 = vmatprep.mubr.f32.mxu0 %v918
        %1261 = vmatmul.mubr.f32.gmra.mxu0 %v917
        %v1262 = vpop.f32.mrf.mxu0
        %v1263 = vadd.f32 0.0, %v1262
        %v1264 = vpop.f32.mrf.mxu0
        %1265 = vmatprep.mubr.f32.mxu0 %v920
        %1266 = vmatmul.mubr.f32.gmra.mxu0 %v919
        %v1267 = vpop.f32.mrf.mxu0
        %v1268 = vadd.f32 0.0, %v1267
        %v1269 = vpop.f32.mrf.mxu0
        %1270 = vmatprep.mubr.f32.mxu0 %v922
        %1271 = vmatmul.mubr.f32.gmra.mxu0 %v921
        %v1272 = vpop.f32.mrf.mxu0
        %v1273 = vadd.f32 0.0, %v1272
        %v1274 = vpop.f32.mrf.mxu0
        %1275 = vmatprep.mubr.f32.mxu0 %v924
        %1276 = vmatmul.mubr.f32.gmra.mxu0 %v923
        %v1277 = vpop.f32.mrf.mxu0
        %v1278 = vadd.f32 0.0, %v1277
        %v1279 = vpop.f32.mrf.mxu0
        %1280 = vmatprep.mubr.f32.mxu0 %v926
        %1281 = vmatmul.mubr.f32.gmra.mxu0 %v925
        %v1282 = vpop.f32.mrf.mxu0
        %v1283 = vadd.f32 0.0, %v1282
        %v1284 = vpop.f32.mrf.mxu0
        %1285 = vmatprep.mubr.f32.mxu0 %v928
        %1286 = vmatmul.mubr.f32.gmra.mxu0 %v927
        %v1287 = vpop.f32.mrf.mxu0
        %v1288 = vadd.f32 0.0, %v1287
        %v1289 = vpop.f32.mrf.mxu0
        %1290 = vmatprep.mubr.f32.mxu0 %v930
        %1291 = vmatmul.mubr.f32.gmra.mxu0 %v929
        %v1292 = vpop.f32.mrf.mxu0
        %v1293 = vadd.f32 0.0, %v1292
        %v1294 = vpop.f32.mrf.mxu0
        %1295 = vmatprep.mubr.f32.mxu0 %v932
        %1296 = vmatmul.mubr.f32.gmra.mxu0 %v931
        %v1297 = vpop.f32.mrf.mxu0
        %v1298 = vadd.f32 0.0, %v1297
        %v1299 = vpop.f32.mrf.mxu0
        %1300 = vmatprep.mubr.f32.mxu0 %v934
        %1301 = vmatmul.mubr.f32.gmra.mxu0 %v933
        %v1302 = vpop.f32.mrf.mxu0
        %v1303 = vadd.f32 0.0, %v1302
        %v1304 = vpop.f32.mrf.mxu0
        %1305 = vmatprep.mubr.f32.mxu0 %v936
        %1306 = vmatmul.mubr.f32.gmra.mxu0 %v935
        %v1307 = vpop.f32.mrf.mxu0
        %v1308 = vadd.f32 0.0, %v1307
        %v1309 = vpop.f32.mrf.mxu0
        %1310 = vmatprep.mubr.f32.mxu0 %v938
        %1311 = vmatmul.mubr.f32.gmra.mxu0 %v937
        %v1312 = vpop.f32.mrf.mxu0
        %v1313 = vadd.f32 0.0, %v1312
        %v1314 = vpop.f32.mrf.mxu0
        %1315 = vmatprep.mubr.f32.mxu0 %v940
        %1316 = vmatmul.mubr.f32.gmra.mxu0 %v939
        %v1317 = vpop.f32.mrf.mxu0
        %v1318 = vadd.f32 0.0, %v1317
        %v1319 = vpop.f32.mrf.mxu0
        %1320 = vmatprep.mubr.f32.mxu0 %v942
        %1321 = vmatmul.mubr.f32.gmra.mxu0 %v941
        %v1322 = vpop.f32.mrf.mxu0
        %v1323 = vadd.f32 0.0, %v1322
        %v1324 = vpop.f32.mrf.mxu0
        %1325 = vmatprep.mubr.f32.mxu0 %v944
        %1326 = vmatmul.mubr.f32.gmra.mxu0 %v943
        %v1327 = vpop.f32.mrf.mxu0
        %v1328 = vadd.f32 0.0, %v1327
        %v1329 = vpop.f32.mrf.mxu0
        %1330 = vmatprep.mubr.f32.mxu0 %v946
        %1331 = vmatmul.mubr.f32.gmra.mxu0 %v945
        %v1332 = vpop.f32.mrf.mxu0
        %v1333 = vadd.f32 0.0, %v1332
        %v1334 = vpop.f32.mrf.mxu0
        %1335 = vmatprep.mubr.f32.mxu0 %v948
        %1336 = vmatmul.mubr.f32.gmra.mxu0 %v947
        %v1337 = vpop.f32.mrf.mxu0
        %v1338 = vadd.f32 0.0, %v1337
        %v1339 = vpop.f32.mrf.mxu0
        %1340 = vmatprep.mubr.f32.mxu0 %v950
        %1341 = vmatmul.mubr.f32.gmra.mxu0 %v949
        %v1342 = vpop.f32.mrf.mxu0
        %v1343 = vadd.f32 0.0, %v1342
        %v1344 = vpop.f32.mrf.mxu0
        %1345 = vmatprep.mubr.f32.mxu0 %v952
        %1346 = vmatmul.mubr.f32.gmra.mxu0 %v951
        %v1347 = vpop.f32.mrf.mxu0
        %v1348 = vadd.f32 0.0, %v1347
        %v1349 = vpop.f32.mrf.mxu0
        %1350 = vmatprep.mubr.f32.mxu0 %v954
        %1351 = vmatmul.mubr.f32.gmra.mxu0 %v953
        %v1352 = vpop.f32.mrf.mxu0
        %v1353 = vadd.f32 0.0, %v1352
        %v1354 = vpop.f32.mrf.mxu0
        %1355 = vmatprep.mubr.f32.mxu0 %v956
        %1356 = vmatmul.mubr.f32.gmra.mxu0 %v955
        %v1357 = vpop.f32.mrf.mxu0
        %v1358 = vadd.f32 0.0, %v1357
        %v1359 = vpop.f32.mrf.mxu0
        %1360 = vmatprep.mubr.f32.mxu0 %v958
        %1361 = vmatmul.mubr.f32.gmra.mxu0 %v957
        %v1362 = vpop.f32.mrf.mxu0
        %v1363 = vadd.f32 0.0, %v1362
        %v1364 = vpop.f32.mrf.mxu0
        %1365 = vmatprep.mubr.f32.mxu0 %v960
        %1366 = vmatmul.mubr.f32.gmra.mxu0 %v959
        %v1367 = vpop.f32.mrf.mxu0
        %v1368 = vadd.f32 0.0, %v1367
        %v1369 = vpop.f32.mrf.mxu0
        %1370 = vmatprep.mubr.f32.mxu0 %v962
        %1371 = vmatmul.mubr.f32.gmra.mxu0 %v961
        %v1372 = vpop.f32.mrf.mxu0
        %v1373 = vadd.f32 0.0, %v1372
        %v1374 = vpop.f32.mrf.mxu0
        %1375 = vmatprep.mubr.f32.mxu0 %v964
        %1376 = vmatmul.mubr.f32.gmra.mxu0 %v963
        %v1377 = vpop.f32.mrf.mxu0
        %v1378 = vadd.f32 0.0, %v1377
        %v1379 = vpop.f32.mrf.mxu0
        %1380 = vmatprep.mubr.f32.mxu0 %v966
        %1381 = vmatmul.mubr.f32.gmra.mxu0 %v965
        %v1382 = vpop.f32.mrf.mxu0
        %v1383 = vadd.f32 0.0, %v1382
        %v1384 = vpop.f32.mrf.mxu0
        %1385 = vmatprep.mubr.f32.mxu0 %v968
        %1386 = vmatmul.mubr.f32.gmra.mxu0 %v967
        %v1387 = vpop.f32.mrf.mxu0
        %v1388 = vadd.f32 0.0, %v1387
        %v1389 = vpop.f32.mrf.mxu0
        %1390 = vmatprep.mubr.f32.mxu0 %v970
        %1391 = vmatmul.mubr.f32.gmra.mxu0 %v969
        %v1392 = vpop.f32.mrf.mxu0
        %v1393 = vadd.f32 0.0, %v1392
        %v1394 = vpop.f32.mrf.mxu0
        %1395 = vdwg.mxu0
        %vm1396 = vcmask 23552
        %1397 = vst.msk [vmem:[#allocation2] sm:$0xff] %vm1396, %v1038
        %1398 = vst.msk [vmem:[#allocation2 + $0x8] sm:$0xff] %vm1396, %v1043
        %1399 = vst.msk [vmem:[#allocation2 + $0x10] sm:$0xff] %vm1396, %v1048
        %1400 = vst.msk [vmem:[#allocation2 + $0x18] sm:$0xff] %vm1396, %v1053
        %1401 = vst.msk [vmem:[#allocation2 + $0x20] sm:$0xff] %vm1396, %v1058
        %1402 = vst.msk [vmem:[#allocation2 + $0x28] sm:$0xff] %vm1396, %v1063
        %1403 = vst.msk [vmem:[#allocation2 + $0x30] sm:$0xff] %vm1396, %v1068
        %1404 = vst.msk [vmem:[#allocation2 + $0x38] sm:$0xff] %vm1396, %v1073
        %1413 = vrot.lane.b32.xlu0 %v1078, 3
        %v1414 = vpop.permute.xlu0 %1413
        %1415 = vrot.lane.b32.xlu0 %v1083, 3
        %v1416 = vpop.permute.xlu0 %1415
        %1417 = vrot.lane.b32.xlu0 %v1088, 3
        %v1418 = vpop.permute.xlu0 %1417
        %1419 = vrot.lane.b32.xlu0 %v1093, 3
        %v1420 = vpop.permute.xlu0 %1419
        %1421 = vrot.lane.b32.xlu0 %v1098, 3
        %v1422 = vpop.permute.xlu0 %1421
        %1423 = vrot.lane.b32.xlu0 %v1103, 3
        %v1424 = vpop.permute.xlu0 %1423
        %1425 = vrot.lane.b32.xlu0 %v1108, 3
        %v1426 = vpop.permute.xlu0 %1425
        %1427 = vrot.lane.b32.xlu0 %v1113, 3
        %v1428 = vpop.permute.xlu0 %1427
        %vm1437 = vcmask 48152
        %1438 = vst.msk [vmem:[#allocation2] sm:$0xff] %vm1437, %v1414
        %1439 = vst.msk [vmem:[#allocation2 + $0x8] sm:$0xff] %vm1437, %v1416
        %1440 = vst.msk [vmem:[#allocation2 + $0x10] sm:$0xff] %vm1437, %v1418
        %1441 = vst.msk [vmem:[#allocation2 + $0x18] sm:$0xff] %vm1437, %v1420
        %1442 = vst.msk [vmem:[#allocation2 + $0x20] sm:$0xff] %vm1437, %v1422
        %1443 = vst.msk [vmem:[#allocation2 + $0x28] sm:$0xff] %vm1437, %v1424
        %1444 = vst.msk [vmem:[#allocation2 + $0x30] sm:$0xff] %vm1437, %v1426
        %1445 = vst.msk [vmem:[#allocation2 + $0x38] sm:$0xff] %vm1437, %v1428
        %1454 = vrot.lane.b32.xlu0 %v1118, 6
        %v1455 = vpop.permute.xlu0 %1454
        %1456 = vrot.lane.b32.xlu0 %v1123, 6
        %v1457 = vpop.permute.xlu0 %1456
        %1458 = vrot.lane.b32.xlu0 %v1128, 6
        %v1459 = vpop.permute.xlu0 %1458
        %1460 = vrot.lane.b32.xlu0 %v1133, 6
        %v1461 = vpop.permute.xlu0 %1460
        %1462 = vrot.lane.b32.xlu0 %v1138, 6
        %v1463 = vpop.permute.xlu0 %1462
        %1464 = vrot.lane.b32.xlu0 %v1143, 6
        %v1465 = vpop.permute.xlu0 %1464
        %1466 = vrot.lane.b32.xlu0 %v1148, 6
        %v1467 = vpop.permute.xlu0 %1466
        %1468 = vrot.lane.b32.xlu0 %v1153, 6
        %v1469 = vpop.permute.xlu0 %1468
        %vm1478 = vcmask 72752
        %1479 = vst.msk [vmem:[#allocation2] sm:$0xff] %vm1478, %v1455
        %1480 = vst.msk [vmem:[#allocation2 + $0x8] sm:$0xff] %vm1478, %v1457
        %1481 = vst.msk [vmem:[#allocation2 + $0x10] sm:$0xff] %vm1478, %v1459
        %1482 = vst.msk [vmem:[#allocation2 + $0x18] sm:$0xff] %vm1478, %v1461
        %1483 = vst.msk [vmem:[#allocation2 + $0x20] sm:$0xff] %vm1478, %v1463
        %1484 = vst.msk [vmem:[#allocation2 + $0x28] sm:$0xff] %vm1478, %v1465
        %1485 = vst.msk [vmem:[#allocation2 + $0x30] sm:$0xff] %vm1478, %v1467
        %1486 = vst.msk [vmem:[#allocation2 + $0x38] sm:$0xff] %vm1478, %v1469
        %1495 = vrot.lane.b32.xlu0 %v1158, 9
        %v1496 = vpop.permute.xlu0 %1495
        %1497 = vrot.lane.b32.xlu0 %v1163, 9
        %v1498 = vpop.permute.xlu0 %1497
        %1499 = vrot.lane.b32.xlu0 %v1168, 9
        %v1500 = vpop.permute.xlu0 %1499
        %1501 = vrot.lane.b32.xlu0 %v1173, 9
        %v1502 = vpop.permute.xlu0 %1501
        %1503 = vrot.lane.b32.xlu0 %v1178, 9
        %v1504 = vpop.permute.xlu0 %1503
        %1505 = vrot.lane.b32.xlu0 %v1183, 9
        %v1506 = vpop.permute.xlu0 %1505
        %1507 = vrot.lane.b32.xlu0 %v1188, 9
        %v1508 = vpop.permute.xlu0 %1507
        %1509 = vrot.lane.b32.xlu0 %v1193, 9
        %v1510 = vpop.permute.xlu0 %1509
        %vm1519 = vcmask 97352
        %1520 = vst.msk [vmem:[#allocation2] sm:$0xff] %vm1519, %v1496
        %1521 = vst.msk [vmem:[#allocation2 + $0x8] sm:$0xff] %vm1519, %v1498
        %1522 = vst.msk [vmem:[#allocation2 + $0x10] sm:$0xff] %vm1519, %v1500
        %1523 = vst.msk [vmem:[#allocation2 + $0x18] sm:$0xff] %vm1519, %v1502
        %1524 = vst.msk [vmem:[#allocation2 + $0x20] sm:$0xff] %vm1519, %v1504
        %1525 = vst.msk [vmem:[#allocation2 + $0x28] sm:$0xff] %vm1519, %v1506
        %1526 = vst.msk [vmem:[#allocation2 + $0x30] sm:$0xff] %vm1519, %v1508
        %1527 = vst.msk [vmem:[#allocation2 + $0x38] sm:$0xff] %vm1519, %v1510
        %1536 = vrot.lane.b32.xlu0 %v1198, 12
        %v1537 = vpop.permute.xlu0 %1536
        %1538 = vrot.lane.b32.xlu0 %v1203, 12
        %v1539 = vpop.permute.xlu0 %1538
        %1540 = vrot.lane.b32.xlu0 %v1208, 12
        %v1541 = vpop.permute.xlu0 %1540
        %1542 = vrot.lane.b32.xlu0 %v1213, 12
        %v1543 = vpop.permute.xlu0 %1542
        %1544 = vrot.lane.b32.xlu0 %v1218, 12
        %v1545 = vpop.permute.xlu0 %1544
        %1546 = vrot.lane.b32.xlu0 %v1223, 12
        %v1547 = vpop.permute.xlu0 %1546
        %1548 = vrot.lane.b32.xlu0 %v1228, 12
        %v1549 = vpop.permute.xlu0 %1548
        %1550 = vrot.lane.b32.xlu0 %v1233, 12
        %v1551 = vpop.permute.xlu0 %1550
        %vm1560 = vcmask 121952
        %1561 = vst.msk [vmem:[#allocation2] sm:$0xff] %vm1560, %v1537
        %1562 = vst.msk [vmem:[#allocation2 + $0x8] sm:$0xff] %vm1560, %v1539
        %1563 = vst.msk [vmem:[#allocation2 + $0x10] sm:$0xff] %vm1560, %v1541
        %1564 = vst.msk [vmem:[#allocation2 + $0x18] sm:$0xff] %vm1560, %v1543
        %1565 = vst.msk [vmem:[#allocation2 + $0x20] sm:$0xff] %vm1560, %v1545
        %1566 = vst.msk [vmem:[#allocation2 + $0x28] sm:$0xff] %vm1560, %v1547
        %1567 = vst.msk [vmem:[#allocation2 + $0x30] sm:$0xff] %vm1560, %v1549
        %1568 = vst.msk [vmem:[#allocation2 + $0x38] sm:$0xff] %vm1560, %v1551
        %1577 = vrot.lane.b32.xlu0 %v1238, 15
        %v1578 = vpop.permute.xlu0 %1577
        %1579 = vrot.lane.b32.xlu0 %v1243, 15
        %v1580 = vpop.permute.xlu0 %1579
        %1581 = vrot.lane.b32.xlu0 %v1248, 15
        %v1582 = vpop.permute.xlu0 %1581
        %1583 = vrot.lane.b32.xlu0 %v1253, 15
        %v1584 = vpop.permute.xlu0 %1583
        %1585 = vrot.lane.b32.xlu0 %v1258, 15
        %v1586 = vpop.permute.xlu0 %1585
        %1587 = vrot.lane.b32.xlu0 %v1263, 15
        %v1588 = vpop.permute.xlu0 %1587
        %1589 = vrot.lane.b32.xlu0 %v1268, 15
        %v1590 = vpop.permute.xlu0 %1589
        %1591 = vrot.lane.b32.xlu0 %v1273, 15
        %v1592 = vpop.permute.xlu0 %1591
        %vm1601 = vcmask 146552
        %1602 = vst.msk [vmem:[#allocation2] sm:$0xff] %vm1601, %v1578
        %1603 = vst.msk [vmem:[#allocation2 + $0x8] sm:$0xff] %vm1601, %v1580
        %1604 = vst.msk [vmem:[#allocation2 + $0x10] sm:$0xff] %vm1601, %v1582
        %1605 = vst.msk [vmem:[#allocation2 + $0x18] sm:$0xff] %vm1601, %v1584
        %1606 = vst.msk [vmem:[#allocation2 + $0x20] sm:$0xff] %vm1601, %v1586
        %1607 = vst.msk [vmem:[#allocation2 + $0x28] sm:$0xff] %vm1601, %v1588
        %1608 = vst.msk [vmem:[#allocation2 + $0x30] sm:$0xff] %vm1601, %v1590
        %1609 = vst.msk [vmem:[#allocation2 + $0x38] sm:$0xff] %vm1601, %v1592
        %1618 = vrot.lane.b32.xlu0 %v1278, 18
        %v1619 = vpop.permute.xlu0 %1618
        %1620 = vrot.lane.b32.xlu0 %v1283, 18
        %v1621 = vpop.permute.xlu0 %1620
        %1622 = vrot.lane.b32.xlu0 %v1288, 18
        %v1623 = vpop.permute.xlu0 %1622
        %1624 = vrot.lane.b32.xlu0 %v1293, 18
        %v1625 = vpop.permute.xlu0 %1624
        %1626 = vrot.lane.b32.xlu0 %v1298, 18
        %v1627 = vpop.permute.xlu0 %1626
        %1628 = vrot.lane.b32.xlu0 %v1303, 18
        %v1629 = vpop.permute.xlu0 %1628
        %1630 = vrot.lane.b32.xlu0 %v1308, 18
        %v1631 = vpop.permute.xlu0 %1630
        %1632 = vrot.lane.b32.xlu0 %v1313, 18
        %v1633 = vpop.permute.xlu0 %1632
        %vm1642 = vcmask 171152
        %1643 = vst.msk [vmem:[#allocation2] sm:$0xff] %vm1642, %v1619
        %1644 = vst.msk [vmem:[#allocation2 + $0x8] sm:$0xff] %vm1642, %v1621
        %1645 = vst.msk [vmem:[#allocation2 + $0x10] sm:$0xff] %vm1642, %v1623
        %1646 = vst.msk [vmem:[#allocation2 + $0x18] sm:$0xff] %vm1642, %v1625
        %1647 = vst.msk [vmem:[#allocation2 + $0x20] sm:$0xff] %vm1642, %v1627
        %1648 = vst.msk [vmem:[#allocation2 + $0x28] sm:$0xff] %vm1642, %v1629
        %1649 = vst.msk [vmem:[#allocation2 + $0x30] sm:$0xff] %vm1642, %v1631
        %1650 = vst.msk [vmem:[#allocation2 + $0x38] sm:$0xff] %vm1642, %v1633
        %1659 = vrot.lane.b32.xlu0 %v1318, 21
        %v1660 = vpop.permute.xlu0 %1659
        %1661 = vrot.lane.b32.xlu0 %v1323, 21
        %v1662 = vpop.permute.xlu0 %1661
        %1663 = vrot.lane.b32.xlu0 %v1328, 21
        %v1664 = vpop.permute.xlu0 %1663
        %1665 = vrot.lane.b32.xlu0 %v1333, 21
        %v1666 = vpop.permute.xlu0 %1665
        %1667 = vrot.lane.b32.xlu0 %v1338, 21
        %v1668 = vpop.permute.xlu0 %1667
        %1669 = vrot.lane.b32.xlu0 %v1343, 21
        %v1670 = vpop.permute.xlu0 %1669
        %1671 = vrot.lane.b32.xlu0 %v1348, 21
        %v1672 = vpop.permute.xlu0 %1671
        %1673 = vrot.lane.b32.xlu0 %v1353, 21
        %v1674 = vpop.permute.xlu0 %1673
        %vm1683 = vcmask 195752
        %1684 = vst.msk [vmem:[#allocation2] sm:$0xff] %vm1683, %v1660
        %1685 = vst.msk [vmem:[#allocation2 + $0x8] sm:$0xff] %vm1683, %v1662
        %1686 = vst.msk [vmem:[#allocation2 + $0x10] sm:$0xff] %vm1683, %v1664
        %1687 = vst.msk [vmem:[#allocation2 + $0x18] sm:$0xff] %vm1683, %v1666
        %1688 = vst.msk [vmem:[#allocation2 + $0x20] sm:$0xff] %vm1683, %v1668
        %1689 = vst.msk [vmem:[#allocation2 + $0x28] sm:$0xff] %vm1683, %v1670
        %1690 = vst.msk [vmem:[#allocation2 + $0x30] sm:$0xff] %vm1683, %v1672
        %1691 = vst.msk [vmem:[#allocation2 + $0x38] sm:$0xff] %vm1683, %v1674
        %1700 = vrot.lane.b32.xlu0 %v1358, 24
        %v1701 = vpop.permute.xlu0 %1700
        %1702 = vrot.lane.b32.xlu0 %v1363, 24
        %v1703 = vpop.permute.xlu0 %1702
        %1704 = vrot.lane.b32.xlu0 %v1368, 24
        %v1705 = vpop.permute.xlu0 %1704
        %1706 = vrot.lane.b32.xlu0 %v1373, 24
        %v1707 = vpop.permute.xlu0 %1706
        %1708 = vrot.lane.b32.xlu0 %v1378, 24
        %v1709 = vpop.permute.xlu0 %1708
        %1710 = vrot.lane.b32.xlu0 %v1383, 24
        %v1711 = vpop.permute.xlu0 %1710
        %1712 = vrot.lane.b32.xlu0 %v1388, 24
        %v1713 = vpop.permute.xlu0 %1712
        %1714 = vrot.lane.b32.xlu0 %v1393, 24
        %v1715 = vpop.permute.xlu0 %1714
        %vm1724 = vcmask 220352
        %1725 = vst.msk [vmem:[#allocation2] sm:$0xff] %vm1724, %v1701
        %1726 = vst.msk [vmem:[#allocation2 + $0x8] sm:$0xff] %vm1724, %v1703
        %1727 = vst.msk [vmem:[#allocation2 + $0x10] sm:$0xff] %vm1724, %v1705
        %1728 = vst.msk [vmem:[#allocation2 + $0x18] sm:$0xff] %vm1724, %v1707
        %1729 = vst.msk [vmem:[#allocation2 + $0x20] sm:$0xff] %vm1724, %v1709
        %1730 = vst.msk [vmem:[#allocation2 + $0x28] sm:$0xff] %vm1724, %v1711
        %1731 = vst.msk [vmem:[#allocation2 + $0x30] sm:$0xff] %vm1724, %v1713
        %1732 = vst.msk [vmem:[#allocation2 + $0x38] sm:$0xff] %vm1724, %v1715
        %v1733 = vld [vmem:[#allocation2] sm:$0xff]
        %v1734 = vld [vmem:[#allocation2 + $0x8] sm:$0xff]
        %v1735 = vld [vmem:[#allocation2 + $0x10] sm:$0xff]
        %v1736 = vld [vmem:[#allocation2 + $0x18] sm:$0xff]
        %v1737 = vld [vmem:[#allocation2 + $0x20] sm:$0xff]
        %v1738 = vld [vmem:[#allocation2 + $0x28] sm:$0xff]
        %v1739 = vld [vmem:[#allocation2 + $0x30] sm:$0xff]
        %v1740 = vld [vmem:[#allocation2 + $0x38] sm:$0xff]
        %v1741 = vld [vmem:[%s2] sm:$0xff]
        %v1742 = vld [vmem:[%s2 + $0x8] sm:$0xff]
        %v1743 = vld [vmem:[%s2 + $0x10] sm:$0xff]
        %v1744 = vld [vmem:[%s2 + $0x18] sm:$0x7]
        %v1745 = vld [vmem:[%s3] sm:$0x1]
        %v1747 = vlaneseq
        %v1748 = vshrl.u32 %v1747, 7
        %v1749 = vsub.s32 0, %v1748
        %v1750 = vrot.slane %v1745, %v1749
        %vm1752 = vcmask 220160
        %v1754 = vsel %vm1752, %v1733, 0
        %v1757 = vsel %vm1752, %v1734, 0
        %v1760 = vsel %vm1752, %v1735, 0
        %v1763 = vsel %vm1752, %v1736, 0
        %v1766 = vsel %vm1752, %v1737, 0
        %v1769 = vsel %vm1752, %v1738, 0
        %v1772 = vsel %vm1752, %v1739, 0
        %v1775 = vsel %vm1752, %v1740, 0
        %vm1777 = vcmask 1042432
        %v1779 = vsel %vm1777, %v1744, 0
        %1781 = vmatprep.subr.mxu0 0.0
        %1782 = vmatpush1.msra.mxu0 0.0
        %1783 = vmatprep.subr.mxu0 0.0
        %1784 = vmatpush1.msra.mxu0 0.0
        %1785 = vmatprep.subr.mxu0 0.0
        %1786 = vmatpush1.msra.mxu0 0.0
        %1787 = vmatprep.subr.mxu0 0.0
        %1788 = vmatpush1.msra.mxu0 0.0
        %1789 = vmatprep.subr.mxu0 0.0
        %1790 = vmatpush1.msra.mxu0 0.0
        %1791 = vmatprep.subr.mxu0 0.0
        %1792 = vmatpush1.msra.mxu0 0.0
        %1793 = vmatprep.subr.mxu0 0.0
        %1794 = vmatpush1.msra.mxu0 0.0
        %1795 = vmatprep.subr.mxu0 0.0
        %1796 = vmatpush1.msra.mxu0 0.0
        %1797 = vmatprep.subr.mxu0 0.0
        %1798 = vmatpush1.msra.mxu0 0.0
        %1799 = vmatprep.subr.mxu0 0.0
        %1800 = vmatpush1.msra.mxu0 0.0
        %1801 = vmatprep.subr.mxu0 0.0
        %1802 = vmatpush1.msra.mxu0 0.0
        %1803 = vmatprep.subr.mxu0 0.0
        %1804 = vmatpush1.msra.mxu0 0.0
        %1805 = vmatprep.subr.mxu0 0.0
        %1806 = vmatpush1.msra.mxu0 %v1779
        %1807 = vmatprep.subr.mxu0 0.0
        %1808 = vmatpush1.msra.mxu0 %v1743
        %1809 = vmatprep.subr.mxu0 0.0
        %1810 = vmatpush1.msra.mxu0 %v1742
        %1811 = vmatprep.subr.mxu0 0.0
        %1812 = vmatpush1.msra.mxu0 %v1741
        %1813 = vmatprep.subr.mxu0 0.0
        %1814 = vmatpush2.msra.mxu0 0.0
        %1815 = vmatprep.subr.mxu0 0.0
        %1816 = vmatpush2.msra.mxu0 0.0
        %1817 = vmatprep.subr.mxu0 0.0
        %1818 = vmatpush2.msra.mxu0 0.0
        %1819 = vmatprep.subr.mxu0 0.0
        %1820 = vmatpush2.msra.mxu0 0.0
        %1821 = vmatprep.subr.mxu0 0.0
        %1822 = vmatpush2.msra.mxu0 0.0
        %1823 = vmatprep.subr.mxu0 0.0
        %1824 = vmatpush2.msra.mxu0 0.0
        %1825 = vmatprep.subr.mxu0 0.0
        %1826 = vmatpush2.msra.mxu0 0.0
        %1827 = vmatprep.subr.mxu0 0.0
        %1828 = vmatpush2.msra.mxu0 0.0
        %1829 = vmatprep.subr.mxu0 0.0
        %1830 = vmatpush2.msra.mxu0 0.0
        %1831 = vmatprep.subr.mxu0 0.0
        %1832 = vmatpush2.msra.mxu0 0.0
        %1833 = vmatprep.subr.mxu0 0.0
        %1834 = vmatpush2.msra.mxu0 0.0
        %1835 = vmatprep.subr.mxu0 0.0
        %1836 = vmatpush2.msra.mxu0 0.0
        %1837 = vmatprep.subr.mxu0 0.0
        %1838 = vmatpush2.msra.mxu0 0.0
        %1839 = vmatprep.subr.mxu0 0.0
        %1840 = vmatpush2.msra.mxu0 0.0
        %1841 = vmatprep.subr.mxu0 0.0
        %1842 = vmatpush2.msra.mxu0 0.0
        %1843 = vmatprep.subr.mxu0 0.0
        %1844 = vmatpush2.msra.mxu0 0.0
        %1845 = vmatprep.mubr.f32.mxu0 0.0
        %1846 = vmatmul.mubr.f32.gmra.mxu0 %v1754
        %v1847 = vpop.f32.mrf.mxu0
        %v1848 = vadd.f32 %v1750, %v1847
        %v1849 = vpop.f32.mrf.mxu0
        %1850 = vmatprep.mubr.f32.mxu0 0.0
        %1851 = vmatmul.mubr.f32.gmra.mxu0 %v1757
        %v1852 = vpop.f32.mrf.mxu0
        %v1853 = vadd.f32 %v1750, %v1852
        %v1854 = vpop.f32.mrf.mxu0
        %1855 = vmatprep.mubr.f32.mxu0 0.0
        %1856 = vmatmul.mubr.f32.gmra.mxu0 %v1760
        %v1857 = vpop.f32.mrf.mxu0
        %v1858 = vadd.f32 %v1750, %v1857
        %v1859 = vpop.f32.mrf.mxu0
        %1860 = vmatprep.mubr.f32.mxu0 0.0
        %1861 = vmatmul.mubr.f32.gmra.mxu0 %v1763
        %v1862 = vpop.f32.mrf.mxu0
        %v1863 = vadd.f32 %v1750, %v1862
        %v1864 = vpop.f32.mrf.mxu0
        %1865 = vmatprep.mubr.f32.mxu0 0.0
        %1866 = vmatmul.mubr.f32.gmra.mxu0 %v1766
        %v1867 = vpop.f32.mrf.mxu0
        %v1868 = vadd.f32 %v1750, %v1867
        %v1869 = vpop.f32.mrf.mxu0
        %1870 = vmatprep.mubr.f32.mxu0 0.0
        %1871 = vmatmul.mubr.f32.gmra.mxu0 %v1769
        %v1872 = vpop.f32.mrf.mxu0
        %v1873 = vadd.f32 %v1750, %v1872
        %v1874 = vpop.f32.mrf.mxu0
        %1875 = vmatprep.mubr.f32.mxu0 0.0
        %1876 = vmatmul.mubr.f32.gmra.mxu0 %v1772
        %v1877 = vpop.f32.mrf.mxu0
        %v1878 = vadd.f32 %v1750, %v1877
        %v1879 = vpop.f32.mrf.mxu0
        %1880 = vmatprep.mubr.f32.mxu0 0.0
        %1881 = vmatmul.mubr.f32.gmra.mxu0 %v1775
        %v1882 = vpop.f32.mrf.mxu0
        %v1883 = vadd.f32 %v1750, %v1882
        %v1884 = vpop.f32.mrf.mxu0
        %1885 = vdwg.mxu0
        %v1886 = vmax.f32 %v1848, 0.0
        %v1887 = vmax.f32 %v1853, 0.0
        %v1888 = vmax.f32 %v1858, 0.0
        %v1889 = vmax.f32 %v1863, 0.0
        %v1890 = vmax.f32 %v1868, 0.0
        %v1891 = vmax.f32 %v1873, 0.0
        %v1892 = vmax.f32 %v1878, 0.0
        %v1893 = vmax.f32 %v1883, 0.0
        %v1894 = vld [vmem:[%s4] sm:$0xff]
        %v1895 = vld [vmem:[%s4 + $0x8] sm:$0xff]
        %v1896 = vld [vmem:[%s4 + $0x10] sm:$0xff]
        %v1897 = vld [vmem:[%s4 + $0x18] sm:$0xff]
        %v1898 = vld [vmem:[%s4 + $0x20] sm:$0xff]
        %v1899 = vld [vmem:[%s4 + $0x28] sm:$0xff]
        %v1900 = vld [vmem:[%s4 + $0x30] sm:$0xff]
        %v1901 = vld [vmem:[%s4 + $0x38] sm:$0xff]
        %v1902 = vld [vmem:[%s4 + $0x40] sm:$0xff]
        %v1903 = vld [vmem:[%s4 + $0x48] sm:$0xff]
        %v1904 = vld [vmem:[%s4 + $0x50] sm:$0xff]
        %v1905 = vld [vmem:[%s4 + $0x58] sm:$0xff]
        %v1906 = vld [vmem:[%s4 + $0x60] sm:$0xff]
        %v1907 = vld [vmem:[%s4 + $0x68] sm:$0xff]
        %v1908 = vld [vmem:[%s4 + $0x70] sm:$0xff]
        %v1909 = vld [vmem:[%s4 + $0x78] sm:$0xff]
        %v1910 = vld [vmem:[%s4 + $0x80] sm:$0xff]
        %v1911 = vld [vmem:[%s4 + $0x88] sm:$0xff]
        %vm1912 = vcmask 523264
        %v1914 = vsel %vm1912, %v1894, 0
        %v1917 = vsel %vm1912, %v1895, 0
        %v1920 = vsel %vm1912, %v1896, 0
        %v1923 = vsel %vm1912, %v1897, 0
        %v1926 = vsel %vm1912, %v1898, 0
        %v1929 = vsel %vm1912, %v1899, 0
        %v1932 = vsel %vm1912, %v1900, 0
        %v1935 = vsel %vm1912, %v1901, 0
        %v1938 = vsel %vm1912, %v1902, 0
        %v1941 = vsel %vm1912, %v1903, 0
        %v1944 = vsel %vm1912, %v1904, 0
        %v1947 = vsel %vm1912, %v1905, 0
        %v1950 = vsel %vm1912, %v1906, 0
        %v1953 = vsel %vm1912, %v1907, 0
        %v1956 = vsel %vm1912, %v1908, 0
        %v1959 = vsel %vm1912, %v1909, 0
        %v1962 = vsel %vm1912, %v1910, 0
        %v1965 = vsel %vm1912, %v1911, 0
        %1967 = vmatprep.subr.mxu0 0.0
        %1968 = vmatpush1.msra.mxu0 0.0
        %1969 = vmatprep.subr.mxu0 0.0
        %1970 = vmatpush1.msra.mxu0 0.0
        %1971 = vmatprep.subr.mxu0 0.0
        %1972 = vmatpush1.msra.mxu0 0.0
        %1973 = vmatprep.subr.mxu0 0.0
        %1974 = vmatpush1.msra.mxu0 0.0
        %1975 = vmatprep.subr.mxu0 0.0
        %1976 = vmatpush1.msra.mxu0 0.0
        %1977 = vmatprep.subr.mxu0 0.0
        %1978 = vmatpush1.msra.mxu0 0.0
        %1979 = vmatprep.subr.mxu0 0.0
        %1980 = vmatpush1.msra.mxu0 0.0
        %1981 = vmatprep.subr.mxu0 0.0
        %1982 = vmatpush1.msra.mxu0 0.0
        %1983 = vmatprep.subr.mxu0 0.0
        %1984 = vmatpush1.msra.mxu0 %v1893
        %1985 = vmatprep.subr.mxu0 0.0
        %1986 = vmatpush1.msra.mxu0 %v1892
        %1987 = vmatprep.subr.mxu0 0.0
        %1988 = vmatpush1.msra.mxu0 %v1891
        %1989 = vmatprep.subr.mxu0 0.0
        %1990 = vmatpush1.msra.mxu0 %v1890
        %1991 = vmatprep.subr.mxu0 0.0
        %1992 = vmatpush1.msra.mxu0 %v1889
        %1993 = vmatprep.subr.mxu0 0.0
        %1994 = vmatpush1.msra.mxu0 %v1888
        %1995 = vmatprep.subr.mxu0 0.0
        %1996 = vmatpush1.msra.mxu0 %v1887
        %1997 = vmatprep.subr.mxu0 0.0
        %1998 = vmatpush1.msra.mxu0 %v1886
        %1999 = vmatprep.subr.mxu0 0.0
        %2000 = vmatpush2.msra.mxu0 0.0
        %2001 = vmatprep.subr.mxu0 0.0
        %2002 = vmatpush2.msra.mxu0 0.0
        %2003 = vmatprep.subr.mxu0 0.0
        %2004 = vmatpush2.msra.mxu0 0.0
        %2005 = vmatprep.subr.mxu0 0.0
        %2006 = vmatpush2.msra.mxu0 0.0
        %2007 = vmatprep.subr.mxu0 0.0
        %2008 = vmatpush2.msra.mxu0 0.0
        %2009 = vmatprep.subr.mxu0 0.0
        %2010 = vmatpush2.msra.mxu0 0.0
        %2011 = vmatprep.subr.mxu0 0.0
        %2012 = vmatpush2.msra.mxu0 0.0
        %2013 = vmatprep.subr.mxu0 0.0
        %2014 = vmatpush2.msra.mxu0 0.0
        %2015 = vmatprep.subr.mxu0 0.0
        %2016 = vmatpush2.msra.mxu0 0.0
        %2017 = vmatprep.subr.mxu0 0.0
        %2018 = vmatpush2.msra.mxu0 0.0
        %2019 = vmatprep.subr.mxu0 0.0
        %2020 = vmatpush2.msra.mxu0 0.0
        %2021 = vmatprep.subr.mxu0 0.0
        %2022 = vmatpush2.msra.mxu0 0.0
        %2023 = vmatprep.subr.mxu0 0.0
        %2024 = vmatpush2.msra.mxu0 0.0
        %2025 = vmatprep.subr.mxu0 0.0
        %2026 = vmatpush2.msra.mxu0 0.0
        %2027 = vmatprep.subr.mxu0 0.0
        %2028 = vmatpush2.msra.mxu0 0.0
        %2029 = vmatprep.subr.mxu0 0.0
        %2030 = vmatpush2.msra.mxu0 0.0
        %2031 = vmatprep.mubr.f32.mxu0 0.0
        %2032 = vmatmul.mubr.f32.gmra.mxu0 %v1914
        %v2033 = vpop.f32.mrf.mxu0
        %v2034 = vadd.f32 0.0, %v2033
        %v2035 = vpop.f32.mrf.mxu0
        %2036 = vmatprep.mubr.f32.mxu0 0.0
        %2037 = vmatmul.mubr.f32.gmra.mxu0 %v1917
        %v2038 = vpop.f32.mrf.mxu0
        %v2039 = vadd.f32 0.0, %v2038
        %v2040 = vpop.f32.mrf.mxu0
        %2041 = vmatprep.mubr.f32.mxu0 0.0
        %2042 = vmatmul.mubr.f32.gmra.mxu0 %v1920
        %v2043 = vpop.f32.mrf.mxu0
        %v2044 = vadd.f32 0.0, %v2043
        %v2045 = vpop.f32.mrf.mxu0
        %2046 = vmatprep.mubr.f32.mxu0 0.0
        %2047 = vmatmul.mubr.f32.gmra.mxu0 %v1923
        %v2048 = vpop.f32.mrf.mxu0
        %v2049 = vadd.f32 0.0, %v2048
        %v2050 = vpop.f32.mrf.mxu0
        %2051 = vmatprep.mubr.f32.mxu0 0.0
        %2052 = vmatmul.mubr.f32.gmra.mxu0 %v1926
        %v2053 = vpop.f32.mrf.mxu0
        %v2054 = vadd.f32 0.0, %v2053
        %v2055 = vpop.f32.mrf.mxu0
        %2056 = vmatprep.mubr.f32.mxu0 0.0
        %2057 = vmatmul.mubr.f32.gmra.mxu0 %v1929
        %v2058 = vpop.f32.mrf.mxu0
        %v2059 = vadd.f32 0.0, %v2058
        %v2060 = vpop.f32.mrf.mxu0
        %2061 = vmatprep.mubr.f32.mxu0 0.0
        %2062 = vmatmul.mubr.f32.gmra.mxu0 %v1932
        %v2063 = vpop.f32.mrf.mxu0
        %v2064 = vadd.f32 0.0, %v2063
        %v2065 = vpop.f32.mrf.mxu0
        %2066 = vmatprep.mubr.f32.mxu0 0.0
        %2067 = vmatmul.mubr.f32.gmra.mxu0 %v1935
        %v2068 = vpop.f32.mrf.mxu0
        %v2069 = vadd.f32 0.0, %v2068
        %v2070 = vpop.f32.mrf.mxu0
        %2071 = vmatprep.mubr.f32.mxu0 0.0
        %2072 = vmatmul.mubr.f32.gmra.mxu0 %v1938
        %v2073 = vpop.f32.mrf.mxu0
        %v2074 = vadd.f32 0.0, %v2073
        %v2075 = vpop.f32.mrf.mxu0
        %2076 = vmatprep.mubr.f32.mxu0 0.0
        %2077 = vmatmul.mubr.f32.gmra.mxu0 %v1941
        %v2078 = vpop.f32.mrf.mxu0
        %v2079 = vadd.f32 0.0, %v2078
        %v2080 = vpop.f32.mrf.mxu0
        %2081 = vmatprep.mubr.f32.mxu0 0.0
        %2082 = vmatmul.mubr.f32.gmra.mxu0 %v1944
        %v2083 = vpop.f32.mrf.mxu0
        %v2084 = vadd.f32 0.0, %v2083
        %v2085 = vpop.f32.mrf.mxu0
        %2086 = vmatprep.mubr.f32.mxu0 0.0
        %2087 = vmatmul.mubr.f32.gmra.mxu0 %v1947
        %v2088 = vpop.f32.mrf.mxu0
        %v2089 = vadd.f32 0.0, %v2088
        %v2090 = vpop.f32.mrf.mxu0
        %2091 = vmatprep.mubr.f32.mxu0 0.0
        %2092 = vmatmul.mubr.f32.gmra.mxu0 %v1950
        %v2093 = vpop.f32.mrf.mxu0
        %v2094 = vadd.f32 0.0, %v2093
        %v2095 = vpop.f32.mrf.mxu0
        %2096 = vmatprep.mubr.f32.mxu0 0.0
        %2097 = vmatmul.mubr.f32.gmra.mxu0 %v1953
        %v2098 = vpop.f32.mrf.mxu0
        %v2099 = vadd.f32 0.0, %v2098
        %v2100 = vpop.f32.mrf.mxu0
        %2101 = vmatprep.mubr.f32.mxu0 0.0
        %2102 = vmatmul.mubr.f32.gmra.mxu0 %v1956
        %v2103 = vpop.f32.mrf.mxu0
        %v2104 = vadd.f32 0.0, %v2103
        %v2105 = vpop.f32.mrf.mxu0
        %2106 = vmatprep.mubr.f32.mxu0 0.0
        %2107 = vmatmul.mubr.f32.gmra.mxu0 %v1959
        %v2108 = vpop.f32.mrf.mxu0
        %v2109 = vadd.f32 0.0, %v2108
        %v2110 = vpop.f32.mrf.mxu0
        %2111 = vmatprep.mubr.f32.mxu0 0.0
        %2112 = vmatmul.mubr.f32.gmra.mxu0 %v1962
        %v2113 = vpop.f32.mrf.mxu0
        %v2114 = vadd.f32 0.0, %v2113
        %v2115 = vpop.f32.mrf.mxu0
        %2116 = vmatprep.mubr.f32.mxu0 0.0
        %2117 = vmatmul.mubr.f32.gmra.mxu0 %v1965
        %v2118 = vpop.f32.mrf.mxu0
        %v2119 = vadd.f32 0.0, %v2118
        %v2120 = vpop.f32.mrf.mxu0
        %2121 = vdwg.mxu0
        %vm2122 = vcmask 261120
        %2123 = vst.msk [vmem:[#allocation3] sm:$0xff] %vm2122, %v2034
        %2124 = vst.msk [vmem:[#allocation3 + $0x18] sm:$0xff] %vm2122, %v2039
        %2127 = vrot.lane.b32.xlu0 %v2044, 32
        %v2128 = vpop.permute.xlu0 %2127
        %2129 = vrot.lane.b32.xlu0 %v2049, 32
        %v2130 = vpop.permute.xlu0 %2129
        %vm2133 = vcmask 523520
        %2134 = vst.msk [vmem:[#allocation3] sm:$0xff] %vm2133, %v2128
        %2135 = vst.msk [vmem:[#allocation3 + $0x18] sm:$0xff] %vm2133, %v2130
        %2138 = vrot.lane.b32.xlu0 %v2054, 64
        %v2139 = vpop.permute.xlu0 %2138
        %2140 = vrot.lane.b32.xlu0 %v2059, 64
        %v2141 = vpop.permute.xlu0 %2140
        %vm2144 = vcmask 785920
        %2145 = vst.msk [vmem:[#allocation3] sm:$0xff] %vm2144, %v2139
        %2146 = vst.msk [vmem:[#allocation3 + $0x18] sm:$0xff] %vm2144, %v2141
        %2149 = vrot.lane.b32.xlu0 %v2064, 96
        %v2150 = vpop.permute.xlu0 %2149
        %2151 = vrot.lane.b32.xlu0 %v2069, 96
        %v2152 = vpop.permute.xlu0 %2151
        %vm2155 = vcmask 1048320
        %2156 = vst.msk [vmem:[#allocation3] sm:$0xff] %vm2155, %v2150
        %2157 = vst.msk [vmem:[#allocation3 + $0x18] sm:$0xff] %vm2155, %v2152
        %2158 = vst.msk [vmem:[#allocation3 + $0x8] sm:$0xff] %vm2122, %v2074
        %2159 = vst.msk [vmem:[#allocation3 + $0x20] sm:$0xff] %vm2122, %v2079
        %2162 = vrot.lane.b32.xlu0 %v2084, 32
        %v2163 = vpop.permute.xlu0 %2162
        %2164 = vrot.lane.b32.xlu0 %v2089, 32
        %v2165 = vpop.permute.xlu0 %2164
        %2168 = vst.msk [vmem:[#allocation3 + $0x8] sm:$0xff] %vm2133, %v2163
        %2169 = vst.msk [vmem:[#allocation3 + $0x20] sm:$0xff] %vm2133, %v2165
        %2172 = vrot.lane.b32.xlu0 %v2094, 64
        %v2173 = vpop.permute.xlu0 %2172
        %2174 = vrot.lane.b32.xlu0 %v2099, 64
        %v2175 = vpop.permute.xlu0 %2174
        %2178 = vst.msk [vmem:[#allocation3 + $0x8] sm:$0xff] %vm2144, %v2173
        %2179 = vst.msk [vmem:[#allocation3 + $0x20] sm:$0xff] %vm2144, %v2175
        %2182 = vrot.lane.b32.xlu0 %v2104, 96
        %v2183 = vpop.permute.xlu0 %2182
        %2184 = vrot.lane.b32.xlu0 %v2109, 96
        %v2185 = vpop.permute.xlu0 %2184
        %2188 = vst.msk [vmem:[#allocation3 + $0x8] sm:$0xff] %vm2155, %v2183
        %2189 = vst.msk [vmem:[#allocation3 + $0x20] sm:$0xff] %vm2155, %v2185
        %2190 = vst.msk [vmem:[#allocation3 + $0x10] sm:$0xff] %vm2122, %v2114
        %2191 = vst.msk [vmem:[#allocation3 + $0x28] sm:$0xff] %vm2122, %v2119
        %v2192 = vld [vmem:[#allocation3] sm:$0xff]
        %v2193 = vld [vmem:[#allocation3 + $0x8] sm:$0xff]
        %v2194 = vld [vmem:[#allocation3 + $0x10] sm:$0xff]
        %v2195 = vld [vmem:[#allocation3 + $0x18] sm:$0xff]
        %v2196 = vld [vmem:[#allocation3 + $0x20] sm:$0xff]
        %v2197 = vld [vmem:[#allocation3 + $0x28] sm:$0xff]
        %v2198 = vld [vmem:[%s5] sm:$0xff]
        %v2199 = vld [vmem:[%s5 + $0x8] sm:$0xff]
        %v2200 = vld [vmem:[%s5 + $0x10] sm:$0xff]
        %v2201 = vld [vmem:[%s5 + $0x18] sm:$0xff]
        %v2202 = vld [vmem:[%s5 + $0x20] sm:$0xff]
        %v2203 = vld [vmem:[%s5 + $0x28] sm:$0xff]
        %v2204 = vld [vmem:[%s5 + $0x30] sm:$0xff]
        %v2205 = vld [vmem:[%s5 + $0x38] sm:$0xff]
        %v2206 = vld [vmem:[%s5 + $0x40] sm:$0xff]
        %v2207 = vld [vmem:[%s5 + $0x48] sm:$0xff]
        %v2208 = vld [vmem:[%s5 + $0x50] sm:$0xff]
        %v2209 = vld [vmem:[%s5 + $0x58] sm:$0xff]
        %v2210 = vld [vmem:[%s5 + $0x60] sm:$0xff]
        %v2211 = vld [vmem:[%s5 + $0x68] sm:$0xff]
        %v2212 = vld [vmem:[%s5 + $0x70] sm:$0xff]
        %v2213 = vld [vmem:[%s5 + $0x78] sm:$0xff]
        %v2214 = vld [vmem:[%s5 + $0x80] sm:$0xff]
        %v2215 = vld [vmem:[%s5 + $0x88] sm:$0xff]
        %v2216 = vld [vmem:[%s5 + $0x90] sm:$0xff]
        %v2217 = vld [vmem:[%s5 + $0x98] sm:$0xff]
        %v2218 = vld [vmem:[%s5 + $0xa0] sm:$0xff]
        %v2219 = vld [vmem:[%s5 + $0xa8] sm:$0xff]
        %v2220 = vld [vmem:[%s5 + $0xb0] sm:$0xff]
        %v2221 = vld [vmem:[%s5 + $0xb8] sm:$0xff]
        %v2222 = vld [vmem:[%s5 + $0xc0] sm:$0xff]
        %v2223 = vld [vmem:[%s5 + $0xc8] sm:$0xff]
        %v2224 = vld [vmem:[%s5 + $0xd0] sm:$0xff]
        %v2225 = vld [vmem:[%s5 + $0xd8] sm:$0xff]
        %v2226 = vld [vmem:[%s5 + $0xe0] sm:$0xff]
        %v2227 = vld [vmem:[%s5 + $0xe8] sm:$0xff]
        %v2228 = vld [vmem:[%s5 + $0xf0] sm:$0xff]
        %v2229 = vld [vmem:[%s5 + $0xf8] sm:$0xff]
        %v2230 = vld [vmem:[%s5 + $0x100] sm:$0xff]
        %v2231 = vld [vmem:[%s5 + $0x108] sm:$0xff]
        %v2232 = vld [vmem:[%s5 + $0x110] sm:$0xff]
        %v2233 = vld [vmem:[%s5 + $0x118] sm:$0xff]
        %v2234 = vld [vmem:[%s6] sm:$0x1]
        %v2236 = vlaneseq
        %v2237 = vshrl.u32 %v2236, 7
        %v2238 = vsub.s32 0, %v2237
        %v2239 = vrot.slane %v2234, %v2238
        %v2242 = vsel %vm2122, %v2194, 0
        %v2245 = vsel %vm2122, %v2197, 0
        %2247 = vmatprep.subr.mxu0 0.0
        %2248 = vmatpush1.msra.mxu0 %v2213
        %2249 = vmatprep.subr.mxu0 0.0
        %2250 = vmatpush1.msra.mxu0 %v2212
        %2251 = vmatprep.subr.mxu0 0.0
        %2252 = vmatpush1.msra.mxu0 %v2211
        %2253 = vmatprep.subr.mxu0 0.0
        %2254 = vmatpush1.msra.mxu0 %v2210
        %2255 = vmatprep.subr.mxu0 0.0
        %2256 = vmatpush1.msra.mxu0 %v2209
        %2257 = vmatprep.subr.mxu0 0.0
        %2258 = vmatpush1.msra.mxu0 %v2208
        %2259 = vmatprep.subr.mxu0 0.0
        %2260 = vmatpush1.msra.mxu0 %v2207
        %2261 = vmatprep.subr.mxu0 0.0
        %2262 = vmatpush1.msra.mxu0 %v2206
        %2263 = vmatprep.subr.mxu0 0.0
        %2264 = vmatpush1.msra.mxu0 %v2205
        %2265 = vmatprep.subr.mxu0 0.0
        %2266 = vmatpush1.msra.mxu0 %v2204
        %2267 = vmatprep.subr.mxu0 0.0
        %2268 = vmatpush1.msra.mxu0 %v2203
        %2269 = vmatprep.subr.mxu0 0.0
        %2270 = vmatpush1.msra.mxu0 %v2202
        %2271 = vmatprep.subr.mxu0 0.0
        %2272 = vmatpush1.msra.mxu0 %v2201
        %2273 = vmatprep.subr.mxu0 0.0
        %2274 = vmatpush1.msra.mxu0 %v2200
        %2275 = vmatprep.subr.mxu0 0.0
        %2276 = vmatpush1.msra.mxu0 %v2199
        %2277 = vmatprep.subr.mxu0 0.0
        %2278 = vmatpush1.msra.mxu0 %v2198
        %2279 = vmatprep.subr.mxu0 0.0
        %2280 = vmatpush2.msra.mxu0 %v2229
        %2281 = vmatprep.subr.mxu0 0.0
        %2282 = vmatpush2.msra.mxu0 %v2228
        %2283 = vmatprep.subr.mxu0 0.0
        %2284 = vmatpush2.msra.mxu0 %v2227
        %2285 = vmatprep.subr.mxu0 0.0
        %2286 = vmatpush2.msra.mxu0 %v2226
        %2287 = vmatprep.subr.mxu0 0.0
        %2288 = vmatpush2.msra.mxu0 %v2225
        %2289 = vmatprep.subr.mxu0 0.0
        %2290 = vmatpush2.msra.mxu0 %v2224
        %2291 = vmatprep.subr.mxu0 0.0
        %2292 = vmatpush2.msra.mxu0 %v2223
        %2293 = vmatprep.subr.mxu0 0.0
        %2294 = vmatpush2.msra.mxu0 %v2222
        %2295 = vmatprep.subr.mxu0 0.0
        %2296 = vmatpush2.msra.mxu0 %v2221
        %2297 = vmatprep.subr.mxu0 0.0
        %2298 = vmatpush2.msra.mxu0 %v2220
        %2299 = vmatprep.subr.mxu0 0.0
        %2300 = vmatpush2.msra.mxu0 %v2219
        %2301 = vmatprep.subr.mxu0 0.0
        %2302 = vmatpush2.msra.mxu0 %v2218
        %2303 = vmatprep.subr.mxu0 0.0
        %2304 = vmatpush2.msra.mxu0 %v2217
        %2305 = vmatprep.subr.mxu0 0.0
        %2306 = vmatpush2.msra.mxu0 %v2216
        %2307 = vmatprep.subr.mxu0 0.0
        %2308 = vmatpush2.msra.mxu0 %v2215
        %2309 = vmatprep.subr.mxu0 0.0
        %2310 = vmatpush2.msra.mxu0 %v2214
        %2311 = vmatprep.mubr.f32.mxu0 %v2193
        %2312 = vmatmul.mubr.f32.gmra.mxu0 %v2192
        %v2313 = vpop.f32.mrf.mxu0
        %v2314 = vadd.f32 %v2239, %v2313
        %v2315 = vpop.f32.mrf.mxu0
        %2316 = vmatprep.mubr.f32.mxu0 %v2196
        %2317 = vmatmul.mubr.f32.gmra.mxu0 %v2195
        %v2318 = vpop.f32.mrf.mxu0
        %v2319 = vadd.f32 %v2239, %v2318
        %v2320 = vpop.f32.mrf.mxu0
        %2321 = vdwg.mxu0
        %2322 = vmatprep.subr.mxu0 0.0
        %2323 = vmatpush1.msra.mxu0 0.0
        %2324 = vmatprep.subr.mxu0 0.0
        %2325 = vmatpush1.msra.mxu0 0.0
        %2326 = vmatprep.subr.mxu0 0.0
        %2327 = vmatpush1.msra.mxu0 0.0
        %2328 = vmatprep.subr.mxu0 0.0
        %2329 = vmatpush1.msra.mxu0 0.0
        %2330 = vmatprep.subr.mxu0 0.0
        %2331 = vmatpush1.msra.mxu0 0.0
        %2332 = vmatprep.subr.mxu0 0.0
        %2333 = vmatpush1.msra.mxu0 0.0
        %2334 = vmatprep.subr.mxu0 0.0
        %2335 = vmatpush1.msra.mxu0 0.0
        %2336 = vmatprep.subr.mxu0 0.0
        %2337 = vmatpush1.msra.mxu0 0.0
        %2338 = vmatprep.subr.mxu0 0.0
        %2339 = vmatpush1.msra.mxu0 0.0
        %2340 = vmatprep.subr.mxu0 0.0
        %2341 = vmatpush1.msra.mxu0 0.0
        %2342 = vmatprep.subr.mxu0 0.0
        %2343 = vmatpush1.msra.mxu0 0.0
        %2344 = vmatprep.subr.mxu0 0.0
        %2345 = vmatpush1.msra.mxu0 0.0
        %2346 = vmatprep.subr.mxu0 0.0
        %2347 = vmatpush1.msra.mxu0 %v2233
        %2348 = vmatprep.subr.mxu0 0.0
        %2349 = vmatpush1.msra.mxu0 %v2232
        %2350 = vmatprep.subr.mxu0 0.0
        %2351 = vmatpush1.msra.mxu0 %v2231
        %2352 = vmatprep.subr.mxu0 0.0
        %2353 = vmatpush1.msra.mxu0 %v2230
        %2354 = vmatprep.subr.mxu0 0.0
        %2355 = vmatpush2.msra.mxu0 0.0
        %2356 = vmatprep.subr.mxu0 0.0
        %2357 = vmatpush2.msra.mxu0 0.0
        %2358 = vmatprep.subr.mxu0 0.0
        %2359 = vmatpush2.msra.mxu0 0.0
        %2360 = vmatprep.subr.mxu0 0.0
        %2361 = vmatpush2.msra.mxu0 0.0
        %2362 = vmatprep.subr.mxu0 0.0
        %2363 = vmatpush2.msra.mxu0 0.0
        %2364 = vmatprep.subr.mxu0 0.0
        %2365 = vmatpush2.msra.mxu0 0.0
        %2366 = vmatprep.subr.mxu0 0.0
        %2367 = vmatpush2.msra.mxu0 0.0
        %2368 = vmatprep.subr.mxu0 0.0
        %2369 = vmatpush2.msra.mxu0 0.0
        %2370 = vmatprep.subr.mxu0 0.0
        %2371 = vmatpush2.msra.mxu0 0.0
        %2372 = vmatprep.subr.mxu0 0.0
        %2373 = vmatpush2.msra.mxu0 0.0
        %2374 = vmatprep.subr.mxu0 0.0
        %2375 = vmatpush2.msra.mxu0 0.0
        %2376 = vmatprep.subr.mxu0 0.0
        %2377 = vmatpush2.msra.mxu0 0.0
        %2378 = vmatprep.subr.mxu0 0.0
        %2379 = vmatpush2.msra.mxu0 0.0
        %2380 = vmatprep.subr.mxu0 0.0
        %2381 = vmatpush2.msra.mxu0 0.0
        %2382 = vmatprep.subr.mxu0 0.0
        %2383 = vmatpush2.msra.mxu0 0.0
        %2384 = vmatprep.subr.mxu0 0.0
        %2385 = vmatpush2.msra.mxu0 0.0
        %2386 = vmatprep.mubr.f32.mxu0 0.0
        %2387 = vmatmul.mubr.f32.gmra.mxu0 %v2242
        %v2388 = vpop.f32.mrf.mxu0
        %v2389 = vadd.f32 %v2314, %v2388
        %v2390 = vpop.f32.mrf.mxu0
        %2391 = vmatprep.mubr.f32.mxu0 0.0
        %2392 = vmatmul.mubr.f32.gmra.mxu0 %v2245
        %v2393 = vpop.f32.mrf.mxu0
        %v2394 = vadd.f32 %v2319, %v2393
        %v2395 = vpop.f32.mrf.mxu0
        %2396 = vdwg.mxu0
        %v2397 = vmax.f32 %v2389, 0.0
        %v2398 = vmax.f32 %v2394, 0.0
        %v2399 = vld [vmem:[%s7] sm:$0xff]
        %v2400 = vld [vmem:[%s7 + $0x8] sm:$0xff]
        %v2401 = vld [vmem:[%s7 + $0x10] sm:$0xff]
        %v2402 = vld [vmem:[%s7 + $0x18] sm:$0xff]
        %v2403 = vld [vmem:[%s7 + $0x20] sm:$0xf]
        %vm2404 = vcmask 130048
        %v2406 = vsel %vm2404, %v2399, 0
        %v2409 = vsel %vm2404, %v2400, 0
        %v2412 = vsel %vm2404, %v2401, 0
        %v2415 = vsel %vm2404, %v2402, 0
        %v2418 = vsel %vm2404, %v2403, 0
        %2420 = vmatprep.subr.mxu0 0.0
        %2421 = vmatpush1.msra.mxu0 0.0
        %2422 = vmatprep.subr.mxu0 0.0
        %2423 = vmatpush1.msra.mxu0 0.0
        %2424 = vmatprep.subr.mxu0 0.0
        %2425 = vmatpush1.msra.mxu0 0.0
        %2426 = vmatprep.subr.mxu0 0.0
        %2427 = vmatpush1.msra.mxu0 0.0
        %2428 = vmatprep.subr.mxu0 0.0
        %2429 = vmatpush1.msra.mxu0 0.0
        %2430 = vmatprep.subr.mxu0 0.0
        %2431 = vmatpush1.msra.mxu0 0.0
        %2432 = vmatprep.subr.mxu0 0.0
        %2433 = vmatpush1.msra.mxu0 0.0
        %2434 = vmatprep.subr.mxu0 0.0
        %2435 = vmatpush1.msra.mxu0 0.0
        %2436 = vmatprep.subr.mxu0 0.0
        %2437 = vmatpush1.msra.mxu0 0.0
        %2438 = vmatprep.subr.mxu0 0.0
        %2439 = vmatpush1.msra.mxu0 0.0
        %2440 = vmatprep.subr.mxu0 0.0
        %2441 = vmatpush1.msra.mxu0 0.0
        %2442 = vmatprep.subr.mxu0 0.0
        %2443 = vmatpush1.msra.mxu0 0.0
        %2444 = vmatprep.subr.mxu0 0.0
        %2445 = vmatpush1.msra.mxu0 0.0
        %2446 = vmatprep.subr.mxu0 0.0
        %2447 = vmatpush1.msra.mxu0 0.0
        %2448 = vmatprep.subr.mxu0 0.0
        %2449 = vmatpush1.msra.mxu0 %v2398
        %2450 = vmatprep.subr.mxu0 0.0
        %2451 = vmatpush1.msra.mxu0 %v2397
        %2452 = vmatprep.subr.mxu0 0.0
        %2453 = vmatpush2.msra.mxu0 0.0
        %2454 = vmatprep.subr.mxu0 0.0
        %2455 = vmatpush2.msra.mxu0 0.0
        %2456 = vmatprep.subr.mxu0 0.0
        %2457 = vmatpush2.msra.mxu0 0.0
        %2458 = vmatprep.subr.mxu0 0.0
        %2459 = vmatpush2.msra.mxu0 0.0
        %2460 = vmatprep.subr.mxu0 0.0
        %2461 = vmatpush2.msra.mxu0 0.0
        %2462 = vmatprep.subr.mxu0 0.0
        %2463 = vmatpush2.msra.mxu0 0.0
        %2464 = vmatprep.subr.mxu0 0.0
        %2465 = vmatpush2.msra.mxu0 0.0
        %2466 = vmatprep.subr.mxu0 0.0
        %2467 = vmatpush2.msra.mxu0 0.0
        %2468 = vmatprep.subr.mxu0 0.0
        %2469 = vmatpush2.msra.mxu0 0.0
        %2470 = vmatprep.subr.mxu0 0.0
        %2471 = vmatpush2.msra.mxu0 0.0
        %2472 = vmatprep.subr.mxu0 0.0
        %2473 = vmatpush2.msra.mxu0 0.0
        %2474 = vmatprep.subr.mxu0 0.0
        %2475 = vmatpush2.msra.mxu0 0.0
        %2476 = vmatprep.subr.mxu0 0.0
        %2477 = vmatpush2.msra.mxu0 0.0
        %2478 = vmatprep.subr.mxu0 0.0
        %2479 = vmatpush2.msra.mxu0 0.0
        %2480 = vmatprep.subr.mxu0 0.0
        %2481 = vmatpush2.msra.mxu0 0.0
        %2482 = vmatprep.subr.mxu0 0.0
        %2483 = vmatpush2.msra.mxu0 0.0
        %2484 = vmatprep.mubr.f32.mxu0 0.0
        %2485 = vmatmul.mubr.f32.gmra.mxu0 %v2406
        %v2486 = vpop.f32.mrf.mxu0
        %v2487 = vadd.f32 0.0, %v2486
        %v2488 = vpop.f32.mrf.mxu0
        %2489 = vmatprep.mubr.f32.mxu0 0.0
        %2490 = vmatmul.mubr.f32.gmra.mxu0 %v2409
        %v2491 = vpop.f32.mrf.mxu0
        %v2492 = vadd.f32 0.0, %v2491
        %v2493 = vpop.f32.mrf.mxu0
        %2494 = vmatprep.mubr.f32.mxu0 0.0
        %2495 = vmatmul.mubr.f32.gmra.mxu0 %v2412
        %v2496 = vpop.f32.mrf.mxu0
        %v2497 = vadd.f32 0.0, %v2496
        %v2498 = vpop.f32.mrf.mxu0
        %2499 = vmatprep.mubr.f32.mxu0 0.0
        %2500 = vmatmul.mubr.f32.gmra.mxu0 %v2415
        %v2501 = vpop.f32.mrf.mxu0
        %v2502 = vadd.f32 0.0, %v2501
        %v2503 = vpop.f32.mrf.mxu0
        %2504 = vmatprep.mubr.f32.mxu0 0.0
        %2505 = vmatmul.mubr.f32.gmra.mxu0 %v2418
        %v2506 = vpop.f32.mrf.mxu0
        %v2507 = vadd.f32 0.0, %v2506
        %v2508 = vpop.f32.mrf.mxu0
        %2509 = vdwg.mxu0
        %vm2510 = vcmask 519168
        %2511 = vst.msk [vmem:[#allocation4] sm:$0xf] %vm2510, %v2487
        %v2513 = vcombine.high %v2487, %v2487
        %2514 = vrot.lane.b32.xlu0 %v2513, 64
        %v2515 = vpop.permute.xlu0 %2514
        %vm2517 = vcmask 1043968
        %2518 = vst.msk [vmem:[#allocation4] sm:$0xf] %vm2517, %v2515
        %2519 = vst.msk [vmem:[#allocation4 + $0x4] sm:$0xf] %vm2510, %v2492
        %v2521 = vcombine.high %v2492, %v2492
        %2522 = vrot.lane.b32.xlu0 %v2521, 64
        %v2523 = vpop.permute.xlu0 %2522
        %2525 = vst.msk [vmem:[#allocation4 + $0x4] sm:$0xf] %vm2517, %v2523
        %2526 = vst.msk [vmem:[#allocation4 + $0x8] sm:$0xf] %vm2510, %v2497
        %v2528 = vcombine.high %v2497, %v2497
        %2529 = vrot.lane.b32.xlu0 %v2528, 64
        %v2530 = vpop.permute.xlu0 %2529
        %2532 = vst.msk [vmem:[#allocation4 + $0x8] sm:$0xf] %vm2517, %v2530
        %2533 = vst.msk [vmem:[#allocation4 + $0xc] sm:$0xf] %vm2510, %v2502
        %v2535 = vcombine.high %v2502, %v2502
        %2536 = vrot.lane.b32.xlu0 %v2535, 64
        %v2537 = vpop.permute.xlu0 %2536
        %2539 = vst.msk [vmem:[#allocation4 + $0xc] sm:$0xf] %vm2517, %v2537
        %2540 = vst.msk [vmem:[#allocation4 + $0x10] sm:$0xf] %vm2510, %v2507
        %v2541 = vld [vmem:[#allocation4] sm:$0xff]
        %v2542 = vld [vmem:[#allocation4 + $0x8] sm:$0xff]
        %v2543 = vld [vmem:[#allocation4 + $0x10] sm:$0xf]
        %v2544 = vld [vmem:[#allocation12] sm:$0xff]
        %v2545 = vld [vmem:[#allocation12 + $0x8] sm:$0xff]
        %v2546 = vld [vmem:[#allocation12 + $0x10] sm:$0xff]
        %v2547 = vld [vmem:[#allocation12 + $0x18] sm:$0xff]
        %v2548 = vld [vmem:[#allocation12 + $0x20] sm:$0xff]
        %v2549 = vld [vmem:[#allocation12 + $0x28] sm:$0xff]
        %v2550 = vld [vmem:[#allocation12 + $0x30] sm:$0xff]
        %v2551 = vld [vmem:[#allocation12 + $0x38] sm:$0xff]
        %v2552 = vld [vmem:[#allocation12 + $0x40] sm:$0xff]
        %v2553 = vld [vmem:[#allocation12 + $0x48] sm:$0xff]
        %v2554 = vld [vmem:[#allocation12 + $0x50] sm:$0xff]
        %v2555 = vld [vmem:[#allocation12 + $0x58] sm:$0xff]
        %v2556 = vld [vmem:[#allocation12 + $0x60] sm:$0xff]
        %v2557 = vld [vmem:[#allocation12 + $0x68] sm:$0xff]
        %v2558 = vld [vmem:[#allocation12 + $0x70] sm:$0xff]
        %v2559 = vld [vmem:[#allocation12 + $0x78] sm:$0xff]
        %v2560 = vld [vmem:[#allocation12 + $0x80] sm:$0xff]
        %v2561 = vld [vmem:[#allocation12 + $0x88] sm:$0xff]
        %v2562 = vld [vmem:[#allocation12 + $0x90] sm:$0xff]
        %v2563 = vld [vmem:[#allocation12 + $0x98] sm:$0xff]
        %v2564 = vld [vmem:[#allocation12 + $0xa0] sm:$0xff]
        %v2565 = vld [vmem:[#allocation12 + $0xa8] sm:$0xff]
        %v2566 = vld [vmem:[#allocation12 + $0xb0] sm:$0xff]
        %v2567 = vld [vmem:[#allocation12 + $0xb8] sm:$0xff]
        %v2568 = vld [vmem:[#allocation12 + $0xc0] sm:$0xff]
        %v2569 = vld [vmem:[#allocation12 + $0xc8] sm:$0xff]
        %v2570 = vld [vmem:[#allocation12 + $0xd0] sm:$0xff]
        %v2571 = vld [vmem:[#allocation12 + $0xd8] sm:$0xff]
        %v2572 = vld [vmem:[#allocation12 + $0xe0] sm:$0xff]
        %v2573 = vld [vmem:[#allocation12 + $0xe8] sm:$0xff]
        %v2574 = vld [vmem:[#allocation12 + $0xf0] sm:$0xff]
        %v2575 = vld [vmem:[#allocation12 + $0xf8] sm:$0xff]
        %v2576 = vld [vmem:[#allocation12 + $0x100] sm:$0xff]
        %v2577 = vld [vmem:[#allocation12 + $0x108] sm:$0xff]
        %v2578 = vld [vmem:[#allocation12 + $0x110] sm:$0xff]
        %v2579 = vld [vmem:[#allocation12 + $0x118] sm:$0xff]
        %v2580 = vld [vmem:[#allocation12 + $0x120] sm:$0xff]
        %v2581 = vld [vmem:[#allocation12 + $0x128] sm:$0xff]
        %v2582 = vld [vmem:[#allocation12 + $0x130] sm:$0xff]
        %v2583 = vld [vmem:[#allocation12 + $0x138] sm:$0xff]
        %v2584 = vld [vmem:[#allocation12 + $0x140] sm:$0xff]
        %v2585 = vld [vmem:[#allocation12 + $0x148] sm:$0xff]
        %v2586 = vld [vmem:[#allocation12 + $0x150] sm:$0xff]
        %v2587 = vld [vmem:[#allocation12 + $0x158] sm:$0xff]
        %v2588 = vld [vmem:[#allocation12 + $0x160] sm:$0xff]
        %v2589 = vld [vmem:[#allocation12 + $0x168] sm:$0xff]
        %v2590 = vld [vmem:[#allocation12 + $0x170] sm:$0xff]
        %v2591 = vld [vmem:[#allocation12 + $0x178] sm:$0xff]
        %v2592 = vld [vmem:[#allocation12 + $0x180] sm:$0xff]
        %v2593 = vld [vmem:[#allocation12 + $0x188] sm:$0xff]
        %v2594 = vld [vmem:[#allocation12 + $0x190] sm:$0xff]
        %v2595 = vld [vmem:[#allocation12 + $0x198] sm:$0xff]
        %v2596 = vld [vmem:[#allocation12 + $0x1a0] sm:$0xff]
        %v2597 = vld [vmem:[#allocation12 + $0x1a8] sm:$0xff]
        %v2598 = vld [vmem:[#allocation12 + $0x1b0] sm:$0xff]
        %v2599 = vld [vmem:[#allocation12 + $0x1b8] sm:$0xff]
        %v2600 = vld [vmem:[#allocation12 + $0x1c0] sm:$0xff]
        %v2601 = vld [vmem:[#allocation12 + $0x1c8] sm:$0xff]
        %v2602 = vld [vmem:[#allocation12 + $0x1d0] sm:$0xff]
        %v2603 = vld [vmem:[#allocation12 + $0x1d8] sm:$0xff]
        %v2604 = vld [vmem:[#allocation12 + $0x1e0] sm:$0xff]
        %v2605 = vld [vmem:[#allocation12 + $0x1e8] sm:$0xff]
        %v2606 = vld [vmem:[#allocation12 + $0x1f0] sm:$0xff]
        %v2607 = vld [vmem:[#allocation12 + $0x1f8] sm:$0xff]
        %v2608 = vld [vmem:[#allocation12 + $0x200] sm:$0xff]
        %v2609 = vld [vmem:[#allocation12 + $0x208] sm:$0xff]
        %v2610 = vld [vmem:[#allocation12 + $0x210] sm:$0xff]
        %v2611 = vld [vmem:[#allocation12 + $0x218] sm:$0xff]
        %v2612 = vld [vmem:[#allocation12 + $0x220] sm:$0xff]
        %v2613 = vld [vmem:[#allocation12 + $0x228] sm:$0xff]
        %v2614 = vld [vmem:[#allocation12 + $0x230] sm:$0xff]
        %v2615 = vld [vmem:[#allocation12 + $0x238] sm:$0xff]
        %v2616 = vld [vmem:[%s9] sm:$0x1]
        %v2618 = vlaneseq
        %v2619 = vshrl.u32 %v2618, 7
        %v2620 = vsub.s32 0, %v2619
        %v2621 = vrot.slane %v2616, %v2620
        %v2626 = vcombine.high %v2541, %v2541
        %v2627 = vcombine.high %v2542, %v2542
        %v2630 = vsel %vm1912, %v2543, 0
        %2632 = vmatprep.subr.mxu0 0.0
        %2633 = vmatpush1.msra.mxu0 %v2559
        %2634 = vmatprep.subr.mxu0 0.0
        %2635 = vmatpush1.msra.mxu0 %v2558
        %2636 = vmatprep.subr.mxu0 0.0
        %2637 = vmatpush1.msra.mxu0 %v2557
        %2638 = vmatprep.subr.mxu0 0.0
        %2639 = vmatpush1.msra.mxu0 %v2556
        %2640 = vmatprep.subr.mxu0 0.0
        %2641 = vmatpush1.msra.mxu0 %v2555
        %2642 = vmatprep.subr.mxu0 0.0
        %2643 = vmatpush1.msra.mxu0 %v2554
        %2644 = vmatprep.subr.mxu0 0.0
        %2645 = vmatpush1.msra.mxu0 %v2553
        %2646 = vmatprep.subr.mxu0 0.0
        %2647 = vmatpush1.msra.mxu0 %v2552
        %2648 = vmatprep.subr.mxu0 0.0
        %2649 = vmatpush1.msra.mxu0 %v2551
        %2650 = vmatprep.subr.mxu0 0.0
        %2651 = vmatpush1.msra.mxu0 %v2550
        %2652 = vmatprep.subr.mxu0 0.0
        %2653 = vmatpush1.msra.mxu0 %v2549
        %2654 = vmatprep.subr.mxu0 0.0
        %2655 = vmatpush1.msra.mxu0 %v2548
        %2656 = vmatprep.subr.mxu0 0.0
        %2657 = vmatpush1.msra.mxu0 %v2547
        %2658 = vmatprep.subr.mxu0 0.0
        %2659 = vmatpush1.msra.mxu0 %v2546
        %2660 = vmatprep.subr.mxu0 0.0
        %2661 = vmatpush1.msra.mxu0 %v2545
        %2662 = vmatprep.subr.mxu0 0.0
        %2663 = vmatpush1.msra.mxu0 %v2544
        %2664 = vmatprep.subr.mxu0 0.0
        %2665 = vmatpush2.msra.mxu0 %v2575
        %2666 = vmatprep.subr.mxu0 0.0
        %2667 = vmatpush2.msra.mxu0 %v2574
        %2668 = vmatprep.subr.mxu0 0.0
        %2669 = vmatpush2.msra.mxu0 %v2573
        %2670 = vmatprep.subr.mxu0 0.0
        %2671 = vmatpush2.msra.mxu0 %v2572
        %2672 = vmatprep.subr.mxu0 0.0
        %2673 = vmatpush2.msra.mxu0 %v2571
        %2674 = vmatprep.subr.mxu0 0.0
        %2675 = vmatpush2.msra.mxu0 %v2570
        %2676 = vmatprep.subr.mxu0 0.0
        %2677 = vmatpush2.msra.mxu0 %v2569
        %2678 = vmatprep.subr.mxu0 0.0
        %2679 = vmatpush2.msra.mxu0 %v2568
        %2680 = vmatprep.subr.mxu0 0.0
        %2681 = vmatpush2.msra.mxu0 %v2567
        %2682 = vmatprep.subr.mxu0 0.0
        %2683 = vmatpush2.msra.mxu0 %v2566
        %2684 = vmatprep.subr.mxu0 0.0
        %2685 = vmatpush2.msra.mxu0 %v2565
        %2686 = vmatprep.subr.mxu0 0.0
        %2687 = vmatpush2.msra.mxu0 %v2564
        %2688 = vmatprep.subr.mxu0 0.0
        %2689 = vmatpush2.msra.mxu0 %v2563
        %2690 = vmatprep.subr.mxu0 0.0
        %2691 = vmatpush2.msra.mxu0 %v2562
        %2692 = vmatprep.subr.mxu0 0.0
        %2693 = vmatpush2.msra.mxu0 %v2561
        %2694 = vmatprep.subr.mxu0 0.0
        %2695 = vmatpush2.msra.mxu0 %v2560
        %2696 = vmatprep.mubr.f32.mxu0 %v2626
        %2697 = vmatmul.mubr.f32.gmra.mxu0 %v2541
        %v2698 = vpop.f32.mrf.mxu0
        %v2699 = vadd.f32 %v2621, %v2698
        %v2700 = vpop.f32.mrf.mxu0
        %2701 = vdwg.mxu0
        %2702 = vmatprep.subr.mxu0 0.0
        %2703 = vmatpush1.msra.mxu0 %v2591
        %2704 = vmatprep.subr.mxu0 0.0
        %2705 = vmatpush1.msra.mxu0 %v2590
        %2706 = vmatprep.subr.mxu0 0.0
        %2707 = vmatpush1.msra.mxu0 %v2589
        %2708 = vmatprep.subr.mxu0 0.0
        %2709 = vmatpush1.msra.mxu0 %v2588
        %2710 = vmatprep.subr.mxu0 0.0
        %2711 = vmatpush1.msra.mxu0 %v2587
        %2712 = vmatprep.subr.mxu0 0.0
        %2713 = vmatpush1.msra.mxu0 %v2586
        %2714 = vmatprep.subr.mxu0 0.0
        %2715 = vmatpush1.msra.mxu0 %v2585
        %2716 = vmatprep.subr.mxu0 0.0
        %2717 = vmatpush1.msra.mxu0 %v2584
        %2718 = vmatprep.subr.mxu0 0.0
        %2719 = vmatpush1.msra.mxu0 %v2583
        %2720 = vmatprep.subr.mxu0 0.0
        %2721 = vmatpush1.msra.mxu0 %v2582
        %2722 = vmatprep.subr.mxu0 0.0
        %2723 = vmatpush1.msra.mxu0 %v2581
        %2724 = vmatprep.subr.mxu0 0.0
        %2725 = vmatpush1.msra.mxu0 %v2580
        %2726 = vmatprep.subr.mxu0 0.0
        %2727 = vmatpush1.msra.mxu0 %v2579
        %2728 = vmatprep.subr.mxu0 0.0
        %2729 = vmatpush1.msra.mxu0 %v2578
        %2730 = vmatprep.subr.mxu0 0.0
        %2731 = vmatpush1.msra.mxu0 %v2577
        %2732 = vmatprep.subr.mxu0 0.0
        %2733 = vmatpush1.msra.mxu0 %v2576
        %2734 = vmatprep.subr.mxu0 0.0
        %2735 = vmatpush2.msra.mxu0 %v2607
        %2736 = vmatprep.subr.mxu0 0.0
        %2737 = vmatpush2.msra.mxu0 %v2606
        %2738 = vmatprep.subr.mxu0 0.0
        %2739 = vmatpush2.msra.mxu0 %v2605
        %2740 = vmatprep.subr.mxu0 0.0
        %2741 = vmatpush2.msra.mxu0 %v2604
        %2742 = vmatprep.subr.mxu0 0.0
        %2743 = vmatpush2.msra.mxu0 %v2603
        %2744 = vmatprep.subr.mxu0 0.0
        %2745 = vmatpush2.msra.mxu0 %v2602
        %2746 = vmatprep.subr.mxu0 0.0
        %2747 = vmatpush2.msra.mxu0 %v2601
        %2748 = vmatprep.subr.mxu0 0.0
        %2749 = vmatpush2.msra.mxu0 %v2600
        %2750 = vmatprep.subr.mxu0 0.0
        %2751 = vmatpush2.msra.mxu0 %v2599
        %2752 = vmatprep.subr.mxu0 0.0
        %2753 = vmatpush2.msra.mxu0 %v2598
        %2754 = vmatprep.subr.mxu0 0.0
        %2755 = vmatpush2.msra.mxu0 %v2597
        %2756 = vmatprep.subr.mxu0 0.0
        %2757 = vmatpush2.msra.mxu0 %v2596
        %2758 = vmatprep.subr.mxu0 0.0
        %2759 = vmatpush2.msra.mxu0 %v2595
        %2760 = vmatprep.subr.mxu0 0.0
        %2761 = vmatpush2.msra.mxu0 %v2594
        %2762 = vmatprep.subr.mxu0 0.0
        %2763 = vmatpush2.msra.mxu0 %v2593
        %2764 = vmatprep.subr.mxu0 0.0
        %2765 = vmatpush2.msra.mxu0 %v2592
        %2766 = vmatprep.mubr.f32.mxu0 %v2627
        %2767 = vmatmul.mubr.f32.gmra.mxu0 %v2542
        %v2768 = vpop.f32.mrf.mxu0
        %v2769 = vadd.f32 %v2699, %v2768
        %v2770 = vpop.f32.mrf.mxu0
        %2771 = vdwg.mxu0
        %2772 = vmatprep.subr.mxu0 0.0
        %2773 = vmatpush1.msra.mxu0 0.0
        %2774 = vmatprep.subr.mxu0 0.0
        %2775 = vmatpush1.msra.mxu0 0.0
        %2776 = vmatprep.subr.mxu0 0.0
        %2777 = vmatpush1.msra.mxu0 0.0
        %2778 = vmatprep.subr.mxu0 0.0
        %2779 = vmatpush1.msra.mxu0 0.0
        %2780 = vmatprep.subr.mxu0 0.0
        %2781 = vmatpush1.msra.mxu0 0.0
        %2782 = vmatprep.subr.mxu0 0.0
        %2783 = vmatpush1.msra.mxu0 0.0
        %2784 = vmatprep.subr.mxu0 0.0
        %2785 = vmatpush1.msra.mxu0 0.0
        %2786 = vmatprep.subr.mxu0 0.0
        %2787 = vmatpush1.msra.mxu0 0.0
        %2788 = vmatprep.subr.mxu0 0.0
        %2789 = vmatpush1.msra.mxu0 %v2615
        %2790 = vmatprep.subr.mxu0 0.0
        %2791 = vmatpush1.msra.mxu0 %v2614
        %2792 = vmatprep.subr.mxu0 0.0
        %2793 = vmatpush1.msra.mxu0 %v2613
        %2794 = vmatprep.subr.mxu0 0.0
        %2795 = vmatpush1.msra.mxu0 %v2612
        %2796 = vmatprep.subr.mxu0 0.0
        %2797 = vmatpush1.msra.mxu0 %v2611
        %2798 = vmatprep.subr.mxu0 0.0
        %2799 = vmatpush1.msra.mxu0 %v2610
        %2800 = vmatprep.subr.mxu0 0.0
        %2801 = vmatpush1.msra.mxu0 %v2609
        %2802 = vmatprep.subr.mxu0 0.0
        %2803 = vmatpush1.msra.mxu0 %v2608
        %2804 = vmatprep.subr.mxu0 0.0
        %2805 = vmatpush2.msra.mxu0 0.0
        %2806 = vmatprep.subr.mxu0 0.0
        %2807 = vmatpush2.msra.mxu0 0.0
        %2808 = vmatprep.subr.mxu0 0.0
        %2809 = vmatpush2.msra.mxu0 0.0
        %2810 = vmatprep.subr.mxu0 0.0
        %2811 = vmatpush2.msra.mxu0 0.0
        %2812 = vmatprep.subr.mxu0 0.0
        %2813 = vmatpush2.msra.mxu0 0.0
        %2814 = vmatprep.subr.mxu0 0.0
        %2815 = vmatpush2.msra.mxu0 0.0
        %2816 = vmatprep.subr.mxu0 0.0
        %2817 = vmatpush2.msra.mxu0 0.0
        %2818 = vmatprep.subr.mxu0 0.0
        %2819 = vmatpush2.msra.mxu0 0.0
        %2820 = vmatprep.subr.mxu0 0.0
        %2821 = vmatpush2.msra.mxu0 0.0
        %2822 = vmatprep.subr.mxu0 0.0
        %2823 = vmatpush2.msra.mxu0 0.0
        %2824 = vmatprep.subr.mxu0 0.0
        %2825 = vmatpush2.msra.mxu0 0.0
        %2826 = vmatprep.subr.mxu0 0.0
        %2827 = vmatpush2.msra.mxu0 0.0
        %2828 = vmatprep.subr.mxu0 0.0
        %2829 = vmatpush2.msra.mxu0 0.0
        %2830 = vmatprep.subr.mxu0 0.0
        %2831 = vmatpush2.msra.mxu0 0.0
        %2832 = vmatprep.subr.mxu0 0.0
        %2833 = vmatpush2.msra.mxu0 0.0
        %2834 = vmatprep.subr.mxu0 0.0
        %2835 = vmatpush2.msra.mxu0 0.0
        %2836 = vmatprep.mubr.f32.mxu0 0.0
        %2837 = vmatmul.mubr.f32.gmra.mxu0 %v2630
        %v2838 = vpop.f32.mrf.mxu0
        %v2839 = vadd.f32 %v2769, %v2838
        %v2840 = vpop.f32.mrf.mxu0
        %2841 = vdwg.mxu0
        %v2842 = vmax.f32 %v2839, 0.0
        %v2843 = vld [vmem:[%s10] sm:$0xff]
        %v2844 = vld [vmem:[%s10 + $0x8] sm:$0xff]
        %v2845 = vld [vmem:[%s10 + $0x10] sm:$0xff]
        %v2846 = vld [vmem:[%s10 + $0x18] sm:$0xff]
        %v2847 = vld [vmem:[%s10 + $0x20] sm:$0xff]
        %v2848 = vld [vmem:[%s10 + $0x28] sm:$0xff]
        %v2849 = vld [vmem:[%s10 + $0x30] sm:$0xff]
        %v2850 = vld [vmem:[%s10 + $0x38] sm:$0xff]
        %v2851 = vld [vmem:[%s10 + $0x40] sm:$0xff]
        %v2852 = vld [vmem:[%s10 + $0x48] sm:$0xff]
        %v2853 = vld [vmem:[%s10 + $0x50] sm:$0xff]
        %v2854 = vld [vmem:[%s10 + $0x58] sm:$0xff]
        %v2855 = vld [vmem:[%s10 + $0x60] sm:$0xff]
        %v2856 = vld [vmem:[%s10 + $0x68] sm:$0xff]
        %v2857 = vld [vmem:[%s10 + $0x70] sm:$0xff]
        %v2858 = vld [vmem:[%s10 + $0x78] sm:$0xff]
        %v2859 = vld [vmem:[%s10 + $0x80] sm:$0xff]
        %v2860 = vld [vmem:[%s10 + $0x88] sm:$0xff]
        %v2861 = vld [vmem:[%s10 + $0x90] sm:$0xff]
        %v2862 = vld [vmem:[%s10 + $0x98] sm:$0xff]
        %v2863 = vld [vmem:[%s10 + $0xa0] sm:$0xff]
        %v2864 = vld [vmem:[%s10 + $0xa8] sm:$0xff]
        %v2865 = vld [vmem:[%s10 + $0xb0] sm:$0xff]
        %v2866 = vld [vmem:[%s10 + $0xb8] sm:$0xff]
        %v2867 = vld [vmem:[%s10 + $0xc0] sm:$0xff]
        %v2868 = vld [vmem:[%s10 + $0xc8] sm:$0xff]
        %v2869 = vld [vmem:[%s10 + $0xd0] sm:$0xff]
        %v2870 = vld [vmem:[%s10 + $0xd8] sm:$0xff]
        %v2871 = vld [vmem:[%s10 + $0xe0] sm:$0xff]
        %v2872 = vld [vmem:[%s10 + $0xe8] sm:$0xff]
        %v2873 = vld [vmem:[%s10 + $0xf0] sm:$0xff]
        %v2874 = vld [vmem:[%s10 + $0xf8] sm:$0xff]
        %v2875 = vld [vmem:[%s10 + $0x100] sm:$0xff]
        %v2876 = vld [vmem:[%s10 + $0x108] sm:$0xff]
        %v2877 = vld [vmem:[%s10 + $0x110] sm:$0xff]
        %v2878 = vld [vmem:[%s10 + $0x118] sm:$0xff]
        %v2879 = vld [vmem:[%s10 + $0x120] sm:$0xff]
        %v2880 = vld [vmem:[%s10 + $0x128] sm:$0xff]
        %v2881 = vld [vmem:[%s10 + $0x130] sm:$0xff]
        %v2882 = vld [vmem:[%s10 + $0x138] sm:$0xff]
        %v2883 = vld [vmem:[%s10 + $0x140] sm:$0xff]
        %v2884 = vld [vmem:[%s10 + $0x148] sm:$0xff]
        %v2885 = vld [vmem:[%s10 + $0x150] sm:$0xff]
        %v2886 = vld [vmem:[%s10 + $0x158] sm:$0xff]
        %v2887 = vld [vmem:[%s10 + $0x160] sm:$0xff]
        %v2888 = vld [vmem:[%s10 + $0x168] sm:$0xff]
        %v2889 = vld [vmem:[%s10 + $0x170] sm:$0xff]
        %v2890 = vld [vmem:[%s10 + $0x178] sm:$0xff]
        %v2891 = vld [vmem:[%s10 + $0x180] sm:$0xff]
        %v2892 = vld [vmem:[%s10 + $0x188] sm:$0xff]
        %v2893 = vld [vmem:[%s10 + $0x190] sm:$0xff]
        %v2894 = vld [vmem:[%s10 + $0x198] sm:$0xff]
        %v2895 = vld [vmem:[%s10 + $0x1a0] sm:$0xff]
        %v2896 = vld [vmem:[%s10 + $0x1a8] sm:$0xff]
        %v2897 = vld [vmem:[%s10 + $0x1b0] sm:$0xff]
        %v2898 = vld [vmem:[%s10 + $0x1b8] sm:$0xff]
        %v2899 = vld [vmem:[%s10 + $0x1c0] sm:$0xff]
        %v2900 = vld [vmem:[%s10 + $0x1c8] sm:$0xff]
        %v2901 = vld [vmem:[%s10 + $0x1d0] sm:$0xff]
        %v2902 = vld [vmem:[%s10 + $0x1d8] sm:$0xff]
        %v2903 = vld [vmem:[%s10 + $0x1e0] sm:$0xff]
        %v2904 = vld [vmem:[%s10 + $0x1e8] sm:$0xff]
        %v2905 = vld [vmem:[%s10 + $0x1f0] sm:$0xff]
        %v2906 = vld [vmem:[%s10 + $0x1f8] sm:$0xff]
        %v2907 = vld [vmem:[%s10 + $0x200] sm:$0xff]
        %v2908 = vld [vmem:[%s10 + $0x208] sm:$0xff]
        %v2909 = vld [vmem:[%s10 + $0x210] sm:$0xff]
        %v2910 = vld [vmem:[%s10 + $0x218] sm:$0xff]
        %v2911 = vld [vmem:[%s10 + $0x220] sm:$0xff]
        %v2912 = vld [vmem:[%s10 + $0x228] sm:$0xff]
        %v2913 = vld [vmem:[%s10 + $0x230] sm:$0xff]
        %v2914 = vld [vmem:[%s10 + $0x238] sm:$0xff]
        %v2915 = vld [vmem:[%s10 + $0x240] sm:$0xff]
        %v2916 = vld [vmem:[%s10 + $0x248] sm:$0xff]
        %v2917 = vld [vmem:[%s10 + $0x250] sm:$0xff]
        %v2918 = vld [vmem:[%s10 + $0x258] sm:$0xff]
        %v2919 = vld [vmem:[%s10 + $0x260] sm:$0xff]
        %v2920 = vld [vmem:[%s10 + $0x268] sm:$0xff]
        %v2921 = vld [vmem:[%s10 + $0x270] sm:$0xff]
        %v2922 = vld [vmem:[%s10 + $0x278] sm:$0xff]
        %v2923 = vld [vmem:[%s10 + $0x280] sm:$0xff]
        %v2924 = vld [vmem:[%s10 + $0x288] sm:$0xff]
        %v2925 = vld [vmem:[%s10 + $0x290] sm:$0xff]
        %v2926 = vld [vmem:[%s10 + $0x298] sm:$0xff]
        %v2927 = vld [vmem:[%s10 + $0x2a0] sm:$0xff]
        %v2928 = vld [vmem:[%s10 + $0x2a8] sm:$0xff]
        %v2929 = vld [vmem:[%s10 + $0x2b0] sm:$0xff]
        %v2930 = vld [vmem:[%s10 + $0x2b8] sm:$0xff]
        %v2931 = vld [vmem:[%s10 + $0x2c0] sm:$0xff]
        %v2932 = vld [vmem:[%s10 + $0x2c8] sm:$0xff]
        %v2933 = vld [vmem:[%s10 + $0x2d0] sm:$0xff]
        %v2934 = vld [vmem:[%s10 + $0x2d8] sm:$0xff]
        %v2935 = vld [vmem:[%s10 + $0x2e0] sm:$0xff]
        %v2936 = vld [vmem:[%s10 + $0x2e8] sm:$0xff]
        %v2937 = vld [vmem:[%s10 + $0x2f0] sm:$0xff]
        %v2938 = vld [vmem:[%s10 + $0x2f8] sm:$0xff]
        %v2939 = vld [vmem:[%s10 + $0x300] sm:$0xff]
        %v2940 = vld [vmem:[%s10 + $0x308] sm:$0xff]
        %v2941 = vld [vmem:[%s10 + $0x310] sm:$0xff]
        %v2942 = vld [vmem:[%s10 + $0x318] sm:$0xff]
        %v2943 = vld [vmem:[%s10 + $0x320] sm:$0xff]
        %v2944 = vld [vmem:[%s10 + $0x328] sm:$0xff]
        %v2945 = vld [vmem:[%s10 + $0x330] sm:$0xff]
        %v2946 = vld [vmem:[%s10 + $0x338] sm:$0xff]
        %v2947 = vld [vmem:[%s10 + $0x340] sm:$0xff]
        %v2948 = vld [vmem:[%s10 + $0x348] sm:$0xff]
        %v2949 = vld [vmem:[%s10 + $0x350] sm:$0xff]
        %v2950 = vld [vmem:[%s10 + $0x358] sm:$0xff]
        %v2951 = vld [vmem:[%s10 + $0x360] sm:$0xff]
        %v2952 = vld [vmem:[%s10 + $0x368] sm:$0xff]
        %v2953 = vld [vmem:[%s10 + $0x370] sm:$0xff]
        %v2954 = vld [vmem:[%s10 + $0x378] sm:$0xff]
        %v2955 = vld [vmem:[%s10 + $0x380] sm:$0xff]
        %v2956 = vld [vmem:[%s10 + $0x388] sm:$0xff]
        %v2957 = vld [vmem:[%s10 + $0x390] sm:$0xff]
        %v2958 = vld [vmem:[%s10 + $0x398] sm:$0xff]
        %v2959 = vld [vmem:[%s10 + $0x3a0] sm:$0xff]
        %v2960 = vld [vmem:[%s10 + $0x3a8] sm:$0xff]
        %v2961 = vld [vmem:[%s10 + $0x3b0] sm:$0xff]
        %v2962 = vld [vmem:[%s10 + $0x3b8] sm:$0xff]
        %v2963 = vld [vmem:[%s10 + $0x3c0] sm:$0xff]
        %v2964 = vld [vmem:[%s10 + $0x3c8] sm:$0xff]
        %v2965 = vld [vmem:[%s10 + $0x3d0] sm:$0xff]
        %v2966 = vld [vmem:[%s10 + $0x3d8] sm:$0xff]
        %v2967 = vld [vmem:[%s10 + $0x3e0] sm:$0xff]
        %v2968 = vld [vmem:[%s10 + $0x3e8] sm:$0xff]
        %v2969 = vld [vmem:[%s10 + $0x3f0] sm:$0xff]
        %v2970 = vld [vmem:[%s10 + $0x3f8] sm:$0xff]
        %v2971 = vld [vmem:[%s10 + $0x400] sm:$0xff]
        %v2972 = vld [vmem:[%s10 + $0x408] sm:$0xff]
        %v2973 = vld [vmem:[%s10 + $0x410] sm:$0xff]
        %v2974 = vld [vmem:[%s10 + $0x418] sm:$0xff]
        %v2975 = vld [vmem:[%s10 + $0x420] sm:$0xff]
        %v2976 = vld [vmem:[%s10 + $0x428] sm:$0xff]
        %v2977 = vld [vmem:[%s10 + $0x430] sm:$0xff]
        %v2978 = vld [vmem:[%s10 + $0x438] sm:$0xff]
        %v2979 = vld [vmem:[%s10 + $0x440] sm:$0xff]
        %v2980 = vld [vmem:[%s10 + $0x448] sm:$0xff]
        %v2981 = vld [vmem:[%s10 + $0x450] sm:$0xff]
        %v2982 = vld [vmem:[%s10 + $0x458] sm:$0xff]
        %v2983 = vld [vmem:[%s10 + $0x460] sm:$0xff]
        %v2984 = vld [vmem:[%s10 + $0x468] sm:$0xff]
        %v2985 = vld [vmem:[%s10 + $0x470] sm:$0xff]
        %v2986 = vld [vmem:[%s10 + $0x478] sm:$0xff]
        %v2987 = vld [vmem:[%s10 + $0x480] sm:$0xff]
        %v2988 = vld [vmem:[%s10 + $0x488] sm:$0xff]
        %v2989 = vld [vmem:[%s10 + $0x490] sm:$0xff]
        %v2990 = vld [vmem:[%s10 + $0x498] sm:$0xff]
        %v2991 = vld [vmem:[%s10 + $0x4a0] sm:$0xff]
        %v2992 = vld [vmem:[%s10 + $0x4a8] sm:$0xff]
        %v2993 = vld [vmem:[%s10 + $0x4b0] sm:$0xff]
        %v2994 = vld [vmem:[%s10 + $0x4b8] sm:$0xff]
        %v2995 = vld [vmem:[%s10 + $0x4c0] sm:$0xff]
        %v2996 = vld [vmem:[%s10 + $0x4c8] sm:$0xff]
        %v2997 = vld [vmem:[%s10 + $0x4d0] sm:$0xff]
        %v2998 = vld [vmem:[%s10 + $0x4d8] sm:$0xff]
        %v2999 = vld [vmem:[%s10 + $0x4e0] sm:$0xff]
        %v3000 = vld [vmem:[%s10 + $0x4e8] sm:$0xff]
        %v3001 = vld [vmem:[%s10 + $0x4f0] sm:$0xff]
        %v3002 = vld [vmem:[%s10 + $0x4f8] sm:$0xff]
        %v3003 = vld [vmem:[%s10 + $0x500] sm:$0xff]
        %v3004 = vld [vmem:[%s10 + $0x508] sm:$0xff]
        %v3005 = vld [vmem:[%s10 + $0x510] sm:$0xff]
        %v3006 = vld [vmem:[%s10 + $0x518] sm:$0xff]
        %v3007 = vld [vmem:[%s10 + $0x520] sm:$0xff]
        %v3008 = vld [vmem:[%s10 + $0x528] sm:$0xff]
        %v3009 = vld [vmem:[%s10 + $0x530] sm:$0xff]
        %v3010 = vld [vmem:[%s10 + $0x538] sm:$0xff]
        %v3011 = vld [vmem:[%s10 + $0x540] sm:$0xff]
        %v3012 = vld [vmem:[%s10 + $0x548] sm:$0xff]
        %v3013 = vld [vmem:[%s10 + $0x550] sm:$0xff]
        %v3014 = vld [vmem:[%s10 + $0x558] sm:$0xff]
        %v3015 = vld [vmem:[%s10 + $0x560] sm:$0xff]
        %v3016 = vld [vmem:[%s10 + $0x568] sm:$0xff]
        %v3017 = vld [vmem:[%s10 + $0x570] sm:$0xff]
        %v3018 = vld [vmem:[%s10 + $0x578] sm:$0xff]
        %v3019 = vld [vmem:[%s10 + $0x580] sm:$0xff]
        %v3020 = vld [vmem:[%s10 + $0x588] sm:$0xff]
        %v3021 = vld [vmem:[%s10 + $0x590] sm:$0xff]
        %v3022 = vld [vmem:[%s10 + $0x598] sm:$0xff]
        %v3023 = vld [vmem:[%s10 + $0x5a0] sm:$0xff]
        %v3024 = vld [vmem:[%s10 + $0x5a8] sm:$0xff]
        %v3025 = vld [vmem:[%s10 + $0x5b0] sm:$0xff]
        %v3026 = vld [vmem:[%s10 + $0x5b8] sm:$0xff]
        %v3027 = vld [vmem:[%s10 + $0x5c0] sm:$0xff]
        %v3028 = vld [vmem:[%s10 + $0x5c8] sm:$0xff]
        %v3029 = vld [vmem:[%s10 + $0x5d0] sm:$0xff]
        %v3030 = vld [vmem:[%s10 + $0x5d8] sm:$0xff]
        %v3031 = vld [vmem:[%s10 + $0x5e0] sm:$0xff]
        %v3032 = vld [vmem:[%s10 + $0x5e8] sm:$0xff]
        %v3033 = vld [vmem:[%s10 + $0x5f0] sm:$0xff]
        %v3034 = vld [vmem:[%s10 + $0x5f8] sm:$0xff]
        %v3035 = vld [vmem:[%s10 + $0x600] sm:$0xff]
        %v3036 = vld [vmem:[%s10 + $0x608] sm:$0xff]
        %v3037 = vld [vmem:[%s10 + $0x610] sm:$0xff]
        %v3038 = vld [vmem:[%s10 + $0x618] sm:$0xff]
        %v3039 = vld [vmem:[%s10 + $0x620] sm:$0xff]
        %v3040 = vld [vmem:[%s10 + $0x628] sm:$0xff]
        %v3041 = vld [vmem:[%s10 + $0x630] sm:$0xff]
        %v3042 = vld [vmem:[%s10 + $0x638] sm:$0xff]
        %v3043 = vld [vmem:[%s10 + $0x640] sm:$0xff]
        %v3044 = vld [vmem:[%s10 + $0x648] sm:$0xff]
        %v3045 = vld [vmem:[%s10 + $0x650] sm:$0xff]
        %v3046 = vld [vmem:[%s10 + $0x658] sm:$0xff]
        %v3047 = vld [vmem:[%s10 + $0x660] sm:$0xff]
        %v3048 = vld [vmem:[%s10 + $0x668] sm:$0xff]
        %v3049 = vld [vmem:[%s10 + $0x670] sm:$0xff]
        %v3050 = vld [vmem:[%s10 + $0x678] sm:$0xff]
        %v3051 = vld [vmem:[%s10 + $0x680] sm:$0xff]
        %v3052 = vld [vmem:[%s10 + $0x688] sm:$0xff]
        %v3053 = vld [vmem:[%s10 + $0x690] sm:$0xff]
        %v3054 = vld [vmem:[%s10 + $0x698] sm:$0xff]
        %v3055 = vld [vmem:[%s10 + $0x6a0] sm:$0xff]
        %v3056 = vld [vmem:[%s10 + $0x6a8] sm:$0xff]
        %v3057 = vld [vmem:[%s10 + $0x6b0] sm:$0xff]
        %v3058 = vld [vmem:[%s10 + $0x6b8] sm:$0xff]
        %v3059 = vld [vmem:[%s10 + $0x6c0] sm:$0xff]
        %v3060 = vld [vmem:[%s10 + $0x6c8] sm:$0xff]
        %v3061 = vld [vmem:[%s10 + $0x6d0] sm:$0xff]
        %v3062 = vld [vmem:[%s10 + $0x6d8] sm:$0xff]
        %v3063 = vld [vmem:[%s10 + $0x6e0] sm:$0xff]
        %v3064 = vld [vmem:[%s10 + $0x6e8] sm:$0xff]
        %v3065 = vld [vmem:[%s10 + $0x6f0] sm:$0xff]
        %v3066 = vld [vmem:[%s10 + $0x6f8] sm:$0xff]
        %v3067 = vld [vmem:[%s10 + $0x700] sm:$0xff]
        %v3068 = vld [vmem:[%s10 + $0x708] sm:$0xff]
        %v3069 = vld [vmem:[%s10 + $0x710] sm:$0xff]
        %v3070 = vld [vmem:[%s10 + $0x718] sm:$0xff]
        %v3071 = vld [vmem:[%s10 + $0x720] sm:$0xff]
        %v3072 = vld [vmem:[%s10 + $0x728] sm:$0xff]
        %v3073 = vld [vmem:[%s10 + $0x730] sm:$0xff]
        %v3074 = vld [vmem:[%s10 + $0x738] sm:$0xff]
        %v3075 = vld [vmem:[%s10 + $0x740] sm:$0xff]
        %v3076 = vld [vmem:[%s10 + $0x748] sm:$0xff]
        %v3077 = vld [vmem:[%s10 + $0x750] sm:$0xff]
        %v3078 = vld [vmem:[%s10 + $0x758] sm:$0xff]
        %v3079 = vld [vmem:[%s10 + $0x760] sm:$0xff]
        %v3080 = vld [vmem:[%s10 + $0x768] sm:$0xff]
        %v3081 = vld [vmem:[%s10 + $0x770] sm:$0xff]
        %v3082 = vld [vmem:[%s10 + $0x778] sm:$0xff]
        %v3083 = vld [vmem:[%s10 + $0x780] sm:$0xff]
        %v3084 = vld [vmem:[%s10 + $0x788] sm:$0xff]
        %v3085 = vld [vmem:[%s10 + $0x790] sm:$0xff]
        %v3086 = vld [vmem:[%s10 + $0x798] sm:$0xff]
        %v3087 = vld [vmem:[%s10 + $0x7a0] sm:$0xff]
        %v3088 = vld [vmem:[%s10 + $0x7a8] sm:$0xff]
        %v3089 = vld [vmem:[%s10 + $0x7b0] sm:$0xff]
        %v3090 = vld [vmem:[%s10 + $0x7b8] sm:$0xff]
        %v3091 = vld [vmem:[%s10 + $0x7c0] sm:$0xff]
        %v3092 = vld [vmem:[%s10 + $0x7c8] sm:$0xff]
        %v3093 = vld [vmem:[%s10 + $0x7d0] sm:$0xff]
        %v3094 = vld [vmem:[%s10 + $0x7d8] sm:$0xff]
        %v3095 = vld [vmem:[%s10 + $0x7e0] sm:$0xff]
        %v3096 = vld [vmem:[%s10 + $0x7e8] sm:$0xff]
        %v3097 = vld [vmem:[%s10 + $0x7f0] sm:$0xff]
        %v3098 = vld [vmem:[%s10 + $0x7f8] sm:$0xff]
        %v3099 = vld [vmem:[%s10 + $0x800] sm:$0xff]
        %v3100 = vld [vmem:[%s10 + $0x808] sm:$0xff]
        %v3101 = vld [vmem:[%s10 + $0x810] sm:$0xff]
        %v3102 = vld [vmem:[%s10 + $0x818] sm:$0xff]
        %v3103 = vld [vmem:[%s10 + $0x820] sm:$0xff]
        %v3104 = vld [vmem:[%s10 + $0x828] sm:$0xff]
        %v3105 = vld [vmem:[%s10 + $0x830] sm:$0xff]
        %v3106 = vld [vmem:[%s10 + $0x838] sm:$0xff]
        %v3107 = vld [vmem:[%s10 + $0x840] sm:$0xff]
        %v3108 = vld [vmem:[%s10 + $0x848] sm:$0xff]
        %v3109 = vld [vmem:[%s10 + $0x850] sm:$0xff]
        %v3110 = vld [vmem:[%s10 + $0x858] sm:$0xff]
        %v3111 = vld [vmem:[%s10 + $0x860] sm:$0xff]
        %v3112 = vld [vmem:[%s10 + $0x868] sm:$0xff]
        %v3113 = vld [vmem:[%s10 + $0x870] sm:$0xff]
        %v3114 = vld [vmem:[%s10 + $0x878] sm:$0xff]
        %v3115 = vld [vmem:[%s10 + $0x880] sm:$0xff]
        %v3116 = vld [vmem:[%s10 + $0x888] sm:$0xff]
        %v3117 = vld [vmem:[%s10 + $0x890] sm:$0xff]
        %v3118 = vld [vmem:[%s10 + $0x898] sm:$0xff]
        %v3119 = vld [vmem:[%s10 + $0x8a0] sm:$0xff]
        %v3120 = vld [vmem:[%s10 + $0x8a8] sm:$0xff]
        %v3121 = vld [vmem:[%s10 + $0x8b0] sm:$0xff]
        %v3122 = vld [vmem:[%s10 + $0x8b8] sm:$0xff]
        %v3123 = vld [vmem:[%s10 + $0x8c0] sm:$0xff]
        %v3124 = vld [vmem:[%s10 + $0x8c8] sm:$0xff]
        %v3125 = vld [vmem:[%s10 + $0x8d0] sm:$0xff]
        %v3126 = vld [vmem:[%s10 + $0x8d8] sm:$0xff]
        %v3127 = vld [vmem:[%s10 + $0x8e0] sm:$0xff]
        %v3128 = vld [vmem:[%s10 + $0x8e8] sm:$0xff]
        %v3129 = vld [vmem:[%s10 + $0x8f0] sm:$0xff]
        %v3130 = vld [vmem:[%s10 + $0x8f8] sm:$0xff]
        %3131 = vmatprep.subr.mxu0 %v3114
        %3132 = vmatpush1.msra.mxu0 %v3113
        %3133 = vmatprep.subr.mxu0 %v3096
        %3134 = vmatpush1.msra.mxu0 %v3095
        %3135 = vmatprep.subr.mxu0 %v3078
        %3136 = vmatpush1.msra.mxu0 %v3077
        %3137 = vmatprep.subr.mxu0 %v3060
        %3138 = vmatpush1.msra.mxu0 %v3059
        %3139 = vmatprep.subr.mxu0 %v3042
        %3140 = vmatpush1.msra.mxu0 %v3041
        %3141 = vmatprep.subr.mxu0 %v3024
        %3142 = vmatpush1.msra.mxu0 %v3023
        %3143 = vmatprep.subr.mxu0 %v3006
        %3144 = vmatpush1.msra.mxu0 %v3005
        %3145 = vmatprep.subr.mxu0 %v2988
        %3146 = vmatpush1.msra.mxu0 %v2987
        %3147 = vmatprep.subr.mxu0 %v2970
        %3148 = vmatpush1.msra.mxu0 %v2969
        %3149 = vmatprep.subr.mxu0 %v2952
        %3150 = vmatpush1.msra.mxu0 %v2951
        %3151 = vmatprep.subr.mxu0 %v2934
        %3152 = vmatpush1.msra.mxu0 %v2933
        %3153 = vmatprep.subr.mxu0 %v2916
        %3154 = vmatpush1.msra.mxu0 %v2915
        %3155 = vmatprep.subr.mxu0 %v2898
        %3156 = vmatpush1.msra.mxu0 %v2897
        %3157 = vmatprep.subr.mxu0 %v2880
        %3158 = vmatpush1.msra.mxu0 %v2879
        %3159 = vmatprep.subr.mxu0 %v2862
        %3160 = vmatpush1.msra.mxu0 %v2861
        %3161 = vmatprep.subr.mxu0 %v2844
        %3162 = vmatpush1.msra.mxu0 %v2843
        %3163 = vmatprep.subr.mxu0 0.0
        %3164 = vmatpush2.msra.mxu0 0.0
        %3165 = vmatprep.subr.mxu0 0.0
        %3166 = vmatpush2.msra.mxu0 0.0
        %3167 = vmatprep.subr.mxu0 0.0
        %3168 = vmatpush2.msra.mxu0 0.0
        %3169 = vmatprep.subr.mxu0 0.0
        %3170 = vmatpush2.msra.mxu0 0.0
        %3171 = vmatprep.subr.mxu0 0.0
        %3172 = vmatpush2.msra.mxu0 0.0
        %3173 = vmatprep.subr.mxu0 0.0
        %3174 = vmatpush2.msra.mxu0 0.0
        %3175 = vmatprep.subr.mxu0 0.0
        %3176 = vmatpush2.msra.mxu0 0.0
        %3177 = vmatprep.subr.mxu0 0.0
        %3178 = vmatpush2.msra.mxu0 0.0
        %3179 = vmatprep.subr.mxu0 0.0
        %3180 = vmatpush2.msra.mxu0 0.0
        %3181 = vmatprep.subr.mxu0 0.0
        %3182 = vmatpush2.msra.mxu0 0.0
        %3183 = vmatprep.subr.mxu0 0.0
        %3184 = vmatpush2.msra.mxu0 0.0
        %3185 = vmatprep.subr.mxu0 0.0
        %3186 = vmatpush2.msra.mxu0 0.0
        %3187 = vmatprep.subr.mxu0 0.0
        %3188 = vmatpush2.msra.mxu0 0.0
        %3189 = vmatprep.subr.mxu0 0.0
        %3190 = vmatpush2.msra.mxu0 0.0
        %3191 = vmatprep.subr.mxu0 0.0
        %3192 = vmatpush2.msra.mxu0 0.0
        %3193 = vmatprep.subr.mxu0 0.0
        %3194 = vmatpush2.msra.mxu0 0.0
        %3195 = vmatprep.mubr.f32.mxu0 0.0
        %3196 = vmatmul.mubr.f32.gmra.mxu0 %v2842
        %v3197 = vpop.f32.mrf.mxu0
        %v3198 = vadd.f32 0.0, %v3197
        %v3199 = vpop.f32.mrf.mxu0
        %v3200 = vadd.f32 0.0, %v3199
        %3201 = vdwg.mxu0
        %3202 = vmatprep.subr.mxu0 %v3116
        %3203 = vmatpush1.msra.mxu0 %v3115
        %3204 = vmatprep.subr.mxu0 %v3098
        %3205 = vmatpush1.msra.mxu0 %v3097
        %3206 = vmatprep.subr.mxu0 %v3080
        %3207 = vmatpush1.msra.mxu0 %v3079
        %3208 = vmatprep.subr.mxu0 %v3062
        %3209 = vmatpush1.msra.mxu0 %v3061
        %3210 = vmatprep.subr.mxu0 %v3044
        %3211 = vmatpush1.msra.mxu0 %v3043
        %3212 = vmatprep.subr.mxu0 %v3026
        %3213 = vmatpush1.msra.mxu0 %v3025
        %3214 = vmatprep.subr.mxu0 %v3008
        %3215 = vmatpush1.msra.mxu0 %v3007
        %3216 = vmatprep.subr.mxu0 %v2990
        %3217 = vmatpush1.msra.mxu0 %v2989
        %3218 = vmatprep.subr.mxu0 %v2972
        %3219 = vmatpush1.msra.mxu0 %v2971
        %3220 = vmatprep.subr.mxu0 %v2954
        %3221 = vmatpush1.msra.mxu0 %v2953
        %3222 = vmatprep.subr.mxu0 %v2936
        %3223 = vmatpush1.msra.mxu0 %v2935
        %3224 = vmatprep.subr.mxu0 %v2918
        %3225 = vmatpush1.msra.mxu0 %v2917
        %3226 = vmatprep.subr.mxu0 %v2900
        %3227 = vmatpush1.msra.mxu0 %v2899
        %3228 = vmatprep.subr.mxu0 %v2882
        %3229 = vmatpush1.msra.mxu0 %v2881
        %3230 = vmatprep.subr.mxu0 %v2864
        %3231 = vmatpush1.msra.mxu0 %v2863
        %3232 = vmatprep.subr.mxu0 %v2846
        %3233 = vmatpush1.msra.mxu0 %v2845
        %3234 = vmatprep.subr.mxu0 0.0
        %3235 = vmatpush2.msra.mxu0 0.0
        %3236 = vmatprep.subr.mxu0 0.0
        %3237 = vmatpush2.msra.mxu0 0.0
        %3238 = vmatprep.subr.mxu0 0.0
        %3239 = vmatpush2.msra.mxu0 0.0
        %3240 = vmatprep.subr.mxu0 0.0
        %3241 = vmatpush2.msra.mxu0 0.0
        %3242 = vmatprep.subr.mxu0 0.0
        %3243 = vmatpush2.msra.mxu0 0.0
        %3244 = vmatprep.subr.mxu0 0.0
        %3245 = vmatpush2.msra.mxu0 0.0
        %3246 = vmatprep.subr.mxu0 0.0
        %3247 = vmatpush2.msra.mxu0 0.0
        %3248 = vmatprep.subr.mxu0 0.0
        %3249 = vmatpush2.msra.mxu0 0.0
        %3250 = vmatprep.subr.mxu0 0.0
        %3251 = vmatpush2.msra.mxu0 0.0
        %3252 = vmatprep.subr.mxu0 0.0
        %3253 = vmatpush2.msra.mxu0 0.0
        %3254 = vmatprep.subr.mxu0 0.0
        %3255 = vmatpush2.msra.mxu0 0.0
        %3256 = vmatprep.subr.mxu0 0.0
        %3257 = vmatpush2.msra.mxu0 0.0
        %3258 = vmatprep.subr.mxu0 0.0
        %3259 = vmatpush2.msra.mxu0 0.0
        %3260 = vmatprep.subr.mxu0 0.0
        %3261 = vmatpush2.msra.mxu0 0.0
        %3262 = vmatprep.subr.mxu0 0.0
        %3263 = vmatpush2.msra.mxu0 0.0
        %3264 = vmatprep.subr.mxu0 0.0
        %3265 = vmatpush2.msra.mxu0 0.0
        %3266 = vmatprep.mubr.f32.mxu0 0.0
        %3267 = vmatmul.mubr.f32.gmra.mxu0 %v2842
        %v3268 = vpop.f32.mrf.mxu0
        %v3269 = vadd.f32 0.0, %v3268
        %v3270 = vpop.f32.mrf.mxu0
        %v3271 = vadd.f32 0.0, %v3270
        %3272 = vdwg.mxu0
        %3273 = vmatprep.subr.mxu0 %v3118
        %3274 = vmatpush1.msra.mxu0 %v3117
        %3275 = vmatprep.subr.mxu0 %v3100
        %3276 = vmatpush1.msra.mxu0 %v3099
        %3277 = vmatprep.subr.mxu0 %v3082
        %3278 = vmatpush1.msra.mxu0 %v3081
        %3279 = vmatprep.subr.mxu0 %v3064
        %3280 = vmatpush1.msra.mxu0 %v3063
        %3281 = vmatprep.subr.mxu0 %v3046
        %3282 = vmatpush1.msra.mxu0 %v3045
        %3283 = vmatprep.subr.mxu0 %v3028
        %3284 = vmatpush1.msra.mxu0 %v3027
        %3285 = vmatprep.subr.mxu0 %v3010
        %3286 = vmatpush1.msra.mxu0 %v3009
        %3287 = vmatprep.subr.mxu0 %v2992
        %3288 = vmatpush1.msra.mxu0 %v2991
        %3289 = vmatprep.subr.mxu0 %v2974
        %3290 = vmatpush1.msra.mxu0 %v2973
        %3291 = vmatprep.subr.mxu0 %v2956
        %3292 = vmatpush1.msra.mxu0 %v2955
        %3293 = vmatprep.subr.mxu0 %v2938
        %3294 = vmatpush1.msra.mxu0 %v2937
        %3295 = vmatprep.subr.mxu0 %v2920
        %3296 = vmatpush1.msra.mxu0 %v2919
        %3297 = vmatprep.subr.mxu0 %v2902
        %3298 = vmatpush1.msra.mxu0 %v2901
        %3299 = vmatprep.subr.mxu0 %v2884
        %3300 = vmatpush1.msra.mxu0 %v2883
        %3301 = vmatprep.subr.mxu0 %v2866
        %3302 = vmatpush1.msra.mxu0 %v2865
        %3303 = vmatprep.subr.mxu0 %v2848
        %3304 = vmatpush1.msra.mxu0 %v2847
        %3305 = vmatprep.subr.mxu0 0.0
        %3306 = vmatpush2.msra.mxu0 0.0
        %3307 = vmatprep.subr.mxu0 0.0
        %3308 = vmatpush2.msra.mxu0 0.0
        %3309 = vmatprep.subr.mxu0 0.0
        %3310 = vmatpush2.msra.mxu0 0.0
        %3311 = vmatprep.subr.mxu0 0.0
        %3312 = vmatpush2.msra.mxu0 0.0
        %3313 = vmatprep.subr.mxu0 0.0
        %3314 = vmatpush2.msra.mxu0 0.0
        %3315 = vmatprep.subr.mxu0 0.0
        %3316 = vmatpush2.msra.mxu0 0.0
        %3317 = vmatprep.subr.mxu0 0.0
        %3318 = vmatpush2.msra.mxu0 0.0
        %3319 = vmatprep.subr.mxu0 0.0
        %3320 = vmatpush2.msra.mxu0 0.0
        %3321 = vmatprep.subr.mxu0 0.0
        %3322 = vmatpush2.msra.mxu0 0.0
        %3323 = vmatprep.subr.mxu0 0.0
        %3324 = vmatpush2.msra.mxu0 0.0
        %3325 = vmatprep.subr.mxu0 0.0
        %3326 = vmatpush2.msra.mxu0 0.0
        %3327 = vmatprep.subr.mxu0 0.0
        %3328 = vmatpush2.msra.mxu0 0.0
        %3329 = vmatprep.subr.mxu0 0.0
        %3330 = vmatpush2.msra.mxu0 0.0
        %3331 = vmatprep.subr.mxu0 0.0
        %3332 = vmatpush2.msra.mxu0 0.0
        %3333 = vmatprep.subr.mxu0 0.0
        %3334 = vmatpush2.msra.mxu0 0.0
        %3335 = vmatprep.subr.mxu0 0.0
        %3336 = vmatpush2.msra.mxu0 0.0
        %3337 = vmatprep.mubr.f32.mxu0 0.0
        %3338 = vmatmul.mubr.f32.gmra.mxu0 %v2842
        %v3339 = vpop.f32.mrf.mxu0
        %v3340 = vadd.f32 0.0, %v3339
        %v3341 = vpop.f32.mrf.mxu0
        %v3342 = vadd.f32 0.0, %v3341
        %3343 = vdwg.mxu0
        %3344 = vmatprep.subr.mxu0 %v3120
        %3345 = vmatpush1.msra.mxu0 %v3119
        %3346 = vmatprep.subr.mxu0 %v3102
        %3347 = vmatpush1.msra.mxu0 %v3101
        %3348 = vmatprep.subr.mxu0 %v3084
        %3349 = vmatpush1.msra.mxu0 %v3083
        %3350 = vmatprep.subr.mxu0 %v3066
        %3351 = vmatpush1.msra.mxu0 %v3065
        %3352 = vmatprep.subr.mxu0 %v3048
        %3353 = vmatpush1.msra.mxu0 %v3047
        %3354 = vmatprep.subr.mxu0 %v3030
        %3355 = vmatpush1.msra.mxu0 %v3029
        %3356 = vmatprep.subr.mxu0 %v3012
        %3357 = vmatpush1.msra.mxu0 %v3011
        %3358 = vmatprep.subr.mxu0 %v2994
        %3359 = vmatpush1.msra.mxu0 %v2993
        %3360 = vmatprep.subr.mxu0 %v2976
        %3361 = vmatpush1.msra.mxu0 %v2975
        %3362 = vmatprep.subr.mxu0 %v2958
        %3363 = vmatpush1.msra.mxu0 %v2957
        %3364 = vmatprep.subr.mxu0 %v2940
        %3365 = vmatpush1.msra.mxu0 %v2939
        %3366 = vmatprep.subr.mxu0 %v2922
        %3367 = vmatpush1.msra.mxu0 %v2921
        %3368 = vmatprep.subr.mxu0 %v2904
        %3369 = vmatpush1.msra.mxu0 %v2903
        %3370 = vmatprep.subr.mxu0 %v2886
        %3371 = vmatpush1.msra.mxu0 %v2885
        %3372 = vmatprep.subr.mxu0 %v2868
        %3373 = vmatpush1.msra.mxu0 %v2867
        %3374 = vmatprep.subr.mxu0 %v2850
        %3375 = vmatpush1.msra.mxu0 %v2849
        %3376 = vmatprep.subr.mxu0 0.0
        %3377 = vmatpush2.msra.mxu0 0.0
        %3378 = vmatprep.subr.mxu0 0.0
        %3379 = vmatpush2.msra.mxu0 0.0
        %3380 = vmatprep.subr.mxu0 0.0
        %3381 = vmatpush2.msra.mxu0 0.0
        %3382 = vmatprep.subr.mxu0 0.0
        %3383 = vmatpush2.msra.mxu0 0.0
        %3384 = vmatprep.subr.mxu0 0.0
        %3385 = vmatpush2.msra.mxu0 0.0
        %3386 = vmatprep.subr.mxu0 0.0
        %3387 = vmatpush2.msra.mxu0 0.0
        %3388 = vmatprep.subr.mxu0 0.0
        %3389 = vmatpush2.msra.mxu0 0.0
        %3390 = vmatprep.subr.mxu0 0.0
        %3391 = vmatpush2.msra.mxu0 0.0
        %3392 = vmatprep.subr.mxu0 0.0
        %3393 = vmatpush2.msra.mxu0 0.0
        %3394 = vmatprep.subr.mxu0 0.0
        %3395 = vmatpush2.msra.mxu0 0.0
        %3396 = vmatprep.subr.mxu0 0.0
        %3397 = vmatpush2.msra.mxu0 0.0
        %3398 = vmatprep.subr.mxu0 0.0
        %3399 = vmatpush2.msra.mxu0 0.0
        %3400 = vmatprep.subr.mxu0 0.0
        %3401 = vmatpush2.msra.mxu0 0.0
        %3402 = vmatprep.subr.mxu0 0.0
        %3403 = vmatpush2.msra.mxu0 0.0
        %3404 = vmatprep.subr.mxu0 0.0
        %3405 = vmatpush2.msra.mxu0 0.0
        %3406 = vmatprep.subr.mxu0 0.0
        %3407 = vmatpush2.msra.mxu0 0.0
        %3408 = vmatprep.mubr.f32.mxu0 0.0
        %3409 = vmatmul.mubr.f32.gmra.mxu0 %v2842
        %v3410 = vpop.f32.mrf.mxu0
        %v3411 = vadd.f32 0.0, %v3410
        %v3412 = vpop.f32.mrf.mxu0
        %v3413 = vadd.f32 0.0, %v3412
        %3414 = vdwg.mxu0
        %3415 = vmatprep.subr.mxu0 %v3122
        %3416 = vmatpush1.msra.mxu0 %v3121
        %3417 = vmatprep.subr.mxu0 %v3104
        %3418 = vmatpush1.msra.mxu0 %v3103
        %3419 = vmatprep.subr.mxu0 %v3086
        %3420 = vmatpush1.msra.mxu0 %v3085
        %3421 = vmatprep.subr.mxu0 %v3068
        %3422 = vmatpush1.msra.mxu0 %v3067
        %3423 = vmatprep.subr.mxu0 %v3050
        %3424 = vmatpush1.msra.mxu0 %v3049
        %3425 = vmatprep.subr.mxu0 %v3032
        %3426 = vmatpush1.msra.mxu0 %v3031
        %3427 = vmatprep.subr.mxu0 %v3014
        %3428 = vmatpush1.msra.mxu0 %v3013
        %3429 = vmatprep.subr.mxu0 %v2996
        %3430 = vmatpush1.msra.mxu0 %v2995
        %3431 = vmatprep.subr.mxu0 %v2978
        %3432 = vmatpush1.msra.mxu0 %v2977
        %3433 = vmatprep.subr.mxu0 %v2960
        %3434 = vmatpush1.msra.mxu0 %v2959
        %3435 = vmatprep.subr.mxu0 %v2942
        %3436 = vmatpush1.msra.mxu0 %v2941
        %3437 = vmatprep.subr.mxu0 %v2924
        %3438 = vmatpush1.msra.mxu0 %v2923
        %3439 = vmatprep.subr.mxu0 %v2906
        %3440 = vmatpush1.msra.mxu0 %v2905
        %3441 = vmatprep.subr.mxu0 %v2888
        %3442 = vmatpush1.msra.mxu0 %v2887
        %3443 = vmatprep.subr.mxu0 %v2870
        %3444 = vmatpush1.msra.mxu0 %v2869
        %3445 = vmatprep.subr.mxu0 %v2852
        %3446 = vmatpush1.msra.mxu0 %v2851
        %3447 = vmatprep.subr.mxu0 0.0
        %3448 = vmatpush2.msra.mxu0 0.0
        %3449 = vmatprep.subr.mxu0 0.0
        %3450 = vmatpush2.msra.mxu0 0.0
        %3451 = vmatprep.subr.mxu0 0.0
        %3452 = vmatpush2.msra.mxu0 0.0
        %3453 = vmatprep.subr.mxu0 0.0
        %3454 = vmatpush2.msra.mxu0 0.0
        %3455 = vmatprep.subr.mxu0 0.0
        %3456 = vmatpush2.msra.mxu0 0.0
        %3457 = vmatprep.subr.mxu0 0.0
        %3458 = vmatpush2.msra.mxu0 0.0
        %3459 = vmatprep.subr.mxu0 0.0
        %3460 = vmatpush2.msra.mxu0 0.0
        %3461 = vmatprep.subr.mxu0 0.0
        %3462 = vmatpush2.msra.mxu0 0.0
        %3463 = vmatprep.subr.mxu0 0.0
        %3464 = vmatpush2.msra.mxu0 0.0
        %3465 = vmatprep.subr.mxu0 0.0
        %3466 = vmatpush2.msra.mxu0 0.0
        %3467 = vmatprep.subr.mxu0 0.0
        %3468 = vmatpush2.msra.mxu0 0.0
        %3469 = vmatprep.subr.mxu0 0.0
        %3470 = vmatpush2.msra.mxu0 0.0
        %3471 = vmatprep.subr.mxu0 0.0
        %3472 = vmatpush2.msra.mxu0 0.0
        %3473 = vmatprep.subr.mxu0 0.0
        %3474 = vmatpush2.msra.mxu0 0.0
        %3475 = vmatprep.subr.mxu0 0.0
        %3476 = vmatpush2.msra.mxu0 0.0
        %3477 = vmatprep.subr.mxu0 0.0
        %3478 = vmatpush2.msra.mxu0 0.0
        %3479 = vmatprep.mubr.f32.mxu0 0.0
        %3480 = vmatmul.mubr.f32.gmra.mxu0 %v2842
        %v3481 = vpop.f32.mrf.mxu0
        %v3482 = vadd.f32 0.0, %v3481
        %v3483 = vpop.f32.mrf.mxu0
        %v3484 = vadd.f32 0.0, %v3483
        %3485 = vdwg.mxu0
        %3486 = vmatprep.subr.mxu0 %v3124
        %3487 = vmatpush1.msra.mxu0 %v3123
        %3488 = vmatprep.subr.mxu0 %v3106
        %3489 = vmatpush1.msra.mxu0 %v3105
        %3490 = vmatprep.subr.mxu0 %v3088
        %3491 = vmatpush1.msra.mxu0 %v3087
        %3492 = vmatprep.subr.mxu0 %v3070
        %3493 = vmatpush1.msra.mxu0 %v3069
        %3494 = vmatprep.subr.mxu0 %v3052
        %3495 = vmatpush1.msra.mxu0 %v3051
        %3496 = vmatprep.subr.mxu0 %v3034
        %3497 = vmatpush1.msra.mxu0 %v3033
        %3498 = vmatprep.subr.mxu0 %v3016
        %3499 = vmatpush1.msra.mxu0 %v3015
        %3500 = vmatprep.subr.mxu0 %v2998
        %3501 = vmatpush1.msra.mxu0 %v2997
        %3502 = vmatprep.subr.mxu0 %v2980
        %3503 = vmatpush1.msra.mxu0 %v2979
        %3504 = vmatprep.subr.mxu0 %v2962
        %3505 = vmatpush1.msra.mxu0 %v2961
        %3506 = vmatprep.subr.mxu0 %v2944
        %3507 = vmatpush1.msra.mxu0 %v2943
        %3508 = vmatprep.subr.mxu0 %v2926
        %3509 = vmatpush1.msra.mxu0 %v2925
        %3510 = vmatprep.subr.mxu0 %v2908
        %3511 = vmatpush1.msra.mxu0 %v2907
        %3512 = vmatprep.subr.mxu0 %v2890
        %3513 = vmatpush1.msra.mxu0 %v2889
        %3514 = vmatprep.subr.mxu0 %v2872
        %3515 = vmatpush1.msra.mxu0 %v2871
        %3516 = vmatprep.subr.mxu0 %v2854
        %3517 = vmatpush1.msra.mxu0 %v2853
        %3518 = vmatprep.subr.mxu0 0.0
        %3519 = vmatpush2.msra.mxu0 0.0
        %3520 = vmatprep.subr.mxu0 0.0
        %3521 = vmatpush2.msra.mxu0 0.0
        %3522 = vmatprep.subr.mxu0 0.0
        %3523 = vmatpush2.msra.mxu0 0.0
        %3524 = vmatprep.subr.mxu0 0.0
        %3525 = vmatpush2.msra.mxu0 0.0
        %3526 = vmatprep.subr.mxu0 0.0
        %3527 = vmatpush2.msra.mxu0 0.0
        %3528 = vmatprep.subr.mxu0 0.0
        %3529 = vmatpush2.msra.mxu0 0.0
        %3530 = vmatprep.subr.mxu0 0.0
        %3531 = vmatpush2.msra.mxu0 0.0
        %3532 = vmatprep.subr.mxu0 0.0
        %3533 = vmatpush2.msra.mxu0 0.0
        %3534 = vmatprep.subr.mxu0 0.0
        %3535 = vmatpush2.msra.mxu0 0.0
        %3536 = vmatprep.subr.mxu0 0.0
        %3537 = vmatpush2.msra.mxu0 0.0
        %3538 = vmatprep.subr.mxu0 0.0
        %3539 = vmatpush2.msra.mxu0 0.0
        %3540 = vmatprep.subr.mxu0 0.0
        %3541 = vmatpush2.msra.mxu0 0.0
        %3542 = vmatprep.subr.mxu0 0.0
        %3543 = vmatpush2.msra.mxu0 0.0
        %3544 = vmatprep.subr.mxu0 0.0
        %3545 = vmatpush2.msra.mxu0 0.0
        %3546 = vmatprep.subr.mxu0 0.0
        %3547 = vmatpush2.msra.mxu0 0.0
        %3548 = vmatprep.subr.mxu0 0.0
        %3549 = vmatpush2.msra.mxu0 0.0
        %3550 = vmatprep.mubr.f32.mxu0 0.0
        %3551 = vmatmul.mubr.f32.gmra.mxu0 %v2842
        %v3552 = vpop.f32.mrf.mxu0
        %v3553 = vadd.f32 0.0, %v3552
        %v3554 = vpop.f32.mrf.mxu0
        %v3555 = vadd.f32 0.0, %v3554
        %3556 = vdwg.mxu0
        %3557 = vmatprep.subr.mxu0 %v3126
        %3558 = vmatpush1.msra.mxu0 %v3125
        %3559 = vmatprep.subr.mxu0 %v3108
        %3560 = vmatpush1.msra.mxu0 %v3107
        %3561 = vmatprep.subr.mxu0 %v3090
        %3562 = vmatpush1.msra.mxu0 %v3089
        %3563 = vmatprep.subr.mxu0 %v3072
        %3564 = vmatpush1.msra.mxu0 %v3071
        %3565 = vmatprep.subr.mxu0 %v3054
        %3566 = vmatpush1.msra.mxu0 %v3053
        %3567 = vmatprep.subr.mxu0 %v3036
        %3568 = vmatpush1.msra.mxu0 %v3035
        %3569 = vmatprep.subr.mxu0 %v3018
        %3570 = vmatpush1.msra.mxu0 %v3017
        %3571 = vmatprep.subr.mxu0 %v3000
        %3572 = vmatpush1.msra.mxu0 %v2999
        %3573 = vmatprep.subr.mxu0 %v2982
        %3574 = vmatpush1.msra.mxu0 %v2981
        %3575 = vmatprep.subr.mxu0 %v2964
        %3576 = vmatpush1.msra.mxu0 %v2963
        %3577 = vmatprep.subr.mxu0 %v2946
        %3578 = vmatpush1.msra.mxu0 %v2945
        %3579 = vmatprep.subr.mxu0 %v2928
        %3580 = vmatpush1.msra.mxu0 %v2927
        %3581 = vmatprep.subr.mxu0 %v2910
        %3582 = vmatpush1.msra.mxu0 %v2909
        %3583 = vmatprep.subr.mxu0 %v2892
        %3584 = vmatpush1.msra.mxu0 %v2891
        %3585 = vmatprep.subr.mxu0 %v2874
        %3586 = vmatpush1.msra.mxu0 %v2873
        %3587 = vmatprep.subr.mxu0 %v2856
        %3588 = vmatpush1.msra.mxu0 %v2855
        %3589 = vmatprep.subr.mxu0 0.0
        %3590 = vmatpush2.msra.mxu0 0.0
        %3591 = vmatprep.subr.mxu0 0.0
        %3592 = vmatpush2.msra.mxu0 0.0
        %3593 = vmatprep.subr.mxu0 0.0
        %3594 = vmatpush2.msra.mxu0 0.0
        %3595 = vmatprep.subr.mxu0 0.0
        %3596 = vmatpush2.msra.mxu0 0.0
        %3597 = vmatprep.subr.mxu0 0.0
        %3598 = vmatpush2.msra.mxu0 0.0
        %3599 = vmatprep.subr.mxu0 0.0
        %3600 = vmatpush2.msra.mxu0 0.0
        %3601 = vmatprep.subr.mxu0 0.0
        %3602 = vmatpush2.msra.mxu0 0.0
        %3603 = vmatprep.subr.mxu0 0.0
        %3604 = vmatpush2.msra.mxu0 0.0
        %3605 = vmatprep.subr.mxu0 0.0
        %3606 = vmatpush2.msra.mxu0 0.0
        %3607 = vmatprep.subr.mxu0 0.0
        %3608 = vmatpush2.msra.mxu0 0.0
        %3609 = vmatprep.subr.mxu0 0.0
        %3610 = vmatpush2.msra.mxu0 0.0
        %3611 = vmatprep.subr.mxu0 0.0
        %3612 = vmatpush2.msra.mxu0 0.0
        %3613 = vmatprep.subr.mxu0 0.0
        %3614 = vmatpush2.msra.mxu0 0.0
        %3615 = vmatprep.subr.mxu0 0.0
        %3616 = vmatpush2.msra.mxu0 0.0
        %3617 = vmatprep.subr.mxu0 0.0
        %3618 = vmatpush2.msra.mxu0 0.0
        %3619 = vmatprep.subr.mxu0 0.0
        %3620 = vmatpush2.msra.mxu0 0.0
        %3621 = vmatprep.mubr.f32.mxu0 0.0
        %3622 = vmatmul.mubr.f32.gmra.mxu0 %v2842
        %v3623 = vpop.f32.mrf.mxu0
        %v3624 = vadd.f32 0.0, %v3623
        %v3625 = vpop.f32.mrf.mxu0
        %v3626 = vadd.f32 0.0, %v3625
        %3627 = vdwg.mxu0
        %3628 = vmatprep.subr.mxu0 %v3128
        %3629 = vmatpush1.msra.mxu0 %v3127
        %3630 = vmatprep.subr.mxu0 %v3110
        %3631 = vmatpush1.msra.mxu0 %v3109
        %3632 = vmatprep.subr.mxu0 %v3092
        %3633 = vmatpush1.msra.mxu0 %v3091
        %3634 = vmatprep.subr.mxu0 %v3074
        %3635 = vmatpush1.msra.mxu0 %v3073
        %3636 = vmatprep.subr.mxu0 %v3056
        %3637 = vmatpush1.msra.mxu0 %v3055
        %3638 = vmatprep.subr.mxu0 %v3038
        %3639 = vmatpush1.msra.mxu0 %v3037
        %3640 = vmatprep.subr.mxu0 %v3020
        %3641 = vmatpush1.msra.mxu0 %v3019
        %3642 = vmatprep.subr.mxu0 %v3002
        %3643 = vmatpush1.msra.mxu0 %v3001
        %3644 = vmatprep.subr.mxu0 %v2984
        %3645 = vmatpush1.msra.mxu0 %v2983
        %3646 = vmatprep.subr.mxu0 %v2966
        %3647 = vmatpush1.msra.mxu0 %v2965
        %3648 = vmatprep.subr.mxu0 %v2948
        %3649 = vmatpush1.msra.mxu0 %v2947
        %3650 = vmatprep.subr.mxu0 %v2930
        %3651 = vmatpush1.msra.mxu0 %v2929
        %3652 = vmatprep.subr.mxu0 %v2912
        %3653 = vmatpush1.msra.mxu0 %v2911
        %3654 = vmatprep.subr.mxu0 %v2894
        %3655 = vmatpush1.msra.mxu0 %v2893
        %3656 = vmatprep.subr.mxu0 %v2876
        %3657 = vmatpush1.msra.mxu0 %v2875
        %3658 = vmatprep.subr.mxu0 %v2858
        %3659 = vmatpush1.msra.mxu0 %v2857
        %3660 = vmatprep.subr.mxu0 0.0
        %3661 = vmatpush2.msra.mxu0 0.0
        %3662 = vmatprep.subr.mxu0 0.0
        %3663 = vmatpush2.msra.mxu0 0.0
        %3664 = vmatprep.subr.mxu0 0.0
        %3665 = vmatpush2.msra.mxu0 0.0
        %3666 = vmatprep.subr.mxu0 0.0
        %3667 = vmatpush2.msra.mxu0 0.0
        %3668 = vmatprep.subr.mxu0 0.0
        %3669 = vmatpush2.msra.mxu0 0.0
        %3670 = vmatprep.subr.mxu0 0.0
        %3671 = vmatpush2.msra.mxu0 0.0
        %3672 = vmatprep.subr.mxu0 0.0
        %3673 = vmatpush2.msra.mxu0 0.0
        %3674 = vmatprep.subr.mxu0 0.0
        %3675 = vmatpush2.msra.mxu0 0.0
        %3676 = vmatprep.subr.mxu0 0.0
        %3677 = vmatpush2.msra.mxu0 0.0
        %3678 = vmatprep.subr.mxu0 0.0
        %3679 = vmatpush2.msra.mxu0 0.0
        %3680 = vmatprep.subr.mxu0 0.0
        %3681 = vmatpush2.msra.mxu0 0.0
        %3682 = vmatprep.subr.mxu0 0.0
        %3683 = vmatpush2.msra.mxu0 0.0
        %3684 = vmatprep.subr.mxu0 0.0
        %3685 = vmatpush2.msra.mxu0 0.0
        %3686 = vmatprep.subr.mxu0 0.0
        %3687 = vmatpush2.msra.mxu0 0.0
        %3688 = vmatprep.subr.mxu0 0.0
        %3689 = vmatpush2.msra.mxu0 0.0
        %3690 = vmatprep.subr.mxu0 0.0
        %3691 = vmatpush2.msra.mxu0 0.0
        %3692 = vmatprep.mubr.f32.mxu0 0.0
        %3693 = vmatmul.mubr.f32.gmra.mxu0 %v2842
        %v3694 = vpop.f32.mrf.mxu0
        %v3695 = vadd.f32 0.0, %v3694
        %v3696 = vpop.f32.mrf.mxu0
        %v3697 = vadd.f32 0.0, %v3696
        %3698 = vdwg.mxu0
        %3699 = vmatprep.subr.mxu0 %v3130
        %3700 = vmatpush1.msra.mxu0 %v3129
        %3701 = vmatprep.subr.mxu0 %v3112
        %3702 = vmatpush1.msra.mxu0 %v3111
        %3703 = vmatprep.subr.mxu0 %v3094
        %3704 = vmatpush1.msra.mxu0 %v3093
        %3705 = vmatprep.subr.mxu0 %v3076
        %3706 = vmatpush1.msra.mxu0 %v3075
        %3707 = vmatprep.subr.mxu0 %v3058
        %3708 = vmatpush1.msra.mxu0 %v3057
        %3709 = vmatprep.subr.mxu0 %v3040
        %3710 = vmatpush1.msra.mxu0 %v3039
        %3711 = vmatprep.subr.mxu0 %v3022
        %3712 = vmatpush1.msra.mxu0 %v3021
        %3713 = vmatprep.subr.mxu0 %v3004
        %3714 = vmatpush1.msra.mxu0 %v3003
        %3715 = vmatprep.subr.mxu0 %v2986
        %3716 = vmatpush1.msra.mxu0 %v2985
        %3717 = vmatprep.subr.mxu0 %v2968
        %3718 = vmatpush1.msra.mxu0 %v2967
        %3719 = vmatprep.subr.mxu0 %v2950
        %3720 = vmatpush1.msra.mxu0 %v2949
        %3721 = vmatprep.subr.mxu0 %v2932
        %3722 = vmatpush1.msra.mxu0 %v2931
        %3723 = vmatprep.subr.mxu0 %v2914
        %3724 = vmatpush1.msra.mxu0 %v2913
        %3725 = vmatprep.subr.mxu0 %v2896
        %3726 = vmatpush1.msra.mxu0 %v2895
        %3727 = vmatprep.subr.mxu0 %v2878
        %3728 = vmatpush1.msra.mxu0 %v2877
        %3729 = vmatprep.subr.mxu0 %v2860
        %3730 = vmatpush1.msra.mxu0 %v2859
        %3731 = vmatprep.subr.mxu0 0.0
        %3732 = vmatpush2.msra.mxu0 0.0
        %3733 = vmatprep.subr.mxu0 0.0
        %3734 = vmatpush2.msra.mxu0 0.0
        %3735 = vmatprep.subr.mxu0 0.0
        %3736 = vmatpush2.msra.mxu0 0.0
        %3737 = vmatprep.subr.mxu0 0.0
        %3738 = vmatpush2.msra.mxu0 0.0
        %3739 = vmatprep.subr.mxu0 0.0
        %3740 = vmatpush2.msra.mxu0 0.0
        %3741 = vmatprep.subr.mxu0 0.0
        %3742 = vmatpush2.msra.mxu0 0.0
        %3743 = vmatprep.subr.mxu0 0.0
        %3744 = vmatpush2.msra.mxu0 0.0
        %3745 = vmatprep.subr.mxu0 0.0
        %3746 = vmatpush2.msra.mxu0 0.0
        %3747 = vmatprep.subr.mxu0 0.0
        %3748 = vmatpush2.msra.mxu0 0.0
        %3749 = vmatprep.subr.mxu0 0.0
        %3750 = vmatpush2.msra.mxu0 0.0
        %3751 = vmatprep.subr.mxu0 0.0
        %3752 = vmatpush2.msra.mxu0 0.0
        %3753 = vmatprep.subr.mxu0 0.0
        %3754 = vmatpush2.msra.mxu0 0.0
        %3755 = vmatprep.subr.mxu0 0.0
        %3756 = vmatpush2.msra.mxu0 0.0
        %3757 = vmatprep.subr.mxu0 0.0
        %3758 = vmatpush2.msra.mxu0 0.0
        %3759 = vmatprep.subr.mxu0 0.0
        %3760 = vmatpush2.msra.mxu0 0.0
        %3761 = vmatprep.subr.mxu0 0.0
        %3762 = vmatpush2.msra.mxu0 0.0
        %3763 = vmatprep.mubr.f32.mxu0 0.0
        %3764 = vmatmul.mubr.f32.gmra.mxu0 %v2842
        %v3765 = vpop.f32.mrf.mxu0
        %v3766 = vadd.f32 0.0, %v3765
        %v3767 = vpop.f32.mrf.mxu0
        %v3768 = vadd.f32 0.0, %v3767
        %3769 = vdwg.mxu0
        %3770 = vst [vmem:[#allocation5] sm:$0xf] %v3198
        %3771 = vst [vmem:[#allocation5 + $0x8] sm:$0xf] %v3200
        %v3774 = vrot.slane %v3269, 4
        %v3775 = vrot.slane %v3271, 4
        %3778 = vst [vmem:[#allocation5] sm:$0xf0] %v3774
        %3779 = vst [vmem:[#allocation5 + $0x8] sm:$0xf0] %v3775
        %3780 = vst [vmem:[#allocation5 + $0x10] sm:$0xf] %v3340
        %3781 = vst [vmem:[#allocation5 + $0x18] sm:$0xf] %v3342
        %v3784 = vrot.slane %v3411, 4
        %v3785 = vrot.slane %v3413, 4
        %3788 = vst [vmem:[#allocation5 + $0x10] sm:$0xf0] %v3784
        %3789 = vst [vmem:[#allocation5 + $0x18] sm:$0xf0] %v3785
        %3790 = vst [vmem:[#allocation5 + $0x20] sm:$0xf] %v3482
        %3791 = vst [vmem:[#allocation5 + $0x28] sm:$0xf] %v3484
        %v3794 = vrot.slane %v3553, 4
        %v3795 = vrot.slane %v3555, 4
        %3798 = vst [vmem:[#allocation5 + $0x20] sm:$0xf0] %v3794
        %3799 = vst [vmem:[#allocation5 + $0x28] sm:$0xf0] %v3795
        %3800 = vst [vmem:[#allocation5 + $0x30] sm:$0xf] %v3624
        %3801 = vst [vmem:[#allocation5 + $0x38] sm:$0xf] %v3626
        %v3804 = vrot.slane %v3695, 4
        %v3805 = vrot.slane %v3697, 4
        %3808 = vst [vmem:[#allocation5 + $0x30] sm:$0xf0] %v3804
        %3809 = vst [vmem:[#allocation5 + $0x38] sm:$0xf0] %v3805
        %3810 = vst [vmem:[#allocation5 + $0x40] sm:$0xf] %v3766
        %3811 = vst [vmem:[#allocation5 + $0x48] sm:$0xf] %v3768
        %v3812 = vld [vmem:[%s11] sm:$0xf]
        %v3813 = vld [vmem:[#allocation5] sm:$0xff]
        %v3814 = vld [vmem:[#allocation5 + $0x8] sm:$0xff]
        %v3815 = vld [vmem:[#allocation5 + $0x10] sm:$0xff]
        %v3816 = vld [vmem:[#allocation5 + $0x18] sm:$0xff]
        %v3817 = vld [vmem:[#allocation5 + $0x20] sm:$0xff]
        %v3818 = vld [vmem:[#allocation5 + $0x28] sm:$0xff]
        %v3819 = vld [vmem:[#allocation5 + $0x30] sm:$0xff]
        %v3820 = vld [vmem:[#allocation5 + $0x38] sm:$0xff]
        %v3821 = vld [vmem:[#allocation5 + $0x40] sm:$0xf]
        %v3822 = vld [vmem:[#allocation5 + $0x48] sm:$0xf]
        %v3823 = vld [vmem:[%s12] sm:$0x3]
        %v3825 = vlaneseq
        %v3826 = vshrl.u32 %v3825, 7
        %v3827 = vsub.s32 0, %v3826
        %v3828 = vrot.slane %v3823, %v3827
        %v3829 = vlaneseq
        %v3830 = vshrl.u32 %v3829, 7
        %v3831 = vsub.s32 1, %v3830
        %v3832 = vrot.slane %v3823, %v3831
        %vm3835 = vcmask 293888
        %v3837 = vsel %vm3835, %v3812, 0
        %vm3839 = vcmask 1043456
        %v3841 = vsel %vm3839, %v3821, 0
        %v3844 = vsel %vm3839, %v3822, 0
        %3846 = vmatprep.subr.mxu0 0.0
        %3847 = vmatpush1.msra.mxu0 0.0
        %3848 = vmatprep.subr.mxu0 0.0
        %3849 = vmatpush1.msra.mxu0 0.0
        %3850 = vmatprep.subr.mxu0 0.0
        %3851 = vmatpush1.msra.mxu0 0.0
        %3852 = vmatprep.subr.mxu0 0.0
        %3853 = vmatpush1.msra.mxu0 0.0
        %3854 = vmatprep.subr.mxu0 0.0
        %3855 = vmatpush1.msra.mxu0 0.0
        %3856 = vmatprep.subr.mxu0 0.0
        %3857 = vmatpush1.msra.mxu0 0.0
        %3858 = vmatprep.subr.mxu0 0.0
        %3859 = vmatpush1.msra.mxu0 0.0
        %3860 = vmatprep.subr.mxu0 0.0
        %3861 = vmatpush1.msra.mxu0 0.0
        %3862 = vmatprep.subr.mxu0 0.0
        %3863 = vmatpush1.msra.mxu0 0.0
        %3864 = vmatprep.subr.mxu0 0.0
        %3865 = vmatpush1.msra.mxu0 0.0
        %3866 = vmatprep.subr.mxu0 0.0
        %3867 = vmatpush1.msra.mxu0 0.0
        %3868 = vmatprep.subr.mxu0 %v3844
        %3869 = vmatpush1.msra.mxu0 %v3841
        %3870 = vmatprep.subr.mxu0 %v3820
        %3871 = vmatpush1.msra.mxu0 %v3819
        %3872 = vmatprep.subr.mxu0 %v3818
        %3873 = vmatpush1.msra.mxu0 %v3817
        %3874 = vmatprep.subr.mxu0 %v3816
        %3875 = vmatpush1.msra.mxu0 %v3815
        %3876 = vmatprep.subr.mxu0 %v3814
        %3877 = vmatpush1.msra.mxu0 %v3813
        %3878 = vmatprep.subr.mxu0 0.0
        %3879 = vmatpush2.msra.mxu0 0.0
        %3880 = vmatprep.subr.mxu0 0.0
        %3881 = vmatpush2.msra.mxu0 0.0
        %3882 = vmatprep.subr.mxu0 0.0
        %3883 = vmatpush2.msra.mxu0 0.0
        %3884 = vmatprep.subr.mxu0 0.0
        %3885 = vmatpush2.msra.mxu0 0.0
        %3886 = vmatprep.subr.mxu0 0.0
        %3887 = vmatpush2.msra.mxu0 0.0
        %3888 = vmatprep.subr.mxu0 0.0
        %3889 = vmatpush2.msra.mxu0 0.0
        %3890 = vmatprep.subr.mxu0 0.0
        %3891 = vmatpush2.msra.mxu0 0.0
        %3892 = vmatprep.subr.mxu0 0.0
        %3893 = vmatpush2.msra.mxu0 0.0
        %3894 = vmatprep.subr.mxu0 0.0
        %3895 = vmatpush2.msra.mxu0 0.0
        %3896 = vmatprep.subr.mxu0 0.0
        %3897 = vmatpush2.msra.mxu0 0.0
        %3898 = vmatprep.subr.mxu0 0.0
        %3899 = vmatpush2.msra.mxu0 0.0
        %3900 = vmatprep.subr.mxu0 0.0
        %3901 = vmatpush2.msra.mxu0 0.0
        %3902 = vmatprep.subr.mxu0 0.0
        %3903 = vmatpush2.msra.mxu0 0.0
        %3904 = vmatprep.subr.mxu0 0.0
        %3905 = vmatpush2.msra.mxu0 0.0
        %3906 = vmatprep.subr.mxu0 0.0
        %3907 = vmatpush2.msra.mxu0 0.0
        %3908 = vmatprep.subr.mxu0 0.0
        %3909 = vmatpush2.msra.mxu0 0.0
        %3910 = vmatprep.mubr.f32.mxu0 0.0
        %3911 = vmatmul.mubr.f32.gmra.mxu0 %v3837
        %v3912 = vpop.f32.mrf.mxu0
        %v3913 = vadd.f32 %v3828, %v3912
        %v3914 = vpop.f32.mrf.mxu0
        %v3915 = vadd.f32 %v3832, %v3914
        %3916 = vdwg.mxu0
        %v3917 = vmax.f32 %v3913, 0.0
        %v3918 = vmax.f32 %v3915, 0.0
        %v3919 = vld [vmem:[%s13] sm:$0xff]
        %v3920 = vld [vmem:[%s13 + $0x8] sm:$0xff]
        %v3921 = vld [vmem:[%s13 + $0x10] sm:$0xff]
        %v3922 = vld [vmem:[%s13 + $0x18] sm:$0xff]
        %v3923 = vld [vmem:[%s13 + $0x20] sm:$0xff]
        %v3924 = vld [vmem:[%s13 + $0x28] sm:$0xff]
        %v3925 = vld [vmem:[%s13 + $0x30] sm:$0xff]
        %v3926 = vld [vmem:[%s13 + $0x38] sm:$0xff]
        %v3927 = vld [vmem:[%s13 + $0x40] sm:$0xff]
        %v3928 = vld [vmem:[%s13 + $0x48] sm:$0xff]
        %v3929 = vld [vmem:[%s13 + $0x50] sm:$0xff]
        %v3930 = vld [vmem:[%s13 + $0x58] sm:$0xff]
        %v3931 = vld [vmem:[%s13 + $0x60] sm:$0xff]
        %v3932 = vld [vmem:[%s13 + $0x68] sm:$0xff]
        %v3933 = vld [vmem:[%s13 + $0x70] sm:$0xff]
        %v3934 = vld [vmem:[%s13 + $0x78] sm:$0xff]
        %v3935 = vld [vmem:[%s13 + $0x80] sm:$0xff]
        %v3936 = vld [vmem:[%s13 + $0x88] sm:$0xff]
        %v3937 = vld [vmem:[%s13 + $0x90] sm:$0xff]
        %v3938 = vld [vmem:[%s13 + $0x98] sm:$0xff]
        %v3939 = vld [vmem:[%s13 + $0xa0] sm:$0xff]
        %v3940 = vld [vmem:[%s13 + $0xa8] sm:$0xff]
        %v3941 = vld [vmem:[%s13 + $0xb0] sm:$0xff]
        %v3942 = vld [vmem:[%s13 + $0xb8] sm:$0xff]
        %v3943 = vld [vmem:[%s13 + $0xc0] sm:$0xff]
        %v3944 = vld [vmem:[%s13 + $0xc8] sm:$0xff]
        %v3945 = vld [vmem:[%s13 + $0xd0] sm:$0xff]
        %v3946 = vld [vmem:[%s13 + $0xd8] sm:$0xff]
        %v3947 = vld [vmem:[%s13 + $0xe0] sm:$0xff]
        %v3948 = vld [vmem:[%s13 + $0xe8] sm:$0xff]
        %v3949 = vld [vmem:[%s13 + $0xf0] sm:$0xff]
        %v3950 = vld [vmem:[%s13 + $0xf8] sm:$0xff]
        %v3951 = vld [vmem:[%s13 + $0x100] sm:$0xff]
        %v3952 = vld [vmem:[%s13 + $0x108] sm:$0xff]
        %v3953 = vld [vmem:[%s13 + $0x110] sm:$0xff]
        %v3954 = vld [vmem:[%s13 + $0x118] sm:$0xff]
        %v3955 = vld [vmem:[%s13 + $0x120] sm:$0xff]
        %v3956 = vld [vmem:[%s13 + $0x128] sm:$0xff]
        %v3957 = vld [vmem:[%s13 + $0x130] sm:$0xff]
        %v3958 = vld [vmem:[%s13 + $0x138] sm:$0xff]
        %v3959 = vld [vmem:[%s13 + $0x140] sm:$0xff]
        %v3960 = vld [vmem:[%s13 + $0x148] sm:$0xff]
        %v3961 = vld [vmem:[%s13 + $0x150] sm:$0xff]
        %v3962 = vld [vmem:[%s13 + $0x158] sm:$0xff]
        %v3963 = vld [vmem:[%s13 + $0x160] sm:$0xff]
        %v3964 = vld [vmem:[%s13 + $0x168] sm:$0xff]
        %v3965 = vld [vmem:[%s13 + $0x170] sm:$0xff]
        %v3966 = vld [vmem:[%s13 + $0x178] sm:$0xff]
        %v3967 = vld [vmem:[%s13 + $0x180] sm:$0xff]
        %v3968 = vld [vmem:[%s13 + $0x188] sm:$0xff]
        %v3969 = vld [vmem:[%s13 + $0x190] sm:$0xff]
        %v3970 = vld [vmem:[%s13 + $0x198] sm:$0xff]
        %v3971 = vld [vmem:[%s13 + $0x1a0] sm:$0xff]
        %v3972 = vld [vmem:[%s13 + $0x1a8] sm:$0xff]
        %v3973 = vld [vmem:[%s13 + $0x1b0] sm:$0xff]
        %v3974 = vld [vmem:[%s13 + $0x1b8] sm:$0xff]
        %v3975 = vld [vmem:[%s13 + $0x1c0] sm:$0xff]
        %v3976 = vld [vmem:[%s13 + $0x1c8] sm:$0xff]
        %v3977 = vld [vmem:[%s13 + $0x1d0] sm:$0xff]
        %v3978 = vld [vmem:[%s13 + $0x1d8] sm:$0xff]
        %v3979 = vld [vmem:[%s13 + $0x1e0] sm:$0xff]
        %v3980 = vld [vmem:[%s13 + $0x1e8] sm:$0xff]
        %v3981 = vld [vmem:[%s13 + $0x1f0] sm:$0xff]
        %v3982 = vld [vmem:[%s13 + $0x1f8] sm:$0xff]
        %v3983 = vld [vmem:[%s13 + $0x200] sm:$0xff]
        %v3984 = vld [vmem:[%s13 + $0x208] sm:$0xff]
        %v3985 = vld [vmem:[%s13 + $0x210] sm:$0xff]
        %v3986 = vld [vmem:[%s13 + $0x218] sm:$0xff]
        %v3987 = vld [vmem:[%s13 + $0x220] sm:$0xff]
        %v3988 = vld [vmem:[%s13 + $0x228] sm:$0xff]
        %v3989 = vld [vmem:[%s13 + $0x230] sm:$0xff]
        %v3990 = vld [vmem:[%s13 + $0x238] sm:$0xff]
        %v3991 = vld [vmem:[%s13 + $0x240] sm:$0xff]
        %v3992 = vld [vmem:[%s13 + $0x248] sm:$0xff]
        %v3993 = vld [vmem:[%s13 + $0x250] sm:$0xff]
        %v3994 = vld [vmem:[%s13 + $0x258] sm:$0xff]
        %v3995 = vld [vmem:[%s13 + $0x260] sm:$0xff]
        %v3996 = vld [vmem:[%s13 + $0x268] sm:$0xff]
        %v3997 = vld [vmem:[%s13 + $0x270] sm:$0xff]
        %v3998 = vld [vmem:[%s13 + $0x278] sm:$0xff]
        %v3999 = vld [vmem:[%s13 + $0x280] sm:$0xff]
        %v4000 = vld [vmem:[%s13 + $0x288] sm:$0xff]
        %v4001 = vld [vmem:[%s13 + $0x290] sm:$0xff]
        %v4002 = vld [vmem:[%s13 + $0x298] sm:$0xff]
        %v4003 = vld [vmem:[%s13 + $0x2a0] sm:$0xff]
        %v4004 = vld [vmem:[%s13 + $0x2a8] sm:$0xff]
        %v4005 = vld [vmem:[%s13 + $0x2b0] sm:$0xff]
        %v4006 = vld [vmem:[%s13 + $0x2b8] sm:$0xff]
        %v4007 = vld [vmem:[%s13 + $0x2c0] sm:$0xff]
        %v4008 = vld [vmem:[%s13 + $0x2c8] sm:$0xff]
        %v4009 = vld [vmem:[%s13 + $0x2d0] sm:$0xff]
        %v4010 = vld [vmem:[%s13 + $0x2d8] sm:$0xff]
        %v4011 = vld [vmem:[%s13 + $0x2e0] sm:$0xff]
        %v4012 = vld [vmem:[%s13 + $0x2e8] sm:$0xff]
        %v4013 = vld [vmem:[%s13 + $0x2f0] sm:$0xff]
        %v4014 = vld [vmem:[%s13 + $0x2f8] sm:$0xff]
        %v4015 = vld [vmem:[%s13 + $0x300] sm:$0xff]
        %v4016 = vld [vmem:[%s13 + $0x308] sm:$0xff]
        %v4017 = vld [vmem:[%s13 + $0x310] sm:$0xff]
        %v4018 = vld [vmem:[%s13 + $0x318] sm:$0xff]
        %v4019 = vld [vmem:[%s13 + $0x320] sm:$0xff]
        %v4020 = vld [vmem:[%s13 + $0x328] sm:$0xff]
        %v4021 = vld [vmem:[%s13 + $0x330] sm:$0xff]
        %v4022 = vld [vmem:[%s13 + $0x338] sm:$0xff]
        %v4023 = vld [vmem:[%s13 + $0x340] sm:$0xff]
        %v4024 = vld [vmem:[%s13 + $0x348] sm:$0xff]
        %v4025 = vld [vmem:[%s13 + $0x350] sm:$0xff]
        %v4026 = vld [vmem:[%s13 + $0x358] sm:$0xff]
        %v4027 = vld [vmem:[%s13 + $0x360] sm:$0xff]
        %v4028 = vld [vmem:[%s13 + $0x368] sm:$0xff]
        %v4029 = vld [vmem:[%s13 + $0x370] sm:$0xff]
        %v4030 = vld [vmem:[%s13 + $0x378] sm:$0xff]
        %v4031 = vld [vmem:[%s13 + $0x380] sm:$0xff]
        %v4032 = vld [vmem:[%s13 + $0x388] sm:$0xff]
        %v4033 = vld [vmem:[%s13 + $0x390] sm:$0xff]
        %v4034 = vld [vmem:[%s13 + $0x398] sm:$0xff]
        %v4035 = vld [vmem:[%s13 + $0x3a0] sm:$0xff]
        %v4036 = vld [vmem:[%s13 + $0x3a8] sm:$0xff]
        %v4037 = vld [vmem:[%s13 + $0x3b0] sm:$0xff]
        %v4038 = vld [vmem:[%s13 + $0x3b8] sm:$0xff]
        %v4039 = vld [vmem:[%s13 + $0x3c0] sm:$0xff]
        %v4040 = vld [vmem:[%s13 + $0x3c8] sm:$0xff]
        %v4041 = vld [vmem:[%s13 + $0x3d0] sm:$0xff]
        %v4042 = vld [vmem:[%s13 + $0x3d8] sm:$0xff]
        %v4043 = vld [vmem:[%s13 + $0x3e0] sm:$0xff]
        %v4044 = vld [vmem:[%s13 + $0x3e8] sm:$0xff]
        %v4045 = vld [vmem:[%s13 + $0x3f0] sm:$0xff]
        %v4046 = vld [vmem:[%s13 + $0x3f8] sm:$0xff]
        %v4047 = vld [vmem:[%s13 + $0x400] sm:$0xff]
        %v4048 = vld [vmem:[%s13 + $0x408] sm:$0xff]
        %v4049 = vld [vmem:[%s13 + $0x410] sm:$0xff]
        %v4050 = vld [vmem:[%s13 + $0x418] sm:$0xff]
        %v4051 = vld [vmem:[%s13 + $0x420] sm:$0xff]
        %v4052 = vld [vmem:[%s13 + $0x428] sm:$0xff]
        %v4053 = vld [vmem:[%s13 + $0x430] sm:$0xff]
        %v4054 = vld [vmem:[%s13 + $0x438] sm:$0xff]
        %v4055 = vld [vmem:[%s13 + $0x440] sm:$0xff]
        %v4056 = vld [vmem:[%s13 + $0x448] sm:$0xff]
        %v4057 = vld [vmem:[%s13 + $0x450] sm:$0xff]
        %v4058 = vld [vmem:[%s13 + $0x458] sm:$0xff]
        %v4059 = vld [vmem:[%s13 + $0x460] sm:$0xff]
        %v4060 = vld [vmem:[%s13 + $0x468] sm:$0xff]
        %v4061 = vld [vmem:[%s13 + $0x470] sm:$0xff]
        %v4062 = vld [vmem:[%s13 + $0x478] sm:$0xff]
        %v4063 = vld [vmem:[%s13 + $0x480] sm:$0xff]
        %v4064 = vld [vmem:[%s13 + $0x488] sm:$0xff]
        %v4065 = vld [vmem:[%s13 + $0x490] sm:$0xff]
        %v4066 = vld [vmem:[%s13 + $0x498] sm:$0xff]
        %v4067 = vld [vmem:[%s13 + $0x4a0] sm:$0xff]
        %v4068 = vld [vmem:[%s13 + $0x4a8] sm:$0xff]
        %v4069 = vld [vmem:[%s13 + $0x4b0] sm:$0xff]
        %v4070 = vld [vmem:[%s13 + $0x4b8] sm:$0xff]
        %v4071 = vld [vmem:[%s13 + $0x4c0] sm:$0xff]
        %v4072 = vld [vmem:[%s13 + $0x4c8] sm:$0xff]
        %v4073 = vld [vmem:[%s13 + $0x4d0] sm:$0xff]
        %v4074 = vld [vmem:[%s13 + $0x4d8] sm:$0xff]
        %v4075 = vld [vmem:[%s13 + $0x4e0] sm:$0xff]
        %v4076 = vld [vmem:[%s13 + $0x4e8] sm:$0xff]
        %v4077 = vld [vmem:[%s13 + $0x4f0] sm:$0xff]
        %v4078 = vld [vmem:[%s13 + $0x4f8] sm:$0xff]
        %v4079 = vld [vmem:[%s13 + $0x500] sm:$0xff]
        %v4080 = vld [vmem:[%s13 + $0x508] sm:$0xff]
        %v4081 = vld [vmem:[%s13 + $0x510] sm:$0xff]
        %v4082 = vld [vmem:[%s13 + $0x518] sm:$0xff]
        %v4083 = vld [vmem:[%s13 + $0x520] sm:$0xff]
        %v4084 = vld [vmem:[%s13 + $0x528] sm:$0xff]
        %v4085 = vld [vmem:[%s13 + $0x530] sm:$0xff]
        %v4086 = vld [vmem:[%s13 + $0x538] sm:$0xff]
        %v4087 = vld [vmem:[%s13 + $0x540] sm:$0xff]
        %v4088 = vld [vmem:[%s13 + $0x548] sm:$0xff]
        %v4089 = vld [vmem:[%s13 + $0x550] sm:$0xff]
        %v4090 = vld [vmem:[%s13 + $0x558] sm:$0xff]
        %v4091 = vld [vmem:[%s13 + $0x560] sm:$0xff]
        %v4092 = vld [vmem:[%s13 + $0x568] sm:$0xff]
        %v4093 = vld [vmem:[%s13 + $0x570] sm:$0xff]
        %v4094 = vld [vmem:[%s13 + $0x578] sm:$0xff]
        %v4095 = vld [vmem:[%s13 + $0x580] sm:$0xff]
        %v4096 = vld [vmem:[%s13 + $0x588] sm:$0xff]
        %v4097 = vld [vmem:[%s13 + $0x590] sm:$0xff]
        %v4098 = vld [vmem:[%s13 + $0x598] sm:$0xff]
        %v4099 = vld [vmem:[%s13 + $0x5a0] sm:$0xff]
        %v4100 = vld [vmem:[%s13 + $0x5a8] sm:$0xff]
        %v4101 = vld [vmem:[%s13 + $0x5b0] sm:$0xff]
        %v4102 = vld [vmem:[%s13 + $0x5b8] sm:$0xff]
        %v4103 = vld [vmem:[%s13 + $0x5c0] sm:$0xff]
        %v4104 = vld [vmem:[%s13 + $0x5c8] sm:$0xff]
        %v4105 = vld [vmem:[%s13 + $0x5d0] sm:$0xff]
        %v4106 = vld [vmem:[%s13 + $0x5d8] sm:$0xff]
        %v4107 = vld [vmem:[%s13 + $0x5e0] sm:$0xff]
        %v4108 = vld [vmem:[%s13 + $0x5e8] sm:$0xff]
        %v4109 = vld [vmem:[%s13 + $0x5f0] sm:$0xff]
        %v4110 = vld [vmem:[%s13 + $0x5f8] sm:$0xff]
        %v4111 = vld [vmem:[%s13 + $0x600] sm:$0xff]
        %v4112 = vld [vmem:[%s13 + $0x608] sm:$0xff]
        %v4113 = vld [vmem:[%s13 + $0x610] sm:$0xff]
        %v4114 = vld [vmem:[%s13 + $0x618] sm:$0xff]
        %v4115 = vld [vmem:[%s13 + $0x620] sm:$0xff]
        %v4116 = vld [vmem:[%s13 + $0x628] sm:$0xff]
        %v4117 = vld [vmem:[%s13 + $0x630] sm:$0xff]
        %v4118 = vld [vmem:[%s13 + $0x638] sm:$0xff]
        %v4119 = vld [vmem:[%s13 + $0x640] sm:$0xff]
        %v4120 = vld [vmem:[%s13 + $0x648] sm:$0xff]
        %v4121 = vld [vmem:[%s13 + $0x650] sm:$0xff]
        %v4122 = vld [vmem:[%s13 + $0x658] sm:$0xff]
        %v4123 = vld [vmem:[%s13 + $0x660] sm:$0xff]
        %v4124 = vld [vmem:[%s13 + $0x668] sm:$0xff]
        %v4125 = vld [vmem:[%s13 + $0x670] sm:$0xff]
        %v4126 = vld [vmem:[%s13 + $0x678] sm:$0xff]
        %v4127 = vld [vmem:[%s13 + $0x680] sm:$0xff]
        %v4128 = vld [vmem:[%s13 + $0x688] sm:$0xff]
        %v4129 = vld [vmem:[%s13 + $0x690] sm:$0xff]
        %v4130 = vld [vmem:[%s13 + $0x698] sm:$0xff]
        %v4131 = vld [vmem:[%s13 + $0x6a0] sm:$0xff]
        %v4132 = vld [vmem:[%s13 + $0x6a8] sm:$0xff]
        %v4133 = vld [vmem:[%s13 + $0x6b0] sm:$0xff]
        %v4134 = vld [vmem:[%s13 + $0x6b8] sm:$0xff]
        %v4135 = vld [vmem:[%s13 + $0x6c0] sm:$0xff]
        %v4136 = vld [vmem:[%s13 + $0x6c8] sm:$0xff]
        %v4137 = vld [vmem:[%s13 + $0x6d0] sm:$0xff]
        %v4138 = vld [vmem:[%s13 + $0x6d8] sm:$0xff]
        %v4139 = vld [vmem:[%s13 + $0x6e0] sm:$0xff]
        %v4140 = vld [vmem:[%s13 + $0x6e8] sm:$0xff]
        %v4141 = vld [vmem:[%s13 + $0x6f0] sm:$0xff]
        %v4142 = vld [vmem:[%s13 + $0x6f8] sm:$0xff]
        %v4143 = vld [vmem:[%s13 + $0x700] sm:$0xff]
        %v4144 = vld [vmem:[%s13 + $0x708] sm:$0xff]
        %v4145 = vld [vmem:[%s13 + $0x710] sm:$0xff]
        %v4146 = vld [vmem:[%s13 + $0x718] sm:$0xff]
        %v4147 = vld [vmem:[%s13 + $0x720] sm:$0xff]
        %v4148 = vld [vmem:[%s13 + $0x728] sm:$0xff]
        %v4149 = vld [vmem:[%s13 + $0x730] sm:$0xff]
        %v4150 = vld [vmem:[%s13 + $0x738] sm:$0xff]
        %v4151 = vld [vmem:[%s13 + $0x740] sm:$0xff]
        %v4152 = vld [vmem:[%s13 + $0x748] sm:$0xff]
        %v4153 = vld [vmem:[%s13 + $0x750] sm:$0xff]
        %v4154 = vld [vmem:[%s13 + $0x758] sm:$0xff]
        %v4155 = vld [vmem:[%s13 + $0x760] sm:$0xff]
        %v4156 = vld [vmem:[%s13 + $0x768] sm:$0xff]
        %v4157 = vld [vmem:[%s13 + $0x770] sm:$0xff]
        %v4158 = vld [vmem:[%s13 + $0x778] sm:$0xff]
        %v4159 = vld [vmem:[%s13 + $0x780] sm:$0xff]
        %v4160 = vld [vmem:[%s13 + $0x788] sm:$0xff]
        %v4161 = vld [vmem:[%s13 + $0x790] sm:$0xff]
        %v4162 = vld [vmem:[%s13 + $0x798] sm:$0xff]
        %v4163 = vld [vmem:[%s13 + $0x7a0] sm:$0xff]
        %v4164 = vld [vmem:[%s13 + $0x7a8] sm:$0xff]
        %v4165 = vld [vmem:[%s13 + $0x7b0] sm:$0xff]
        %v4166 = vld [vmem:[%s13 + $0x7b8] sm:$0xff]
        %v4167 = vld [vmem:[%s13 + $0x7c0] sm:$0xff]
        %v4168 = vld [vmem:[%s13 + $0x7c8] sm:$0xff]
        %v4169 = vld [vmem:[%s13 + $0x7d0] sm:$0xff]
        %v4170 = vld [vmem:[%s13 + $0x7d8] sm:$0xff]
        %v4171 = vld [vmem:[%s13 + $0x7e0] sm:$0xff]
        %v4172 = vld [vmem:[%s13 + $0x7e8] sm:$0xff]
        %v4173 = vld [vmem:[%s13 + $0x7f0] sm:$0xff]
        %v4174 = vld [vmem:[%s13 + $0x7f8] sm:$0xff]
        %v4175 = vld [vmem:[%s13 + $0x800] sm:$0xff]
        %v4176 = vld [vmem:[%s13 + $0x808] sm:$0xff]
        %v4177 = vld [vmem:[%s13 + $0x810] sm:$0xff]
        %v4178 = vld [vmem:[%s13 + $0x818] sm:$0xff]
        %v4179 = vld [vmem:[%s13 + $0x820] sm:$0xff]
        %v4180 = vld [vmem:[%s13 + $0x828] sm:$0xff]
        %v4181 = vld [vmem:[%s13 + $0x830] sm:$0xff]
        %v4182 = vld [vmem:[%s13 + $0x838] sm:$0xff]
        %v4183 = vld [vmem:[%s13 + $0x840] sm:$0xff]
        %v4184 = vld [vmem:[%s13 + $0x848] sm:$0xff]
        %v4185 = vld [vmem:[%s13 + $0x850] sm:$0xff]
        %v4186 = vld [vmem:[%s13 + $0x858] sm:$0xff]
        %v4187 = vld [vmem:[%s13 + $0x860] sm:$0xff]
        %v4188 = vld [vmem:[%s13 + $0x868] sm:$0xff]
        %v4189 = vld [vmem:[%s13 + $0x870] sm:$0xff]
        %v4190 = vld [vmem:[%s13 + $0x878] sm:$0xff]
        %v4191 = vld [vmem:[%s13 + $0x880] sm:$0xff]
        %v4192 = vld [vmem:[%s13 + $0x888] sm:$0xff]
        %v4193 = vld [vmem:[%s13 + $0x890] sm:$0xff]
        %v4194 = vld [vmem:[%s13 + $0x898] sm:$0xff]
        %v4195 = vld [vmem:[%s13 + $0x8a0] sm:$0xff]
        %v4196 = vld [vmem:[%s13 + $0x8a8] sm:$0xff]
        %v4197 = vld [vmem:[%s13 + $0x8b0] sm:$0xff]
        %v4198 = vld [vmem:[%s13 + $0x8b8] sm:$0xff]
        %v4199 = vld [vmem:[%s13 + $0x8c0] sm:$0xff]
        %v4200 = vld [vmem:[%s13 + $0x8c8] sm:$0xff]
        %v4201 = vld [vmem:[%s13 + $0x8d0] sm:$0xff]
        %v4202 = vld [vmem:[%s13 + $0x8d8] sm:$0xff]
        %v4203 = vld [vmem:[%s13 + $0x8e0] sm:$0xff]
        %v4204 = vld [vmem:[%s13 + $0x8e8] sm:$0xff]
        %v4205 = vld [vmem:[%s13 + $0x8f0] sm:$0xff]
        %v4206 = vld [vmem:[%s13 + $0x8f8] sm:$0xff]
        %4207 = vmatprep.subr.mxu0 %v4055
        %4208 = vmatpush1.msra.mxu0 %v4054
        %4209 = vmatprep.subr.mxu0 %v4046
        %4210 = vmatpush1.msra.mxu0 %v4045
        %4211 = vmatprep.subr.mxu0 %v4037
        %4212 = vmatpush1.msra.mxu0 %v4036
        %4213 = vmatprep.subr.mxu0 %v4028
        %4214 = vmatpush1.msra.mxu0 %v4027
        %4215 = vmatprep.subr.mxu0 %v4019
        %4216 = vmatpush1.msra.mxu0 %v4018
        %4217 = vmatprep.subr.mxu0 %v4010
        %4218 = vmatpush1.msra.mxu0 %v4009
        %4219 = vmatprep.subr.mxu0 %v4001
        %4220 = vmatpush1.msra.mxu0 %v4000
        %4221 = vmatprep.subr.mxu0 %v3992
        %4222 = vmatpush1.msra.mxu0 %v3991
        %4223 = vmatprep.subr.mxu0 %v3983
        %4224 = vmatpush1.msra.mxu0 %v3982
        %4225 = vmatprep.subr.mxu0 %v3974
        %4226 = vmatpush1.msra.mxu0 %v3973
        %4227 = vmatprep.subr.mxu0 %v3965
        %4228 = vmatpush1.msra.mxu0 %v3964
        %4229 = vmatprep.subr.mxu0 %v3956
        %4230 = vmatpush1.msra.mxu0 %v3955
        %4231 = vmatprep.subr.mxu0 %v3947
        %4232 = vmatpush1.msra.mxu0 %v3946
        %4233 = vmatprep.subr.mxu0 %v3938
        %4234 = vmatpush1.msra.mxu0 %v3937
        %4235 = vmatprep.subr.mxu0 %v3929
        %4236 = vmatpush1.msra.mxu0 %v3928
        %4237 = vmatprep.subr.mxu0 %v3920
        %4238 = vmatpush1.msra.mxu0 %v3919
        %4239 = vmatprep.subr.mxu0 %v4199
        %4240 = vmatpush2.msra.mxu0 %v4198
        %4241 = vmatprep.subr.mxu0 %v4190
        %4242 = vmatpush2.msra.mxu0 %v4189
        %4243 = vmatprep.subr.mxu0 %v4181
        %4244 = vmatpush2.msra.mxu0 %v4180
        %4245 = vmatprep.subr.mxu0 %v4172
        %4246 = vmatpush2.msra.mxu0 %v4171
        %4247 = vmatprep.subr.mxu0 %v4163
        %4248 = vmatpush2.msra.mxu0 %v4162
        %4249 = vmatprep.subr.mxu0 %v4154
        %4250 = vmatpush2.msra.mxu0 %v4153
        %4251 = vmatprep.subr.mxu0 %v4145
        %4252 = vmatpush2.msra.mxu0 %v4144
        %4253 = vmatprep.subr.mxu0 %v4136
        %4254 = vmatpush2.msra.mxu0 %v4135
        %4255 = vmatprep.subr.mxu0 %v4127
        %4256 = vmatpush2.msra.mxu0 %v4126
        %4257 = vmatprep.subr.mxu0 %v4118
        %4258 = vmatpush2.msra.mxu0 %v4117
        %4259 = vmatprep.subr.mxu0 %v4109
        %4260 = vmatpush2.msra.mxu0 %v4108
        %4261 = vmatprep.subr.mxu0 %v4100
        %4262 = vmatpush2.msra.mxu0 %v4099
        %4263 = vmatprep.subr.mxu0 %v4091
        %4264 = vmatpush2.msra.mxu0 %v4090
        %4265 = vmatprep.subr.mxu0 %v4082
        %4266 = vmatpush2.msra.mxu0 %v4081
        %4267 = vmatprep.subr.mxu0 %v4073
        %4268 = vmatpush2.msra.mxu0 %v4072
        %4269 = vmatprep.subr.mxu0 %v4064
        %4270 = vmatpush2.msra.mxu0 %v4063
        %4271 = vmatprep.mubr.f32.mxu0 %v3918
        %4272 = vmatmul.mubr.f32.gmra.mxu0 %v3917
        %v4273 = vpop.f32.mrf.mxu0
        %v4274 = vadd.f32 0.0, %v4273
        %v4275 = vpop.f32.mrf.mxu0
        %v4276 = vadd.f32 0.0, %v4275
        %4277 = vdwg.mxu0
        %4278 = vmatprep.subr.mxu0 %v4057
        %4279 = vmatpush1.msra.mxu0 %v4056
        %4280 = vmatprep.subr.mxu0 %v4048
        %4281 = vmatpush1.msra.mxu0 %v4047
        %4282 = vmatprep.subr.mxu0 %v4039
        %4283 = vmatpush1.msra.mxu0 %v4038
        %4284 = vmatprep.subr.mxu0 %v4030
        %4285 = vmatpush1.msra.mxu0 %v4029
        %4286 = vmatprep.subr.mxu0 %v4021
        %4287 = vmatpush1.msra.mxu0 %v4020
        %4288 = vmatprep.subr.mxu0 %v4012
        %4289 = vmatpush1.msra.mxu0 %v4011
        %4290 = vmatprep.subr.mxu0 %v4003
        %4291 = vmatpush1.msra.mxu0 %v4002
        %4292 = vmatprep.subr.mxu0 %v3994
        %4293 = vmatpush1.msra.mxu0 %v3993
        %4294 = vmatprep.subr.mxu0 %v3985
        %4295 = vmatpush1.msra.mxu0 %v3984
        %4296 = vmatprep.subr.mxu0 %v3976
        %4297 = vmatpush1.msra.mxu0 %v3975
        %4298 = vmatprep.subr.mxu0 %v3967
        %4299 = vmatpush1.msra.mxu0 %v3966
        %4300 = vmatprep.subr.mxu0 %v3958
        %4301 = vmatpush1.msra.mxu0 %v3957
        %4302 = vmatprep.subr.mxu0 %v3949
        %4303 = vmatpush1.msra.mxu0 %v3948
        %4304 = vmatprep.subr.mxu0 %v3940
        %4305 = vmatpush1.msra.mxu0 %v3939
        %4306 = vmatprep.subr.mxu0 %v3931
        %4307 = vmatpush1.msra.mxu0 %v3930
        %4308 = vmatprep.subr.mxu0 %v3922
        %4309 = vmatpush1.msra.mxu0 %v3921
        %4310 = vmatprep.subr.mxu0 %v4201
        %4311 = vmatpush2.msra.mxu0 %v4200
        %4312 = vmatprep.subr.mxu0 %v4192
        %4313 = vmatpush2.msra.mxu0 %v4191
        %4314 = vmatprep.subr.mxu0 %v4183
        %4315 = vmatpush2.msra.mxu0 %v4182
        %4316 = vmatprep.subr.mxu0 %v4174
        %4317 = vmatpush2.msra.mxu0 %v4173
        %4318 = vmatprep.subr.mxu0 %v4165
        %4319 = vmatpush2.msra.mxu0 %v4164
        %4320 = vmatprep.subr.mxu0 %v4156
        %4321 = vmatpush2.msra.mxu0 %v4155
        %4322 = vmatprep.subr.mxu0 %v4147
        %4323 = vmatpush2.msra.mxu0 %v4146
        %4324 = vmatprep.subr.mxu0 %v4138
        %4325 = vmatpush2.msra.mxu0 %v4137
        %4326 = vmatprep.subr.mxu0 %v4129
        %4327 = vmatpush2.msra.mxu0 %v4128
        %4328 = vmatprep.subr.mxu0 %v4120
        %4329 = vmatpush2.msra.mxu0 %v4119
        %4330 = vmatprep.subr.mxu0 %v4111
        %4331 = vmatpush2.msra.mxu0 %v4110
        %4332 = vmatprep.subr.mxu0 %v4102
        %4333 = vmatpush2.msra.mxu0 %v4101
        %4334 = vmatprep.subr.mxu0 %v4093
        %4335 = vmatpush2.msra.mxu0 %v4092
        %4336 = vmatprep.subr.mxu0 %v4084
        %4337 = vmatpush2.msra.mxu0 %v4083
        %4338 = vmatprep.subr.mxu0 %v4075
        %4339 = vmatpush2.msra.mxu0 %v4074
        %4340 = vmatprep.subr.mxu0 %v4066
        %4341 = vmatpush2.msra.mxu0 %v4065
        %4342 = vmatprep.mubr.f32.mxu0 %v3918
        %4343 = vmatmul.mubr.f32.gmra.mxu0 %v3917
        %v4344 = vpop.f32.mrf.mxu0
        %v4345 = vadd.f32 0.0, %v4344
        %v4346 = vpop.f32.mrf.mxu0
        %v4347 = vadd.f32 0.0, %v4346
        %4348 = vdwg.mxu0
        %4349 = vmatprep.subr.mxu0 %v4059
        %4350 = vmatpush1.msra.mxu0 %v4058
        %4351 = vmatprep.subr.mxu0 %v4050
        %4352 = vmatpush1.msra.mxu0 %v4049
        %4353 = vmatprep.subr.mxu0 %v4041
        %4354 = vmatpush1.msra.mxu0 %v4040
        %4355 = vmatprep.subr.mxu0 %v4032
        %4356 = vmatpush1.msra.mxu0 %v4031
        %4357 = vmatprep.subr.mxu0 %v4023
        %4358 = vmatpush1.msra.mxu0 %v4022
        %4359 = vmatprep.subr.mxu0 %v4014
        %4360 = vmatpush1.msra.mxu0 %v4013
        %4361 = vmatprep.subr.mxu0 %v4005
        %4362 = vmatpush1.msra.mxu0 %v4004
        %4363 = vmatprep.subr.mxu0 %v3996
        %4364 = vmatpush1.msra.mxu0 %v3995
        %4365 = vmatprep.subr.mxu0 %v3987
        %4366 = vmatpush1.msra.mxu0 %v3986
        %4367 = vmatprep.subr.mxu0 %v3978
        %4368 = vmatpush1.msra.mxu0 %v3977
        %4369 = vmatprep.subr.mxu0 %v3969
        %4370 = vmatpush1.msra.mxu0 %v3968
        %4371 = vmatprep.subr.mxu0 %v3960
        %4372 = vmatpush1.msra.mxu0 %v3959
        %4373 = vmatprep.subr.mxu0 %v3951
        %4374 = vmatpush1.msra.mxu0 %v3950
        %4375 = vmatprep.subr.mxu0 %v3942
        %4376 = vmatpush1.msra.mxu0 %v3941
        %4377 = vmatprep.subr.mxu0 %v3933
        %4378 = vmatpush1.msra.mxu0 %v3932
        %4379 = vmatprep.subr.mxu0 %v3924
        %4380 = vmatpush1.msra.mxu0 %v3923
        %4381 = vmatprep.subr.mxu0 %v4203
        %4382 = vmatpush2.msra.mxu0 %v4202
        %4383 = vmatprep.subr.mxu0 %v4194
        %4384 = vmatpush2.msra.mxu0 %v4193
        %4385 = vmatprep.subr.mxu0 %v4185
        %4386 = vmatpush2.msra.mxu0 %v4184
        %4387 = vmatprep.subr.mxu0 %v4176
        %4388 = vmatpush2.msra.mxu0 %v4175
        %4389 = vmatprep.subr.mxu0 %v4167
        %4390 = vmatpush2.msra.mxu0 %v4166
        %4391 = vmatprep.subr.mxu0 %v4158
        %4392 = vmatpush2.msra.mxu0 %v4157
        %4393 = vmatprep.subr.mxu0 %v4149
        %4394 = vmatpush2.msra.mxu0 %v4148
        %4395 = vmatprep.subr.mxu0 %v4140
        %4396 = vmatpush2.msra.mxu0 %v4139
        %4397 = vmatprep.subr.mxu0 %v4131
        %4398 = vmatpush2.msra.mxu0 %v4130
        %4399 = vmatprep.subr.mxu0 %v4122
        %4400 = vmatpush2.msra.mxu0 %v4121
        %4401 = vmatprep.subr.mxu0 %v4113
        %4402 = vmatpush2.msra.mxu0 %v4112
        %4403 = vmatprep.subr.mxu0 %v4104
        %4404 = vmatpush2.msra.mxu0 %v4103
        %4405 = vmatprep.subr.mxu0 %v4095
        %4406 = vmatpush2.msra.mxu0 %v4094
        %4407 = vmatprep.subr.mxu0 %v4086
        %4408 = vmatpush2.msra.mxu0 %v4085
        %4409 = vmatprep.subr.mxu0 %v4077
        %4410 = vmatpush2.msra.mxu0 %v4076
        %4411 = vmatprep.subr.mxu0 %v4068
        %4412 = vmatpush2.msra.mxu0 %v4067
        %4413 = vmatprep.mubr.f32.mxu0 %v3918
        %4414 = vmatmul.mubr.f32.gmra.mxu0 %v3917
        %v4415 = vpop.f32.mrf.mxu0
        %v4416 = vadd.f32 0.0, %v4415
        %v4417 = vpop.f32.mrf.mxu0
        %v4418 = vadd.f32 0.0, %v4417
        %4419 = vdwg.mxu0
        %4420 = vmatprep.subr.mxu0 %v4061
        %4421 = vmatpush1.msra.mxu0 %v4060
        %4422 = vmatprep.subr.mxu0 %v4052
        %4423 = vmatpush1.msra.mxu0 %v4051
        %4424 = vmatprep.subr.mxu0 %v4043
        %4425 = vmatpush1.msra.mxu0 %v4042
        %4426 = vmatprep.subr.mxu0 %v4034
        %4427 = vmatpush1.msra.mxu0 %v4033
        %4428 = vmatprep.subr.mxu0 %v4025
        %4429 = vmatpush1.msra.mxu0 %v4024
        %4430 = vmatprep.subr.mxu0 %v4016
        %4431 = vmatpush1.msra.mxu0 %v4015
        %4432 = vmatprep.subr.mxu0 %v4007
        %4433 = vmatpush1.msra.mxu0 %v4006
        %4434 = vmatprep.subr.mxu0 %v3998
        %4435 = vmatpush1.msra.mxu0 %v3997
        %4436 = vmatprep.subr.mxu0 %v3989
        %4437 = vmatpush1.msra.mxu0 %v3988
        %4438 = vmatprep.subr.mxu0 %v3980
        %4439 = vmatpush1.msra.mxu0 %v3979
        %4440 = vmatprep.subr.mxu0 %v3971
        %4441 = vmatpush1.msra.mxu0 %v3970
        %4442 = vmatprep.subr.mxu0 %v3962
        %4443 = vmatpush1.msra.mxu0 %v3961
        %4444 = vmatprep.subr.mxu0 %v3953
        %4445 = vmatpush1.msra.mxu0 %v3952
        %4446 = vmatprep.subr.mxu0 %v3944
        %4447 = vmatpush1.msra.mxu0 %v3943
        %4448 = vmatprep.subr.mxu0 %v3935
        %4449 = vmatpush1.msra.mxu0 %v3934
        %4450 = vmatprep.subr.mxu0 %v3926
        %4451 = vmatpush1.msra.mxu0 %v3925
        %4452 = vmatprep.subr.mxu0 %v4205
        %4453 = vmatpush2.msra.mxu0 %v4204
        %4454 = vmatprep.subr.mxu0 %v4196
        %4455 = vmatpush2.msra.mxu0 %v4195
        %4456 = vmatprep.subr.mxu0 %v4187
        %4457 = vmatpush2.msra.mxu0 %v4186
        %4458 = vmatprep.subr.mxu0 %v4178
        %4459 = vmatpush2.msra.mxu0 %v4177
        %4460 = vmatprep.subr.mxu0 %v4169
        %4461 = vmatpush2.msra.mxu0 %v4168
        %4462 = vmatprep.subr.mxu0 %v4160
        %4463 = vmatpush2.msra.mxu0 %v4159
        %4464 = vmatprep.subr.mxu0 %v4151
        %4465 = vmatpush2.msra.mxu0 %v4150
        %4466 = vmatprep.subr.mxu0 %v4142
        %4467 = vmatpush2.msra.mxu0 %v4141
        %4468 = vmatprep.subr.mxu0 %v4133
        %4469 = vmatpush2.msra.mxu0 %v4132
        %4470 = vmatprep.subr.mxu0 %v4124
        %4471 = vmatpush2.msra.mxu0 %v4123
        %4472 = vmatprep.subr.mxu0 %v4115
        %4473 = vmatpush2.msra.mxu0 %v4114
        %4474 = vmatprep.subr.mxu0 %v4106
        %4475 = vmatpush2.msra.mxu0 %v4105
        %4476 = vmatprep.subr.mxu0 %v4097
        %4477 = vmatpush2.msra.mxu0 %v4096
        %4478 = vmatprep.subr.mxu0 %v4088
        %4479 = vmatpush2.msra.mxu0 %v4087
        %4480 = vmatprep.subr.mxu0 %v4079
        %4481 = vmatpush2.msra.mxu0 %v4078
        %4482 = vmatprep.subr.mxu0 %v4070
        %4483 = vmatpush2.msra.mxu0 %v4069
        %4484 = vmatprep.mubr.f32.mxu0 %v3918
        %4485 = vmatmul.mubr.f32.gmra.mxu0 %v3917
        %v4486 = vpop.f32.mrf.mxu0
        %v4487 = vadd.f32 0.0, %v4486
        %v4488 = vpop.f32.mrf.mxu0
        %v4489 = vadd.f32 0.0, %v4488
        %4490 = vdwg.mxu0
        %4491 = vmatprep.subr.mxu0 0.0
        %4492 = vmatpush1.msra.mxu0 %v4062
        %4493 = vmatprep.subr.mxu0 0.0
        %4494 = vmatpush1.msra.mxu0 %v4053
        %4495 = vmatprep.subr.mxu0 0.0
        %4496 = vmatpush1.msra.mxu0 %v4044
        %4497 = vmatprep.subr.mxu0 0.0
        %4498 = vmatpush1.msra.mxu0 %v4035
        %4499 = vmatprep.subr.mxu0 0.0
        %4500 = vmatpush1.msra.mxu0 %v4026
        %4501 = vmatprep.subr.mxu0 0.0
        %4502 = vmatpush1.msra.mxu0 %v4017
        %4503 = vmatprep.subr.mxu0 0.0
        %4504 = vmatpush1.msra.mxu0 %v4008
        %4505 = vmatprep.subr.mxu0 0.0
        %4506 = vmatpush1.msra.mxu0 %v3999
        %4507 = vmatprep.subr.mxu0 0.0
        %4508 = vmatpush1.msra.mxu0 %v3990
        %4509 = vmatprep.subr.mxu0 0.0
        %4510 = vmatpush1.msra.mxu0 %v3981
        %4511 = vmatprep.subr.mxu0 0.0
        %4512 = vmatpush1.msra.mxu0 %v3972
        %4513 = vmatprep.subr.mxu0 0.0
        %4514 = vmatpush1.msra.mxu0 %v3963
        %4515 = vmatprep.subr.mxu0 0.0
        %4516 = vmatpush1.msra.mxu0 %v3954
        %4517 = vmatprep.subr.mxu0 0.0
        %4518 = vmatpush1.msra.mxu0 %v3945
        %4519 = vmatprep.subr.mxu0 0.0
        %4520 = vmatpush1.msra.mxu0 %v3936
        %4521 = vmatprep.subr.mxu0 0.0
        %4522 = vmatpush1.msra.mxu0 %v3927
        %4523 = vmatprep.subr.mxu0 0.0
        %4524 = vmatpush2.msra.mxu0 %v4206
        %4525 = vmatprep.subr.mxu0 0.0
        %4526 = vmatpush2.msra.mxu0 %v4197
        %4527 = vmatprep.subr.mxu0 0.0
        %4528 = vmatpush2.msra.mxu0 %v4188
        %4529 = vmatprep.subr.mxu0 0.0
        %4530 = vmatpush2.msra.mxu0 %v4179
        %4531 = vmatprep.subr.mxu0 0.0
        %4532 = vmatpush2.msra.mxu0 %v4170
        %4533 = vmatprep.subr.mxu0 0.0
        %4534 = vmatpush2.msra.mxu0 %v4161
        %4535 = vmatprep.subr.mxu0 0.0
        %4536 = vmatpush2.msra.mxu0 %v4152
        %4537 = vmatprep.subr.mxu0 0.0
        %4538 = vmatpush2.msra.mxu0 %v4143
        %4539 = vmatprep.subr.mxu0 0.0
        %4540 = vmatpush2.msra.mxu0 %v4134
        %4541 = vmatprep.subr.mxu0 0.0
        %4542 = vmatpush2.msra.mxu0 %v4125
        %4543 = vmatprep.subr.mxu0 0.0
        %4544 = vmatpush2.msra.mxu0 %v4116
        %4545 = vmatprep.subr.mxu0 0.0
        %4546 = vmatpush2.msra.mxu0 %v4107
        %4547 = vmatprep.subr.mxu0 0.0
        %4548 = vmatpush2.msra.mxu0 %v4098
        %4549 = vmatprep.subr.mxu0 0.0
        %4550 = vmatpush2.msra.mxu0 %v4089
        %4551 = vmatprep.subr.mxu0 0.0
        %4552 = vmatpush2.msra.mxu0 %v4080
        %4553 = vmatprep.subr.mxu0 0.0
        %4554 = vmatpush2.msra.mxu0 %v4071
        %4555 = vmatprep.mubr.f32.mxu0 %v3918
        %4556 = vmatmul.mubr.f32.gmra.mxu0 %v3917
        %v4557 = vpop.f32.mrf.mxu0
        %v4558 = vadd.f32 0.0, %v4557
        %v4559 = vpop.f32.mrf.mxu0
        %4560 = vdwg.mxu0
        %4561 = vst [vmem:[#allocation6] sm:$0xf] %v4274
        %4562 = vst [vmem:[#allocation6 + $0x4] sm:$0xf] %v4276
        %4563 = vst [vmem:[#allocation6 + $0x8] sm:$0xf] %v4345
        %4564 = vst [vmem:[#allocation6 + $0xc] sm:$0xf] %v4347
        %4565 = vst [vmem:[#allocation6 + $0x10] sm:$0xf] %v4416
        %4566 = vst [vmem:[#allocation6 + $0x14] sm:$0xf] %v4418
        %4567 = vst [vmem:[#allocation6 + $0x18] sm:$0xf] %v4487
        %4568 = vst [vmem:[#allocation6 + $0x1c] sm:$0xf] %v4489
        %4569 = vst [vmem:[#allocation6 + $0x20] sm:$0xf] %v4558
        %v4570 = vld [vmem:[%s14] sm:$0xf]
        %v4571 = vld [vmem:[#allocation6] sm:$0xff]
        %v4572 = vld [vmem:[#allocation6 + $0x8] sm:$0xff]
        %v4573 = vld [vmem:[#allocation6 + $0x10] sm:$0xff]
        %v4574 = vld [vmem:[#allocation6 + $0x18] sm:$0xff]
        %v4575 = vld [vmem:[#allocation6 + $0x20] sm:$0xf]
        %v4576 = vld [vmem:[%s15] sm:$0x1]
        %v4578 = vlaneseq
        %v4579 = vshrl.u32 %v4578, 7
        %v4580 = vsub.s32 0, %v4579
        %v4581 = vrot.slane %v4576, %v4580
        %v4584 = vsel %vm3835, %v4570, 0
        %v4587 = vsel %vm3839, %v4575, 0
        %4589 = vmatprep.subr.mxu0 0.0
        %4590 = vmatpush1.msra.mxu0 0.0
        %4591 = vmatprep.subr.mxu0 0.0
        %4592 = vmatpush1.msra.mxu0 0.0
        %4593 = vmatprep.subr.mxu0 0.0
        %4594 = vmatpush1.msra.mxu0 0.0
        %4595 = vmatprep.subr.mxu0 0.0
        %4596 = vmatpush1.msra.mxu0 0.0
        %4597 = vmatprep.subr.mxu0 0.0
        %4598 = vmatpush1.msra.mxu0 0.0
        %4599 = vmatprep.subr.mxu0 0.0
        %4600 = vmatpush1.msra.mxu0 0.0
        %4601 = vmatprep.subr.mxu0 0.0
        %4602 = vmatpush1.msra.mxu0 0.0
        %4603 = vmatprep.subr.mxu0 0.0
        %4604 = vmatpush1.msra.mxu0 0.0
        %4605 = vmatprep.subr.mxu0 0.0
        %4606 = vmatpush1.msra.mxu0 0.0
        %4607 = vmatprep.subr.mxu0 0.0
        %4608 = vmatpush1.msra.mxu0 0.0
        %4609 = vmatprep.subr.mxu0 0.0
        %4610 = vmatpush1.msra.mxu0 0.0
        %4611 = vmatprep.subr.mxu0 0.0
        %4612 = vmatpush1.msra.mxu0 %v4587
        %4613 = vmatprep.subr.mxu0 0.0
        %4614 = vmatpush1.msra.mxu0 %v4574
        %4615 = vmatprep.subr.mxu0 0.0
        %4616 = vmatpush1.msra.mxu0 %v4573
        %4617 = vmatprep.subr.mxu0 0.0
        %4618 = vmatpush1.msra.mxu0 %v4572
        %4619 = vmatprep.subr.mxu0 0.0
        %4620 = vmatpush1.msra.mxu0 %v4571
        %4621 = vmatprep.subr.mxu0 0.0
        %4622 = vmatpush2.msra.mxu0 0.0
        %4623 = vmatprep.subr.mxu0 0.0
        %4624 = vmatpush2.msra.mxu0 0.0
        %4625 = vmatprep.subr.mxu0 0.0
        %4626 = vmatpush2.msra.mxu0 0.0
        %4627 = vmatprep.subr.mxu0 0.0
        %4628 = vmatpush2.msra.mxu0 0.0
        %4629 = vmatprep.subr.mxu0 0.0
        %4630 = vmatpush2.msra.mxu0 0.0
        %4631 = vmatprep.subr.mxu0 0.0
        %4632 = vmatpush2.msra.mxu0 0.0
        %4633 = vmatprep.subr.mxu0 0.0
        %4634 = vmatpush2.msra.mxu0 0.0
        %4635 = vmatprep.subr.mxu0 0.0
        %4636 = vmatpush2.msra.mxu0 0.0
        %4637 = vmatprep.subr.mxu0 0.0
        %4638 = vmatpush2.msra.mxu0 0.0
        %4639 = vmatprep.subr.mxu0 0.0
        %4640 = vmatpush2.msra.mxu0 0.0
        %4641 = vmatprep.subr.mxu0 0.0
        %4642 = vmatpush2.msra.mxu0 0.0
        %4643 = vmatprep.subr.mxu0 0.0
        %4644 = vmatpush2.msra.mxu0 0.0
        %4645 = vmatprep.subr.mxu0 0.0
        %4646 = vmatpush2.msra.mxu0 0.0
        %4647 = vmatprep.subr.mxu0 0.0
        %4648 = vmatpush2.msra.mxu0 0.0
        %4649 = vmatprep.subr.mxu0 0.0
        %4650 = vmatpush2.msra.mxu0 0.0
        %4651 = vmatprep.subr.mxu0 0.0
        %4652 = vmatpush2.msra.mxu0 0.0
        %4653 = vmatprep.mubr.f32.mxu0 0.0
        %4654 = vmatmul.mubr.f32.gmra.mxu0 %v4584
        %v4655 = vpop.f32.mrf.mxu0
        %v4656 = vadd.f32 %v4581, %v4655
        %v4657 = vpop.f32.mrf.mxu0
        %4658 = vdwg.mxu0
        %v4659 = vmax.f32 %v4656, 0.0
        %v4660 = vld [vmem:[%s16] sm:$0xff]
        %v4661 = vld [vmem:[%s16 + $0x8] sm:$0xff]
        %v4662 = vld [vmem:[%s16 + $0x10] sm:$0xff]
        %v4663 = vld [vmem:[%s16 + $0x18] sm:$0xff]
        %v4664 = vld [vmem:[%s16 + $0x20] sm:$0xff]
        %v4665 = vld [vmem:[%s16 + $0x28] sm:$0xff]
        %v4666 = vld [vmem:[%s16 + $0x30] sm:$0xff]
        %v4667 = vld [vmem:[%s16 + $0x38] sm:$0xff]
        %v4668 = vld [vmem:[%s16 + $0x40] sm:$0xff]
        %v4669 = vld [vmem:[%s16 + $0x48] sm:$0xff]
        %v4670 = vld [vmem:[%s16 + $0x50] sm:$0xff]
        %v4671 = vld [vmem:[%s16 + $0x58] sm:$0xff]
        %v4672 = vld [vmem:[%s16 + $0x60] sm:$0xff]
        %v4673 = vld [vmem:[%s16 + $0x68] sm:$0xff]
        %v4674 = vld [vmem:[%s16 + $0x70] sm:$0xff]
        %v4675 = vld [vmem:[%s16 + $0x78] sm:$0xff]
        %v4676 = vld [vmem:[%s16 + $0x80] sm:$0xff]
        %v4677 = vld [vmem:[%s16 + $0x88] sm:$0xff]
        %v4678 = vld [vmem:[%s16 + $0x90] sm:$0xff]
        %v4679 = vld [vmem:[%s16 + $0x98] sm:$0xff]
        %v4680 = vld [vmem:[%s16 + $0xa0] sm:$0xff]
        %v4681 = vld [vmem:[%s16 + $0xa8] sm:$0xff]
        %v4682 = vld [vmem:[%s16 + $0xb0] sm:$0xff]
        %v4683 = vld [vmem:[%s16 + $0xb8] sm:$0xff]
        %v4684 = vld [vmem:[%s16 + $0xc0] sm:$0xff]
        %v4685 = vld [vmem:[%s16 + $0xc8] sm:$0xff]
        %v4686 = vld [vmem:[%s16 + $0xd0] sm:$0xff]
        %v4687 = vld [vmem:[%s16 + $0xd8] sm:$0xff]
        %v4688 = vld [vmem:[%s16 + $0xe0] sm:$0xff]
        %v4689 = vld [vmem:[%s16 + $0xe8] sm:$0xff]
        %v4690 = vld [vmem:[%s16 + $0xf0] sm:$0xff]
        %v4691 = vld [vmem:[%s16 + $0xf8] sm:$0xff]
        %v4692 = vld [vmem:[%s16 + $0x100] sm:$0xff]
        %v4693 = vld [vmem:[%s16 + $0x108] sm:$0xff]
        %v4694 = vld [vmem:[%s16 + $0x110] sm:$0xff]
        %v4695 = vld [vmem:[%s16 + $0x118] sm:$0xff]
        %v4696 = vld [vmem:[%s16 + $0x120] sm:$0xff]
        %v4697 = vld [vmem:[%s16 + $0x128] sm:$0xff]
        %v4698 = vld [vmem:[%s16 + $0x130] sm:$0xff]
        %v4699 = vld [vmem:[%s16 + $0x138] sm:$0xff]
        %v4700 = vld [vmem:[%s16 + $0x140] sm:$0xff]
        %v4701 = vld [vmem:[%s16 + $0x148] sm:$0xff]
        %v4702 = vld [vmem:[%s16 + $0x150] sm:$0xff]
        %v4703 = vld [vmem:[%s16 + $0x158] sm:$0xff]
        %v4704 = vld [vmem:[%s16 + $0x160] sm:$0xff]
        %v4705 = vld [vmem:[%s16 + $0x168] sm:$0xff]
        %v4706 = vld [vmem:[%s16 + $0x170] sm:$0xff]
        %v4707 = vld [vmem:[%s16 + $0x178] sm:$0xff]
        %v4708 = vld [vmem:[%s16 + $0x180] sm:$0xff]
        %v4709 = vld [vmem:[%s16 + $0x188] sm:$0xff]
        %v4710 = vld [vmem:[%s16 + $0x190] sm:$0xff]
        %v4711 = vld [vmem:[%s16 + $0x198] sm:$0xff]
        %v4712 = vld [vmem:[%s16 + $0x1a0] sm:$0xff]
        %v4713 = vld [vmem:[%s16 + $0x1a8] sm:$0xff]
        %v4714 = vld [vmem:[%s16 + $0x1b0] sm:$0xff]
        %v4715 = vld [vmem:[%s16 + $0x1b8] sm:$0xff]
        %v4716 = vld [vmem:[%s16 + $0x1c0] sm:$0xff]
        %v4717 = vld [vmem:[%s16 + $0x1c8] sm:$0xff]
        %v4718 = vld [vmem:[%s16 + $0x1d0] sm:$0xff]
        %v4719 = vld [vmem:[%s16 + $0x1d8] sm:$0xff]
        %v4720 = vld [vmem:[%s16 + $0x1e0] sm:$0xff]
        %v4721 = vld [vmem:[%s16 + $0x1e8] sm:$0xff]
        %v4722 = vld [vmem:[%s16 + $0x1f0] sm:$0xff]
        %v4723 = vld [vmem:[%s16 + $0x1f8] sm:$0xff]
        %v4724 = vld [vmem:[%s16 + $0x200] sm:$0xff]
        %v4725 = vld [vmem:[%s16 + $0x208] sm:$0xff]
        %v4726 = vld [vmem:[%s16 + $0x210] sm:$0xff]
        %v4727 = vld [vmem:[%s16 + $0x218] sm:$0xff]
        %v4728 = vld [vmem:[%s16 + $0x220] sm:$0xff]
        %v4729 = vld [vmem:[%s16 + $0x228] sm:$0xff]
        %v4730 = vld [vmem:[%s16 + $0x230] sm:$0xff]
        %v4731 = vld [vmem:[%s16 + $0x238] sm:$0xff]
        %v4732 = vld [vmem:[%s16 + $0x240] sm:$0xff]
        %v4733 = vld [vmem:[%s16 + $0x248] sm:$0xff]
        %v4734 = vld [vmem:[%s16 + $0x250] sm:$0xff]
        %v4735 = vld [vmem:[%s16 + $0x258] sm:$0xff]
        %v4736 = vld [vmem:[%s16 + $0x260] sm:$0xff]
        %v4737 = vld [vmem:[%s16 + $0x268] sm:$0xff]
        %v4738 = vld [vmem:[%s16 + $0x270] sm:$0xff]
        %v4739 = vld [vmem:[%s16 + $0x278] sm:$0xff]
        %4740 = vmatprep.subr.mxu0 %v4736
        %4741 = vmatpush1.msra.mxu0 %v4735
        %4742 = vmatprep.subr.mxu0 %v4731
        %4743 = vmatpush1.msra.mxu0 %v4730
        %4744 = vmatprep.subr.mxu0 %v4726
        %4745 = vmatpush1.msra.mxu0 %v4725
        %4746 = vmatprep.subr.mxu0 %v4721
        %4747 = vmatpush1.msra.mxu0 %v4720
        %4748 = vmatprep.subr.mxu0 %v4716
        %4749 = vmatpush1.msra.mxu0 %v4715
        %4750 = vmatprep.subr.mxu0 %v4711
        %4751 = vmatpush1.msra.mxu0 %v4710
        %4752 = vmatprep.subr.mxu0 %v4706
        %4753 = vmatpush1.msra.mxu0 %v4705
        %4754 = vmatprep.subr.mxu0 %v4701
        %4755 = vmatpush1.msra.mxu0 %v4700
        %4756 = vmatprep.subr.mxu0 %v4696
        %4757 = vmatpush1.msra.mxu0 %v4695
        %4758 = vmatprep.subr.mxu0 %v4691
        %4759 = vmatpush1.msra.mxu0 %v4690
        %4760 = vmatprep.subr.mxu0 %v4686
        %4761 = vmatpush1.msra.mxu0 %v4685
        %4762 = vmatprep.subr.mxu0 %v4681
        %4763 = vmatpush1.msra.mxu0 %v4680
        %4764 = vmatprep.subr.mxu0 %v4676
        %4765 = vmatpush1.msra.mxu0 %v4675
        %4766 = vmatprep.subr.mxu0 %v4671
        %4767 = vmatpush1.msra.mxu0 %v4670
        %4768 = vmatprep.subr.mxu0 %v4666
        %4769 = vmatpush1.msra.mxu0 %v4665
        %4770 = vmatprep.subr.mxu0 %v4661
        %4771 = vmatpush1.msra.mxu0 %v4660
        %4772 = vmatprep.subr.mxu0 0.0
        %4773 = vmatpush2.msra.mxu0 0.0
        %4774 = vmatprep.subr.mxu0 0.0
        %4775 = vmatpush2.msra.mxu0 0.0
        %4776 = vmatprep.subr.mxu0 0.0
        %4777 = vmatpush2.msra.mxu0 0.0
        %4778 = vmatprep.subr.mxu0 0.0
        %4779 = vmatpush2.msra.mxu0 0.0
        %4780 = vmatprep.subr.mxu0 0.0
        %4781 = vmatpush2.msra.mxu0 0.0
        %4782 = vmatprep.subr.mxu0 0.0
        %4783 = vmatpush2.msra.mxu0 0.0
        %4784 = vmatprep.subr.mxu0 0.0
        %4785 = vmatpush2.msra.mxu0 0.0
        %4786 = vmatprep.subr.mxu0 0.0
        %4787 = vmatpush2.msra.mxu0 0.0
        %4788 = vmatprep.subr.mxu0 0.0
        %4789 = vmatpush2.msra.mxu0 0.0
        %4790 = vmatprep.subr.mxu0 0.0
        %4791 = vmatpush2.msra.mxu0 0.0
        %4792 = vmatprep.subr.mxu0 0.0
        %4793 = vmatpush2.msra.mxu0 0.0
        %4794 = vmatprep.subr.mxu0 0.0
        %4795 = vmatpush2.msra.mxu0 0.0
        %4796 = vmatprep.subr.mxu0 0.0
        %4797 = vmatpush2.msra.mxu0 0.0
        %4798 = vmatprep.subr.mxu0 0.0
        %4799 = vmatpush2.msra.mxu0 0.0
        %4800 = vmatprep.subr.mxu0 0.0
        %4801 = vmatpush2.msra.mxu0 0.0
        %4802 = vmatprep.subr.mxu0 0.0
        %4803 = vmatpush2.msra.mxu0 0.0
        %4804 = vmatprep.mubr.f32.mxu0 0.0
        %4805 = vmatmul.mubr.f32.gmra.mxu0 %v4659
        %v4806 = vpop.f32.mrf.mxu0
        %v4807 = vadd.f32 0.0, %v4806
        %v4808 = vpop.f32.mrf.mxu0
        %v4809 = vadd.f32 0.0, %v4808
        %4810 = vdwg.mxu0
        %4811 = vmatprep.subr.mxu0 %v4738
        %4812 = vmatpush1.msra.mxu0 %v4737
        %4813 = vmatprep.subr.mxu0 %v4733
        %4814 = vmatpush1.msra.mxu0 %v4732
        %4815 = vmatprep.subr.mxu0 %v4728
        %4816 = vmatpush1.msra.mxu0 %v4727
        %4817 = vmatprep.subr.mxu0 %v4723
        %4818 = vmatpush1.msra.mxu0 %v4722
        %4819 = vmatprep.subr.mxu0 %v4718
        %4820 = vmatpush1.msra.mxu0 %v4717
        %4821 = vmatprep.subr.mxu0 %v4713
        %4822 = vmatpush1.msra.mxu0 %v4712
        %4823 = vmatprep.subr.mxu0 %v4708
        %4824 = vmatpush1.msra.mxu0 %v4707
        %4825 = vmatprep.subr.mxu0 %v4703
        %4826 = vmatpush1.msra.mxu0 %v4702
        %4827 = vmatprep.subr.mxu0 %v4698
        %4828 = vmatpush1.msra.mxu0 %v4697
        %4829 = vmatprep.subr.mxu0 %v4693
        %4830 = vmatpush1.msra.mxu0 %v4692
        %4831 = vmatprep.subr.mxu0 %v4688
        %4832 = vmatpush1.msra.mxu0 %v4687
        %4833 = vmatprep.subr.mxu0 %v4683
        %4834 = vmatpush1.msra.mxu0 %v4682
        %4835 = vmatprep.subr.mxu0 %v4678
        %4836 = vmatpush1.msra.mxu0 %v4677
        %4837 = vmatprep.subr.mxu0 %v4673
        %4838 = vmatpush1.msra.mxu0 %v4672
        %4839 = vmatprep.subr.mxu0 %v4668
        %4840 = vmatpush1.msra.mxu0 %v4667
        %4841 = vmatprep.subr.mxu0 %v4663
        %4842 = vmatpush1.msra.mxu0 %v4662
        %4843 = vmatprep.subr.mxu0 0.0
        %4844 = vmatpush2.msra.mxu0 0.0
        %4845 = vmatprep.subr.mxu0 0.0
        %4846 = vmatpush2.msra.mxu0 0.0
        %4847 = vmatprep.subr.mxu0 0.0
        %4848 = vmatpush2.msra.mxu0 0.0
        %4849 = vmatprep.subr.mxu0 0.0
        %4850 = vmatpush2.msra.mxu0 0.0
        %4851 = vmatprep.subr.mxu0 0.0
        %4852 = vmatpush2.msra.mxu0 0.0
        %4853 = vmatprep.subr.mxu0 0.0
        %4854 = vmatpush2.msra.mxu0 0.0
        %4855 = vmatprep.subr.mxu0 0.0
        %4856 = vmatpush2.msra.mxu0 0.0
        %4857 = vmatprep.subr.mxu0 0.0
        %4858 = vmatpush2.msra.mxu0 0.0
        %4859 = vmatprep.subr.mxu0 0.0
        %4860 = vmatpush2.msra.mxu0 0.0
        %4861 = vmatprep.subr.mxu0 0.0
        %4862 = vmatpush2.msra.mxu0 0.0
        %4863 = vmatprep.subr.mxu0 0.0
        %4864 = vmatpush2.msra.mxu0 0.0
        %4865 = vmatprep.subr.mxu0 0.0
        %4866 = vmatpush2.msra.mxu0 0.0
        %4867 = vmatprep.subr.mxu0 0.0
        %4868 = vmatpush2.msra.mxu0 0.0
        %4869 = vmatprep.subr.mxu0 0.0
        %4870 = vmatpush2.msra.mxu0 0.0
        %4871 = vmatprep.subr.mxu0 0.0
        %4872 = vmatpush2.msra.mxu0 0.0
        %4873 = vmatprep.subr.mxu0 0.0
        %4874 = vmatpush2.msra.mxu0 0.0
        %4875 = vmatprep.mubr.f32.mxu0 0.0
        %4876 = vmatmul.mubr.f32.gmra.mxu0 %v4659
        %v4877 = vpop.f32.mrf.mxu0
        %v4878 = vadd.f32 0.0, %v4877
        %v4879 = vpop.f32.mrf.mxu0
        %v4880 = vadd.f32 0.0, %v4879
        %4881 = vdwg.mxu0
        %4882 = vmatprep.subr.mxu0 0.0
        %4883 = vmatpush1.msra.mxu0 %v4739
        %4884 = vmatprep.subr.mxu0 0.0
        %4885 = vmatpush1.msra.mxu0 %v4734
        %4886 = vmatprep.subr.mxu0 0.0
        %4887 = vmatpush1.msra.mxu0 %v4729
        %4888 = vmatprep.subr.mxu0 0.0
        %4889 = vmatpush1.msra.mxu0 %v4724
        %4890 = vmatprep.subr.mxu0 0.0
        %4891 = vmatpush1.msra.mxu0 %v4719
        %4892 = vmatprep.subr.mxu0 0.0
        %4893 = vmatpush1.msra.mxu0 %v4714
        %4894 = vmatprep.subr.mxu0 0.0
        %4895 = vmatpush1.msra.mxu0 %v4709
        %4896 = vmatprep.subr.mxu0 0.0
        %4897 = vmatpush1.msra.mxu0 %v4704
        %4898 = vmatprep.subr.mxu0 0.0
        %4899 = vmatpush1.msra.mxu0 %v4699
        %4900 = vmatprep.subr.mxu0 0.0
        %4901 = vmatpush1.msra.mxu0 %v4694
        %4902 = vmatprep.subr.mxu0 0.0
        %4903 = vmatpush1.msra.mxu0 %v4689
        %4904 = vmatprep.subr.mxu0 0.0
        %4905 = vmatpush1.msra.mxu0 %v4684
        %4906 = vmatprep.subr.mxu0 0.0
        %4907 = vmatpush1.msra.mxu0 %v4679
        %4908 = vmatprep.subr.mxu0 0.0
        %4909 = vmatpush1.msra.mxu0 %v4674
        %4910 = vmatprep.subr.mxu0 0.0
        %4911 = vmatpush1.msra.mxu0 %v4669
        %4912 = vmatprep.subr.mxu0 0.0
        %4913 = vmatpush1.msra.mxu0 %v4664
        %4914 = vmatprep.subr.mxu0 0.0
        %4915 = vmatpush2.msra.mxu0 0.0
        %4916 = vmatprep.subr.mxu0 0.0
        %4917 = vmatpush2.msra.mxu0 0.0
        %4918 = vmatprep.subr.mxu0 0.0
        %4919 = vmatpush2.msra.mxu0 0.0
        %4920 = vmatprep.subr.mxu0 0.0
        %4921 = vmatpush2.msra.mxu0 0.0
        %4922 = vmatprep.subr.mxu0 0.0
        %4923 = vmatpush2.msra.mxu0 0.0
        %4924 = vmatprep.subr.mxu0 0.0
        %4925 = vmatpush2.msra.mxu0 0.0
        %4926 = vmatprep.subr.mxu0 0.0
        %4927 = vmatpush2.msra.mxu0 0.0
        %4928 = vmatprep.subr.mxu0 0.0
        %4929 = vmatpush2.msra.mxu0 0.0
        %4930 = vmatprep.subr.mxu0 0.0
        %4931 = vmatpush2.msra.mxu0 0.0
        %4932 = vmatprep.subr.mxu0 0.0
        %4933 = vmatpush2.msra.mxu0 0.0
        %4934 = vmatprep.subr.mxu0 0.0
        %4935 = vmatpush2.msra.mxu0 0.0
        %4936 = vmatprep.subr.mxu0 0.0
        %4937 = vmatpush2.msra.mxu0 0.0
        %4938 = vmatprep.subr.mxu0 0.0
        %4939 = vmatpush2.msra.mxu0 0.0
        %4940 = vmatprep.subr.mxu0 0.0
        %4941 = vmatpush2.msra.mxu0 0.0
        %4942 = vmatprep.subr.mxu0 0.0
        %4943 = vmatpush2.msra.mxu0 0.0
        %4944 = vmatprep.subr.mxu0 0.0
        %4945 = vmatpush2.msra.mxu0 0.0
        %4946 = vmatprep.mubr.f32.mxu0 0.0
        %4947 = vmatmul.mubr.f32.gmra.mxu0 %v4659
        %v4948 = vpop.f32.mrf.mxu0
        %v4949 = vadd.f32 0.0, %v4948
        %v4950 = vpop.f32.mrf.mxu0
        %4951 = vdwg.mxu0
        %4952 = vst.msk [vmem:[#allocation7] sm:$0xf] %vm2510, %v4807
        %4954 = vrot.lane.b32.xlu0 %v4807, 64
        %v4955 = vpop.permute.xlu0 %4954
        %4957 = vst.msk [vmem:[#allocation7 + $0x4] sm:$0xf] %vm2510, %v4955
        %4958 = vst.msk [vmem:[#allocation7 + $0x8] sm:$0xf] %vm2510, %v4809
        %4960 = vrot.lane.b32.xlu0 %v4809, 64
        %v4961 = vpop.permute.xlu0 %4960
        %4963 = vst.msk [vmem:[#allocation7 + $0xc] sm:$0xf] %vm2510, %v4961
        %4964 = vst.msk [vmem:[#allocation7 + $0x10] sm:$0xf] %vm2510, %v4878
        %4966 = vrot.lane.b32.xlu0 %v4878, 64
        %v4967 = vpop.permute.xlu0 %4966
        %4969 = vst.msk [vmem:[#allocation7 + $0x14] sm:$0xf] %vm2510, %v4967
        %4970 = vst.msk [vmem:[#allocation7 + $0x18] sm:$0xf] %vm2510, %v4880
        %4972 = vrot.lane.b32.xlu0 %v4880, 64
        %v4973 = vpop.permute.xlu0 %4972
        %4975 = vst.msk [vmem:[#allocation7 + $0x1c] sm:$0xf] %vm2510, %v4973
        %4976 = vst.msk [vmem:[#allocation7 + $0x20] sm:$0xf] %vm2510, %v4949
        %v4977 = vld [vmem:[%s17] sm:$0xff]
        %v4978 = vld [vmem:[%s17 + $0x8] sm:$0xff]
        %v4979 = vld [vmem:[#allocation7] sm:$0xff]
        %v4980 = vld [vmem:[#allocation7 + $0x8] sm:$0xff]
        %v4981 = vld [vmem:[#allocation7 + $0x10] sm:$0xff]
        %v4982 = vld [vmem:[#allocation7 + $0x18] sm:$0xff]
        %v4983 = vld [vmem:[#allocation7 + $0x20] sm:$0xf]
        %v4984 = vld [vmem:[%s18] sm:$0x1]
        %v4986 = vlaneseq
        %v4987 = vshrl.u32 %v4986, 7
        %v4988 = vsub.s32 0, %v4987
        %v4989 = vrot.slane %v4984, %v4988
        %v4992 = vsel %vm3835, %v4977, 0
        %v4995 = vsel %vm3835, %v4978, 0
        %v4998 = vsel %vm3839, %v4983, 0
        %5000 = vmatprep.subr.mxu0 0.0
        %5001 = vmatpush1.msra.mxu0 0.0
        %5002 = vmatprep.subr.mxu0 0.0
        %5003 = vmatpush1.msra.mxu0 0.0
        %5004 = vmatprep.subr.mxu0 0.0
        %5005 = vmatpush1.msra.mxu0 0.0
        %5006 = vmatprep.subr.mxu0 0.0
        %5007 = vmatpush1.msra.mxu0 0.0
        %5008 = vmatprep.subr.mxu0 0.0
        %5009 = vmatpush1.msra.mxu0 0.0
        %5010 = vmatprep.subr.mxu0 0.0
        %5011 = vmatpush1.msra.mxu0 0.0
        %5012 = vmatprep.subr.mxu0 0.0
        %5013 = vmatpush1.msra.mxu0 0.0
        %5014 = vmatprep.subr.mxu0 0.0
        %5015 = vmatpush1.msra.mxu0 0.0
        %5016 = vmatprep.subr.mxu0 0.0
        %5017 = vmatpush1.msra.mxu0 0.0
        %5018 = vmatprep.subr.mxu0 0.0
        %5019 = vmatpush1.msra.mxu0 0.0
        %5020 = vmatprep.subr.mxu0 0.0
        %5021 = vmatpush1.msra.mxu0 0.0
        %5022 = vmatprep.subr.mxu0 0.0
        %5023 = vmatpush1.msra.mxu0 %v4998
        %5024 = vmatprep.subr.mxu0 0.0
        %5025 = vmatpush1.msra.mxu0 %v4982
        %5026 = vmatprep.subr.mxu0 0.0
        %5027 = vmatpush1.msra.mxu0 %v4981
        %5028 = vmatprep.subr.mxu0 0.0
        %5029 = vmatpush1.msra.mxu0 %v4980
        %5030 = vmatprep.subr.mxu0 0.0
        %5031 = vmatpush1.msra.mxu0 %v4979
        %5032 = vmatprep.subr.mxu0 0.0
        %5033 = vmatpush2.msra.mxu0 0.0
        %5034 = vmatprep.subr.mxu0 0.0
        %5035 = vmatpush2.msra.mxu0 0.0
        %5036 = vmatprep.subr.mxu0 0.0
        %5037 = vmatpush2.msra.mxu0 0.0
        %5038 = vmatprep.subr.mxu0 0.0
        %5039 = vmatpush2.msra.mxu0 0.0
        %5040 = vmatprep.subr.mxu0 0.0
        %5041 = vmatpush2.msra.mxu0 0.0
        %5042 = vmatprep.subr.mxu0 0.0
        %5043 = vmatpush2.msra.mxu0 0.0
        %5044 = vmatprep.subr.mxu0 0.0
        %5045 = vmatpush2.msra.mxu0 0.0
        %5046 = vmatprep.subr.mxu0 0.0
        %5047 = vmatpush2.msra.mxu0 0.0
        %5048 = vmatprep.subr.mxu0 0.0
        %5049 = vmatpush2.msra.mxu0 0.0
        %5050 = vmatprep.subr.mxu0 0.0
        %5051 = vmatpush2.msra.mxu0 0.0
        %5052 = vmatprep.subr.mxu0 0.0
        %5053 = vmatpush2.msra.mxu0 0.0
        %5054 = vmatprep.subr.mxu0 0.0
        %5055 = vmatpush2.msra.mxu0 0.0
        %5056 = vmatprep.subr.mxu0 0.0
        %5057 = vmatpush2.msra.mxu0 0.0
        %5058 = vmatprep.subr.mxu0 0.0
        %5059 = vmatpush2.msra.mxu0 0.0
        %5060 = vmatprep.subr.mxu0 0.0
        %5061 = vmatpush2.msra.mxu0 0.0
        %5062 = vmatprep.subr.mxu0 0.0
        %5063 = vmatpush2.msra.mxu0 0.0
        %5064 = vmatprep.mubr.f32.mxu0 0.0
        %5065 = vmatmul.mubr.f32.gmra.mxu0 %v4992
        %v5066 = vpop.f32.mrf.mxu0
        %v5067 = vadd.f32 %v4989, %v5066
        %v5068 = vpop.f32.mrf.mxu0
        %5069 = vmatprep.mubr.f32.mxu0 0.0
        %5070 = vmatmul.mubr.f32.gmra.mxu0 %v4995
        %v5071 = vpop.f32.mrf.mxu0
        %v5072 = vadd.f32 %v4989, %v5071
        %v5073 = vpop.f32.mrf.mxu0
        %5074 = vdwg.mxu0
        %v5075 = vmax.f32 %v5067, 0.0
        %v5076 = vmax.f32 %v5072, 0.0
        %v5077 = vld [vmem:[%s19] sm:$0xff]
        %v5078 = vld [vmem:[%s19 + $0x8] sm:$0xff]
        %v5079 = vld [vmem:[%s19 + $0x10] sm:$0xff]
        %v5080 = vld [vmem:[%s19 + $0x18] sm:$0xff]
        %v5081 = vld [vmem:[%s19 + $0x20] sm:$0xff]
        %v5082 = vld [vmem:[%s19 + $0x28] sm:$0xff]
        %v5083 = vld [vmem:[%s19 + $0x30] sm:$0xff]
        %v5084 = vld [vmem:[%s19 + $0x38] sm:$0xff]
        %v5085 = vld [vmem:[%s19 + $0x40] sm:$0xff]
        %v5086 = vld [vmem:[%s19 + $0x48] sm:$0xff]
        %v5087 = vld [vmem:[%s19 + $0x50] sm:$0xff]
        %v5088 = vld [vmem:[%s19 + $0x58] sm:$0xff]
        %v5089 = vld [vmem:[%s19 + $0x60] sm:$0xff]
        %v5090 = vld [vmem:[%s19 + $0x68] sm:$0xff]
        %v5091 = vld [vmem:[%s19 + $0x70] sm:$0xff]
        %v5092 = vld [vmem:[%s19 + $0x78] sm:$0xff]
        %v5093 = vld [vmem:[%s19 + $0x80] sm:$0xff]
        %v5094 = vld [vmem:[%s19 + $0x88] sm:$0xff]
        %v5095 = vld [vmem:[%s19 + $0x90] sm:$0xff]
        %v5096 = vld [vmem:[%s19 + $0x98] sm:$0xff]
        %v5097 = vld [vmem:[%s19 + $0xa0] sm:$0xff]
        %v5098 = vld [vmem:[%s19 + $0xa8] sm:$0xff]
        %v5099 = vld [vmem:[%s19 + $0xb0] sm:$0xff]
        %v5100 = vld [vmem:[%s19 + $0xb8] sm:$0xff]
        %v5102 = vsel %vm1912, %v5075, 0
        %v5105 = vsel %vm1912, %v5076, 0
        %5107 = vmatprep.subr.mxu0 0.0
        %5108 = vmatpush1.msra.mxu0 0.0
        %5109 = vmatprep.subr.mxu0 0.0
        %5110 = vmatpush1.msra.mxu0 0.0
        %5111 = vmatprep.subr.mxu0 0.0
        %5112 = vmatpush1.msra.mxu0 0.0
        %5113 = vmatprep.subr.mxu0 0.0
        %5114 = vmatpush1.msra.mxu0 0.0
        %5115 = vmatprep.subr.mxu0 0.0
        %5116 = vmatpush1.msra.mxu0 0.0
        %5117 = vmatprep.subr.mxu0 0.0
        %5118 = vmatpush1.msra.mxu0 0.0
        %5119 = vmatprep.subr.mxu0 0.0
        %5120 = vmatpush1.msra.mxu0 0.0
        %5121 = vmatprep.subr.mxu0 0.0
        %5122 = vmatpush1.msra.mxu0 0.0
        %5123 = vmatprep.subr.mxu0 %v5099
        %5124 = vmatpush1.msra.mxu0 %v5098
        %5125 = vmatprep.subr.mxu0 %v5096
        %5126 = vmatpush1.msra.mxu0 %v5095
        %5127 = vmatprep.subr.mxu0 %v5093
        %5128 = vmatpush1.msra.mxu0 %v5092
        %5129 = vmatprep.subr.mxu0 %v5090
        %5130 = vmatpush1.msra.mxu0 %v5089
        %5131 = vmatprep.subr.mxu0 %v5087
        %5132 = vmatpush1.msra.mxu0 %v5086
        %5133 = vmatprep.subr.mxu0 %v5084
        %5134 = vmatpush1.msra.mxu0 %v5083
        %5135 = vmatprep.subr.mxu0 %v5081
        %5136 = vmatpush1.msra.mxu0 %v5080
        %5137 = vmatprep.subr.mxu0 %v5078
        %5138 = vmatpush1.msra.mxu0 %v5077
        %5139 = vmatprep.subr.mxu0 0.0
        %5140 = vmatpush2.msra.mxu0 0.0
        %5141 = vmatprep.subr.mxu0 0.0
        %5142 = vmatpush2.msra.mxu0 0.0
        %5143 = vmatprep.subr.mxu0 0.0
        %5144 = vmatpush2.msra.mxu0 0.0
        %5145 = vmatprep.subr.mxu0 0.0
        %5146 = vmatpush2.msra.mxu0 0.0
        %5147 = vmatprep.subr.mxu0 0.0
        %5148 = vmatpush2.msra.mxu0 0.0
        %5149 = vmatprep.subr.mxu0 0.0
        %5150 = vmatpush2.msra.mxu0 0.0
        %5151 = vmatprep.subr.mxu0 0.0
        %5152 = vmatpush2.msra.mxu0 0.0
        %5153 = vmatprep.subr.mxu0 0.0
        %5154 = vmatpush2.msra.mxu0 0.0
        %5155 = vmatprep.subr.mxu0 0.0
        %5156 = vmatpush2.msra.mxu0 0.0
        %5157 = vmatprep.subr.mxu0 0.0
        %5158 = vmatpush2.msra.mxu0 0.0
        %5159 = vmatprep.subr.mxu0 0.0
        %5160 = vmatpush2.msra.mxu0 0.0
        %5161 = vmatprep.subr.mxu0 0.0
        %5162 = vmatpush2.msra.mxu0 0.0
        %5163 = vmatprep.subr.mxu0 0.0
        %5164 = vmatpush2.msra.mxu0 0.0
        %5165 = vmatprep.subr.mxu0 0.0
        %5166 = vmatpush2.msra.mxu0 0.0
        %5167 = vmatprep.subr.mxu0 0.0
        %5168 = vmatpush2.msra.mxu0 0.0
        %5169 = vmatprep.subr.mxu0 0.0
        %5170 = vmatpush2.msra.mxu0 0.0
        %5171 = vmatprep.mubr.f32.mxu0 0.0
        %5172 = vmatmul.mubr.f32.gmra.mxu0 %v5102
        %v5173 = vpop.f32.mrf.mxu0
        %v5174 = vadd.f32 0.0, %v5173
        %v5175 = vpop.f32.mrf.mxu0
        %v5176 = vadd.f32 0.0, %v5175
        %5177 = vmatprep.mubr.f32.mxu0 0.0
        %5178 = vmatmul.mubr.f32.gmra.mxu0 %v5105
        %v5179 = vpop.f32.mrf.mxu0
        %v5180 = vadd.f32 0.0, %v5179
        %v5181 = vpop.f32.mrf.mxu0
        %v5182 = vadd.f32 0.0, %v5181
        %5183 = vdwg.mxu0
        %5184 = vmatprep.subr.mxu0 0.0
        %5185 = vmatpush1.msra.mxu0 0.0
        %5186 = vmatprep.subr.mxu0 0.0
        %5187 = vmatpush1.msra.mxu0 0.0
        %5188 = vmatprep.subr.mxu0 0.0
        %5189 = vmatpush1.msra.mxu0 0.0
        %5190 = vmatprep.subr.mxu0 0.0
        %5191 = vmatpush1.msra.mxu0 0.0
        %5192 = vmatprep.subr.mxu0 0.0
        %5193 = vmatpush1.msra.mxu0 0.0
        %5194 = vmatprep.subr.mxu0 0.0
        %5195 = vmatpush1.msra.mxu0 0.0
        %5196 = vmatprep.subr.mxu0 0.0
        %5197 = vmatpush1.msra.mxu0 0.0
        %5198 = vmatprep.subr.mxu0 0.0
        %5199 = vmatpush1.msra.mxu0 0.0
        %5200 = vmatprep.subr.mxu0 0.0
        %5201 = vmatpush1.msra.mxu0 %v5100
        %5202 = vmatprep.subr.mxu0 0.0
        %5203 = vmatpush1.msra.mxu0 %v5097
        %5204 = vmatprep.subr.mxu0 0.0
        %5205 = vmatpush1.msra.mxu0 %v5094
        %5206 = vmatprep.subr.mxu0 0.0
        %5207 = vmatpush1.msra.mxu0 %v5091
        %5208 = vmatprep.subr.mxu0 0.0
        %5209 = vmatpush1.msra.mxu0 %v5088
        %5210 = vmatprep.subr.mxu0 0.0
        %5211 = vmatpush1.msra.mxu0 %v5085
        %5212 = vmatprep.subr.mxu0 0.0
        %5213 = vmatpush1.msra.mxu0 %v5082
        %5214 = vmatprep.subr.mxu0 0.0
        %5215 = vmatpush1.msra.mxu0 %v5079
        %5216 = vmatprep.subr.mxu0 0.0
        %5217 = vmatpush2.msra.mxu0 0.0
        %5218 = vmatprep.subr.mxu0 0.0
        %5219 = vmatpush2.msra.mxu0 0.0
        %5220 = vmatprep.subr.mxu0 0.0
        %5221 = vmatpush2.msra.mxu0 0.0
        %5222 = vmatprep.subr.mxu0 0.0
        %5223 = vmatpush2.msra.mxu0 0.0
        %5224 = vmatprep.subr.mxu0 0.0
        %5225 = vmatpush2.msra.mxu0 0.0
        %5226 = vmatprep.subr.mxu0 0.0
        %5227 = vmatpush2.msra.mxu0 0.0
        %5228 = vmatprep.subr.mxu0 0.0
        %5229 = vmatpush2.msra.mxu0 0.0
        %5230 = vmatprep.subr.mxu0 0.0
        %5231 = vmatpush2.msra.mxu0 0.0
        %5232 = vmatprep.subr.mxu0 0.0
        %5233 = vmatpush2.msra.mxu0 0.0
        %5234 = vmatprep.subr.mxu0 0.0
        %5235 = vmatpush2.msra.mxu0 0.0
        %5236 = vmatprep.subr.mxu0 0.0
        %5237 = vmatpush2.msra.mxu0 0.0
        %5238 = vmatprep.subr.mxu0 0.0
        %5239 = vmatpush2.msra.mxu0 0.0
        %5240 = vmatprep.subr.mxu0 0.0
        %5241 = vmatpush2.msra.mxu0 0.0
        %5242 = vmatprep.subr.mxu0 0.0
        %5243 = vmatpush2.msra.mxu0 0.0
        %5244 = vmatprep.subr.mxu0 0.0
        %5245 = vmatpush2.msra.mxu0 0.0
        %5246 = vmatprep.subr.mxu0 0.0
        %5247 = vmatpush2.msra.mxu0 0.0
        %5248 = vmatprep.mubr.f32.mxu0 0.0
        %5249 = vmatmul.mubr.f32.gmra.mxu0 %v5102
        %v5250 = vpop.f32.mrf.mxu0
        %v5251 = vadd.f32 0.0, %v5250
        %v5252 = vpop.f32.mrf.mxu0
        %5253 = vmatprep.mubr.f32.mxu0 0.0
        %5254 = vmatmul.mubr.f32.gmra.mxu0 %v5105
        %v5255 = vpop.f32.mrf.mxu0
        %v5256 = vadd.f32 0.0, %v5255
        %v5257 = vpop.f32.mrf.mxu0
        %5258 = vdwg.mxu0
        %5259 = vst.msk [vmem:[#allocation8] sm:$0xff] %vm2122, %v5174
        %5260 = vst.msk [vmem:[#allocation8 + $0x8] sm:$0xff] %vm2122, %v5180
        %5263 = vrot.lane.b32.xlu0 %v5174, 96
        %v5264 = vpop.permute.xlu0 %5263
        %5265 = vrot.lane.b32.xlu0 %v5180, 96
        %v5266 = vpop.permute.xlu0 %5265
        %5269 = vst.msk [vmem:[#allocation8 + $0x10] sm:$0xff] %vm2122, %v5264
        %5270 = vst.msk [vmem:[#allocation8 + $0x18] sm:$0xff] %vm2122, %v5266
        %5271 = vrot.lane.b32.xlu0 %v5174, 64
        %v5272 = vpop.permute.xlu0 %5271
        %5273 = vrot.lane.b32.xlu0 %v5180, 64
        %v5274 = vpop.permute.xlu0 %5273
        %5277 = vst.msk [vmem:[#allocation8 + $0x20] sm:$0xff] %vm2122, %v5272
        %5278 = vst.msk [vmem:[#allocation8 + $0x28] sm:$0xff] %vm2122, %v5274
        %5279 = vrot.lane.b32.xlu0 %v5174, 32
        %v5280 = vpop.permute.xlu0 %5279
        %5281 = vrot.lane.b32.xlu0 %v5180, 32
        %v5282 = vpop.permute.xlu0 %5281
        %5285 = vst.msk [vmem:[#allocation8 + $0x30] sm:$0xff] %vm2122, %v5280
        %5286 = vst.msk [vmem:[#allocation8 + $0x38] sm:$0xff] %vm2122, %v5282
        %5287 = vst.msk [vmem:[#allocation8 + $0x40] sm:$0xff] %vm2122, %v5176
        %5288 = vst.msk [vmem:[#allocation8 + $0x48] sm:$0xff] %vm2122, %v5182
        %5291 = vrot.lane.b32.xlu0 %v5176, 96
        %v5292 = vpop.permute.xlu0 %5291
        %5293 = vrot.lane.b32.xlu0 %v5182, 96
        %v5294 = vpop.permute.xlu0 %5293
        %5297 = vst.msk [vmem:[#allocation8 + $0x50] sm:$0xff] %vm2122, %v5292
        %5298 = vst.msk [vmem:[#allocation8 + $0x58] sm:$0xff] %vm2122, %v5294
        %5299 = vrot.lane.b32.xlu0 %v5176, 64
        %v5300 = vpop.permute.xlu0 %5299
        %5301 = vrot.lane.b32.xlu0 %v5182, 64
        %v5302 = vpop.permute.xlu0 %5301
        %5305 = vst.msk [vmem:[#allocation8 + $0x60] sm:$0xff] %vm2122, %v5300
        %5306 = vst.msk [vmem:[#allocation8 + $0x68] sm:$0xff] %vm2122, %v5302
        %5307 = vrot.lane.b32.xlu0 %v5176, 32
        %v5308 = vpop.permute.xlu0 %5307
        %5309 = vrot.lane.b32.xlu0 %v5182, 32
        %v5310 = vpop.permute.xlu0 %5309
        %5313 = vst.msk [vmem:[#allocation8 + $0x70] sm:$0xff] %vm2122, %v5308
        %5314 = vst.msk [vmem:[#allocation8 + $0x78] sm:$0xff] %vm2122, %v5310
        %5315 = vst.msk [vmem:[#allocation8 + $0x80] sm:$0xff] %vm2122, %v5251
        %5316 = vst.msk [vmem:[#allocation8 + $0x88] sm:$0xff] %vm2122, %v5256
        %v5317 = vld [vmem:[%s20] sm:$0xff]
        %v5318 = vld [vmem:[%s20 + $0x8] sm:$0xff]
        %v5319 = vld [vmem:[%s20 + $0x10] sm:$0xff]
        %v5320 = vld [vmem:[%s20 + $0x18] sm:$0xff]
        %v5321 = vld [vmem:[%s20 + $0x20] sm:$0xff]
        %v5322 = vld [vmem:[%s20 + $0x28] sm:$0xff]
        %v5323 = vld [vmem:[%s20 + $0x30] sm:$0xff]
        %v5324 = vld [vmem:[%s20 + $0x38] sm:$0xff]
        %v5325 = vld [vmem:[%s20 + $0x40] sm:$0xff]
        %v5326 = vld [vmem:[%s20 + $0x48] sm:$0xff]
        %v5327 = vld [vmem:[%s20 + $0x50] sm:$0xff]
        %v5328 = vld [vmem:[%s20 + $0x58] sm:$0xff]
        %v5329 = vld [vmem:[%s20 + $0x60] sm:$0xff]
        %v5330 = vld [vmem:[%s20 + $0x68] sm:$0xff]
        %v5331 = vld [vmem:[%s20 + $0x70] sm:$0xff]
        %v5332 = vld [vmem:[%s20 + $0x78] sm:$0xff]
        %v5333 = vld [vmem:[#allocation8] sm:$0xff]
        %v5334 = vld [vmem:[#allocation8 + $0x8] sm:$0xff]
        %v5335 = vld [vmem:[#allocation8 + $0x10] sm:$0xff]
        %v5336 = vld [vmem:[#allocation8 + $0x18] sm:$0xff]
        %v5337 = vld [vmem:[#allocation8 + $0x20] sm:$0xff]
        %v5338 = vld [vmem:[#allocation8 + $0x28] sm:$0xff]
        %v5339 = vld [vmem:[#allocation8 + $0x30] sm:$0xff]
        %v5340 = vld [vmem:[#allocation8 + $0x38] sm:$0xff]
        %v5341 = vld [vmem:[#allocation8 + $0x40] sm:$0xff]
        %v5342 = vld [vmem:[#allocation8 + $0x48] sm:$0xff]
        %v5343 = vld [vmem:[#allocation8 + $0x50] sm:$0xff]
        %v5344 = vld [vmem:[#allocation8 + $0x58] sm:$0xff]
        %v5345 = vld [vmem:[#allocation8 + $0x60] sm:$0xff]
        %v5346 = vld [vmem:[#allocation8 + $0x68] sm:$0xff]
        %v5347 = vld [vmem:[#allocation8 + $0x70] sm:$0xff]
        %v5348 = vld [vmem:[#allocation8 + $0x78] sm:$0xff]
        %v5349 = vld [vmem:[#allocation8 + $0x80] sm:$0xff]
        %v5350 = vld [vmem:[#allocation8 + $0x88] sm:$0xff]
        %v5351 = vld [vmem:[%s21] sm:$0x1]
        %v5353 = vlaneseq
        %v5354 = vshrl.u32 %v5353, 7
        %v5355 = vsub.s32 0, %v5354
        %v5356 = vrot.slane %v5351, %v5355
        %v5359 = vsel %vm2404, %v5318, 0
        %v5362 = vsel %vm2404, %v5320, 0
        %v5365 = vsel %vm2404, %v5322, 0
        %v5368 = vsel %vm2404, %v5324, 0
        %v5371 = vsel %vm2404, %v5326, 0
        %v5374 = vsel %vm2404, %v5328, 0
        %v5377 = vsel %vm2404, %v5330, 0
        %v5380 = vsel %vm2404, %v5332, 0
        %5382 = vmatprep.subr.mxu0 0.0
        %5383 = vmatpush1.msra.mxu0 %v5348
        %5384 = vmatprep.subr.mxu0 0.0
        %5385 = vmatpush1.msra.mxu0 %v5347
        %5386 = vmatprep.subr.mxu0 0.0
        %5387 = vmatpush1.msra.mxu0 %v5346
        %5388 = vmatprep.subr.mxu0 0.0
        %5389 = vmatpush1.msra.mxu0 %v5345
        %5390 = vmatprep.subr.mxu0 0.0
        %5391 = vmatpush1.msra.mxu0 %v5344
        %5392 = vmatprep.subr.mxu0 0.0
        %5393 = vmatpush1.msra.mxu0 %v5343
        %5394 = vmatprep.subr.mxu0 0.0
        %5395 = vmatpush1.msra.mxu0 %v5342
        %5396 = vmatprep.subr.mxu0 0.0
        %5397 = vmatpush1.msra.mxu0 %v5341
        %5398 = vmatprep.subr.mxu0 0.0
        %5399 = vmatpush1.msra.mxu0 %v5340
        %5400 = vmatprep.subr.mxu0 0.0
        %5401 = vmatpush1.msra.mxu0 %v5339
        %5402 = vmatprep.subr.mxu0 0.0
        %5403 = vmatpush1.msra.mxu0 %v5338
        %5404 = vmatprep.subr.mxu0 0.0
        %5405 = vmatpush1.msra.mxu0 %v5337
        %5406 = vmatprep.subr.mxu0 0.0
        %5407 = vmatpush1.msra.mxu0 %v5336
        %5408 = vmatprep.subr.mxu0 0.0
        %5409 = vmatpush1.msra.mxu0 %v5335
        %5410 = vmatprep.subr.mxu0 0.0
        %5411 = vmatpush1.msra.mxu0 %v5334
        %5412 = vmatprep.subr.mxu0 0.0
        %5413 = vmatpush1.msra.mxu0 %v5333
        %5414 = vmatprep.subr.mxu0 0.0
        %5415 = vmatpush2.msra.mxu0 0.0
        %5416 = vmatprep.subr.mxu0 0.0
        %5417 = vmatpush2.msra.mxu0 0.0
        %5418 = vmatprep.subr.mxu0 0.0
        %5419 = vmatpush2.msra.mxu0 0.0
        %5420 = vmatprep.subr.mxu0 0.0
        %5421 = vmatpush2.msra.mxu0 0.0
        %5422 = vmatprep.subr.mxu0 0.0
        %5423 = vmatpush2.msra.mxu0 0.0
        %5424 = vmatprep.subr.mxu0 0.0
        %5425 = vmatpush2.msra.mxu0 0.0
        %5426 = vmatprep.subr.mxu0 0.0
        %5427 = vmatpush2.msra.mxu0 0.0
        %5428 = vmatprep.subr.mxu0 0.0
        %5429 = vmatpush2.msra.mxu0 0.0
        %5430 = vmatprep.subr.mxu0 0.0
        %5431 = vmatpush2.msra.mxu0 0.0
        %5432 = vmatprep.subr.mxu0 0.0
        %5433 = vmatpush2.msra.mxu0 0.0
        %5434 = vmatprep.subr.mxu0 0.0
        %5435 = vmatpush2.msra.mxu0 0.0
        %5436 = vmatprep.subr.mxu0 0.0
        %5437 = vmatpush2.msra.mxu0 0.0
        %5438 = vmatprep.subr.mxu0 0.0
        %5439 = vmatpush2.msra.mxu0 0.0
        %5440 = vmatprep.subr.mxu0 0.0
        %5441 = vmatpush2.msra.mxu0 0.0
        %5442 = vmatprep.subr.mxu0 0.0
        %5443 = vmatpush2.msra.mxu0 %v5350
        %5444 = vmatprep.subr.mxu0 0.0
        %5445 = vmatpush2.msra.mxu0 %v5349
        %5446 = vmatprep.mubr.f32.mxu0 %v5359
        %5447 = vmatmul.mubr.f32.gmra.mxu0 %v5317
        %v5448 = vpop.f32.mrf.mxu0
        %v5449 = vadd.f32 %v5356, %v5448
        %v5450 = vpop.f32.mrf.mxu0
        %5451 = vmatprep.mubr.f32.mxu0 %v5362
        %5452 = vmatmul.mubr.f32.gmra.mxu0 %v5319
        %v5453 = vpop.f32.mrf.mxu0
        %v5454 = vadd.f32 %v5356, %v5453
        %v5455 = vpop.f32.mrf.mxu0
        %5456 = vmatprep.mubr.f32.mxu0 %v5365
        %5457 = vmatmul.mubr.f32.gmra.mxu0 %v5321
        %v5458 = vpop.f32.mrf.mxu0
        %v5459 = vadd.f32 %v5356, %v5458
        %v5460 = vpop.f32.mrf.mxu0
        %5461 = vmatprep.mubr.f32.mxu0 %v5368
        %5462 = vmatmul.mubr.f32.gmra.mxu0 %v5323
        %v5463 = vpop.f32.mrf.mxu0
        %v5464 = vadd.f32 %v5356, %v5463
        %v5465 = vpop.f32.mrf.mxu0
        %5466 = vmatprep.mubr.f32.mxu0 %v5371
        %5467 = vmatmul.mubr.f32.gmra.mxu0 %v5325
        %v5468 = vpop.f32.mrf.mxu0
        %v5469 = vadd.f32 %v5356, %v5468
        %v5470 = vpop.f32.mrf.mxu0
        %5471 = vmatprep.mubr.f32.mxu0 %v5374
        %5472 = vmatmul.mubr.f32.gmra.mxu0 %v5327
        %v5473 = vpop.f32.mrf.mxu0
        %v5474 = vadd.f32 %v5356, %v5473
        %v5475 = vpop.f32.mrf.mxu0
        %5476 = vmatprep.mubr.f32.mxu0 %v5377
        %5477 = vmatmul.mubr.f32.gmra.mxu0 %v5329
        %v5478 = vpop.f32.mrf.mxu0
        %v5479 = vadd.f32 %v5356, %v5478
        %v5480 = vpop.f32.mrf.mxu0
        %5481 = vmatprep.mubr.f32.mxu0 %v5380
        %5482 = vmatmul.mubr.f32.gmra.mxu0 %v5331
        %v5483 = vpop.f32.mrf.mxu0
        %v5484 = vadd.f32 %v5356, %v5483
        %v5485 = vpop.f32.mrf.mxu0
        %5486 = vdwg.mxu0
        %v5487 = vmax.f32 %v5449, 0.0
        %v5488 = vmax.f32 %v5454, 0.0
        %v5489 = vmax.f32 %v5459, 0.0
        %v5490 = vmax.f32 %v5464, 0.0
        %v5491 = vmax.f32 %v5469, 0.0
        %v5492 = vmax.f32 %v5474, 0.0
        %v5493 = vmax.f32 %v5479, 0.0
        %v5494 = vmax.f32 %v5484, 0.0
        %v5495 = vld [vmem:[%s22] sm:$0xff]
        %v5496 = vld [vmem:[%s22 + $0x8] sm:$0xff]
        %v5497 = vld [vmem:[%s22 + $0x10] sm:$0xff]
        %v5498 = vld [vmem:[%s22 + $0x18] sm:$0xff]
        %v5500 = vsel %vm2122, %v5487, 0
        %v5503 = vsel %vm2122, %v5488, 0
        %v5506 = vsel %vm2122, %v5489, 0
        %v5509 = vsel %vm2122, %v5490, 0
        %v5512 = vsel %vm2122, %v5491, 0
        %v5515 = vsel %vm2122, %v5492, 0
        %v5518 = vsel %vm2122, %v5493, 0
        %v5521 = vsel %vm2122, %v5494, 0
        %5523 = vmatprep.subr.mxu0 0.0
        %5524 = vmatpush1.msra.mxu0 0.0
        %5525 = vmatprep.subr.mxu0 0.0
        %5526 = vmatpush1.msra.mxu0 0.0
        %5527 = vmatprep.subr.mxu0 0.0
        %5528 = vmatpush1.msra.mxu0 0.0
        %5529 = vmatprep.subr.mxu0 0.0
        %5530 = vmatpush1.msra.mxu0 0.0
        %5531 = vmatprep.subr.mxu0 0.0
        %5532 = vmatpush1.msra.mxu0 0.0
        %5533 = vmatprep.subr.mxu0 0.0
        %5534 = vmatpush1.msra.mxu0 0.0
        %5535 = vmatprep.subr.mxu0 0.0
        %5536 = vmatpush1.msra.mxu0 0.0
        %5537 = vmatprep.subr.mxu0 0.0
        %5538 = vmatpush1.msra.mxu0 0.0
        %5539 = vmatprep.subr.mxu0 0.0
        %5540 = vmatpush1.msra.mxu0 0.0
        %5541 = vmatprep.subr.mxu0 0.0
        %5542 = vmatpush1.msra.mxu0 0.0
        %5543 = vmatprep.subr.mxu0 0.0
        %5544 = vmatpush1.msra.mxu0 0.0
        %5545 = vmatprep.subr.mxu0 0.0
        %5546 = vmatpush1.msra.mxu0 0.0
        %5547 = vmatprep.subr.mxu0 0.0
        %5548 = vmatpush1.msra.mxu0 %v5498
        %5549 = vmatprep.subr.mxu0 0.0
        %5550 = vmatpush1.msra.mxu0 %v5497
        %5551 = vmatprep.subr.mxu0 0.0
        %5552 = vmatpush1.msra.mxu0 %v5496
        %5553 = vmatprep.subr.mxu0 0.0
        %5554 = vmatpush1.msra.mxu0 %v5495
        %5555 = vmatprep.subr.mxu0 0.0
        %5556 = vmatpush2.msra.mxu0 0.0
        %5557 = vmatprep.subr.mxu0 0.0
        %5558 = vmatpush2.msra.mxu0 0.0
        %5559 = vmatprep.subr.mxu0 0.0
        %5560 = vmatpush2.msra.mxu0 0.0
        %5561 = vmatprep.subr.mxu0 0.0
        %5562 = vmatpush2.msra.mxu0 0.0
        %5563 = vmatprep.subr.mxu0 0.0
        %5564 = vmatpush2.msra.mxu0 0.0
        %5565 = vmatprep.subr.mxu0 0.0
        %5566 = vmatpush2.msra.mxu0 0.0
        %5567 = vmatprep.subr.mxu0 0.0
        %5568 = vmatpush2.msra.mxu0 0.0
        %5569 = vmatprep.subr.mxu0 0.0
        %5570 = vmatpush2.msra.mxu0 0.0
        %5571 = vmatprep.subr.mxu0 0.0
        %5572 = vmatpush2.msra.mxu0 0.0
        %5573 = vmatprep.subr.mxu0 0.0
        %5574 = vmatpush2.msra.mxu0 0.0
        %5575 = vmatprep.subr.mxu0 0.0
        %5576 = vmatpush2.msra.mxu0 0.0
        %5577 = vmatprep.subr.mxu0 0.0
        %5578 = vmatpush2.msra.mxu0 0.0
        %5579 = vmatprep.subr.mxu0 0.0
        %5580 = vmatpush2.msra.mxu0 0.0
        %5581 = vmatprep.subr.mxu0 0.0
        %5582 = vmatpush2.msra.mxu0 0.0
        %5583 = vmatprep.subr.mxu0 0.0
        %5584 = vmatpush2.msra.mxu0 0.0
        %5585 = vmatprep.subr.mxu0 0.0
        %5586 = vmatpush2.msra.mxu0 0.0
        %5587 = vmatprep.mubr.f32.mxu0 0.0
        %5588 = vmatmul.mubr.f32.gmra.mxu0 %v5500
        %v5589 = vpop.f32.mrf.mxu0
        %v5590 = vadd.f32 0.0, %v5589
        %v5591 = vpop.f32.mrf.mxu0
        %5592 = vmatprep.mubr.f32.mxu0 0.0
        %5593 = vmatmul.mubr.f32.gmra.mxu0 %v5503
        %v5594 = vpop.f32.mrf.mxu0
        %v5595 = vadd.f32 0.0, %v5594
        %v5596 = vpop.f32.mrf.mxu0
        %5597 = vmatprep.mubr.f32.mxu0 0.0
        %5598 = vmatmul.mubr.f32.gmra.mxu0 %v5506
        %v5599 = vpop.f32.mrf.mxu0
        %v5600 = vadd.f32 0.0, %v5599
        %v5601 = vpop.f32.mrf.mxu0
        %5602 = vmatprep.mubr.f32.mxu0 0.0
        %5603 = vmatmul.mubr.f32.gmra.mxu0 %v5509
        %v5604 = vpop.f32.mrf.mxu0
        %v5605 = vadd.f32 0.0, %v5604
        %v5606 = vpop.f32.mrf.mxu0
        %5607 = vmatprep.mubr.f32.mxu0 0.0
        %5608 = vmatmul.mubr.f32.gmra.mxu0 %v5512
        %v5609 = vpop.f32.mrf.mxu0
        %v5610 = vadd.f32 0.0, %v5609
        %v5611 = vpop.f32.mrf.mxu0
        %5612 = vmatprep.mubr.f32.mxu0 0.0
        %5613 = vmatmul.mubr.f32.gmra.mxu0 %v5515
        %v5614 = vpop.f32.mrf.mxu0
        %v5615 = vadd.f32 0.0, %v5614
        %v5616 = vpop.f32.mrf.mxu0
        %5617 = vmatprep.mubr.f32.mxu0 0.0
        %5618 = vmatmul.mubr.f32.gmra.mxu0 %v5518
        %v5619 = vpop.f32.mrf.mxu0
        %v5620 = vadd.f32 0.0, %v5619
        %v5621 = vpop.f32.mrf.mxu0
        %5622 = vmatprep.mubr.f32.mxu0 0.0
        %5623 = vmatmul.mubr.f32.gmra.mxu0 %v5521
        %v5624 = vpop.f32.mrf.mxu0
        %v5625 = vadd.f32 0.0, %v5624
        %v5626 = vpop.f32.mrf.mxu0
        %5627 = vdwg.mxu0
        %5628 = vst.msk [vmem:[#allocation9] sm:$0xff] %vm1396, %v5590
        %5629 = vst.msk [vmem:[#allocation9 + $0x8] sm:$0xff] %vm1396, %v5595
        %5630 = vst.msk [vmem:[#allocation9 + $0x10] sm:$0xff] %vm1396, %v5600
        %5631 = vst.msk [vmem:[#allocation9 + $0x18] sm:$0xff] %vm1396, %v5605
        %5632 = vst.msk [vmem:[#allocation9 + $0x20] sm:$0xff] %vm1396, %v5610
        %5633 = vst.msk [vmem:[#allocation9 + $0x28] sm:$0xff] %vm1396, %v5615
        %5634 = vst.msk [vmem:[#allocation9 + $0x30] sm:$0xff] %vm1396, %v5620
        %5635 = vst.msk [vmem:[#allocation9 + $0x38] sm:$0xff] %vm1396, %v5625
        %5644 = vrot.lane.b32.xlu0 %v5590, 125
        %v5645 = vpop.permute.xlu0 %5644
        %5646 = vrot.lane.b32.xlu0 %v5595, 125
        %v5647 = vpop.permute.xlu0 %5646
        %5648 = vrot.lane.b32.xlu0 %v5600, 125
        %v5649 = vpop.permute.xlu0 %5648
        %5650 = vrot.lane.b32.xlu0 %v5605, 125
        %v5651 = vpop.permute.xlu0 %5650
        %5652 = vrot.lane.b32.xlu0 %v5610, 125
        %v5653 = vpop.permute.xlu0 %5652
        %5654 = vrot.lane.b32.xlu0 %v5615, 125
        %v5655 = vpop.permute.xlu0 %5654
        %5656 = vrot.lane.b32.xlu0 %v5620, 125
        %v5657 = vpop.permute.xlu0 %5656
        %5658 = vrot.lane.b32.xlu0 %v5625, 125
        %v5659 = vpop.permute.xlu0 %5658
        %5668 = vst.msk [vmem:[#allocation9 + $0x40] sm:$0xff] %vm1396, %v5645
        %5669 = vst.msk [vmem:[#allocation9 + $0x48] sm:$0xff] %vm1396, %v5647
        %5670 = vst.msk [vmem:[#allocation9 + $0x50] sm:$0xff] %vm1396, %v5649
        %5671 = vst.msk [vmem:[#allocation9 + $0x58] sm:$0xff] %vm1396, %v5651
        %5672 = vst.msk [vmem:[#allocation9 + $0x60] sm:$0xff] %vm1396, %v5653
        %5673 = vst.msk [vmem:[#allocation9 + $0x68] sm:$0xff] %vm1396, %v5655
        %5674 = vst.msk [vmem:[#allocation9 + $0x70] sm:$0xff] %vm1396, %v5657
        %5675 = vst.msk [vmem:[#allocation9 + $0x78] sm:$0xff] %vm1396, %v5659
        %5676 = vrot.lane.b32.xlu0 %v5590, 122
        %v5677 = vpop.permute.xlu0 %5676
        %5678 = vrot.lane.b32.xlu0 %v5595, 122
        %v5679 = vpop.permute.xlu0 %5678
        %5680 = vrot.lane.b32.xlu0 %v5600, 122
        %v5681 = vpop.permute.xlu0 %5680
        %5682 = vrot.lane.b32.xlu0 %v5605, 122
        %v5683 = vpop.permute.xlu0 %5682
        %5684 = vrot.lane.b32.xlu0 %v5610, 122
        %v5685 = vpop.permute.xlu0 %5684
        %5686 = vrot.lane.b32.xlu0 %v5615, 122
        %v5687 = vpop.permute.xlu0 %5686
        %5688 = vrot.lane.b32.xlu0 %v5620, 122
        %v5689 = vpop.permute.xlu0 %5688
        %5690 = vrot.lane.b32.xlu0 %v5625, 122
        %v5691 = vpop.permute.xlu0 %5690
        %5700 = vst.msk [vmem:[#allocation9 + $0x80] sm:$0xff] %vm1396, %v5677
        %5701 = vst.msk [vmem:[#allocation9 + $0x88] sm:$0xff] %vm1396, %v5679
        %5702 = vst.msk [vmem:[#allocation9 + $0x90] sm:$0xff] %vm1396, %v5681
        %5703 = vst.msk [vmem:[#allocation9 + $0x98] sm:$0xff] %vm1396, %v5683
        %5704 = vst.msk [vmem:[#allocation9 + $0xa0] sm:$0xff] %vm1396, %v5685
        %5705 = vst.msk [vmem:[#allocation9 + $0xa8] sm:$0xff] %vm1396, %v5687
        %5706 = vst.msk [vmem:[#allocation9 + $0xb0] sm:$0xff] %vm1396, %v5689
        %5707 = vst.msk [vmem:[#allocation9 + $0xb8] sm:$0xff] %vm1396, %v5691
        %5708 = vrot.lane.b32.xlu0 %v5590, 119
        %v5709 = vpop.permute.xlu0 %5708
        %5710 = vrot.lane.b32.xlu0 %v5595, 119
        %v5711 = vpop.permute.xlu0 %5710
        %5712 = vrot.lane.b32.xlu0 %v5600, 119
        %v5713 = vpop.permute.xlu0 %5712
        %5714 = vrot.lane.b32.xlu0 %v5605, 119
        %v5715 = vpop.permute.xlu0 %5714
        %5716 = vrot.lane.b32.xlu0 %v5610, 119
        %v5717 = vpop.permute.xlu0 %5716
        %5718 = vrot.lane.b32.xlu0 %v5615, 119
        %v5719 = vpop.permute.xlu0 %5718
        %5720 = vrot.lane.b32.xlu0 %v5620, 119
        %v5721 = vpop.permute.xlu0 %5720
        %5722 = vrot.lane.b32.xlu0 %v5625, 119
        %v5723 = vpop.permute.xlu0 %5722
        %5732 = vst.msk [vmem:[#allocation9 + $0xc0] sm:$0xff] %vm1396, %v5709
        %5733 = vst.msk [vmem:[#allocation9 + $0xc8] sm:$0xff] %vm1396, %v5711
        %5734 = vst.msk [vmem:[#allocation9 + $0xd0] sm:$0xff] %vm1396, %v5713
        %5735 = vst.msk [vmem:[#allocation9 + $0xd8] sm:$0xff] %vm1396, %v5715
        %5736 = vst.msk [vmem:[#allocation9 + $0xe0] sm:$0xff] %vm1396, %v5717
        %5737 = vst.msk [vmem:[#allocation9 + $0xe8] sm:$0xff] %vm1396, %v5719
        %5738 = vst.msk [vmem:[#allocation9 + $0xf0] sm:$0xff] %vm1396, %v5721
        %5739 = vst.msk [vmem:[#allocation9 + $0xf8] sm:$0xff] %vm1396, %v5723
        %5740 = vrot.lane.b32.xlu0 %v5590, 116
        %v5741 = vpop.permute.xlu0 %5740
        %5742 = vrot.lane.b32.xlu0 %v5595, 116
        %v5743 = vpop.permute.xlu0 %5742
        %5744 = vrot.lane.b32.xlu0 %v5600, 116
        %v5745 = vpop.permute.xlu0 %5744
        %5746 = vrot.lane.b32.xlu0 %v5605, 116
        %v5747 = vpop.permute.xlu0 %5746
        %5748 = vrot.lane.b32.xlu0 %v5610, 116
        %v5749 = vpop.permute.xlu0 %5748
        %5750 = vrot.lane.b32.xlu0 %v5615, 116
        %v5751 = vpop.permute.xlu0 %5750
        %5752 = vrot.lane.b32.xlu0 %v5620, 116
        %v5753 = vpop.permute.xlu0 %5752
        %5754 = vrot.lane.b32.xlu0 %v5625, 116
        %v5755 = vpop.permute.xlu0 %5754
        %5764 = vst.msk [vmem:[#allocation9 + $0x100] sm:$0xff] %vm1396, %v5741
        %5765 = vst.msk [vmem:[#allocation9 + $0x108] sm:$0xff] %vm1396, %v5743
        %5766 = vst.msk [vmem:[#allocation9 + $0x110] sm:$0xff] %vm1396, %v5745
        %5767 = vst.msk [vmem:[#allocation9 + $0x118] sm:$0xff] %vm1396, %v5747
        %5768 = vst.msk [vmem:[#allocation9 + $0x120] sm:$0xff] %vm1396, %v5749
        %5769 = vst.msk [vmem:[#allocation9 + $0x128] sm:$0xff] %vm1396, %v5751
        %5770 = vst.msk [vmem:[#allocation9 + $0x130] sm:$0xff] %vm1396, %v5753
        %5771 = vst.msk [vmem:[#allocation9 + $0x138] sm:$0xff] %vm1396, %v5755
        %5772 = vrot.lane.b32.xlu0 %v5590, 113
        %v5773 = vpop.permute.xlu0 %5772
        %5774 = vrot.lane.b32.xlu0 %v5595, 113
        %v5775 = vpop.permute.xlu0 %5774
        %5776 = vrot.lane.b32.xlu0 %v5600, 113
        %v5777 = vpop.permute.xlu0 %5776
        %5778 = vrot.lane.b32.xlu0 %v5605, 113
        %v5779 = vpop.permute.xlu0 %5778
        %5780 = vrot.lane.b32.xlu0 %v5610, 113
        %v5781 = vpop.permute.xlu0 %5780
        %5782 = vrot.lane.b32.xlu0 %v5615, 113
        %v5783 = vpop.permute.xlu0 %5782
        %5784 = vrot.lane.b32.xlu0 %v5620, 113
        %v5785 = vpop.permute.xlu0 %5784
        %5786 = vrot.lane.b32.xlu0 %v5625, 113
        %v5787 = vpop.permute.xlu0 %5786
        %5796 = vst.msk [vmem:[#allocation9 + $0x140] sm:$0xff] %vm1396, %v5773
        %5797 = vst.msk [vmem:[#allocation9 + $0x148] sm:$0xff] %vm1396, %v5775
        %5798 = vst.msk [vmem:[#allocation9 + $0x150] sm:$0xff] %vm1396, %v5777
        %5799 = vst.msk [vmem:[#allocation9 + $0x158] sm:$0xff] %vm1396, %v5779
        %5800 = vst.msk [vmem:[#allocation9 + $0x160] sm:$0xff] %vm1396, %v5781
        %5801 = vst.msk [vmem:[#allocation9 + $0x168] sm:$0xff] %vm1396, %v5783
        %5802 = vst.msk [vmem:[#allocation9 + $0x170] sm:$0xff] %vm1396, %v5785
        %5803 = vst.msk [vmem:[#allocation9 + $0x178] sm:$0xff] %vm1396, %v5787
        %5804 = vrot.lane.b32.xlu0 %v5590, 110
        %v5805 = vpop.permute.xlu0 %5804
        %5806 = vrot.lane.b32.xlu0 %v5595, 110
        %v5807 = vpop.permute.xlu0 %5806
        %5808 = vrot.lane.b32.xlu0 %v5600, 110
        %v5809 = vpop.permute.xlu0 %5808
        %5810 = vrot.lane.b32.xlu0 %v5605, 110
        %v5811 = vpop.permute.xlu0 %5810
        %5812 = vrot.lane.b32.xlu0 %v5610, 110
        %v5813 = vpop.permute.xlu0 %5812
        %5814 = vrot.lane.b32.xlu0 %v5615, 110
        %v5815 = vpop.permute.xlu0 %5814
        %5816 = vrot.lane.b32.xlu0 %v5620, 110
        %v5817 = vpop.permute.xlu0 %5816
        %5818 = vrot.lane.b32.xlu0 %v5625, 110
        %v5819 = vpop.permute.xlu0 %5818
        %5828 = vst.msk [vmem:[#allocation9 + $0x180] sm:$0xff] %vm1396, %v5805
        %5829 = vst.msk [vmem:[#allocation9 + $0x188] sm:$0xff] %vm1396, %v5807
        %5830 = vst.msk [vmem:[#allocation9 + $0x190] sm:$0xff] %vm1396, %v5809
        %5831 = vst.msk [vmem:[#allocation9 + $0x198] sm:$0xff] %vm1396, %v5811
        %5832 = vst.msk [vmem:[#allocation9 + $0x1a0] sm:$0xff] %vm1396, %v5813
        %5833 = vst.msk [vmem:[#allocation9 + $0x1a8] sm:$0xff] %vm1396, %v5815
        %5834 = vst.msk [vmem:[#allocation9 + $0x1b0] sm:$0xff] %vm1396, %v5817
        %5835 = vst.msk [vmem:[#allocation9 + $0x1b8] sm:$0xff] %vm1396, %v5819
        %5836 = vrot.lane.b32.xlu0 %v5590, 107
        %v5837 = vpop.permute.xlu0 %5836
        %5838 = vrot.lane.b32.xlu0 %v5595, 107
        %v5839 = vpop.permute.xlu0 %5838
        %5840 = vrot.lane.b32.xlu0 %v5600, 107
        %v5841 = vpop.permute.xlu0 %5840
        %5842 = vrot.lane.b32.xlu0 %v5605, 107
        %v5843 = vpop.permute.xlu0 %5842
        %5844 = vrot.lane.b32.xlu0 %v5610, 107
        %v5845 = vpop.permute.xlu0 %5844
        %5846 = vrot.lane.b32.xlu0 %v5615, 107
        %v5847 = vpop.permute.xlu0 %5846
        %5848 = vrot.lane.b32.xlu0 %v5620, 107
        %v5849 = vpop.permute.xlu0 %5848
        %5850 = vrot.lane.b32.xlu0 %v5625, 107
        %v5851 = vpop.permute.xlu0 %5850
        %5860 = vst.msk [vmem:[#allocation9 + $0x1c0] sm:$0xff] %vm1396, %v5837
        %5861 = vst.msk [vmem:[#allocation9 + $0x1c8] sm:$0xff] %vm1396, %v5839
        %5862 = vst.msk [vmem:[#allocation9 + $0x1d0] sm:$0xff] %vm1396, %v5841
        %5863 = vst.msk [vmem:[#allocation9 + $0x1d8] sm:$0xff] %vm1396, %v5843
        %5864 = vst.msk [vmem:[#allocation9 + $0x1e0] sm:$0xff] %vm1396, %v5845
        %5865 = vst.msk [vmem:[#allocation9 + $0x1e8] sm:$0xff] %vm1396, %v5847
        %5866 = vst.msk [vmem:[#allocation9 + $0x1f0] sm:$0xff] %vm1396, %v5849
        %5867 = vst.msk [vmem:[#allocation9 + $0x1f8] sm:$0xff] %vm1396, %v5851
        %5868 = vrot.lane.b32.xlu0 %v5590, 104
        %v5869 = vpop.permute.xlu0 %5868
        %5870 = vrot.lane.b32.xlu0 %v5595, 104
        %v5871 = vpop.permute.xlu0 %5870
        %5872 = vrot.lane.b32.xlu0 %v5600, 104
        %v5873 = vpop.permute.xlu0 %5872
        %5874 = vrot.lane.b32.xlu0 %v5605, 104
        %v5875 = vpop.permute.xlu0 %5874
        %5876 = vrot.lane.b32.xlu0 %v5610, 104
        %v5877 = vpop.permute.xlu0 %5876
        %5878 = vrot.lane.b32.xlu0 %v5615, 104
        %v5879 = vpop.permute.xlu0 %5878
        %5880 = vrot.lane.b32.xlu0 %v5620, 104
        %v5881 = vpop.permute.xlu0 %5880
        %5882 = vrot.lane.b32.xlu0 %v5625, 104
        %v5883 = vpop.permute.xlu0 %5882
        %5892 = vst.msk [vmem:[#allocation9 + $0x200] sm:$0xff] %vm1396, %v5869
        %5893 = vst.msk [vmem:[#allocation9 + $0x208] sm:$0xff] %vm1396, %v5871
        %5894 = vst.msk [vmem:[#allocation9 + $0x210] sm:$0xff] %vm1396, %v5873
        %5895 = vst.msk [vmem:[#allocation9 + $0x218] sm:$0xff] %vm1396, %v5875
        %5896 = vst.msk [vmem:[#allocation9 + $0x220] sm:$0xff] %vm1396, %v5877
        %5897 = vst.msk [vmem:[#allocation9 + $0x228] sm:$0xff] %vm1396, %v5879
        %5898 = vst.msk [vmem:[#allocation9 + $0x230] sm:$0xff] %vm1396, %v5881
        %5899 = vst.msk [vmem:[#allocation9 + $0x238] sm:$0xff] %vm1396, %v5883
        %v5900 = vld [vmem:[%s23] sm:$0xff]
        %v5901 = vld [vmem:[%s23 + $0x8] sm:$0xff]
        %v5902 = vld [vmem:[%s23 + $0x10] sm:$0xff]
        %v5903 = vld [vmem:[%s23 + $0x18] sm:$0xff]
        %v5904 = vld [vmem:[%s23 + $0x20] sm:$0xff]
        %v5905 = vld [vmem:[%s23 + $0x28] sm:$0xff]
        %v5906 = vld [vmem:[%s23 + $0x30] sm:$0xff]
        %v5907 = vld [vmem:[%s23 + $0x38] sm:$0xff]
        %v5908 = vld [vmem:[%s23 + $0x40] sm:$0xff]
        %v5909 = vld [vmem:[%s23 + $0x48] sm:$0xff]
        %v5910 = vld [vmem:[%s23 + $0x50] sm:$0xff]
        %v5911 = vld [vmem:[%s23 + $0x58] sm:$0xff]
        %v5912 = vld [vmem:[%s23 + $0x60] sm:$0xff]
        %v5913 = vld [vmem:[%s23 + $0x68] sm:$0xff]
        %v5914 = vld [vmem:[%s23 + $0x70] sm:$0xff]
        %v5915 = vld [vmem:[%s23 + $0x78] sm:$0xff]
        %v5916 = vld [vmem:[%s23 + $0x80] sm:$0xff]
        %v5917 = vld [vmem:[%s23 + $0x88] sm:$0xff]
        %v5918 = vld [vmem:[%s23 + $0x90] sm:$0xff]
        %v5919 = vld [vmem:[%s23 + $0x98] sm:$0xff]
        %v5920 = vld [vmem:[%s23 + $0xa0] sm:$0xff]
        %v5921 = vld [vmem:[%s23 + $0xa8] sm:$0xff]
        %v5922 = vld [vmem:[%s23 + $0xb0] sm:$0xff]
        %v5923 = vld [vmem:[%s23 + $0xb8] sm:$0xff]
        %v5924 = vld [vmem:[%s23 + $0xc0] sm:$0xff]
        %v5925 = vld [vmem:[%s23 + $0xc8] sm:$0xff]
        %v5926 = vld [vmem:[%s23 + $0xd0] sm:$0xff]
        %v5927 = vld [vmem:[%s23 + $0xd8] sm:$0xff]
        %v5928 = vld [vmem:[%s23 + $0xe0] sm:$0xff]
        %v5929 = vld [vmem:[%s23 + $0xe8] sm:$0xff]
        %v5930 = vld [vmem:[%s23 + $0xf0] sm:$0xff]
        %v5931 = vld [vmem:[%s23 + $0xf8] sm:$0xff]
        %v5932 = vld [vmem:[%s23 + $0x100] sm:$0xff]
        %v5933 = vld [vmem:[%s23 + $0x108] sm:$0xff]
        %v5934 = vld [vmem:[%s23 + $0x110] sm:$0xff]
        %v5935 = vld [vmem:[%s23 + $0x118] sm:$0xff]
        %v5936 = vld [vmem:[%s23 + $0x120] sm:$0xff]
        %v5937 = vld [vmem:[%s23 + $0x128] sm:$0xff]
        %v5938 = vld [vmem:[%s23 + $0x130] sm:$0xff]
        %v5939 = vld [vmem:[%s23 + $0x138] sm:$0xff]
        %v5940 = vld [vmem:[%s23 + $0x140] sm:$0xff]
        %v5941 = vld [vmem:[%s23 + $0x148] sm:$0xff]
        %v5942 = vld [vmem:[%s23 + $0x150] sm:$0xff]
        %v5943 = vld [vmem:[%s23 + $0x158] sm:$0xff]
        %v5944 = vld [vmem:[%s23 + $0x160] sm:$0xff]
        %v5945 = vld [vmem:[%s23 + $0x168] sm:$0xff]
        %v5946 = vld [vmem:[%s23 + $0x170] sm:$0xff]
        %v5947 = vld [vmem:[%s23 + $0x178] sm:$0xff]
        %v5948 = vld [vmem:[%s23 + $0x180] sm:$0xff]
        %v5949 = vld [vmem:[%s23 + $0x188] sm:$0xff]
        %v5950 = vld [vmem:[%s23 + $0x190] sm:$0xff]
        %v5951 = vld [vmem:[%s23 + $0x198] sm:$0xff]
        %v5952 = vld [vmem:[%s23 + $0x1a0] sm:$0xff]
        %v5953 = vld [vmem:[%s23 + $0x1a8] sm:$0xff]
        %v5954 = vld [vmem:[%s23 + $0x1b0] sm:$0xff]
        %v5955 = vld [vmem:[%s23 + $0x1b8] sm:$0xff]
        %v5956 = vld [vmem:[%s23 + $0x1c0] sm:$0xff]
        %v5957 = vld [vmem:[%s23 + $0x1c8] sm:$0xff]
        %v5958 = vld [vmem:[%s23 + $0x1d0] sm:$0xff]
        %v5959 = vld [vmem:[%s23 + $0x1d8] sm:$0xff]
        %v5960 = vld [vmem:[%s23 + $0x1e0] sm:$0xff]
        %v5961 = vld [vmem:[%s23 + $0x1e8] sm:$0xff]
        %v5962 = vld [vmem:[%s23 + $0x1f0] sm:$0xff]
        %v5963 = vld [vmem:[%s23 + $0x1f8] sm:$0xff]
        %v5964 = vld [vmem:[%s23 + $0x200] sm:$0xff]
        %v5965 = vld [vmem:[%s23 + $0x208] sm:$0xff]
        %v5966 = vld [vmem:[%s23 + $0x210] sm:$0xff]
        %v5967 = vld [vmem:[%s23 + $0x218] sm:$0xff]
        %v5968 = vld [vmem:[%s23 + $0x220] sm:$0xff]
        %v5969 = vld [vmem:[%s23 + $0x228] sm:$0xff]
        %v5970 = vld [vmem:[%s23 + $0x230] sm:$0xff]
        %v5971 = vld [vmem:[%s23 + $0x238] sm:$0xff]
        %v5972 = vld [vmem:[%s23 + $0x240] sm:$0xff]
        %v5973 = vld [vmem:[%s23 + $0x248] sm:$0xff]
        %v5974 = vld [vmem:[%s23 + $0x250] sm:$0xff]
        %v5975 = vld [vmem:[%s23 + $0x258] sm:$0xff]
        %v5976 = vld [vmem:[%s23 + $0x260] sm:$0xff]
        %v5977 = vld [vmem:[%s23 + $0x268] sm:$0xff]
        %v5978 = vld [vmem:[%s23 + $0x270] sm:$0xff]
        %v5979 = vld [vmem:[%s23 + $0x278] sm:$0xff]
        %v5980 = vld [vmem:[%s23 + $0x280] sm:$0xff]
        %v5981 = vld [vmem:[%s23 + $0x288] sm:$0xff]
        %v5982 = vld [vmem:[%s23 + $0x290] sm:$0xff]
        %v5983 = vld [vmem:[%s23 + $0x298] sm:$0xff]
        %v5984 = vld [vmem:[%s23 + $0x2a0] sm:$0xff]
        %v5985 = vld [vmem:[%s23 + $0x2a8] sm:$0xff]
        %v5986 = vld [vmem:[%s23 + $0x2b0] sm:$0xff]
        %v5987 = vld [vmem:[%s23 + $0x2b8] sm:$0xff]
        %v5988 = vld [vmem:[%s23 + $0x2c0] sm:$0xff]
        %v5989 = vld [vmem:[%s23 + $0x2c8] sm:$0xff]
        %v5990 = vld [vmem:[%s23 + $0x2d0] sm:$0xff]
        %v5991 = vld [vmem:[%s23 + $0x2d8] sm:$0xff]
        %v5992 = vld [vmem:[%s23 + $0x2e0] sm:$0xff]
        %v5993 = vld [vmem:[%s23 + $0x2e8] sm:$0xff]
        %v5994 = vld [vmem:[%s23 + $0x2f0] sm:$0xff]
        %v5995 = vld [vmem:[%s23 + $0x2f8] sm:$0xff]
        %v5996 = vld [vmem:[%s23 + $0x300] sm:$0xff]
        %v5997 = vld [vmem:[%s23 + $0x308] sm:$0xff]
        %v5998 = vld [vmem:[%s23 + $0x310] sm:$0xff]
        %v5999 = vld [vmem:[%s23 + $0x318] sm:$0xff]
        %v6000 = vld [vmem:[%s23 + $0x320] sm:$0xff]
        %v6001 = vld [vmem:[%s23 + $0x328] sm:$0xff]
        %v6002 = vld [vmem:[%s23 + $0x330] sm:$0xff]
        %v6003 = vld [vmem:[%s23 + $0x338] sm:$0xff]
        %v6004 = vld [vmem:[%s23 + $0x340] sm:$0xff]
        %v6005 = vld [vmem:[%s23 + $0x348] sm:$0xff]
        %v6006 = vld [vmem:[%s23 + $0x350] sm:$0xff]
        %v6007 = vld [vmem:[%s23 + $0x358] sm:$0xff]
        %v6008 = vld [vmem:[%s23 + $0x360] sm:$0xff]
        %v6009 = vld [vmem:[%s23 + $0x368] sm:$0xff]
        %v6010 = vld [vmem:[%s23 + $0x370] sm:$0xff]
        %v6011 = vld [vmem:[%s23 + $0x378] sm:$0xff]
        %v6012 = vld [vmem:[%s23 + $0x380] sm:$0xff]
        %v6013 = vld [vmem:[%s23 + $0x388] sm:$0xff]
        %v6014 = vld [vmem:[%s23 + $0x390] sm:$0xff]
        %v6015 = vld [vmem:[%s23 + $0x398] sm:$0xff]
        %v6016 = vld [vmem:[%s23 + $0x3a0] sm:$0xff]
        %v6017 = vld [vmem:[%s23 + $0x3a8] sm:$0xff]
        %v6018 = vld [vmem:[%s23 + $0x3b0] sm:$0xff]
        %v6019 = vld [vmem:[%s23 + $0x3b8] sm:$0xff]
        %v6020 = vld [vmem:[%s23 + $0x3c0] sm:$0xff]
        %v6021 = vld [vmem:[%s23 + $0x3c8] sm:$0xff]
        %v6022 = vld [vmem:[%s23 + $0x3d0] sm:$0xff]
        %v6023 = vld [vmem:[%s23 + $0x3d8] sm:$0xff]
        %v6024 = vld [vmem:[%s23 + $0x3e0] sm:$0xff]
        %v6025 = vld [vmem:[%s23 + $0x3e8] sm:$0xff]
        %v6026 = vld [vmem:[%s23 + $0x3f0] sm:$0xff]
        %v6027 = vld [vmem:[%s23 + $0x3f8] sm:$0xff]
        %v6028 = vld [vmem:[%s23 + $0x400] sm:$0xff]
        %v6029 = vld [vmem:[%s23 + $0x408] sm:$0xff]
        %v6030 = vld [vmem:[%s23 + $0x410] sm:$0xff]
        %v6031 = vld [vmem:[%s23 + $0x418] sm:$0xff]
        %v6032 = vld [vmem:[%s23 + $0x420] sm:$0xff]
        %v6033 = vld [vmem:[%s23 + $0x428] sm:$0xff]
        %v6034 = vld [vmem:[%s23 + $0x430] sm:$0xff]
        %v6035 = vld [vmem:[%s23 + $0x438] sm:$0xff]
        %v6036 = vld [vmem:[%s23 + $0x440] sm:$0xff]
        %v6037 = vld [vmem:[%s23 + $0x448] sm:$0xff]
        %v6038 = vld [vmem:[%s23 + $0x450] sm:$0xff]
        %v6039 = vld [vmem:[%s23 + $0x458] sm:$0xff]
        %v6040 = vld [vmem:[%s23 + $0x460] sm:$0xff]
        %v6041 = vld [vmem:[%s23 + $0x468] sm:$0xff]
        %v6042 = vld [vmem:[%s23 + $0x470] sm:$0xff]
        %v6043 = vld [vmem:[%s23 + $0x478] sm:$0xff]
        %v6044 = vld [vmem:[%s23 + $0x480] sm:$0xff]
        %v6045 = vld [vmem:[%s23 + $0x488] sm:$0xff]
        %v6046 = vld [vmem:[%s23 + $0x490] sm:$0xff]
        %v6047 = vld [vmem:[%s23 + $0x498] sm:$0xff]
        %v6048 = vld [vmem:[%s23 + $0x4a0] sm:$0xff]
        %v6049 = vld [vmem:[%s23 + $0x4a8] sm:$0xff]
        %v6050 = vld [vmem:[%s23 + $0x4b0] sm:$0xff]
        %v6051 = vld [vmem:[%s23 + $0x4b8] sm:$0xff]
        %v6052 = vld [vmem:[%s23 + $0x4c0] sm:$0xff]
        %v6053 = vld [vmem:[%s23 + $0x4c8] sm:$0xff]
        %v6054 = vld [vmem:[%s23 + $0x4d0] sm:$0xff]
        %v6055 = vld [vmem:[%s23 + $0x4d8] sm:$0xff]
        %v6056 = vld [vmem:[%s23 + $0x4e0] sm:$0xff]
        %v6057 = vld [vmem:[%s23 + $0x4e8] sm:$0xff]
        %v6058 = vld [vmem:[%s23 + $0x4f0] sm:$0xff]
        %v6059 = vld [vmem:[%s23 + $0x4f8] sm:$0xff]
        %v6060 = vld [vmem:[#allocation9] sm:$0xff]
        %v6061 = vld [vmem:[#allocation9 + $0x8] sm:$0xff]
        %v6062 = vld [vmem:[#allocation9 + $0x10] sm:$0xff]
        %v6063 = vld [vmem:[#allocation9 + $0x18] sm:$0xff]
        %v6064 = vld [vmem:[#allocation9 + $0x20] sm:$0xff]
        %v6065 = vld [vmem:[#allocation9 + $0x28] sm:$0xff]
        %v6066 = vld [vmem:[#allocation9 + $0x30] sm:$0xff]
        %v6067 = vld [vmem:[#allocation9 + $0x38] sm:$0xff]
        %v6068 = vld [vmem:[#allocation9 + $0x40] sm:$0xff]
        %v6069 = vld [vmem:[#allocation9 + $0x48] sm:$0xff]
        %v6070 = vld [vmem:[#allocation9 + $0x50] sm:$0xff]
        %v6071 = vld [vmem:[#allocation9 + $0x58] sm:$0xff]
        %v6072 = vld [vmem:[#allocation9 + $0x60] sm:$0xff]
        %v6073 = vld [vmem:[#allocation9 + $0x68] sm:$0xff]
        %v6074 = vld [vmem:[#allocation9 + $0x70] sm:$0xff]
        %v6075 = vld [vmem:[#allocation9 + $0x78] sm:$0xff]
        %v6076 = vld [vmem:[#allocation9 + $0x80] sm:$0xff]
        %v6077 = vld [vmem:[#allocation9 + $0x88] sm:$0xff]
        %v6078 = vld [vmem:[#allocation9 + $0x90] sm:$0xff]
        %v6079 = vld [vmem:[#allocation9 + $0x98] sm:$0xff]
        %v6080 = vld [vmem:[#allocation9 + $0xa0] sm:$0xff]
        %v6081 = vld [vmem:[#allocation9 + $0xa8] sm:$0xff]
        %v6082 = vld [vmem:[#allocation9 + $0xb0] sm:$0xff]
        %v6083 = vld [vmem:[#allocation9 + $0xb8] sm:$0xff]
        %v6084 = vld [vmem:[#allocation9 + $0xc0] sm:$0xff]
        %v6085 = vld [vmem:[#allocation9 + $0xc8] sm:$0xff]
        %v6086 = vld [vmem:[#allocation9 + $0xd0] sm:$0xff]
        %v6087 = vld [vmem:[#allocation9 + $0xd8] sm:$0xff]
        %v6088 = vld [vmem:[#allocation9 + $0xe0] sm:$0xff]
        %v6089 = vld [vmem:[#allocation9 + $0xe8] sm:$0xff]
        %v6090 = vld [vmem:[#allocation9 + $0xf0] sm:$0xff]
        %v6091 = vld [vmem:[#allocation9 + $0xf8] sm:$0xff]
        %v6092 = vld [vmem:[#allocation9 + $0x100] sm:$0xff]
        %v6093 = vld [vmem:[#allocation9 + $0x108] sm:$0xff]
        %v6094 = vld [vmem:[#allocation9 + $0x110] sm:$0xff]
        %v6095 = vld [vmem:[#allocation9 + $0x118] sm:$0xff]
        %v6096 = vld [vmem:[#allocation9 + $0x120] sm:$0xff]
        %v6097 = vld [vmem:[#allocation9 + $0x128] sm:$0xff]
        %v6098 = vld [vmem:[#allocation9 + $0x130] sm:$0xff]
        %v6099 = vld [vmem:[#allocation9 + $0x138] sm:$0xff]
        %v6100 = vld [vmem:[#allocation9 + $0x140] sm:$0xff]
        %v6101 = vld [vmem:[#allocation9 + $0x148] sm:$0xff]
        %v6102 = vld [vmem:[#allocation9 + $0x150] sm:$0xff]
        %v6103 = vld [vmem:[#allocation9 + $0x158] sm:$0xff]
        %v6104 = vld [vmem:[#allocation9 + $0x160] sm:$0xff]
        %v6105 = vld [vmem:[#allocation9 + $0x168] sm:$0xff]
        %v6106 = vld [vmem:[#allocation9 + $0x170] sm:$0xff]
        %v6107 = vld [vmem:[#allocation9 + $0x178] sm:$0xff]
        %v6108 = vld [vmem:[#allocation9 + $0x180] sm:$0xff]
        %v6109 = vld [vmem:[#allocation9 + $0x188] sm:$0xff]
        %v6110 = vld [vmem:[#allocation9 + $0x190] sm:$0xff]
        %v6111 = vld [vmem:[#allocation9 + $0x198] sm:$0xff]
        %v6112 = vld [vmem:[#allocation9 + $0x1a0] sm:$0xff]
        %v6113 = vld [vmem:[#allocation9 + $0x1a8] sm:$0xff]
        %v6114 = vld [vmem:[#allocation9 + $0x1b0] sm:$0xff]
        %v6115 = vld [vmem:[#allocation9 + $0x1b8] sm:$0xff]
        %v6116 = vld [vmem:[#allocation9 + $0x1c0] sm:$0xff]
        %v6117 = vld [vmem:[#allocation9 + $0x1c8] sm:$0xff]
        %v6118 = vld [vmem:[#allocation9 + $0x1d0] sm:$0xff]
        %v6119 = vld [vmem:[#allocation9 + $0x1d8] sm:$0xff]
        %v6120 = vld [vmem:[#allocation9 + $0x1e0] sm:$0xff]
        %v6121 = vld [vmem:[#allocation9 + $0x1e8] sm:$0xff]
        %v6122 = vld [vmem:[#allocation9 + $0x1f0] sm:$0xff]
        %v6123 = vld [vmem:[#allocation9 + $0x1f8] sm:$0xff]
        %v6124 = vld [vmem:[#allocation9 + $0x200] sm:$0xff]
        %v6125 = vld [vmem:[#allocation9 + $0x208] sm:$0xff]
        %v6126 = vld [vmem:[#allocation9 + $0x210] sm:$0xff]
        %v6127 = vld [vmem:[#allocation9 + $0x218] sm:$0xff]
        %v6128 = vld [vmem:[#allocation9 + $0x220] sm:$0xff]
        %v6129 = vld [vmem:[#allocation9 + $0x228] sm:$0xff]
        %v6130 = vld [vmem:[#allocation9 + $0x230] sm:$0xff]
        %v6131 = vld [vmem:[#allocation9 + $0x238] sm:$0xff]
        %v6132 = vld [vmem:[%s24] sm:$0x1]
        %v6134 = vlaneseq
        %v6135 = vshrl.u32 %v6134, 7
        %v6136 = vsub.s32 0, %v6135
        %v6137 = vrot.slane %v6132, %v6136
        %v6140 = vsel %vm1912, %v5904, 0
        %v6143 = vsel %vm1912, %v5909, 0
        %v6146 = vsel %vm1912, %v5914, 0
        %v6149 = vsel %vm1912, %v5919, 0
        %v6152 = vsel %vm1912, %v5924, 0
        %v6155 = vsel %vm1912, %v5929, 0
        %v6158 = vsel %vm1912, %v5934, 0
        %v6161 = vsel %vm1912, %v5939, 0
        %v6164 = vsel %vm1912, %v5944, 0
        %v6167 = vsel %vm1912, %v5949, 0
        %v6170 = vsel %vm1912, %v5954, 0
        %v6173 = vsel %vm1912, %v5959, 0
        %v6176 = vsel %vm1912, %v5964, 0
        %v6179 = vsel %vm1912, %v5969, 0
        %v6182 = vsel %vm1912, %v5974, 0
        %v6185 = vsel %vm1912, %v5979, 0
        %v6188 = vsel %vm1912, %v5984, 0
        %v6191 = vsel %vm1912, %v5989, 0
        %v6194 = vsel %vm1912, %v5994, 0
        %v6197 = vsel %vm1912, %v5999, 0
        %v6200 = vsel %vm1912, %v6004, 0
        %v6203 = vsel %vm1912, %v6009, 0
        %v6206 = vsel %vm1912, %v6014, 0
        %v6209 = vsel %vm1912, %v6019, 0
        %v6212 = vsel %vm1912, %v6024, 0
        %v6215 = vsel %vm1912, %v6029, 0
        %v6218 = vsel %vm1912, %v6034, 0
        %v6221 = vsel %vm1912, %v6039, 0
        %v6224 = vsel %vm1912, %v6044, 0
        %v6227 = vsel %vm1912, %v6049, 0
        %v6230 = vsel %vm1912, %v6054, 0
        %v6233 = vsel %vm1912, %v6059, 0
        %6235 = vmatprep.subr.mxu0 0.0
        %6236 = vmatpush1.msra.mxu0 %v6075
        %6237 = vmatprep.subr.mxu0 0.0
        %6238 = vmatpush1.msra.mxu0 %v6074
        %6239 = vmatprep.subr.mxu0 0.0
        %6240 = vmatpush1.msra.mxu0 %v6073
        %6241 = vmatprep.subr.mxu0 0.0
        %6242 = vmatpush1.msra.mxu0 %v6072
        %6243 = vmatprep.subr.mxu0 0.0
        %6244 = vmatpush1.msra.mxu0 %v6071
        %6245 = vmatprep.subr.mxu0 0.0
        %6246 = vmatpush1.msra.mxu0 %v6070
        %6247 = vmatprep.subr.mxu0 0.0
        %6248 = vmatpush1.msra.mxu0 %v6069
        %6249 = vmatprep.subr.mxu0 0.0
        %6250 = vmatpush1.msra.mxu0 %v6068
        %6251 = vmatprep.subr.mxu0 0.0
        %6252 = vmatpush1.msra.mxu0 %v6067
        %6253 = vmatprep.subr.mxu0 0.0
        %6254 = vmatpush1.msra.mxu0 %v6066
        %6255 = vmatprep.subr.mxu0 0.0
        %6256 = vmatpush1.msra.mxu0 %v6065
        %6257 = vmatprep.subr.mxu0 0.0
        %6258 = vmatpush1.msra.mxu0 %v6064
        %6259 = vmatprep.subr.mxu0 0.0
        %6260 = vmatpush1.msra.mxu0 %v6063
        %6261 = vmatprep.subr.mxu0 0.0
        %6262 = vmatpush1.msra.mxu0 %v6062
        %6263 = vmatprep.subr.mxu0 0.0
        %6264 = vmatpush1.msra.mxu0 %v6061
        %6265 = vmatprep.subr.mxu0 0.0
        %6266 = vmatpush1.msra.mxu0 %v6060
        %6267 = vmatprep.subr.mxu0 0.0
        %6268 = vmatpush2.msra.mxu0 %v6091
        %6269 = vmatprep.subr.mxu0 0.0
        %6270 = vmatpush2.msra.mxu0 %v6090
        %6271 = vmatprep.subr.mxu0 0.0
        %6272 = vmatpush2.msra.mxu0 %v6089
        %6273 = vmatprep.subr.mxu0 0.0
        %6274 = vmatpush2.msra.mxu0 %v6088
        %6275 = vmatprep.subr.mxu0 0.0
        %6276 = vmatpush2.msra.mxu0 %v6087
        %6277 = vmatprep.subr.mxu0 0.0
        %6278 = vmatpush2.msra.mxu0 %v6086
        %6279 = vmatprep.subr.mxu0 0.0
        %6280 = vmatpush2.msra.mxu0 %v6085
        %6281 = vmatprep.subr.mxu0 0.0
        %6282 = vmatpush2.msra.mxu0 %v6084
        %6283 = vmatprep.subr.mxu0 0.0
        %6284 = vmatpush2.msra.mxu0 %v6083
        %6285 = vmatprep.subr.mxu0 0.0
        %6286 = vmatpush2.msra.mxu0 %v6082
        %6287 = vmatprep.subr.mxu0 0.0
        %6288 = vmatpush2.msra.mxu0 %v6081
        %6289 = vmatprep.subr.mxu0 0.0
        %6290 = vmatpush2.msra.mxu0 %v6080
        %6291 = vmatprep.subr.mxu0 0.0
        %6292 = vmatpush2.msra.mxu0 %v6079
        %6293 = vmatprep.subr.mxu0 0.0
        %6294 = vmatpush2.msra.mxu0 %v6078
        %6295 = vmatprep.subr.mxu0 0.0
        %6296 = vmatpush2.msra.mxu0 %v6077
        %6297 = vmatprep.subr.mxu0 0.0
        %6298 = vmatpush2.msra.mxu0 %v6076
        %6299 = vmatprep.mubr.f32.mxu0 %v5901
        %6300 = vmatmul.mubr.f32.gmra.mxu0 %v5900
        %v6301 = vpop.f32.mrf.mxu0
        %v6302 = vadd.f32 %v6137, %v6301
        %v6303 = vpop.f32.mrf.mxu0
        %6304 = vmatprep.mubr.f32.mxu0 %v5906
        %6305 = vmatmul.mubr.f32.gmra.mxu0 %v5905
        %v6306 = vpop.f32.mrf.mxu0
        %v6307 = vadd.f32 %v6137, %v6306
        %v6308 = vpop.f32.mrf.mxu0
        %6309 = vmatprep.mubr.f32.mxu0 %v5911
        %6310 = vmatmul.mubr.f32.gmra.mxu0 %v5910
        %v6311 = vpop.f32.mrf.mxu0
        %v6312 = vadd.f32 %v6137, %v6311
        %v6313 = vpop.f32.mrf.mxu0
        %6314 = vmatprep.mubr.f32.mxu0 %v5916
        %6315 = vmatmul.mubr.f32.gmra.mxu0 %v5915
        %v6316 = vpop.f32.mrf.mxu0
        %v6317 = vadd.f32 %v6137, %v6316
        %v6318 = vpop.f32.mrf.mxu0
        %6319 = vmatprep.mubr.f32.mxu0 %v5921
        %6320 = vmatmul.mubr.f32.gmra.mxu0 %v5920
        %v6321 = vpop.f32.mrf.mxu0
        %v6322 = vadd.f32 %v6137, %v6321
        %v6323 = vpop.f32.mrf.mxu0
        %6324 = vmatprep.mubr.f32.mxu0 %v5926
        %6325 = vmatmul.mubr.f32.gmra.mxu0 %v5925
        %v6326 = vpop.f32.mrf.mxu0
        %v6327 = vadd.f32 %v6137, %v6326
        %v6328 = vpop.f32.mrf.mxu0
        %6329 = vmatprep.mubr.f32.mxu0 %v5931
        %6330 = vmatmul.mubr.f32.gmra.mxu0 %v5930
        %v6331 = vpop.f32.mrf.mxu0
        %v6332 = vadd.f32 %v6137, %v6331
        %v6333 = vpop.f32.mrf.mxu0
        %6334 = vmatprep.mubr.f32.mxu0 %v5936
        %6335 = vmatmul.mubr.f32.gmra.mxu0 %v5935
        %v6336 = vpop.f32.mrf.mxu0
        %v6337 = vadd.f32 %v6137, %v6336
        %v6338 = vpop.f32.mrf.mxu0
        %6339 = vmatprep.mubr.f32.mxu0 %v5941
        %6340 = vmatmul.mubr.f32.gmra.mxu0 %v5940
        %v6341 = vpop.f32.mrf.mxu0
        %v6342 = vadd.f32 %v6137, %v6341
        %v6343 = vpop.f32.mrf.mxu0
        %6344 = vmatprep.mubr.f32.mxu0 %v5946
        %6345 = vmatmul.mubr.f32.gmra.mxu0 %v5945
        %v6346 = vpop.f32.mrf.mxu0
        %v6347 = vadd.f32 %v6137, %v6346
        %v6348 = vpop.f32.mrf.mxu0
        %6349 = vmatprep.mubr.f32.mxu0 %v5951
        %6350 = vmatmul.mubr.f32.gmra.mxu0 %v5950
        %v6351 = vpop.f32.mrf.mxu0
        %v6352 = vadd.f32 %v6137, %v6351
        %v6353 = vpop.f32.mrf.mxu0
        %6354 = vmatprep.mubr.f32.mxu0 %v5956
        %6355 = vmatmul.mubr.f32.gmra.mxu0 %v5955
        %v6356 = vpop.f32.mrf.mxu0
        %v6357 = vadd.f32 %v6137, %v6356
        %v6358 = vpop.f32.mrf.mxu0
        %6359 = vmatprep.mubr.f32.mxu0 %v5961
        %6360 = vmatmul.mubr.f32.gmra.mxu0 %v5960
        %v6361 = vpop.f32.mrf.mxu0
        %v6362 = vadd.f32 %v6137, %v6361
        %v6363 = vpop.f32.mrf.mxu0
        %6364 = vmatprep.mubr.f32.mxu0 %v5966
        %6365 = vmatmul.mubr.f32.gmra.mxu0 %v5965
        %v6366 = vpop.f32.mrf.mxu0
        %v6367 = vadd.f32 %v6137, %v6366
        %v6368 = vpop.f32.mrf.mxu0
        %6369 = vmatprep.mubr.f32.mxu0 %v5971
        %6370 = vmatmul.mubr.f32.gmra.mxu0 %v5970
        %v6371 = vpop.f32.mrf.mxu0
        %v6372 = vadd.f32 %v6137, %v6371
        %v6373 = vpop.f32.mrf.mxu0
        %6374 = vmatprep.mubr.f32.mxu0 %v5976
        %6375 = vmatmul.mubr.f32.gmra.mxu0 %v5975
        %v6376 = vpop.f32.mrf.mxu0
        %v6377 = vadd.f32 %v6137, %v6376
        %v6378 = vpop.f32.mrf.mxu0
        %6379 = vmatprep.mubr.f32.mxu0 %v5981
        %6380 = vmatmul.mubr.f32.gmra.mxu0 %v5980
        %v6381 = vpop.f32.mrf.mxu0
        %v6382 = vadd.f32 %v6137, %v6381
        %v6383 = vpop.f32.mrf.mxu0
        %6384 = vmatprep.mubr.f32.mxu0 %v5986
        %6385 = vmatmul.mubr.f32.gmra.mxu0 %v5985
        %v6386 = vpop.f32.mrf.mxu0
        %v6387 = vadd.f32 %v6137, %v6386
        %v6388 = vpop.f32.mrf.mxu0
        %6389 = vmatprep.mubr.f32.mxu0 %v5991
        %6390 = vmatmul.mubr.f32.gmra.mxu0 %v5990
        %v6391 = vpop.f32.mrf.mxu0
        %v6392 = vadd.f32 %v6137, %v6391
        %v6393 = vpop.f32.mrf.mxu0
        %6394 = vmatprep.mubr.f32.mxu0 %v5996
        %6395 = vmatmul.mubr.f32.gmra.mxu0 %v5995
        %v6396 = vpop.f32.mrf.mxu0
        %v6397 = vadd.f32 %v6137, %v6396
        %v6398 = vpop.f32.mrf.mxu0
        %6399 = vmatprep.mubr.f32.mxu0 %v6001
        %6400 = vmatmul.mubr.f32.gmra.mxu0 %v6000
        %v6401 = vpop.f32.mrf.mxu0
        %v6402 = vadd.f32 %v6137, %v6401
        %v6403 = vpop.f32.mrf.mxu0
        %6404 = vmatprep.mubr.f32.mxu0 %v6006
        %6405 = vmatmul.mubr.f32.gmra.mxu0 %v6005
        %v6406 = vpop.f32.mrf.mxu0
        %v6407 = vadd.f32 %v6137, %v6406
        %v6408 = vpop.f32.mrf.mxu0
        %6409 = vmatprep.mubr.f32.mxu0 %v6011
        %6410 = vmatmul.mubr.f32.gmra.mxu0 %v6010
        %v6411 = vpop.f32.mrf.mxu0
        %v6412 = vadd.f32 %v6137, %v6411
        %v6413 = vpop.f32.mrf.mxu0
        %6414 = vmatprep.mubr.f32.mxu0 %v6016
        %6415 = vmatmul.mubr.f32.gmra.mxu0 %v6015
        %v6416 = vpop.f32.mrf.mxu0
        %v6417 = vadd.f32 %v6137, %v6416
        %v6418 = vpop.f32.mrf.mxu0
        %6419 = vmatprep.mubr.f32.mxu0 %v6021
        %6420 = vmatmul.mubr.f32.gmra.mxu0 %v6020
        %v6421 = vpop.f32.mrf.mxu0
        %v6422 = vadd.f32 %v6137, %v6421
        %v6423 = vpop.f32.mrf.mxu0
        %6424 = vmatprep.mubr.f32.mxu0 %v6026
        %6425 = vmatmul.mubr.f32.gmra.mxu0 %v6025
        %v6426 = vpop.f32.mrf.mxu0
        %v6427 = vadd.f32 %v6137, %v6426
        %v6428 = vpop.f32.mrf.mxu0
        %6429 = vmatprep.mubr.f32.mxu0 %v6031
        %6430 = vmatmul.mubr.f32.gmra.mxu0 %v6030
        %v6431 = vpop.f32.mrf.mxu0
        %v6432 = vadd.f32 %v6137, %v6431
        %v6433 = vpop.f32.mrf.mxu0
        %6434 = vmatprep.mubr.f32.mxu0 %v6036
        %6435 = vmatmul.mubr.f32.gmra.mxu0 %v6035
        %v6436 = vpop.f32.mrf.mxu0
        %v6437 = vadd.f32 %v6137, %v6436
        %v6438 = vpop.f32.mrf.mxu0
        %6439 = vmatprep.mubr.f32.mxu0 %v6041
        %6440 = vmatmul.mubr.f32.gmra.mxu0 %v6040
        %v6441 = vpop.f32.mrf.mxu0
        %v6442 = vadd.f32 %v6137, %v6441
        %v6443 = vpop.f32.mrf.mxu0
        %6444 = vmatprep.mubr.f32.mxu0 %v6046
        %6445 = vmatmul.mubr.f32.gmra.mxu0 %v6045
        %v6446 = vpop.f32.mrf.mxu0
        %v6447 = vadd.f32 %v6137, %v6446
        %v6448 = vpop.f32.mrf.mxu0
        %6449 = vmatprep.mubr.f32.mxu0 %v6051
        %6450 = vmatmul.mubr.f32.gmra.mxu0 %v6050
        %v6451 = vpop.f32.mrf.mxu0
        %v6452 = vadd.f32 %v6137, %v6451
        %v6453 = vpop.f32.mrf.mxu0
        %6454 = vmatprep.mubr.f32.mxu0 %v6056
        %6455 = vmatmul.mubr.f32.gmra.mxu0 %v6055
        %v6456 = vpop.f32.mrf.mxu0
        %v6457 = vadd.f32 %v6137, %v6456
        %v6458 = vpop.f32.mrf.mxu0
        %6459 = vdwg.mxu0
        %6460 = vmatprep.subr.mxu0 0.0
        %6461 = vmatpush1.msra.mxu0 %v6107
        %6462 = vmatprep.subr.mxu0 0.0
        %6463 = vmatpush1.msra.mxu0 %v6106
        %6464 = vmatprep.subr.mxu0 0.0
        %6465 = vmatpush1.msra.mxu0 %v6105
        %6466 = vmatprep.subr.mxu0 0.0
        %6467 = vmatpush1.msra.mxu0 %v6104
        %6468 = vmatprep.subr.mxu0 0.0
        %6469 = vmatpush1.msra.mxu0 %v6103
        %6470 = vmatprep.subr.mxu0 0.0
        %6471 = vmatpush1.msra.mxu0 %v6102
        %6472 = vmatprep.subr.mxu0 0.0
        %6473 = vmatpush1.msra.mxu0 %v6101
        %6474 = vmatprep.subr.mxu0 0.0
        %6475 = vmatpush1.msra.mxu0 %v6100
        %6476 = vmatprep.subr.mxu0 0.0
        %6477 = vmatpush1.msra.mxu0 %v6099
        %6478 = vmatprep.subr.mxu0 0.0
        %6479 = vmatpush1.msra.mxu0 %v6098
        %6480 = vmatprep.subr.mxu0 0.0
        %6481 = vmatpush1.msra.mxu0 %v6097
        %6482 = vmatprep.subr.mxu0 0.0
        %6483 = vmatpush1.msra.mxu0 %v6096
        %6484 = vmatprep.subr.mxu0 0.0
        %6485 = vmatpush1.msra.mxu0 %v6095
        %6486 = vmatprep.subr.mxu0 0.0
        %6487 = vmatpush1.msra.mxu0 %v6094
        %6488 = vmatprep.subr.mxu0 0.0
        %6489 = vmatpush1.msra.mxu0 %v6093
        %6490 = vmatprep.subr.mxu0 0.0
        %6491 = vmatpush1.msra.mxu0 %v6092
        %6492 = vmatprep.subr.mxu0 0.0
        %6493 = vmatpush2.msra.mxu0 %v6123
        %6494 = vmatprep.subr.mxu0 0.0
        %6495 = vmatpush2.msra.mxu0 %v6122
        %6496 = vmatprep.subr.mxu0 0.0
        %6497 = vmatpush2.msra.mxu0 %v6121
        %6498 = vmatprep.subr.mxu0 0.0
        %6499 = vmatpush2.msra.mxu0 %v6120
        %6500 = vmatprep.subr.mxu0 0.0
        %6501 = vmatpush2.msra.mxu0 %v6119
        %6502 = vmatprep.subr.mxu0 0.0
        %6503 = vmatpush2.msra.mxu0 %v6118
        %6504 = vmatprep.subr.mxu0 0.0
        %6505 = vmatpush2.msra.mxu0 %v6117
        %6506 = vmatprep.subr.mxu0 0.0
        %6507 = vmatpush2.msra.mxu0 %v6116
        %6508 = vmatprep.subr.mxu0 0.0
        %6509 = vmatpush2.msra.mxu0 %v6115
        %6510 = vmatprep.subr.mxu0 0.0
        %6511 = vmatpush2.msra.mxu0 %v6114
        %6512 = vmatprep.subr.mxu0 0.0
        %6513 = vmatpush2.msra.mxu0 %v6113
        %6514 = vmatprep.subr.mxu0 0.0
        %6515 = vmatpush2.msra.mxu0 %v6112
        %6516 = vmatprep.subr.mxu0 0.0
        %6517 = vmatpush2.msra.mxu0 %v6111
        %6518 = vmatprep.subr.mxu0 0.0
        %6519 = vmatpush2.msra.mxu0 %v6110
        %6520 = vmatprep.subr.mxu0 0.0
        %6521 = vmatpush2.msra.mxu0 %v6109
        %6522 = vmatprep.subr.mxu0 0.0
        %6523 = vmatpush2.msra.mxu0 %v6108
        %6524 = vmatprep.mubr.f32.mxu0 %v5903
        %6525 = vmatmul.mubr.f32.gmra.mxu0 %v5902
        %v6526 = vpop.f32.mrf.mxu0
        %v6527 = vadd.f32 %v6302, %v6526
        %v6528 = vpop.f32.mrf.mxu0
        %6529 = vmatprep.mubr.f32.mxu0 %v5908
        %6530 = vmatmul.mubr.f32.gmra.mxu0 %v5907
        %v6531 = vpop.f32.mrf.mxu0
        %v6532 = vadd.f32 %v6307, %v6531
        %v6533 = vpop.f32.mrf.mxu0
        %6534 = vmatprep.mubr.f32.mxu0 %v5913
        %6535 = vmatmul.mubr.f32.gmra.mxu0 %v5912
        %v6536 = vpop.f32.mrf.mxu0
        %v6537 = vadd.f32 %v6312, %v6536
        %v6538 = vpop.f32.mrf.mxu0
        %6539 = vmatprep.mubr.f32.mxu0 %v5918
        %6540 = vmatmul.mubr.f32.gmra.mxu0 %v5917
        %v6541 = vpop.f32.mrf.mxu0
        %v6542 = vadd.f32 %v6317, %v6541
        %v6543 = vpop.f32.mrf.mxu0
        %6544 = vmatprep.mubr.f32.mxu0 %v5923
        %6545 = vmatmul.mubr.f32.gmra.mxu0 %v5922
        %v6546 = vpop.f32.mrf.mxu0
        %v6547 = vadd.f32 %v6322, %v6546
        %v6548 = vpop.f32.mrf.mxu0
        %6549 = vmatprep.mubr.f32.mxu0 %v5928
        %6550 = vmatmul.mubr.f32.gmra.mxu0 %v5927
        %v6551 = vpop.f32.mrf.mxu0
        %v6552 = vadd.f32 %v6327, %v6551
        %v6553 = vpop.f32.mrf.mxu0
        %6554 = vmatprep.mubr.f32.mxu0 %v5933
        %6555 = vmatmul.mubr.f32.gmra.mxu0 %v5932
        %v6556 = vpop.f32.mrf.mxu0
        %v6557 = vadd.f32 %v6332, %v6556
        %v6558 = vpop.f32.mrf.mxu0
        %6559 = vmatprep.mubr.f32.mxu0 %v5938
        %6560 = vmatmul.mubr.f32.gmra.mxu0 %v5937
        %v6561 = vpop.f32.mrf.mxu0
        %v6562 = vadd.f32 %v6337, %v6561
        %v6563 = vpop.f32.mrf.mxu0
        %6564 = vmatprep.mubr.f32.mxu0 %v5943
        %6565 = vmatmul.mubr.f32.gmra.mxu0 %v5942
        %v6566 = vpop.f32.mrf.mxu0
        %v6567 = vadd.f32 %v6342, %v6566
        %v6568 = vpop.f32.mrf.mxu0
        %6569 = vmatprep.mubr.f32.mxu0 %v5948
        %6570 = vmatmul.mubr.f32.gmra.mxu0 %v5947
        %v6571 = vpop.f32.mrf.mxu0
        %v6572 = vadd.f32 %v6347, %v6571
        %v6573 = vpop.f32.mrf.mxu0
        %6574 = vmatprep.mubr.f32.mxu0 %v5953
        %6575 = vmatmul.mubr.f32.gmra.mxu0 %v5952
        %v6576 = vpop.f32.mrf.mxu0
        %v6577 = vadd.f32 %v6352, %v6576
        %v6578 = vpop.f32.mrf.mxu0
        %6579 = vmatprep.mubr.f32.mxu0 %v5958
        %6580 = vmatmul.mubr.f32.gmra.mxu0 %v5957
        %v6581 = vpop.f32.mrf.mxu0
        %v6582 = vadd.f32 %v6357, %v6581
        %v6583 = vpop.f32.mrf.mxu0
        %6584 = vmatprep.mubr.f32.mxu0 %v5963
        %6585 = vmatmul.mubr.f32.gmra.mxu0 %v5962
        %v6586 = vpop.f32.mrf.mxu0
        %v6587 = vadd.f32 %v6362, %v6586
        %v6588 = vpop.f32.mrf.mxu0
        %6589 = vmatprep.mubr.f32.mxu0 %v5968
        %6590 = vmatmul.mubr.f32.gmra.mxu0 %v5967
        %v6591 = vpop.f32.mrf.mxu0
        %v6592 = vadd.f32 %v6367, %v6591
        %v6593 = vpop.f32.mrf.mxu0
        %6594 = vmatprep.mubr.f32.mxu0 %v5973
        %6595 = vmatmul.mubr.f32.gmra.mxu0 %v5972
        %v6596 = vpop.f32.mrf.mxu0
        %v6597 = vadd.f32 %v6372, %v6596
        %v6598 = vpop.f32.mrf.mxu0
        %6599 = vmatprep.mubr.f32.mxu0 %v5978
        %6600 = vmatmul.mubr.f32.gmra.mxu0 %v5977
        %v6601 = vpop.f32.mrf.mxu0
        %v6602 = vadd.f32 %v6377, %v6601
        %v6603 = vpop.f32.mrf.mxu0
        %6604 = vmatprep.mubr.f32.mxu0 %v5983
        %6605 = vmatmul.mubr.f32.gmra.mxu0 %v5982
        %v6606 = vpop.f32.mrf.mxu0
        %v6607 = vadd.f32 %v6382, %v6606
        %v6608 = vpop.f32.mrf.mxu0
        %6609 = vmatprep.mubr.f32.mxu0 %v5988
        %6610 = vmatmul.mubr.f32.gmra.mxu0 %v5987
        %v6611 = vpop.f32.mrf.mxu0
        %v6612 = vadd.f32 %v6387, %v6611
        %v6613 = vpop.f32.mrf.mxu0
        %6614 = vmatprep.mubr.f32.mxu0 %v5993
        %6615 = vmatmul.mubr.f32.gmra.mxu0 %v5992
        %v6616 = vpop.f32.mrf.mxu0
        %v6617 = vadd.f32 %v6392, %v6616
        %v6618 = vpop.f32.mrf.mxu0
        %6619 = vmatprep.mubr.f32.mxu0 %v5998
        %6620 = vmatmul.mubr.f32.gmra.mxu0 %v5997
        %v6621 = vpop.f32.mrf.mxu0
        %v6622 = vadd.f32 %v6397, %v6621
        %v6623 = vpop.f32.mrf.mxu0
        %6624 = vmatprep.mubr.f32.mxu0 %v6003
        %6625 = vmatmul.mubr.f32.gmra.mxu0 %v6002
        %v6626 = vpop.f32.mrf.mxu0
        %v6627 = vadd.f32 %v6402, %v6626
        %v6628 = vpop.f32.mrf.mxu0
        %6629 = vmatprep.mubr.f32.mxu0 %v6008
        %6630 = vmatmul.mubr.f32.gmra.mxu0 %v6007
        %v6631 = vpop.f32.mrf.mxu0
        %v6632 = vadd.f32 %v6407, %v6631
        %v6633 = vpop.f32.mrf.mxu0
        %6634 = vmatprep.mubr.f32.mxu0 %v6013
        %6635 = vmatmul.mubr.f32.gmra.mxu0 %v6012
        %v6636 = vpop.f32.mrf.mxu0
        %v6637 = vadd.f32 %v6412, %v6636
        %v6638 = vpop.f32.mrf.mxu0
        %6639 = vmatprep.mubr.f32.mxu0 %v6018
        %6640 = vmatmul.mubr.f32.gmra.mxu0 %v6017
        %v6641 = vpop.f32.mrf.mxu0
        %v6642 = vadd.f32 %v6417, %v6641
        %v6643 = vpop.f32.mrf.mxu0
        %6644 = vmatprep.mubr.f32.mxu0 %v6023
        %6645 = vmatmul.mubr.f32.gmra.mxu0 %v6022
        %v6646 = vpop.f32.mrf.mxu0
        %v6647 = vadd.f32 %v6422, %v6646
        %v6648 = vpop.f32.mrf.mxu0
        %6649 = vmatprep.mubr.f32.mxu0 %v6028
        %6650 = vmatmul.mubr.f32.gmra.mxu0 %v6027
        %v6651 = vpop.f32.mrf.mxu0
        %v6652 = vadd.f32 %v6427, %v6651
        %v6653 = vpop.f32.mrf.mxu0
        %6654 = vmatprep.mubr.f32.mxu0 %v6033
        %6655 = vmatmul.mubr.f32.gmra.mxu0 %v6032
        %v6656 = vpop.f32.mrf.mxu0
        %v6657 = vadd.f32 %v6432, %v6656
        %v6658 = vpop.f32.mrf.mxu0
        %6659 = vmatprep.mubr.f32.mxu0 %v6038
        %6660 = vmatmul.mubr.f32.gmra.mxu0 %v6037
        %v6661 = vpop.f32.mrf.mxu0
        %v6662 = vadd.f32 %v6437, %v6661
        %v6663 = vpop.f32.mrf.mxu0
        %6664 = vmatprep.mubr.f32.mxu0 %v6043
        %6665 = vmatmul.mubr.f32.gmra.mxu0 %v6042
        %v6666 = vpop.f32.mrf.mxu0
        %v6667 = vadd.f32 %v6442, %v6666
        %v6668 = vpop.f32.mrf.mxu0
        %6669 = vmatprep.mubr.f32.mxu0 %v6048
        %6670 = vmatmul.mubr.f32.gmra.mxu0 %v6047
        %v6671 = vpop.f32.mrf.mxu0
        %v6672 = vadd.f32 %v6447, %v6671
        %v6673 = vpop.f32.mrf.mxu0
        %6674 = vmatprep.mubr.f32.mxu0 %v6053
        %6675 = vmatmul.mubr.f32.gmra.mxu0 %v6052
        %v6676 = vpop.f32.mrf.mxu0
        %v6677 = vadd.f32 %v6452, %v6676
        %v6678 = vpop.f32.mrf.mxu0
        %6679 = vmatprep.mubr.f32.mxu0 %v6058
        %6680 = vmatmul.mubr.f32.gmra.mxu0 %v6057
        %v6681 = vpop.f32.mrf.mxu0
        %v6682 = vadd.f32 %v6457, %v6681
        %v6683 = vpop.f32.mrf.mxu0
        %6684 = vdwg.mxu0
        %6685 = vmatprep.subr.mxu0 0.0
        %6686 = vmatpush1.msra.mxu0 0.0
        %6687 = vmatprep.subr.mxu0 0.0
        %6688 = vmatpush1.msra.mxu0 0.0
        %6689 = vmatprep.subr.mxu0 0.0
        %6690 = vmatpush1.msra.mxu0 0.0
        %6691 = vmatprep.subr.mxu0 0.0
        %6692 = vmatpush1.msra.mxu0 0.0
        %6693 = vmatprep.subr.mxu0 0.0
        %6694 = vmatpush1.msra.mxu0 0.0
        %6695 = vmatprep.subr.mxu0 0.0
        %6696 = vmatpush1.msra.mxu0 0.0
        %6697 = vmatprep.subr.mxu0 0.0
        %6698 = vmatpush1.msra.mxu0 0.0
        %6699 = vmatprep.subr.mxu0 0.0
        %6700 = vmatpush1.msra.mxu0 0.0
        %6701 = vmatprep.subr.mxu0 0.0
        %6702 = vmatpush1.msra.mxu0 %v6131
        %6703 = vmatprep.subr.mxu0 0.0
        %6704 = vmatpush1.msra.mxu0 %v6130
        %6705 = vmatprep.subr.mxu0 0.0
        %6706 = vmatpush1.msra.mxu0 %v6129
        %6707 = vmatprep.subr.mxu0 0.0
        %6708 = vmatpush1.msra.mxu0 %v6128
        %6709 = vmatprep.subr.mxu0 0.0
        %6710 = vmatpush1.msra.mxu0 %v6127
        %6711 = vmatprep.subr.mxu0 0.0
        %6712 = vmatpush1.msra.mxu0 %v6126
        %6713 = vmatprep.subr.mxu0 0.0
        %6714 = vmatpush1.msra.mxu0 %v6125
        %6715 = vmatprep.subr.mxu0 0.0
        %6716 = vmatpush1.msra.mxu0 %v6124
        %6717 = vmatprep.subr.mxu0 0.0
        %6718 = vmatpush2.msra.mxu0 0.0
        %6719 = vmatprep.subr.mxu0 0.0
        %6720 = vmatpush2.msra.mxu0 0.0
        %6721 = vmatprep.subr.mxu0 0.0
        %6722 = vmatpush2.msra.mxu0 0.0
        %6723 = vmatprep.subr.mxu0 0.0
        %6724 = vmatpush2.msra.mxu0 0.0
        %6725 = vmatprep.subr.mxu0 0.0
        %6726 = vmatpush2.msra.mxu0 0.0
        %6727 = vmatprep.subr.mxu0 0.0
        %6728 = vmatpush2.msra.mxu0 0.0
        %6729 = vmatprep.subr.mxu0 0.0
        %6730 = vmatpush2.msra.mxu0 0.0
        %6731 = vmatprep.subr.mxu0 0.0
        %6732 = vmatpush2.msra.mxu0 0.0
        %6733 = vmatprep.subr.mxu0 0.0
        %6734 = vmatpush2.msra.mxu0 0.0
        %6735 = vmatprep.subr.mxu0 0.0
        %6736 = vmatpush2.msra.mxu0 0.0
        %6737 = vmatprep.subr.mxu0 0.0
        %6738 = vmatpush2.msra.mxu0 0.0
        %6739 = vmatprep.subr.mxu0 0.0
        %6740 = vmatpush2.msra.mxu0 0.0
        %6741 = vmatprep.subr.mxu0 0.0
        %6742 = vmatpush2.msra.mxu0 0.0
        %6743 = vmatprep.subr.mxu0 0.0
        %6744 = vmatpush2.msra.mxu0 0.0
        %6745 = vmatprep.subr.mxu0 0.0
        %6746 = vmatpush2.msra.mxu0 0.0
        %6747 = vmatprep.subr.mxu0 0.0
        %6748 = vmatpush2.msra.mxu0 0.0
        %6749 = vmatprep.mubr.f32.mxu0 0.0
        %6750 = vmatmul.mubr.f32.gmra.mxu0 %v6140
        %v6751 = vpop.f32.mrf.mxu0
        %v6752 = vadd.f32 %v6527, %v6751
        %v6753 = vpop.f32.mrf.mxu0
        %6754 = vmatprep.mubr.f32.mxu0 0.0
        %6755 = vmatmul.mubr.f32.gmra.mxu0 %v6143
        %v6756 = vpop.f32.mrf.mxu0
        %v6757 = vadd.f32 %v6532, %v6756
        %v6758 = vpop.f32.mrf.mxu0
        %6759 = vmatprep.mubr.f32.mxu0 0.0
        %6760 = vmatmul.mubr.f32.gmra.mxu0 %v6146
        %v6761 = vpop.f32.mrf.mxu0
        %v6762 = vadd.f32 %v6537, %v6761
        %v6763 = vpop.f32.mrf.mxu0
        %6764 = vmatprep.mubr.f32.mxu0 0.0
        %6765 = vmatmul.mubr.f32.gmra.mxu0 %v6149
        %v6766 = vpop.f32.mrf.mxu0
        %v6767 = vadd.f32 %v6542, %v6766
        %v6768 = vpop.f32.mrf.mxu0
        %6769 = vmatprep.mubr.f32.mxu0 0.0
        %6770 = vmatmul.mubr.f32.gmra.mxu0 %v6152
        %v6771 = vpop.f32.mrf.mxu0
        %v6772 = vadd.f32 %v6547, %v6771
        %v6773 = vpop.f32.mrf.mxu0
        %6774 = vmatprep.mubr.f32.mxu0 0.0
        %6775 = vmatmul.mubr.f32.gmra.mxu0 %v6155
        %v6776 = vpop.f32.mrf.mxu0
        %v6777 = vadd.f32 %v6552, %v6776
        %v6778 = vpop.f32.mrf.mxu0
        %6779 = vmatprep.mubr.f32.mxu0 0.0
        %6780 = vmatmul.mubr.f32.gmra.mxu0 %v6158
        %v6781 = vpop.f32.mrf.mxu0
        %v6782 = vadd.f32 %v6557, %v6781
        %v6783 = vpop.f32.mrf.mxu0
        %6784 = vmatprep.mubr.f32.mxu0 0.0
        %6785 = vmatmul.mubr.f32.gmra.mxu0 %v6161
        %v6786 = vpop.f32.mrf.mxu0
        %v6787 = vadd.f32 %v6562, %v6786
        %v6788 = vpop.f32.mrf.mxu0
        %6789 = vmatprep.mubr.f32.mxu0 0.0
        %6790 = vmatmul.mubr.f32.gmra.mxu0 %v6164
        %v6791 = vpop.f32.mrf.mxu0
        %v6792 = vadd.f32 %v6567, %v6791
        %v6793 = vpop.f32.mrf.mxu0
        %6794 = vmatprep.mubr.f32.mxu0 0.0
        %6795 = vmatmul.mubr.f32.gmra.mxu0 %v6167
        %v6796 = vpop.f32.mrf.mxu0
        %v6797 = vadd.f32 %v6572, %v6796
        %v6798 = vpop.f32.mrf.mxu0
        %6799 = vmatprep.mubr.f32.mxu0 0.0
        %6800 = vmatmul.mubr.f32.gmra.mxu0 %v6170
        %v6801 = vpop.f32.mrf.mxu0
        %v6802 = vadd.f32 %v6577, %v6801
        %v6803 = vpop.f32.mrf.mxu0
        %6804 = vmatprep.mubr.f32.mxu0 0.0
        %6805 = vmatmul.mubr.f32.gmra.mxu0 %v6173
        %v6806 = vpop.f32.mrf.mxu0
        %v6807 = vadd.f32 %v6582, %v6806
        %v6808 = vpop.f32.mrf.mxu0
        %6809 = vmatprep.mubr.f32.mxu0 0.0
        %6810 = vmatmul.mubr.f32.gmra.mxu0 %v6176
        %v6811 = vpop.f32.mrf.mxu0
        %v6812 = vadd.f32 %v6587, %v6811
        %v6813 = vpop.f32.mrf.mxu0
        %6814 = vmatprep.mubr.f32.mxu0 0.0
        %6815 = vmatmul.mubr.f32.gmra.mxu0 %v6179
        %v6816 = vpop.f32.mrf.mxu0
        %v6817 = vadd.f32 %v6592, %v6816
        %v6818 = vpop.f32.mrf.mxu0
        %6819 = vmatprep.mubr.f32.mxu0 0.0
        %6820 = vmatmul.mubr.f32.gmra.mxu0 %v6182
        %v6821 = vpop.f32.mrf.mxu0
        %v6822 = vadd.f32 %v6597, %v6821
        %v6823 = vpop.f32.mrf.mxu0
        %6824 = vmatprep.mubr.f32.mxu0 0.0
        %6825 = vmatmul.mubr.f32.gmra.mxu0 %v6185
        %v6826 = vpop.f32.mrf.mxu0
        %v6827 = vadd.f32 %v6602, %v6826
        %v6828 = vpop.f32.mrf.mxu0
        %6829 = vmatprep.mubr.f32.mxu0 0.0
        %6830 = vmatmul.mubr.f32.gmra.mxu0 %v6188
        %v6831 = vpop.f32.mrf.mxu0
        %v6832 = vadd.f32 %v6607, %v6831
        %v6833 = vpop.f32.mrf.mxu0
        %6834 = vmatprep.mubr.f32.mxu0 0.0
        %6835 = vmatmul.mubr.f32.gmra.mxu0 %v6191
        %v6836 = vpop.f32.mrf.mxu0
        %v6837 = vadd.f32 %v6612, %v6836
        %v6838 = vpop.f32.mrf.mxu0
        %6839 = vmatprep.mubr.f32.mxu0 0.0
        %6840 = vmatmul.mubr.f32.gmra.mxu0 %v6194
        %v6841 = vpop.f32.mrf.mxu0
        %v6842 = vadd.f32 %v6617, %v6841
        %v6843 = vpop.f32.mrf.mxu0
        %6844 = vmatprep.mubr.f32.mxu0 0.0
        %6845 = vmatmul.mubr.f32.gmra.mxu0 %v6197
        %v6846 = vpop.f32.mrf.mxu0
        %v6847 = vadd.f32 %v6622, %v6846
        %v6848 = vpop.f32.mrf.mxu0
        %6849 = vmatprep.mubr.f32.mxu0 0.0
        %6850 = vmatmul.mubr.f32.gmra.mxu0 %v6200
        %v6851 = vpop.f32.mrf.mxu0
        %v6852 = vadd.f32 %v6627, %v6851
        %v6853 = vpop.f32.mrf.mxu0
        %6854 = vmatprep.mubr.f32.mxu0 0.0
        %6855 = vmatmul.mubr.f32.gmra.mxu0 %v6203
        %v6856 = vpop.f32.mrf.mxu0
        %v6857 = vadd.f32 %v6632, %v6856
        %v6858 = vpop.f32.mrf.mxu0
        %6859 = vmatprep.mubr.f32.mxu0 0.0
        %6860 = vmatmul.mubr.f32.gmra.mxu0 %v6206
        %v6861 = vpop.f32.mrf.mxu0
        %v6862 = vadd.f32 %v6637, %v6861
        %v6863 = vpop.f32.mrf.mxu0
        %6864 = vmatprep.mubr.f32.mxu0 0.0
        %6865 = vmatmul.mubr.f32.gmra.mxu0 %v6209
        %v6866 = vpop.f32.mrf.mxu0
        %v6867 = vadd.f32 %v6642, %v6866
        %v6868 = vpop.f32.mrf.mxu0
        %6869 = vmatprep.mubr.f32.mxu0 0.0
        %6870 = vmatmul.mubr.f32.gmra.mxu0 %v6212
        %v6871 = vpop.f32.mrf.mxu0
        %v6872 = vadd.f32 %v6647, %v6871
        %v6873 = vpop.f32.mrf.mxu0
        %6874 = vmatprep.mubr.f32.mxu0 0.0
        %6875 = vmatmul.mubr.f32.gmra.mxu0 %v6215
        %v6876 = vpop.f32.mrf.mxu0
        %v6877 = vadd.f32 %v6652, %v6876
        %v6878 = vpop.f32.mrf.mxu0
        %6879 = vmatprep.mubr.f32.mxu0 0.0
        %6880 = vmatmul.mubr.f32.gmra.mxu0 %v6218
        %v6881 = vpop.f32.mrf.mxu0
        %v6882 = vadd.f32 %v6657, %v6881
        %v6883 = vpop.f32.mrf.mxu0
        %6884 = vmatprep.mubr.f32.mxu0 0.0
        %6885 = vmatmul.mubr.f32.gmra.mxu0 %v6221
        %v6886 = vpop.f32.mrf.mxu0
        %v6887 = vadd.f32 %v6662, %v6886
        %v6888 = vpop.f32.mrf.mxu0
        %6889 = vmatprep.mubr.f32.mxu0 0.0
        %6890 = vmatmul.mubr.f32.gmra.mxu0 %v6224
        %v6891 = vpop.f32.mrf.mxu0
        %v6892 = vadd.f32 %v6667, %v6891
        %v6893 = vpop.f32.mrf.mxu0
        %6894 = vmatprep.mubr.f32.mxu0 0.0
        %6895 = vmatmul.mubr.f32.gmra.mxu0 %v6227
        %v6896 = vpop.f32.mrf.mxu0
        %v6897 = vadd.f32 %v6672, %v6896
        %v6898 = vpop.f32.mrf.mxu0
        %6899 = vmatprep.mubr.f32.mxu0 0.0
        %6900 = vmatmul.mubr.f32.gmra.mxu0 %v6230
        %v6901 = vpop.f32.mrf.mxu0
        %v6902 = vadd.f32 %v6677, %v6901
        %v6903 = vpop.f32.mrf.mxu0
        %6904 = vmatprep.mubr.f32.mxu0 0.0
        %6905 = vmatmul.mubr.f32.gmra.mxu0 %v6233
        %v6906 = vpop.f32.mrf.mxu0
        %v6907 = vadd.f32 %v6682, %v6906
        %v6908 = vpop.f32.mrf.mxu0
        %6909 = vdwg.mxu0
        %v6910 = vsub.f32 0.0, %v6752
        %v6911 = vsub.f32 0.0, %v6757
        %v6912 = vsub.f32 0.0, %v6762
        %v6913 = vsub.f32 0.0, %v6767
        %v6914 = vsub.f32 0.0, %v6772
        %v6915 = vsub.f32 0.0, %v6777
        %v6916 = vsub.f32 0.0, %v6782
        %v6917 = vsub.f32 0.0, %v6787
        %v6918 = vsub.f32 0.0, %v6792
        %v6919 = vsub.f32 0.0, %v6797
        %v6920 = vsub.f32 0.0, %v6802
        %v6921 = vsub.f32 0.0, %v6807
        %v6922 = vsub.f32 0.0, %v6812
        %v6923 = vsub.f32 0.0, %v6817
        %v6924 = vsub.f32 0.0, %v6822
        %v6925 = vsub.f32 0.0, %v6827
        %v6926 = vsub.f32 0.0, %v6832
        %v6927 = vsub.f32 0.0, %v6837
        %v6928 = vsub.f32 0.0, %v6842
        %v6929 = vsub.f32 0.0, %v6847
        %v6930 = vsub.f32 0.0, %v6852
        %v6931 = vsub.f32 0.0, %v6857
        %v6932 = vsub.f32 0.0, %v6862
        %v6933 = vsub.f32 0.0, %v6867
        %v6934 = vsub.f32 0.0, %v6872
        %v6935 = vsub.f32 0.0, %v6877
        %v6936 = vsub.f32 0.0, %v6882
        %v6937 = vsub.f32 0.0, %v6887
        %v6938 = vsub.f32 0.0, %v6892
        %v6939 = vsub.f32 0.0, %v6897
        %v6940 = vsub.f32 0.0, %v6902
        %v6941 = vsub.f32 0.0, %v6907
        %v6942 = vmul.f32 %v6910, 1.442695
        %v6943 = vpow.pop %v6942
        %v6944 = vmul.f32 %v6911, 1.442695
        %v6945 = vpow.pop %v6944
        %v6946 = vmul.f32 %v6912, 1.442695
        %v6947 = vpow.pop %v6946
        %v6948 = vmul.f32 %v6913, 1.442695
        %v6949 = vpow.pop %v6948
        %v6950 = vmul.f32 %v6914, 1.442695
        %v6951 = vpow.pop %v6950
        %v6952 = vmul.f32 %v6915, 1.442695
        %v6953 = vpow.pop %v6952
        %v6954 = vmul.f32 %v6916, 1.442695
        %v6955 = vpow.pop %v6954
        %v6956 = vmul.f32 %v6917, 1.442695
        %v6957 = vpow.pop %v6956
        %v6958 = vmul.f32 %v6918, 1.442695
        %v6959 = vpow.pop %v6958
        %v6960 = vmul.f32 %v6919, 1.442695
        %v6961 = vpow.pop %v6960
        %v6962 = vmul.f32 %v6920, 1.442695
        %v6963 = vpow.pop %v6962
        %v6964 = vmul.f32 %v6921, 1.442695
        %v6965 = vpow.pop %v6964
        %v6966 = vmul.f32 %v6922, 1.442695
        %v6967 = vpow.pop %v6966
        %v6968 = vmul.f32 %v6923, 1.442695
        %v6969 = vpow.pop %v6968
        %v6970 = vmul.f32 %v6924, 1.442695
        %v6971 = vpow.pop %v6970
        %v6972 = vmul.f32 %v6925, 1.442695
        %v6973 = vpow.pop %v6972
        %v6974 = vmul.f32 %v6926, 1.442695
        %v6975 = vpow.pop %v6974
        %v6976 = vmul.f32 %v6927, 1.442695
        %v6977 = vpow.pop %v6976
        %v6978 = vmul.f32 %v6928, 1.442695
        %v6979 = vpow.pop %v6978
        %v6980 = vmul.f32 %v6929, 1.442695
        %v6981 = vpow.pop %v6980
        %v6982 = vmul.f32 %v6930, 1.442695
        %v6983 = vpow.pop %v6982
        %v6984 = vmul.f32 %v6931, 1.442695
        %v6985 = vpow.pop %v6984
        %v6986 = vmul.f32 %v6932, 1.442695
        %v6987 = vpow.pop %v6986
        %v6988 = vmul.f32 %v6933, 1.442695
        %v6989 = vpow.pop %v6988
        %v6990 = vmul.f32 %v6934, 1.442695
        %v6991 = vpow.pop %v6990
        %v6992 = vmul.f32 %v6935, 1.442695
        %v6993 = vpow.pop %v6992
        %v6994 = vmul.f32 %v6936, 1.442695
        %v6995 = vpow.pop %v6994
        %v6996 = vmul.f32 %v6937, 1.442695
        %v6997 = vpow.pop %v6996
        %v6998 = vmul.f32 %v6938, 1.442695
        %v6999 = vpow.pop %v6998
        %v7000 = vmul.f32 %v6939, 1.442695
        %v7001 = vpow.pop %v7000
        %v7002 = vmul.f32 %v6940, 1.442695
        %v7003 = vpow.pop %v7002
        %v7004 = vmul.f32 %v6941, 1.442695
        %v7005 = vpow.pop %v7004
        %v7006 = vadd.f32 %v6943, 1.0
        %v7007 = vadd.f32 %v6945, 1.0
        %v7008 = vadd.f32 %v6947, 1.0
        %v7009 = vadd.f32 %v6949, 1.0
        %v7010 = vadd.f32 %v6951, 1.0
        %v7011 = vadd.f32 %v6953, 1.0
        %v7012 = vadd.f32 %v6955, 1.0
        %v7013 = vadd.f32 %v6957, 1.0
        %v7014 = vadd.f32 %v6959, 1.0
        %v7015 = vadd.f32 %v6961, 1.0
        %v7016 = vadd.f32 %v6963, 1.0
        %v7017 = vadd.f32 %v6965, 1.0
        %v7018 = vadd.f32 %v6967, 1.0
        %v7019 = vadd.f32 %v6969, 1.0
        %v7020 = vadd.f32 %v6971, 1.0
        %v7021 = vadd.f32 %v6973, 1.0
        %v7022 = vadd.f32 %v6975, 1.0
        %v7023 = vadd.f32 %v6977, 1.0
        %v7024 = vadd.f32 %v6979, 1.0
        %v7025 = vadd.f32 %v6981, 1.0
        %v7026 = vadd.f32 %v6983, 1.0
        %v7027 = vadd.f32 %v6985, 1.0
        %v7028 = vadd.f32 %v6987, 1.0
        %v7029 = vadd.f32 %v6989, 1.0
        %v7030 = vadd.f32 %v6991, 1.0
        %v7031 = vadd.f32 %v6993, 1.0
        %v7032 = vadd.f32 %v6995, 1.0
        %v7033 = vadd.f32 %v6997, 1.0
        %v7034 = vadd.f32 %v6999, 1.0
        %v7035 = vadd.f32 %v7001, 1.0
        %v7036 = vadd.f32 %v7003, 1.0
        %v7037 = vadd.f32 %v7005, 1.0
        %v7038 = vrcp.pop %v7006
        %v7039 = vrcp.pop %v7007
        %v7040 = vrcp.pop %v7008
        %v7041 = vrcp.pop %v7009
        %v7042 = vrcp.pop %v7010
        %v7043 = vrcp.pop %v7011
        %v7044 = vrcp.pop %v7012
        %v7045 = vrcp.pop %v7013
        %v7046 = vrcp.pop %v7014
        %v7047 = vrcp.pop %v7015
        %v7048 = vrcp.pop %v7016
        %v7049 = vrcp.pop %v7017
        %v7050 = vrcp.pop %v7018
        %v7051 = vrcp.pop %v7019
        %v7052 = vrcp.pop %v7020
        %v7053 = vrcp.pop %v7021
        %v7054 = vrcp.pop %v7022
        %v7055 = vrcp.pop %v7023
        %v7056 = vrcp.pop %v7024
        %v7057 = vrcp.pop %v7025
        %v7058 = vrcp.pop %v7026
        %v7059 = vrcp.pop %v7027
        %v7060 = vrcp.pop %v7028
        %v7061 = vrcp.pop %v7029
        %v7062 = vrcp.pop %v7030
        %v7063 = vrcp.pop %v7031
        %v7064 = vrcp.pop %v7032
        %v7065 = vrcp.pop %v7033
        %v7066 = vrcp.pop %v7034
        %v7067 = vrcp.pop %v7035
        %v7068 = vrcp.pop %v7036
        %v7069 = vrcp.pop %v7037
        %v7070 = vmax.f32 %v7038, 0.0
        %v7071 = vmax.f32 %v7039, 0.0
        %v7072 = vmax.f32 %v7040, 0.0
        %v7073 = vmax.f32 %v7041, 0.0
        %v7074 = vmax.f32 %v7042, 0.0
        %v7075 = vmax.f32 %v7043, 0.0
        %v7076 = vmax.f32 %v7044, 0.0
        %v7077 = vmax.f32 %v7045, 0.0
        %v7078 = vmax.f32 %v7046, 0.0
        %v7079 = vmax.f32 %v7047, 0.0
        %v7080 = vmax.f32 %v7048, 0.0
        %v7081 = vmax.f32 %v7049, 0.0
        %v7082 = vmax.f32 %v7050, 0.0
        %v7083 = vmax.f32 %v7051, 0.0
        %v7084 = vmax.f32 %v7052, 0.0
        %v7085 = vmax.f32 %v7053, 0.0
        %v7086 = vmax.f32 %v7054, 0.0
        %v7087 = vmax.f32 %v7055, 0.0
        %v7088 = vmax.f32 %v7056, 0.0
        %v7089 = vmax.f32 %v7057, 0.0
        %v7090 = vmax.f32 %v7058, 0.0
        %v7091 = vmax.f32 %v7059, 0.0
        %v7092 = vmax.f32 %v7060, 0.0
        %v7093 = vmax.f32 %v7061, 0.0
        %v7094 = vmax.f32 %v7062, 0.0
        %v7095 = vmax.f32 %v7063, 0.0
        %v7096 = vmax.f32 %v7064, 0.0
        %v7097 = vmax.f32 %v7065, 0.0
        %v7098 = vmax.f32 %v7066, 0.0
        %v7099 = vmax.f32 %v7067, 0.0
        %v7100 = vmax.f32 %v7068, 0.0
        %v7101 = vmax.f32 %v7069, 0.0
        %v7102 = vmin.f32 %v7070, 1.0
        %v7103 = vmin.f32 %v7071, 1.0
        %v7104 = vmin.f32 %v7072, 1.0
        %v7105 = vmin.f32 %v7073, 1.0
        %v7106 = vmin.f32 %v7074, 1.0
        %v7107 = vmin.f32 %v7075, 1.0
        %v7108 = vmin.f32 %v7076, 1.0
        %v7109 = vmin.f32 %v7077, 1.0
        %v7110 = vmin.f32 %v7078, 1.0
        %v7111 = vmin.f32 %v7079, 1.0
        %v7112 = vmin.f32 %v7080, 1.0
        %v7113 = vmin.f32 %v7081, 1.0
        %v7114 = vmin.f32 %v7082, 1.0
        %v7115 = vmin.f32 %v7083, 1.0
        %v7116 = vmin.f32 %v7084, 1.0
        %v7117 = vmin.f32 %v7085, 1.0
        %v7118 = vmin.f32 %v7086, 1.0
        %v7119 = vmin.f32 %v7087, 1.0
        %v7120 = vmin.f32 %v7088, 1.0
        %v7121 = vmin.f32 %v7089, 1.0
        %v7122 = vmin.f32 %v7090, 1.0
        %v7123 = vmin.f32 %v7091, 1.0
        %v7124 = vmin.f32 %v7092, 1.0
        %v7125 = vmin.f32 %v7093, 1.0
        %v7126 = vmin.f32 %v7094, 1.0
        %v7127 = vmin.f32 %v7095, 1.0
        %v7128 = vmin.f32 %v7096, 1.0
        %v7129 = vmin.f32 %v7097, 1.0
        %v7130 = vmin.f32 %v7098, 1.0
        %v7131 = vmin.f32 %v7099, 1.0
        %v7132 = vmin.f32 %v7100, 1.0
        %v7133 = vmin.f32 %v7101, 1.0
        %7134 = vst.msk [vmem:[%s794] sm:$0xff] %vm1396, %v7102
        %7135 = vst.msk [vmem:[%s794 + $0x8] sm:$0xff] %vm1396, %v7103
        %7136 = vst.msk [vmem:[%s794 + $0x10] sm:$0xff] %vm1396, %v7104
        %7137 = vst.msk [vmem:[%s794 + $0x18] sm:$0xff] %vm1396, %v7105
        %7138 = vst.msk [vmem:[%s794 + $0x20] sm:$0xff] %vm1396, %v7106
        %7139 = vst.msk [vmem:[%s794 + $0x28] sm:$0xff] %vm1396, %v7107
        %7140 = vst.msk [vmem:[%s794 + $0x30] sm:$0xff] %vm1396, %v7108
        %7141 = vst.msk [vmem:[%s794 + $0x38] sm:$0xff] %vm1396, %v7109
        %7142 = vst.msk [vmem:[%s794 + $0x40] sm:$0xff] %vm1396, %v7110
        %7143 = vst.msk [vmem:[%s794 + $0x48] sm:$0xff] %vm1396, %v7111
        %7144 = vst.msk [vmem:[%s794 + $0x50] sm:$0xff] %vm1396, %v7112
        %7145 = vst.msk [vmem:[%s794 + $0x58] sm:$0xff] %vm1396, %v7113
        %7146 = vst.msk [vmem:[%s794 + $0x60] sm:$0xff] %vm1396, %v7114
        %7147 = vst.msk [vmem:[%s794 + $0x68] sm:$0xff] %vm1396, %v7115
        %7148 = vst.msk [vmem:[%s794 + $0x70] sm:$0xff] %vm1396, %v7116
        %7149 = vst.msk [vmem:[%s794 + $0x78] sm:$0xff] %vm1396, %v7117
        %7150 = vst.msk [vmem:[%s794 + $0x80] sm:$0xff] %vm1396, %v7118
        %7151 = vst.msk [vmem:[%s794 + $0x88] sm:$0xff] %vm1396, %v7119
        %7152 = vst.msk [vmem:[%s794 + $0x90] sm:$0xff] %vm1396, %v7120
        %7153 = vst.msk [vmem:[%s794 + $0x98] sm:$0xff] %vm1396, %v7121
        %7154 = vst.msk [vmem:[%s794 + $0xa0] sm:$0xff] %vm1396, %v7122
        %7155 = vst.msk [vmem:[%s794 + $0xa8] sm:$0xff] %vm1396, %v7123
        %7156 = vst.msk [vmem:[%s794 + $0xb0] sm:$0xff] %vm1396, %v7124
        %7157 = vst.msk [vmem:[%s794 + $0xb8] sm:$0xff] %vm1396, %v7125
        %7158 = vst.msk [vmem:[%s794 + $0xc0] sm:$0xff] %vm1396, %v7126
        %7159 = vst.msk [vmem:[%s794 + $0xc8] sm:$0xff] %vm1396, %v7127
        %7160 = vst.msk [vmem:[%s794 + $0xd0] sm:$0xff] %vm1396, %v7128
        %7161 = vst.msk [vmem:[%s794 + $0xd8] sm:$0xff] %vm1396, %v7129
        %7162 = vst.msk [vmem:[%s794 + $0xe0] sm:$0xff] %vm1396, %v7130
        %7163 = vst.msk [vmem:[%s794 + $0xe8] sm:$0xff] %vm1396, %v7131
        %7164 = vst.msk [vmem:[%s794 + $0xf0] sm:$0xff] %vm1396, %v7132
        %7165 = vst.msk [vmem:[%s794 + $0xf8] sm:$0xff] %vm1396, %v7133
        %p7166 = scmp.lt.s32.totalorder %s38, 1
        %s7167 = scalar_select %p7166, %s38, 1
        %s7168 = smul.addr %s7167, 32
        %s7169 = smul.addr %s7168, 8
        %s7170 = scalar_lea.vmem %s25, %s7169
        // Predicated region
        $region129: #{small_texture_autoencoder_forward.1} parent=119 // pred_check
          %p7171 = pneg %p586
        $region130: #{small_texture_autoencoder_forward.1} parent=119 // pred_check_branch
          %7173 = sbr.rel (%p7171) target = $region132
        $region131: #{small_texture_autoencoder_forward.1} parent=119 // pred_region
          _
        $region132: #{small_texture_autoencoder_forward.1} parent=119 // pred_fallthru
          _
      $region120: #{small_texture_autoencoder_forward.1} parent=5 // pred_fallthru
        _
      %p7174 = scmp.le.s32.totalorder 2, %s33
      // Predicated region
      $region133: #{small_texture_autoencoder_forward.1} parent=5 // pred_check
        %p7175 = pneg %p7174
      $region134: #{small_texture_autoencoder_forward.1} parent=5 // pred_check_branch
        %7177 = sbr.rel (%p7175) target = $region136
      $region135: #{small_texture_autoencoder_forward.1} parent=5 // pred_region
        %s7178 = ssub.s32 %s33, 2
        // Predicated region
        $region137: #{small_texture_autoencoder_forward.1} parent=135 // pred_check
          %p7179 = pneg %p592
        $region138: #{small_texture_autoencoder_forward.1} parent=135 // pred_check_branch
          %7181 = sbr.rel (%p7179) target = $region140
        $region139: #{small_texture_autoencoder_forward.1} parent=135 // pred_region
          %p7182 = scmp.lt.s32.totalorder %s39, 1
          %s7183 = scalar_select %p7182, %s39, 1
          %s7184 = smul.addr %s7183, 32
          %s7185 = smul.addr %s7184, 8
          %s7186 = scalar_lea.vmem %s25, %s7185
        $region140: #{small_texture_autoencoder_forward.1} parent=135 // pred_fallthru
          _
      $region136: #{small_texture_autoencoder_forward.1} parent=5 // pred_fallthru
        _
    $region6: #{small_texture_autoencoder_forward.1} parent=1 // loop_footer
      %s37 = sadd.s32 1, %s33
    $region7: #{small_texture_autoencoder_forward.1} parent=1 // loop_footer_branch
      %32 = sbr.rel target = $region3
    $region8: #{small_texture_autoencoder_forward.1} parent=1 // loop_exit
      _
    %7187 = vsyncpa [#allocation11], 1
    %s7188 = scalar_lea.sflag [#allocation11], 1
    %7189 = vsyncpa %s7188, 1
    %7190 = vsyncpa [#allocation13], 1

</llo_original>
